<compile_context>
chip_gen: v7x
topology: tpu7x:2x2x1
jax: 0.10.0
libtpu: 0.0.40
codegen_flags: <defaults>
</compile_context>

<pallas_src>
import functools

import jax
import jax.numpy as jnp
from jax import lax
from jax.experimental import pallas as pl
from jax.experimental.pallas import tpu as pltpu


# ----------------------------------------------------------------------------
# Small helpers
# ----------------------------------------------------------------------------

def _round_up(x, m):
    return -(-x // m) * m


def _pick_tile(M):
    """Row-tile for the GEMM M axis.

    Multiple of 8, big enough to amortize per-grid-step overhead, small enough
    that x/w/out/residual tiles (double buffered, bf16) stay a few MiB — well
    inside the default scoped-VMEM limit on v5e/v6e and v7x's 64 MiB VMEM.
    """
    if M <= 512:
        tm = _round_up(M, 8)
        return tm, tm
    for tm in (512, 448, 384, 320, 256, 192, 128):
        if M % tm == 0:
            return tm, M
    return 256, _round_up(M, 256)


# ----------------------------------------------------------------------------
# Pallas kernels
# ----------------------------------------------------------------------------

def _gemm_kernel(*refs, relu, has_pre, has_res):
    """Fused 1x1-conv GEMM:  out = act( relu_pre(x + b_pre) @ W + b [+ residual] ).

    x, W are bf16 (MXU native), accumulation is f32. The optional prologue
    (has_pre) applies the previous 3x3 conv's folded-BN bias + ReLU to the
    input tile; the optional epilogue (has_res) adds the bottleneck identity.
    """
    x_ref, w_ref, b_ref = refs[0], refs[1], refs[2]
    i = 3
    pre_ref = None
    res_ref = None
    if has_pre:
        pre_ref = refs[i]
        i += 1
    if has_res:
        res_ref = refs[i]
        i += 1
    o_ref = refs[i]

    x = x_ref[...]
    if has_pre:
        x = jnp.maximum(x.astype(jnp.float32) + pre_ref[...], 0.0).astype(jnp.bfloat16)
    acc = jnp.dot(x, w_ref[...], preferred_element_type=jnp.float32)
    acc = acc + b_ref[...]                      # folded-BN bias, shape (1, N)
    if has_res:
        acc = acc + res_ref[...].astype(jnp.float32)
    if relu:
        acc = jnp.maximum(acc, 0.0)
    o_ref[...] = acc.astype(o_ref.dtype)


def fused_gemm(x, w, b, *, relu, pre_bias=None, residual=None,
               out_dtype=jnp.bfloat16):
    """(M,K)@(K,N) + bias (+prologue bias/ReLU) (+residual) (+ReLU), tiled on M."""
    M, K = x.shape
    N = w.shape[1]
    TM, Mp = _pick_tile(M)

    x = x.astype(jnp.bfloat16)
    if residual is not None:
        residual = residual.astype(jnp.bfloat16)
    if Mp != M:
        x = jnp.pad(x, ((0, Mp - M), (0, 0)))
        if residual is not None:
            residual = jnp.pad(residual, ((0, Mp - M), (0, 0)))

    in_specs = [pl.BlockSpec((TM, K), lambda i: (i, 0)),
                pl.BlockSpec((K, N), lambda i: (0, 0)),     # weights resident
                pl.BlockSpec((1, N), lambda i: (0, 0))]
    args = [x, w.astype(jnp.bfloat16), b.reshape(1, N).astype(jnp.float32)]
    if pre_bias is not None:
        in_specs.append(pl.BlockSpec((1, K), lambda i: (0, 0)))
        args.append(pre_bias.reshape(1, K).astype(jnp.float32))
    if residual is not None:
        in_specs.append(pl.BlockSpec((TM, N), lambda i: (i, 0)))
        args.append(residual)

    out = pl.pallas_call(
        functools.partial(_gemm_kernel, relu=relu,
                          has_pre=pre_bias is not None,
                          has_res=residual is not None),
        out_shape=jax.ShapeDtypeStruct((Mp, N), out_dtype),
        grid=(Mp // TM,),
        in_specs=in_specs,
        out_specs=pl.BlockSpec((TM, N), lambda i: (i, 0)),
        compiler_params=pltpu.CompilerParams(dimension_semantics=("parallel",)),
    )(*args)
    return out[:M] if Mp != M else out


def _mse_kernel(a_ref, b_ref, o_ref, acc_ref, *, inv_feat):
    """Per-sample sum((a-b)^2) accumulated over feature tiles; mean at the end."""
    @pl.when(pl.program_id(0) == 0)
    def _():
        acc_ref[...] = jnp.zeros_like(acc_ref)

    d = a_ref[...].astype(jnp.float32) - b_ref[...].astype(jnp.float32)
    acc_ref[...] += jnp.sum(d * d, axis=1, keepdims=True)

    @pl.when(pl.program_id(0) == pl.num_programs(0) - 1)
    def _():
        o_ref[...] = acc_ref[...] * inv_feat


def per_sample_mse(a, b):
    """torch.mean(torch.square(a-b), dim=[1,2,3]) — tiled reduction over features."""
    B = a.shape[0]
    af = a.reshape(B, -1)
    bf = b.reshape(B, -1)
    F = af.shape[1]

    TF = None
    for t in (65536, 32768, 16384, 8192, 4096, 2048, 1024, 512, 256, 128):
        if F % t == 0:
            TF = t
            break
    if TF is None:
        TF = min(65536, _round_up(F, 128))
        Fp = _round_up(F, TF)
        af = jnp.pad(af, ((0, 0), (0, Fp - F)))   # zero pad contributes 0 to the sum
        bf = jnp.pad(bf, ((0, 0), (0, Fp - F)))
    else:
        Fp = F

    out = pl.pallas_call(
        functools.partial(_mse_kernel, inv_feat=1.0 / F),
        out_shape=jax.ShapeDtypeStruct((B, 1), jnp.float32),
        grid=(Fp // TF,),
        in_specs=[pl.BlockSpec((B, TF), lambda f: (0, f)),
                  pl.BlockSpec((B, TF), lambda f: (0, f))],
        out_specs=pl.BlockSpec((B, 1), lambda f: (0, 0)),
        scratch_shapes=[pltpu.VMEM((B, 1), jnp.float32)],
        compiler_params=pltpu.CompilerParams(dimension_semantics=("arbitrary",)),
    )(af, bf)
    return out[:, 0]


# ----------------------------------------------------------------------------
# Conv glue + ResNet-50 trunk up to layer3
# ----------------------------------------------------------------------------

def conv1x1(x, p, *, stride=1, relu, pre_bias=None, residual_nhwc=None):
    """1x1 conv + folded BN (+ prologue / residual / ReLU) via the Pallas GEMM."""
    w, b = p                                     # w: (Cin, Cout) bf16, b: (Cout,) f32
    if stride > 1:
        x = x[:, ::stride, ::stride, :]
    N, H, W, Cin = x.shape
    Cout = w.shape[1]
    res2 = None
    if residual_nhwc is not None:
        res2 = residual_nhwc.reshape(N * H * W, Cout)
    y = fused_gemm(x.reshape(N * H * W, Cin), w, b, relu=relu,
                   pre_bias=pre_bias, residual=res2)
    return y.reshape(N, H, W, Cout)


def conv_spatial(x, p, *, stride, pad):
    """3x3 / 7x7 conv with BN folded into the weights.

    Per the perf guidance this uses lax.conv_general_dilated instead of a
    materialized im2col (which inflated HBM traffic ~9x); bias/ReLU are NOT
    applied here — callers fuse them elsewhere.
    """
    w, _ = p                                     # (kh, kw, Cin, Cout) bf16
    return lax.conv_general_dilated(
        x, w, window_strides=(stride, stride),
        padding=((pad, pad), (pad, pad)),
        dimension_numbers=("NHWC", "HWIO", "NHWC"),
        preferred_element_type=jnp.float32)


def stem(x, p):
    """conv1 (7x7 s2) + bn1 + relu + maxpool(3x3 s2 p1)."""
    _, b = p
    y = conv_spatial(x, p, stride=2, pad=3)
    # bias+ReLU left to XLA so it fuses into the conv epilogue (a separate
    # Pallas pass here would only add an HBM round trip).
    y = jnp.maximum(y + b, 0.0).astype(jnp.bfloat16)
    y = lax.reduce_window(y, jnp.asarray(-jnp.inf, y.dtype), lax.max,
                          (1, 3, 3, 1), (1, 2, 2, 1),
                          [(0, 0), (1, 1), (1, 1), (0, 0)])
    return y


def bottleneck(x, blk):
    if blk["ds"] is not None:
        identity = conv1x1(x, blk["ds"], stride=blk["stride"], relu=False)
    else:
        identity = x
    out = conv1x1(x, blk["c1"], relu=True)
    # 3x3 conv: raw (no bias / relu); its folded-BN bias + ReLU are applied in
    # the c3 GEMM prologue, and the residual add + ReLU in the c3 epilogue.
    out = conv_spatial(out, blk["c2"], stride=blk["stride"], pad=1).astype(jnp.bfloat16)
    out = conv1x1(out, blk["c3"], relu=True,
                  pre_bias=blk["c2"][1], residual_nhwc=identity)
    return out


def stage_B1(x, params):
    x = stem(x, params["stem"])
    for blk in params["layer1"]:
        x = bottleneck(x, blk)
    return x


def stage_blocks(x, blocks):
    for blk in blocks:
        x = bottleneck(x, blk)
    return x


def res_loss(data_nchw, target_nchw, params):
    B = data_nchw.shape[0]
    # Single pass: run data and target through the trunk together so every
    # conv kernel is launched once and weights are DMA'd once per layer.
    x = jnp.concatenate([data_nchw, target_nchw], axis=0)
    x = jnp.transpose(x, (0, 2, 3, 1)).astype(jnp.bfloat16)   # NCHW -> NHWC

    x = stage_B1(x, params)
    b1 = per_sample_mse(x[:B], x[B:])
    x = stage_blocks(x, params["layer2"])
    b2 = per_sample_mse(x[:B], x[B:])
    x = stage_blocks(x, params["layer3"])
    b3 = per_sample_mse(x[:B], x[B:])
    return b1 + b2 + b3


# ----------------------------------------------------------------------------
# Deterministic synthetic parameters (ResNet-50 shapes, BN folded, eval mode)
# ----------------------------------------------------------------------------

def _init_conv_bn(key, kh, kw, cin, cout):
    kw_k, g_k, be_k, m_k, v_k = jax.random.split(key, 5)
    fan_in = kh * kw * cin
    w = jax.random.normal(kw_k, (kh, kw, cin, cout), jnp.float32) * (2.0 / fan_in) ** 0.5
    gamma = 1.0 + 0.1 * jax.random.normal(g_k, (cout,), jnp.float32)
    beta = 0.1 * jax.random.normal(be_k, (cout,), jnp.float32)
    mean = 0.1 * jax.random.normal(m_k, (cout,), jnp.float32)
    var = 1.0 + 0.1 * jnp.abs(jax.random.normal(v_k, (cout,), jnp.float32))
    scale = gamma / jnp.sqrt(var + 1e-5)
    wf = w * scale                               # folded weight
    bf = beta - mean * scale                     # folded bias
    if kh == 1 and kw == 1:
        wf = wf.reshape(cin, cout)
    return wf.astype(jnp.bfloat16), bf.astype(jnp.float32)


def _make_layer(key, inplanes, planes, blocks, stride):
    layer = []
    keys = jax.random.split(key, blocks)
    for i in range(blocks):
        s = stride if i == 0 else 1
        inp = inplanes if i == 0 else planes * 4
        kk = jax.random.split(keys[i], 4)
        ds = None
        if i == 0 and (stride != 1 or inp != planes * 4):
            ds = _init_conv_bn(kk[3], 1, 1, inp, planes * 4)
        layer.append({
            "c1": _init_conv_bn(kk[0], 1, 1, inp, planes),
            "c2": _init_conv_bn(kk[1], 3, 3, planes, planes),
            "c3": _init_conv_bn(kk[2], 1, 1, planes, planes * 4),
            "ds": ds,
            "stride": s,
        })
    return layer


def make_resnet_params(key):
    k_stem, k1, k2, k3 = jax.random.split(key, 4)
    return {
        "stem": _init_conv_bn(k_stem, 7, 7, 3, 64),
        "layer1": _make_layer(k1, 64, 64, 3, 1),
        "layer2": _make_layer(k2, 256, 128, 4, 2),
        "layer3": _make_layer(k3, 512, 256, 6, 2),
    }


# ----------------------------------------------------------------------------

if __name__ == "__main__":
    key = jax.random.PRNGKey(0)
    pkey, dkey, tkey = jax.random.split(key, 3)

    params = make_resnet_params(pkey)

    # small NCHW inputs, 3 channels as required by resnet50.conv1
    data = jax.random.normal(dkey, (2, 3, 32, 32), jnp.float32)
    target = jax.random.normal(tkey, (2, 3, 32, 32), jnp.float32)

    loss_fn = jax.jit(lambda d, t: res_loss(d, t, params))
    out = loss_fn(data, target)
    out = jax.block_until_ready(out)

    assert out.shape == (2,) and bool(jnp.all(jnp.isfinite(out)))
    print("KERNEL_OK")
</pallas_src>

<mosaic_0001>
module attributes {stable_mosaic.version = 11 : i64} {
  func.func @_gemm_kernel(%arg0: i32, %arg1: memref<256x64xbf16, #tpu.memory_space<vmem>>, %arg2: memref<64x64xbf16, #tpu.memory_space<vmem>>, %arg3: memref<1x64xf32, #tpu.memory_space<vmem>>, %arg4: memref<256x64xbf16, #tpu.memory_space<vmem>>) attributes {dimension_semantics = [#tpu.dimension_semantics<parallel>], iteration_bounds = array<i64: 1>, scalar_prefetch = 0 : i64, scratch_operands = 0 : i64, tpu.core_type = #tpu.core_type<tc>, window_params = [{transform_indices = @transform_0, window_bounds = array<i64: 256, 64>}, {pipeline_mode = #tpu.pipeline_mode<synchronous>, transform_indices = @transform_1, window_bounds = array<i64: 64, 64>}, {pipeline_mode = #tpu.pipeline_mode<synchronous>, transform_indices = @transform_2, window_bounds = array<i64: 1, 64>}, {transform_indices = @transform_3, window_bounds = array<i64: 256, 64>}]} {
    %c0 = arith.constant 0 : index
    %c0_0 = arith.constant 0 : index
    %0 = vector.load %arg1[%c0, %c0_0] : memref<256x64xbf16, #tpu.memory_space<vmem>>, vector<256x64xbf16>
    %c0_1 = arith.constant 0 : index
    %c0_2 = arith.constant 0 : index
    %1 = vector.load %arg2[%c0_1, %c0_2] : memref<64x64xbf16, #tpu.memory_space<vmem>>, vector<64x64xbf16>
    %cst = arith.constant dense<0.000000e+00> : vector<256x64xf32>
    %2 = tpu.matmul %0, %1, %cst {dimension_numbers = #tpu.dot_dimension_numbers<[1], [0], [0], [1], [0, 0, 1, 1], [], []>} : vector<256x64xbf16>, vector<64x64xbf16>, vector<256x64xf32> -> vector<256x64xf32>
    %c0_3 = arith.constant 0 : index
    %c0_4 = arith.constant 0 : index
    %3 = vector.load %arg3[%c0_3, %c0_4] : memref<1x64xf32, #tpu.memory_space<vmem>>, vector<1x64xf32>
    %4 = vector.broadcast %3 : vector<1x64xf32> to vector<256x64xf32>
    %5 = arith.addf %2, %4 : vector<256x64xf32>
    %cst_5 = arith.constant 0.000000e+00 : f32
    %6 = vector.broadcast %cst_5 : f32 to vector<256x64xf32>
    %7 = arith.maximumf %5, %6 : vector<256x64xf32>
    %8 = arith.truncf %7 : vector<256x64xf32> to vector<256x64xbf16>
    %c0_6 = arith.constant 0 : index
    %c0_7 = arith.constant 0 : index
    %9 = vector.load %arg4[%c0_6, %c0_7] : memref<256x64xbf16, #tpu.memory_space<vmem>>, vector<256x64xbf16>
    tpu.vector_store %arg4[%c0_6, %c0_7], %8 {strides = array<i32>} : memref<256x64xbf16, #tpu.memory_space<vmem>>, vector<256x64xbf16>,
    return
  }
  func.func @transform_0(%arg0: i32) -> (i32, i32) {
    %c0_i32 = arith.constant 0 : i32
    %c0_i32_0 = arith.constant 0 : i32
    return %arg0, %c0_i32 : i32, i32
  }
  func.func @transform_1(%arg0: i32) -> (i32, i32) {
    %c0_i32 = arith.constant 0 : i32
    %c0_i32_0 = arith.constant 0 : i32
    %c0_i32_1 = arith.constant 0 : i32
    return %c0_i32, %c0_i32_0 : i32, i32
  }
  func.func @transform_2(%arg0: i32) -> (i32, i32) {
    %c0_i32 = arith.constant 0 : i32
    %c0_i32_0 = arith.constant 0 : i32
    %c0_i32_1 = arith.constant 0 : i32
    return %c0_i32, %c0_i32_0 : i32, i32
  }
  func.func @transform_3(%arg0: i32) -> (i32, i32) {
    %c0_i32 = arith.constant 0 : i32
    %c0_i32_0 = arith.constant 0 : i32
    return %arg0, %c0_i32 : i32, i32
  }
}

module attributes {stable_mosaic.version = 11 : i64} {
  func.func @_gemm_kernel(%arg0: i32, %arg1: memref<256x64xbf16, #tpu.memory_space<vmem>>, %arg2: memref<64x256xbf16, #tpu.memory_space<vmem>>, %arg3: memref<1x256xf32, #tpu.memory_space<vmem>>, %arg4: memref<256x256xbf16, #tpu.memory_space<vmem>>) attributes {dimension_semantics = [#tpu.dimension_semantics<parallel>], iteration_bounds = array<i64: 1>, scalar_prefetch = 0 : i64, scratch_operands = 0 : i64, tpu.core_type = #tpu.core_type<tc>, window_params = [{transform_indices = @transform_0, window_bounds = array<i64: 256, 64>}, {pipeline_mode = #tpu.pipeline_mode<synchronous>, transform_indices = @transform_1, window_bounds = array<i64: 64, 256>}, {pipeline_mode = #tpu.pipeline_mode<synchronous>, transform_indices = @transform_2, window_bounds = array<i64: 1, 256>}, {transform_indices = @transform_3, window_bounds = array<i64: 256, 256>}]} {
    %c0 = arith.constant 0 : index
    %c0_0 = arith.constant 0 : index
    %0 = vector.load %arg1[%c0, %c0_0] : memref<256x64xbf16, #tpu.memory_space<vmem>>, vector<256x64xbf16>
    %c0_1 = arith.constant 0 : index
    %c0_2 = arith.constant 0 : index
    %1 = vector.load %arg2[%c0_1, %c0_2] : memref<64x256xbf16, #tpu.memory_space<vmem>>, vector<64x256xbf16>
    %cst = arith.constant dense<0.000000e+00> : vector<256x256xf32>
    %2 = tpu.matmul %0, %1, %cst {dimension_numbers = #tpu.dot_dimension_numbers<[1], [0], [0], [1], [0, 0, 1, 1], [], []>} : vector<256x64xbf16>, vector<64x256xbf16>, vector<256x256xf32> -> vector<256x256xf32>
    %c0_3 = arith.constant 0 : index
    %c0_4 = arith.constant 0 : index
    %3 = vector.load %arg3[%c0_3, %c0_4] : memref<1x256xf32, #tpu.memory_space<vmem>>, vector<1x256xf32>
    %4 = vector.broadcast %3 : vector<1x256xf32> to vector<256x256xf32>
    %5 = arith.addf %2, %4 : vector<256x256xf32>
    %6 = arith.truncf %5 : vector<256x256xf32> to vector<256x256xbf16>
    %c0_5 = arith.constant 0 : index
    %c0_6 = arith.constant 0 : index
    %7 = vector.load %arg4[%c0_5, %c0_6] : memref<256x256xbf16, #tpu.memory_space<vmem>>, vector<256x256xbf16>
    tpu.vector_store %arg4[%c0_5, %c0_6], %6 {strides = array<i32>} : memref<256x256xbf16, #tpu.memory_space<vmem>>, vector<256x256xbf16>,
    return
  }
  func.func @transform_0(%arg0: i32) -> (i32, i32) {
    %c0_i32 = arith.constant 0 : i32
    %c0_i32_0 = arith.constant 0 : i32
    return %arg0, %c0_i32 : i32, i32
  }
  func.func @transform_1(%arg0: i32) -> (i32, i32) {
    %c0_i32 = arith.constant 0 : i32
    %c0_i32_0 = arith.constant 0 : i32
    %c0_i32_1 = arith.constant 0 : i32
    return %c0_i32, %c0_i32_0 : i32, i32
  }
  func.func @transform_2(%arg0: i32) -> (i32, i32) {
    %c0_i32 = arith.constant 0 : i32
    %c0_i32_0 = arith.constant 0 : i32
    %c0_i32_1 = arith.constant 0 : i32
    return %c0_i32, %c0_i32_0 : i32, i32
  }
  func.func @transform_3(%arg0: i32) -> (i32, i32) {
    %c0_i32 = arith.constant 0 : i32
    %c0_i32_0 = arith.constant 0 : i32
    return %arg0, %c0_i32 : i32, i32
  }
}

module attributes {stable_mosaic.version = 11 : i64} {
  func.func @_gemm_kernel(%arg0: i32, %arg1: memref<256x64xbf16, #tpu.memory_space<vmem>>, %arg2: memref<64x256xbf16, #tpu.memory_space<vmem>>, %arg3: memref<1x256xf32, #tpu.memory_space<vmem>>, %arg4: memref<1x64xf32, #tpu.memory_space<vmem>>, %arg5: memref<256x256xbf16, #tpu.memory_space<vmem>>, %arg6: memref<256x256xbf16, #tpu.memory_space<vmem>>) attributes {dimension_semantics = [#tpu.dimension_semantics<parallel>], iteration_bounds = array<i64: 1>, scalar_prefetch = 0 : i64, scratch_operands = 0 : i64, tpu.core_type = #tpu.core_type<tc>, window_params = [{transform_indices = @transform_0, window_bounds = array<i64: 256, 64>}, {pipeline_mode = #tpu.pipeline_mode<synchronous>, transform_indices = @transform_1, window_bounds = array<i64: 64, 256>}, {pipeline_mode = #tpu.pipeline_mode<synchronous>, transform_indices = @transform_2, window_bounds = array<i64: 1, 256>}, {pipeline_mode = #tpu.pipeline_mode<synchronous>, transform_indices = @transform_3, window_bounds = array<i64: 1, 64>}, {transform_indices = @transform_4, window_bounds = array<i64: 256, 256>}, {transform_indices = @transform_5, window_bounds = array<i64: 256, 256>}]} {
    %c0 = arith.constant 0 : index
    %c0_0 = arith.constant 0 : index
    %0 = vector.load %arg1[%c0, %c0_0] : memref<256x64xbf16, #tpu.memory_space<vmem>>, vector<256x64xbf16>
    %1 = arith.extf %0 : vector<256x64xbf16> to vector<256x64xf32>
    %c0_1 = arith.constant 0 : index
    %c0_2 = arith.constant 0 : index
    %2 = vector.load %arg4[%c0_1, %c0_2] : memref<1x64xf32, #tpu.memory_space<vmem>>, vector<1x64xf32>
    %3 = vector.broadcast %2 : vector<1x64xf32> to vector<256x64xf32>
    %4 = arith.addf %1, %3 : vector<256x64xf32>
    %cst = arith.constant 0.000000e+00 : f32
    %5 = vector.broadcast %cst : f32 to vector<256x64xf32>
    %6 = arith.maximumf %4, %5 : vector<256x64xf32>
    %7 = arith.truncf %6 : vector<256x64xf32> to vector<256x64xbf16>
    %c0_3 = arith.constant 0 : index
    %c0_4 = arith.constant 0 : index
    %8 = vector.load %arg2[%c0_3, %c0_4] : memref<64x256xbf16, #tpu.memory_space<vmem>>, vector<64x256xbf16>
    %cst_5 = arith.constant dense<0.000000e+00> : vector<256x256xf32>
    %9 = tpu.matmul %7, %8, %cst_5 {dimension_numbers = #tpu.dot_dimension_numbers<[1], [0], [0], [1], [0, 0, 1, 1], [], []>} : vector<256x64xbf16>, vector<64x256xbf16>, vector<256x256xf32> -> vector<256x256xf32>
    %c0_6 = arith.constant 0 : index
    %c0_7 = arith.constant 0 : index
    %10 = vector.load %arg3[%c0_6, %c0_7] : memref<1x256xf32, #tpu.memory_space<vmem>>, vector<1x256xf32>
    %11 = vector.broadcast %10 : vector<1x256xf32> to vector<256x256xf32>
    %12 = arith.addf %9, %11 : vector<256x256xf32>
    %c0_8 = arith.constant 0 : index
    %c0_9 = arith.constant 0 : index
    %13 = vector.load %arg5[%c0_8, %c0_9] : memref<256x256xbf16, #tpu.memory_space<vmem>>, vector<256x256xbf16>
    %14 = arith.extf %13 : vector<256x256xbf16> to vector<256x256xf32>
    %15 = arith.addf %12, %14 : vector<256x256xf32>
    %cst_10 = arith.constant 0.000000e+00 : f32
    %16 = vector.broadcast %cst_10 : f32 to vector<256x256xf32>
    %17 = arith.maximumf %15, %16 : vector<256x256xf32>
    %18 = arith.truncf %17 : vector<256x256xf32> to vector<256x256xbf16>
    %c0_11 = arith.constant 0 : index
    %c0_12 = arith.constant 0 : index
    %19 = vector.load %arg6[%c0_11, %c0_12] : memref<256x256xbf16, #tpu.memory_space<vmem>>, vector<256x256xbf16>
    tpu.vector_store %arg6[%c0_11, %c0_12], %18 {strides = array<i32>} : memref<256x256xbf16, #tpu.memory_space<vmem>>, vector<256x256xbf16>,
    return
  }
  func.func @transform_0(%arg0: i32) -> (i32, i32) {
    %c0_i32 = arith.constant 0 : i32
    %c0_i32_0 = arith.constant 0 : i32
    return %arg0, %c0_i32 : i32, i32
  }
  func.func @transform_1(%arg0: i32) -> (i32, i32) {
    %c0_i32 = arith.constant 0 : i32
    %c0_i32_0 = arith.constant 0 : i32
    %c0_i32_1 = arith.constant 0 : i32
    return %c0_i32, %c0_i32_0 : i32, i32
  }
  func.func @transform_2(%arg0: i32) -> (i32, i32) {
    %c0_i32 = arith.constant 0 : i32
    %c0_i32_0 = arith.constant 0 : i32
    %c0_i32_1 = arith.constant 0 : i32
    return %c0_i32, %c0_i32_0 : i32, i32
  }
  func.func @transform_3(%arg0: i32) -> (i32, i32) {
    %c0_i32 = arith.constant 0 : i32
    %c0_i32_0 = arith.constant 0 : i32
    %c0_i32_1 = arith.constant 0 : i32
    return %c0_i32, %c0_i32_0 : i32, i32
  }
  func.func @transform_4(%arg0: i32) -> (i32, i32) {
    %c0_i32 = arith.constant 0 : i32
    %c0_i32_0 = arith.constant 0 : i32
    return %arg0, %c0_i32 : i32, i32
  }
  func.func @transform_5(%arg0: i32) -> (i32, i32) {
    %c0_i32 = arith.constant 0 : i32
    %c0_i32_0 = arith.constant 0 : i32
    return %arg0, %c0_i32 : i32, i32
  }
}

module attributes {stable_mosaic.version = 11 : i64} {
  func.func @_gemm_kernel(%arg0: i32, %arg1: memref<256x256xbf16, #tpu.memory_space<vmem>>, %arg2: memref<256x64xbf16, #tpu.memory_space<vmem>>, %arg3: memref<1x64xf32, #tpu.memory_space<vmem>>, %arg4: memref<256x64xbf16, #tpu.memory_space<vmem>>) attributes {dimension_semantics = [#tpu.dimension_semantics<parallel>], iteration_bounds = array<i64: 1>, scalar_prefetch = 0 : i64, scratch_operands = 0 : i64, tpu.core_type = #tpu.core_type<tc>, window_params = [{transform_indices = @transform_0, window_bounds = array<i64: 256, 256>}, {pipeline_mode = #tpu.pipeline_mode<synchronous>, transform_indices = @transform_1, window_bounds = array<i64: 256, 64>}, {pipeline_mode = #tpu.pipeline_mode<synchronous>, transform_indices = @transform_2, window_bounds = array<i64: 1, 64>}, {transform_indices = @transform_3, window_bounds = array<i64: 256, 64>}]} {
    %c0 = arith.constant 0 : index
    %c0_0 = arith.constant 0 : index
    %0 = vector.load %arg1[%c0, %c0_0] : memref<256x256xbf16, #tpu.memory_space<vmem>>, vector<256x256xbf16>
    %c0_1 = arith.constant 0 : index
    %c0_2 = arith.constant 0 : index
    %1 = vector.load %arg2[%c0_1, %c0_2] : memref<256x64xbf16, #tpu.memory_space<vmem>>, vector<256x64xbf16>
    %cst = arith.constant dense<0.000000e+00> : vector<256x64xf32>
    %2 = tpu.matmul %0, %1, %cst {dimension_numbers = #tpu.dot_dimension_numbers<[1], [0], [0], [1], [0, 0, 1, 1], [], []>} : vector<256x256xbf16>, vector<256x64xbf16>, vector<256x64xf32> -> vector<256x64xf32>
    %c0_3 = arith.constant 0 : index
    %c0_4 = arith.constant 0 : index
    %3 = vector.load %arg3[%c0_3, %c0_4] : memref<1x64xf32, #tpu.memory_space<vmem>>, vector<1x64xf32>
    %4 = vector.broadcast %3 : vector<1x64xf32> to vector<256x64xf32>
    %5 = arith.addf %2, %4 : vector<256x64xf32>
    %cst_5 = arith.constant 0.000000e+00 : f32
    %6 = vector.broadcast %cst_5 : f32 to vector<256x64xf32>
    %7 = arith.maximumf %5, %6 : vector<256x64xf32>
    %8 = arith.truncf %7 : vector<256x64xf32> to vector<256x64xbf16>
    %c0_6 = arith.constant 0 : index
    %c0_7 = arith.constant 0 : index
    %9 = vector.load %arg4[%c0_6, %c0_7] : memref<256x64xbf16, #tpu.memory_space<vmem>>, vector<256x64xbf16>
    tpu.vector_store %arg4[%c0_6, %c0_7], %8 {strides = array<i32>} : memref<256x64xbf16, #tpu.memory_space<vmem>>, vector<256x64xbf16>,
    return
  }
  func.func @transform_0(%arg0: i32) -> (i32, i32) {
    %c0_i32 = arith.constant 0 : i32
    %c0_i32_0 = arith.constant 0 : i32
    return %arg0, %c0_i32 : i32, i32
  }
  func.func @transform_1(%arg0: i32) -> (i32, i32) {
    %c0_i32 = arith.constant 0 : i32
    %c0_i32_0 = arith.constant 0 : i32
    %c0_i32_1 = arith.constant 0 : i32
    return %c0_i32, %c0_i32_0 : i32, i32
  }
  func.func @transform_2(%arg0: i32) -> (i32, i32) {
    %c0_i32 = arith.constant 0 : i32
    %c0_i32_0 = arith.constant 0 : i32
    %c0_i32_1 = arith.constant 0 : i32
    return %c0_i32, %c0_i32_0 : i32, i32
  }
  func.func @transform_3(%arg0: i32) -> (i32, i32) {
    %c0_i32 = arith.constant 0 : i32
    %c0_i32_0 = arith.constant 0 : i32
    return %arg0, %c0_i32 : i32, i32
  }
}

module attributes {stable_mosaic.version = 11 : i64} {
  func.func @_gemm_kernel(%arg0: i32, %arg1: memref<64x256xbf16, #tpu.memory_space<vmem>>, %arg2: memref<256x512xbf16, #tpu.memory_space<vmem>>, %arg3: memref<1x512xf32, #tpu.memory_space<vmem>>, %arg4: memref<64x512xbf16, #tpu.memory_space<vmem>>) attributes {dimension_semantics = [#tpu.dimension_semantics<parallel>], iteration_bounds = array<i64: 1>, scalar_prefetch = 0 : i64, scratch_operands = 0 : i64, tpu.core_type = #tpu.core_type<tc>, window_params = [{transform_indices = @transform_0, window_bounds = array<i64: 64, 256>}, {pipeline_mode = #tpu.pipeline_mode<synchronous>, transform_indices = @transform_1, window_bounds = array<i64: 256, 512>}, {pipeline_mode = #tpu.pipeline_mode<synchronous>, transform_indices = @transform_2, window_bounds = array<i64: 1, 512>}, {transform_indices = @transform_3, window_bounds = array<i64: 64, 512>}]} {
    %c0 = arith.constant 0 : index
    %c0_0 = arith.constant 0 : index
    %0 = vector.load %arg1[%c0, %c0_0] : memref<64x256xbf16, #tpu.memory_space<vmem>>, vector<64x256xbf16>
    %c0_1 = arith.constant 0 : index
    %c0_2 = arith.constant 0 : index
    %1 = vector.load %arg2[%c0_1, %c0_2] : memref<256x512xbf16, #tpu.memory_space<vmem>>, vector<256x512xbf16>
    %cst = arith.constant dense<0.000000e+00> : vector<64x512xf32>
    %2 = tpu.matmul %0, %1, %cst {dimension_numbers = #tpu.dot_dimension_numbers<[1], [0], [0], [1], [0, 0, 1, 1], [], []>} : vector<64x256xbf16>, vector<256x512xbf16>, vector<64x512xf32> -> vector<64x512xf32>
    %c0_3 = arith.constant 0 : index
    %c0_4 = arith.constant 0 : index
    %3 = vector.load %arg3[%c0_3, %c0_4] : memref<1x512xf32, #tpu.memory_space<vmem>>, vector<1x512xf32>
    %4 = vector.broadcast %3 : vector<1x512xf32> to vector<64x512xf32>
    %5 = arith.addf %2, %4 : vector<64x512xf32>
    %6 = arith.truncf %5 : vector<64x512xf32> to vector<64x512xbf16>
    %c0_5 = arith.constant 0 : index
    %c0_6 = arith.constant 0 : index
    %7 = vector.load %arg4[%c0_5, %c0_6] : memref<64x512xbf16, #tpu.memory_space<vmem>>, vector<64x512xbf16>
    tpu.vector_store %arg4[%c0_5, %c0_6], %6 {strides = array<i32>} : memref<64x512xbf16, #tpu.memory_space<vmem>>, vector<64x512xbf16>,
    return
  }
  func.func @transform_0(%arg0: i32) -> (i32, i32) {
    %c0_i32 = arith.constant 0 : i32
    %c0_i32_0 = arith.constant 0 : i32
    return %arg0, %c0_i32 : i32, i32
  }
  func.func @transform_1(%arg0: i32) -> (i32, i32) {
    %c0_i32 = arith.constant 0 : i32
    %c0_i32_0 = arith.constant 0 : i32
    %c0_i32_1 = arith.constant 0 : i32
    return %c0_i32, %c0_i32_0 : i32, i32
  }
  func.func @transform_2(%arg0: i32) -> (i32, i32) {
    %c0_i32 = arith.constant 0 : i32
    %c0_i32_0 = arith.constant 0 : i32
    %c0_i32_1 = arith.constant 0 : i32
    return %c0_i32, %c0_i32_0 : i32, i32
  }
  func.func @transform_3(%arg0: i32) -> (i32, i32) {
    %c0_i32 = arith.constant 0 : i32
    %c0_i32_0 = arith.constant 0 : i32
    return %arg0, %c0_i32 : i32, i32
  }
}

module attributes {stable_mosaic.version = 11 : i64} {
  func.func @_gemm_kernel(%arg0: i32, %arg1: memref<256x256xbf16, #tpu.memory_space<vmem>>, %arg2: memref<256x128xbf16, #tpu.memory_space<vmem>>, %arg3: memref<1x128xf32, #tpu.memory_space<vmem>>, %arg4: memref<256x128xbf16, #tpu.memory_space<vmem>>) attributes {dimension_semantics = [#tpu.dimension_semantics<parallel>], iteration_bounds = array<i64: 1>, scalar_prefetch = 0 : i64, scratch_operands = 0 : i64, tpu.core_type = #tpu.core_type<tc>, window_params = [{transform_indices = @transform_0, window_bounds = array<i64: 256, 256>}, {pipeline_mode = #tpu.pipeline_mode<synchronous>, transform_indices = @transform_1, window_bounds = array<i64: 256, 128>}, {pipeline_mode = #tpu.pipeline_mode<synchronous>, transform_indices = @transform_2, window_bounds = array<i64: 1, 128>}, {transform_indices = @transform_3, window_bounds = array<i64: 256, 128>}]} {
    %c0 = arith.constant 0 : index
    %c0_0 = arith.constant 0 : index
    %0 = vector.load %arg1[%c0, %c0_0] : memref<256x256xbf16, #tpu.memory_space<vmem>>, vector<256x256xbf16>
    %c0_1 = arith.constant 0 : index
    %c0_2 = arith.constant 0 : index
    %1 = vector.load %arg2[%c0_1, %c0_2] : memref<256x128xbf16, #tpu.memory_space<vmem>>, vector<256x128xbf16>
    %cst = arith.constant dense<0.000000e+00> : vector<256x128xf32>
    %2 = tpu.matmul %0, %1, %cst {dimension_numbers = #tpu.dot_dimension_numbers<[1], [0], [0], [1], [0, 0, 1, 1], [], []>} : vector<256x256xbf16>, vector<256x128xbf16>, vector<256x128xf32> -> vector<256x128xf32>
    %c0_3 = arith.constant 0 : index
    %c0_4 = arith.constant 0 : index
    %3 = vector.load %arg3[%c0_3, %c0_4] : memref<1x128xf32, #tpu.memory_space<vmem>>, vector<1x128xf32>
    %4 = vector.broadcast %3 : vector<1x128xf32> to vector<256x128xf32>
    %5 = arith.addf %2, %4 : vector<256x128xf32>
    %cst_5 = arith.constant 0.000000e+00 : f32
    %6 = vector.broadcast %cst_5 : f32 to vector<256x128xf32>
    %7 = arith.maximumf %5, %6 : vector<256x128xf32>
    %8 = arith.truncf %7 : vector<256x128xf32> to vector<256x128xbf16>
    %c0_6 = arith.constant 0 : index
    %c0_7 = arith.constant 0 : index
    %9 = vector.load %arg4[%c0_6, %c0_7] : memref<256x128xbf16, #tpu.memory_space<vmem>>, vector<256x128xbf16>
    tpu.vector_store %arg4[%c0_6, %c0_7], %8 {strides = array<i32>} : memref<256x128xbf16, #tpu.memory_space<vmem>>, vector<256x128xbf16>,
    return
  }
  func.func @transform_0(%arg0: i32) -> (i32, i32) {
    %c0_i32 = arith.constant 0 : i32
    %c0_i32_0 = arith.constant 0 : i32
    return %arg0, %c0_i32 : i32, i32
  }
  func.func @transform_1(%arg0: i32) -> (i32, i32) {
    %c0_i32 = arith.constant 0 : i32
    %c0_i32_0 = arith.constant 0 : i32
    %c0_i32_1 = arith.constant 0 : i32
    return %c0_i32, %c0_i32_0 : i32, i32
  }
  func.func @transform_2(%arg0: i32) -> (i32, i32) {
    %c0_i32 = arith.constant 0 : i32
    %c0_i32_0 = arith.constant 0 : i32
    %c0_i32_1 = arith.constant 0 : i32
    return %c0_i32, %c0_i32_0 : i32, i32
  }
  func.func @transform_3(%arg0: i32) -> (i32, i32) {
    %c0_i32 = arith.constant 0 : i32
    %c0_i32_0 = arith.constant 0 : i32
    return %arg0, %c0_i32 : i32, i32
  }
}

module attributes {stable_mosaic.version = 11 : i64} {
  func.func @_gemm_kernel(%arg0: i32, %arg1: memref<64x512xbf16, #tpu.memory_space<vmem>>, %arg2: memref<512x128xbf16, #tpu.memory_space<vmem>>, %arg3: memref<1x128xf32, #tpu.memory_space<vmem>>, %arg4: memref<64x128xbf16, #tpu.memory_space<vmem>>) attributes {dimension_semantics = [#tpu.dimension_semantics<parallel>], iteration_bounds = array<i64: 1>, scalar_prefetch = 0 : i64, scratch_operands = 0 : i64, tpu.core_type = #tpu.core_type<tc>, window_params = [{transform_indices = @transform_0, window_bounds = array<i64: 64, 512>}, {pipeline_mode = #tpu.pipeline_mode<synchronous>, transform_indices = @transform_1, window_bounds = array<i64: 512, 128>}, {pipeline_mode = #tpu.pipeline_mode<synchronous>, transform_indices = @transform_2, window_bounds = array<i64: 1, 128>}, {transform_indices = @transform_3, window_bounds = array<i64: 64, 128>}]} {
    %c0 = arith.constant 0 : index
    %c0_0 = arith.constant 0 : index
    %0 = vector.load %arg1[%c0, %c0_0] : memref<64x512xbf16, #tpu.memory_space<vmem>>, vector<64x512xbf16>
    %c0_1 = arith.constant 0 : index
    %c0_2 = arith.constant 0 : index
    %1 = vector.load %arg2[%c0_1, %c0_2] : memref<512x128xbf16, #tpu.memory_space<vmem>>, vector<512x128xbf16>
    %cst = arith.constant dense<0.000000e+00> : vector<64x128xf32>
    %2 = tpu.matmul %0, %1, %cst {dimension_numbers = #tpu.dot_dimension_numbers<[1], [0], [0], [1], [0, 0, 1, 1], [], []>} : vector<64x512xbf16>, vector<512x128xbf16>, vector<64x128xf32> -> vector<64x128xf32>
    %c0_3 = arith.constant 0 : index
    %c0_4 = arith.constant 0 : index
    %3 = vector.load %arg3[%c0_3, %c0_4] : memref<1x128xf32, #tpu.memory_space<vmem>>, vector<1x128xf32>
    %4 = vector.broadcast %3 : vector<1x128xf32> to vector<64x128xf32>
    %5 = arith.addf %2, %4 : vector<64x128xf32>
    %cst_5 = arith.constant 0.000000e+00 : f32
    %6 = vector.broadcast %cst_5 : f32 to vector<64x128xf32>
    %7 = arith.maximumf %5, %6 : vector<64x128xf32>
    %8 = arith.truncf %7 : vector<64x128xf32> to vector<64x128xbf16>
    %c0_6 = arith.constant 0 : index
    %c0_7 = arith.constant 0 : index
    %9 = vector.load %arg4[%c0_6, %c0_7] : memref<64x128xbf16, #tpu.memory_space<vmem>>, vector<64x128xbf16>
    tpu.vector_store %arg4[%c0_6, %c0_7], %8 {strides = array<i32>} : memref<64x128xbf16, #tpu.memory_space<vmem>>, vector<64x128xbf16>,
    return
  }
  func.func @transform_0(%arg0: i32) -> (i32, i32) {
    %c0_i32 = arith.constant 0 : i32
    %c0_i32_0 = arith.constant 0 : i32
    return %arg0, %c0_i32 : i32, i32
  }
  func.func @transform_1(%arg0: i32) -> (i32, i32) {
    %c0_i32 = arith.constant 0 : i32
    %c0_i32_0 = arith.constant 0 : i32
    %c0_i32_1 = arith.constant 0 : i32
    return %c0_i32, %c0_i32_0 : i32, i32
  }
  func.func @transform_2(%arg0: i32) -> (i32, i32) {
    %c0_i32 = arith.constant 0 : i32
    %c0_i32_0 = arith.constant 0 : i32
    %c0_i32_1 = arith.constant 0 : i32
    return %c0_i32, %c0_i32_0 : i32, i32
  }
  func.func @transform_3(%arg0: i32) -> (i32, i32) {
    %c0_i32 = arith.constant 0 : i32
    %c0_i32_0 = arith.constant 0 : i32
    return %arg0, %c0_i32 : i32, i32
  }
}

module attributes {stable_mosaic.version = 11 : i64} {
  func.func @_gemm_kernel(%arg0: i32, %arg1: memref<64x128xbf16, #tpu.memory_space<vmem>>, %arg2: memref<128x512xbf16, #tpu.memory_space<vmem>>, %arg3: memref<1x512xf32, #tpu.memory_space<vmem>>, %arg4: memref<1x128xf32, #tpu.memory_space<vmem>>, %arg5: memref<64x512xbf16, #tpu.memory_space<vmem>>, %arg6: memref<64x512xbf16, #tpu.memory_space<vmem>>) attributes {dimension_semantics = [#tpu.dimension_semantics<parallel>], iteration_bounds = array<i64: 1>, scalar_prefetch = 0 : i64, scratch_operands = 0 : i64, tpu.core_type = #tpu.core_type<tc>, window_params = [{transform_indices = @transform_0, window_bounds = array<i64: 64, 128>}, {pipeline_mode = #tpu.pipeline_mode<synchronous>, transform_indices = @transform_1, window_bounds = array<i64: 128, 512>}, {pipeline_mode = #tpu.pipeline_mode<synchronous>, transform_indices = @transform_2, window_bounds = array<i64: 1, 512>}, {pipeline_mode = #tpu.pipeline_mode<synchronous>, transform_indices = @transform_3, window_bounds = array<i64: 1, 128>}, {transform_indices = @transform_4, window_bounds = array<i64: 64, 512>}, {transform_indices = @transform_5, window_bounds = array<i64: 64, 512>}]} {
    %c0 = arith.constant 0 : index
    %c0_0 = arith.constant 0 : index
    %0 = vector.load %arg1[%c0, %c0_0] : memref<64x128xbf16, #tpu.memory_space<vmem>>, vector<64x128xbf16>
    %1 = arith.extf %0 : vector<64x128xbf16> to vector<64x128xf32>
    %c0_1 = arith.constant 0 : index
    %c0_2 = arith.constant 0 : index
    %2 = vector.load %arg4[%c0_1, %c0_2] : memref<1x128xf32, #tpu.memory_space<vmem>>, vector<1x128xf32>
    %3 = vector.broadcast %2 : vector<1x128xf32> to vector<64x128xf32>
    %4 = arith.addf %1, %3 : vector<64x128xf32>
    %cst = arith.constant 0.000000e+00 : f32
    %5 = vector.broadcast %cst : f32 to vector<64x128xf32>
    %6 = arith.maximumf %4, %5 : vector<64x128xf32>
    %7 = arith.truncf %6 : vector<64x128xf32> to vector<64x128xbf16>
    %c0_3 = arith.constant 0 : index
    %c0_4 = arith.constant 0 : index
    %8 = vector.load %arg2[%c0_3, %c0_4] : memref<128x512xbf16, #tpu.memory_space<vmem>>, vector<128x512xbf16>
    %cst_5 = arith.constant dense<0.000000e+00> : vector<64x512xf32>
    %9 = tpu.matmul %7, %8, %cst_5 {dimension_numbers = #tpu.dot_dimension_numbers<[1], [0], [0], [1], [0, 0, 1, 1], [], []>} : vector<64x128xbf16>, vector<128x512xbf16>, vector<64x512xf32> -> vector<64x512xf32>
    %c0_6 = arith.constant 0 : index
    %c0_7 = arith.constant 0 : index
    %10 = vector.load %arg3[%c0_6, %c0_7] : memref<1x512xf32, #tpu.memory_space<vmem>>, vector<1x512xf32>
    %11 = vector.broadcast %10 : vector<1x512xf32> to vector<64x512xf32>
    %12 = arith.addf %9, %11 : vector<64x512xf32>
    %c0_8 = arith.constant 0 : index
    %c0_9 = arith.constant 0 : index
    %13 = vector.load %arg5[%c0_8, %c0_9] : memref<64x512xbf16, #tpu.memory_space<vmem>>, vector<64x512xbf16>
    %14 = arith.extf %13 : vector<64x512xbf16> to vector<64x512xf32>
    %15 = arith.addf %12, %14 : vector<64x512xf32>
    %cst_10 = arith.constant 0.000000e+00 : f32
    %16 = vector.broadcast %cst_10 : f32 to vector<64x512xf32>
    %17 = arith.maximumf %15, %16 : vector<64x512xf32>
    %18 = arith.truncf %17 : vector<64x512xf32> to vector<64x512xbf16>
    %c0_11 = arith.constant 0 : index
    %c0_12 = arith.constant 0 : index
    %19 = vector.load %arg6[%c0_11, %c0_12] : memref<64x512xbf16, #tpu.memory_space<vmem>>, vector<64x512xbf16>
    tpu.vector_store %arg6[%c0_11, %c0_12], %18 {strides = array<i32>} : memref<64x512xbf16, #tpu.memory_space<vmem>>, vector<64x512xbf16>,
    return
  }
  func.func @transform_0(%arg0: i32) -> (i32, i32) {
    %c0_i32 = arith.constant 0 : i32
    %c0_i32_0 = arith.constant 0 : i32
    return %arg0, %c0_i32 : i32, i32
  }
  func.func @transform_1(%arg0: i32) -> (i32, i32) {
    %c0_i32 = arith.constant 0 : i32
    %c0_i32_0 = arith.constant 0 : i32
    %c0_i32_1 = arith.constant 0 : i32
    return %c0_i32, %c0_i32_0 : i32, i32
  }
  func.func @transform_2(%arg0: i32) -> (i32, i32) {
    %c0_i32 = arith.constant 0 : i32
    %c0_i32_0 = arith.constant 0 : i32
    %c0_i32_1 = arith.constant 0 : i32
    return %c0_i32, %c0_i32_0 : i32, i32
  }
  func.func @transform_3(%arg0: i32) -> (i32, i32) {
    %c0_i32 = arith.constant 0 : i32
    %c0_i32_0 = arith.constant 0 : i32
    %c0_i32_1 = arith.constant 0 : i32
    return %c0_i32, %c0_i32_0 : i32, i32
  }
  func.func @transform_4(%arg0: i32) -> (i32, i32) {
    %c0_i32 = arith.constant 0 : i32
    %c0_i32_0 = arith.constant 0 : i32
    return %arg0, %c0_i32 : i32, i32
  }
  func.func @transform_5(%arg0: i32) -> (i32, i32) {
    %c0_i32 = arith.constant 0 : i32
    %c0_i32_0 = arith.constant 0 : i32
    return %arg0, %c0_i32 : i32, i32
  }
}

module attributes {stable_mosaic.version = 11 : i64} {
  func.func @_gemm_kernel(%arg0: i32, %arg1: memref<16x512xbf16, #tpu.memory_space<vmem>>, %arg2: memref<512x1024xbf16, #tpu.memory_space<vmem>>, %arg3: memref<1x1024xf32, #tpu.memory_space<vmem>>, %arg4: memref<16x1024xbf16, #tpu.memory_space<vmem>>) attributes {dimension_semantics = [#tpu.dimension_semantics<parallel>], iteration_bounds = array<i64: 1>, scalar_prefetch = 0 : i64, scratch_operands = 0 : i64, tpu.core_type = #tpu.core_type<tc>, window_params = [{transform_indices = @transform_0, window_bounds = array<i64: 16, 512>}, {pipeline_mode = #tpu.pipeline_mode<synchronous>, transform_indices = @transform_1, window_bounds = array<i64: 512, 1024>}, {pipeline_mode = #tpu.pipeline_mode<synchronous>, transform_indices = @transform_2, window_bounds = array<i64: 1, 1024>}, {transform_indices = @transform_3, window_bounds = array<i64: 16, 1024>}]} {
    %c0 = arith.constant 0 : index
    %c0_0 = arith.constant 0 : index
    %0 = vector.load %arg1[%c0, %c0_0] : memref<16x512xbf16, #tpu.memory_space<vmem>>, vector<16x512xbf16>
    %c0_1 = arith.constant 0 : index
    %c0_2 = arith.constant 0 : index
    %1 = vector.load %arg2[%c0_1, %c0_2] : memref<512x1024xbf16, #tpu.memory_space<vmem>>, vector<512x1024xbf16>
    %cst = arith.constant dense<0.000000e+00> : vector<16x1024xf32>
    %2 = tpu.matmul %0, %1, %cst {dimension_numbers = #tpu.dot_dimension_numbers<[1], [0], [0], [1], [0, 0, 1, 1], [], []>} : vector<16x512xbf16>, vector<512x1024xbf16>, vector<16x1024xf32> -> vector<16x1024xf32>
    %c0_3 = arith.constant 0 : index
    %c0_4 = arith.constant 0 : index
    %3 = vector.load %arg3[%c0_3, %c0_4] : memref<1x1024xf32, #tpu.memory_space<vmem>>, vector<1x1024xf32>
    %4 = vector.broadcast %3 : vector<1x1024xf32> to vector<16x1024xf32>
    %5 = arith.addf %2, %4 : vector<16x1024xf32>
    %6 = arith.truncf %5 : vector<16x1024xf32> to vector<16x1024xbf16>
    %c0_5 = arith.constant 0 : index
    %c0_6 = arith.constant 0 : index
    %7 = vector.load %arg4[%c0_5, %c0_6] : memref<16x1024xbf16, #tpu.memory_space<vmem>>, vector<16x1024xbf16>
    tpu.vector_store %arg4[%c0_5, %c0_6], %6 {strides = array<i32>} : memref<16x1024xbf16, #tpu.memory_space<vmem>>, vector<16x1024xbf16>,
    return
  }
  func.func @transform_0(%arg0: i32) -> (i32, i32) {
    %c0_i32 = arith.constant 0 : i32
    %c0_i32_0 = arith.constant 0 : i32
    return %arg0, %c0_i32 : i32, i32
  }
  func.func @transform_1(%arg0: i32) -> (i32, i32) {
    %c0_i32 = arith.constant 0 : i32
    %c0_i32_0 = arith.constant 0 : i32
    %c0_i32_1 = arith.constant 0 : i32
    return %c0_i32, %c0_i32_0 : i32, i32
  }
  func.func @transform_2(%arg0: i32) -> (i32, i32) {
    %c0_i32 = arith.constant 0 : i32
    %c0_i32_0 = arith.constant 0 : i32
    %c0_i32_1 = arith.constant 0 : i32
    return %c0_i32, %c0_i32_0 : i32, i32
  }
  func.func @transform_3(%arg0: i32) -> (i32, i32) {
    %c0_i32 = arith.constant 0 : i32
    %c0_i32_0 = arith.constant 0 : i32
    return %arg0, %c0_i32 : i32, i32
  }
}

module attributes {stable_mosaic.version = 11 : i64} {
  func.func @_gemm_kernel(%arg0: i32, %arg1: memref<64x512xbf16, #tpu.memory_space<vmem>>, %arg2: memref<512x256xbf16, #tpu.memory_space<vmem>>, %arg3: memref<1x256xf32, #tpu.memory_space<vmem>>, %arg4: memref<64x256xbf16, #tpu.memory_space<vmem>>) attributes {dimension_semantics = [#tpu.dimension_semantics<parallel>], iteration_bounds = array<i64: 1>, scalar_prefetch = 0 : i64, scratch_operands = 0 : i64, tpu.core_type = #tpu.core_type<tc>, window_params = [{transform_indices = @transform_0, window_bounds = array<i64: 64, 512>}, {pipeline_mode = #tpu.pipeline_mode<synchronous>, transform_indices = @transform_1, window_bounds = array<i64: 512, 256>}, {pipeline_mode = #tpu.pipeline_mode<synchronous>, transform_indices = @transform_2, window_bounds = array<i64: 1, 256>}, {transform_indices = @transform_3, window_bounds = array<i64: 64, 256>}]} {
    %c0 = arith.constant 0 : index
    %c0_0 = arith.constant 0 : index
    %0 = vector.load %arg1[%c0, %c0_0] : memref<64x512xbf16, #tpu.memory_space<vmem>>, vector<64x512xbf16>
    %c0_1 = arith.constant 0 : index
    %c0_2 = arith.constant 0 : index
    %1 = vector.load %arg2[%c0_1, %c0_2] : memref<512x256xbf16, #tpu.memory_space<vmem>>, vector<512x256xbf16>
    %cst = arith.constant dense<0.000000e+00> : vector<64x256xf32>
    %2 = tpu.matmul %0, %1, %cst {dimension_numbers = #tpu.dot_dimension_numbers<[1], [0], [0], [1], [0, 0, 1, 1], [], []>} : vector<64x512xbf16>, vector<512x256xbf16>, vector<64x256xf32> -> vector<64x256xf32>
    %c0_3 = arith.constant 0 : index
    %c0_4 = arith.constant 0 : index
    %3 = vector.load %arg3[%c0_3, %c0_4] : memref<1x256xf32, #tpu.memory_space<vmem>>, vector<1x256xf32>
    %4 = vector.broadcast %3 : vector<1x256xf32> to vector<64x256xf32>
    %5 = arith.addf %2, %4 : vector<64x256xf32>
    %cst_5 = arith.constant 0.000000e+00 : f32
    %6 = vector.broadcast %cst_5 : f32 to vector<64x256xf32>
    %7 = arith.maximumf %5, %6 : vector<64x256xf32>
    %8 = arith.truncf %7 : vector<64x256xf32> to vector<64x256xbf16>
    %c0_6 = arith.constant 0 : index
    %c0_7 = arith.constant 0 : index
    %9 = vector.load %arg4[%c0_6, %c0_7] : memref<64x256xbf16, #tpu.memory_space<vmem>>, vector<64x256xbf16>
    tpu.vector_store %arg4[%c0_6, %c0_7], %8 {strides = array<i32>} : memref<64x256xbf16, #tpu.memory_space<vmem>>, vector<64x256xbf16>,
    return
  }
  func.func @transform_0(%arg0: i32) -> (i32, i32) {
    %c0_i32 = arith.constant 0 : i32
    %c0_i32_0 = arith.constant 0 : i32
    return %arg0, %c0_i32 : i32, i32
  }
  func.func @transform_1(%arg0: i32) -> (i32, i32) {
    %c0_i32 = arith.constant 0 : i32
    %c0_i32_0 = arith.constant 0 : i32
    %c0_i32_1 = arith.constant 0 : i32
    return %c0_i32, %c0_i32_0 : i32, i32
  }
  func.func @transform_2(%arg0: i32) -> (i32, i32) {
    %c0_i32 = arith.constant 0 : i32
    %c0_i32_0 = arith.constant 0 : i32
    %c0_i32_1 = arith.constant 0 : i32
    return %c0_i32, %c0_i32_0 : i32, i32
  }
  func.func @transform_3(%arg0: i32) -> (i32, i32) {
    %c0_i32 = arith.constant 0 : i32
    %c0_i32_0 = arith.constant 0 : i32
    return %arg0, %c0_i32 : i32, i32
  }
}

module attributes {stable_mosaic.version = 11 : i64} {
  func.func @_gemm_kernel(%arg0: i32, %arg1: memref<16x256xbf16, #tpu.memory_space<vmem>>, %arg2: memref<256x1024xbf16, #tpu.memory_space<vmem>>, %arg3: memref<1x1024xf32, #tpu.memory_space<vmem>>, %arg4: memref<1x256xf32, #tpu.memory_space<vmem>>, %arg5: memref<16x1024xbf16, #tpu.memory_space<vmem>>, %arg6: memref<16x1024xbf16, #tpu.memory_space<vmem>>) attributes {dimension_semantics = [#tpu.dimension_semantics<parallel>], iteration_bounds = array<i64: 1>, scalar_prefetch = 0 : i64, scratch_operands = 0 : i64, tpu.core_type = #tpu.core_type<tc>, window_params = [{transform_indices = @transform_0, window_bounds = array<i64: 16, 256>}, {pipeline_mode = #tpu.pipeline_mode<synchronous>, transform_indices = @transform_1, window_bounds = array<i64: 256, 1024>}, {pipeline_mode = #tpu.pipeline_mode<synchronous>, transform_indices = @transform_2, window_bounds = array<i64: 1, 1024>}, {pipeline_mode = #tpu.pipeline_mode<synchronous>, transform_indices = @transform_3, window_bounds = array<i64: 1, 256>}, {transform_indices = @transform_4, window_bounds = array<i64: 16, 1024>}, {transform_indices = @transform_5, window_bounds = array<i64: 16, 1024>}]} {
    %c0 = arith.constant 0 : index
    %c0_0 = arith.constant 0 : index
    %0 = vector.load %arg1[%c0, %c0_0] : memref<16x256xbf16, #tpu.memory_space<vmem>>, vector<16x256xbf16>
    %1 = arith.extf %0 : vector<16x256xbf16> to vector<16x256xf32>
    %c0_1 = arith.constant 0 : index
    %c0_2 = arith.constant 0 : index
    %2 = vector.load %arg4[%c0_1, %c0_2] : memref<1x256xf32, #tpu.memory_space<vmem>>, vector<1x256xf32>
    %3 = vector.broadcast %2 : vector<1x256xf32> to vector<16x256xf32>
    %4 = arith.addf %1, %3 : vector<16x256xf32>
    %cst = arith.constant 0.000000e+00 : f32
    %5 = vector.broadcast %cst : f32 to vector<16x256xf32>
    %6 = arith.maximumf %4, %5 : vector<16x256xf32>
    %7 = arith.truncf %6 : vector<16x256xf32> to vector<16x256xbf16>
    %c0_3 = arith.constant 0 : index
    %c0_4 = arith.constant 0 : index
    %8 = vector.load %arg2[%c0_3, %c0_4] : memref<256x1024xbf16, #tpu.memory_space<vmem>>, vector<256x1024xbf16>
    %cst_5 = arith.constant dense<0.000000e+00> : vector<16x1024xf32>
    %9 = tpu.matmul %7, %8, %cst_5 {dimension_numbers = #tpu.dot_dimension_numbers<[1], [0], [0], [1], [0, 0, 1, 1], [], []>} : vector<16x256xbf16>, vector<256x1024xbf16>, vector<16x1024xf32> -> vector<16x1024xf32>
    %c0_6 = arith.constant 0 : index
    %c0_7 = arith.constant 0 : index
    %10 = vector.load %arg3[%c0_6, %c0_7] : memref<1x1024xf32, #tpu.memory_space<vmem>>, vector<1x1024xf32>
    %11 = vector.broadcast %10 : vector<1x1024xf32> to vector<16x1024xf32>
    %12 = arith.addf %9, %11 : vector<16x1024xf32>
    %c0_8 = arith.constant 0 : index
    %c0_9 = arith.constant 0 : index
    %13 = vector.load %arg5[%c0_8, %c0_9] : memref<16x1024xbf16, #tpu.memory_space<vmem>>, vector<16x1024xbf16>
    %14 = arith.extf %13 : vector<16x1024xbf16> to vector<16x1024xf32>
    %15 = arith.addf %12, %14 : vector<16x1024xf32>
    %cst_10 = arith.constant 0.000000e+00 : f32
    %16 = vector.broadcast %cst_10 : f32 to vector<16x1024xf32>
    %17 = arith.maximumf %15, %16 : vector<16x1024xf32>
    %18 = arith.truncf %17 : vector<16x1024xf32> to vector<16x1024xbf16>
    %c0_11 = arith.constant 0 : index
    %c0_12 = arith.constant 0 : index
    %19 = vector.load %arg6[%c0_11, %c0_12] : memref<16x1024xbf16, #tpu.memory_space<vmem>>, vector<16x1024xbf16>
    tpu.vector_store %arg6[%c0_11, %c0_12], %18 {strides = array<i32>} : memref<16x1024xbf16, #tpu.memory_space<vmem>>, vector<16x1024xbf16>,
    return
  }
  func.func @transform_0(%arg0: i32) -> (i32, i32) {
    %c0_i32 = arith.constant 0 : i32
    %c0_i32_0 = arith.constant 0 : i32
    return %arg0, %c0_i32 : i32, i32
  }
  func.func @transform_1(%arg0: i32) -> (i32, i32) {
    %c0_i32 = arith.constant 0 : i32
    %c0_i32_0 = arith.constant 0 : i32
    %c0_i32_1 = arith.constant 0 : i32
    return %c0_i32, %c0_i32_0 : i32, i32
  }
  func.func @transform_2(%arg0: i32) -> (i32, i32) {
    %c0_i32 = arith.constant 0 : i32
    %c0_i32_0 = arith.constant 0 : i32
    %c0_i32_1 = arith.constant 0 : i32
    return %c0_i32, %c0_i32_0 : i32, i32
  }
  func.func @transform_3(%arg0: i32) -> (i32, i32) {
    %c0_i32 = arith.constant 0 : i32
    %c0_i32_0 = arith.constant 0 : i32
    %c0_i32_1 = arith.constant 0 : i32
    return %c0_i32, %c0_i32_0 : i32, i32
  }
  func.func @transform_4(%arg0: i32) -> (i32, i32) {
    %c0_i32 = arith.constant 0 : i32
    %c0_i32_0 = arith.constant 0 : i32
    return %arg0, %c0_i32 : i32, i32
  }
  func.func @transform_5(%arg0: i32) -> (i32, i32) {
    %c0_i32 = arith.constant 0 : i32
    %c0_i32_0 = arith.constant 0 : i32
    return %arg0, %c0_i32 : i32, i32
  }
}

module attributes {stable_mosaic.version = 11 : i64} {
  func.func @_gemm_kernel(%arg0: i32, %arg1: memref<16x1024xbf16, #tpu.memory_space<vmem>>, %arg2: memref<1024x256xbf16, #tpu.memory_space<vmem>>, %arg3: memref<1x256xf32, #tpu.memory_space<vmem>>, %arg4: memref<16x256xbf16, #tpu.memory_space<vmem>>) attributes {dimension_semantics = [#tpu.dimension_semantics<parallel>], iteration_bounds = array<i64: 1>, scalar_prefetch = 0 : i64, scratch_operands = 0 : i64, tpu.core_type = #tpu.core_type<tc>, window_params = [{transform_indices = @transform_0, window_bounds = array<i64: 16, 1024>}, {pipeline_mode = #tpu.pipeline_mode<synchronous>, transform_indices = @transform_1, window_bounds = array<i64: 1024, 256>}, {pipeline_mode = #tpu.pipeline_mode<synchronous>, transform_indices = @transform_2, window_bounds = array<i64: 1, 256>}, {transform_indices = @transform_3, window_bounds = array<i64: 16, 256>}]} {
    %c0 = arith.constant 0 : index
    %c0_0 = arith.constant 0 : index
    %0 = vector.load %arg1[%c0, %c0_0] : memref<16x1024xbf16, #tpu.memory_space<vmem>>, vector<16x1024xbf16>
    %c0_1 = arith.constant 0 : index
    %c0_2 = arith.constant 0 : index
    %1 = vector.load %arg2[%c0_1, %c0_2] : memref<1024x256xbf16, #tpu.memory_space<vmem>>, vector<1024x256xbf16>
    %cst = arith.constant dense<0.000000e+00> : vector<16x256xf32>
    %2 = tpu.matmul %0, %1, %cst {dimension_numbers = #tpu.dot_dimension_numbers<[1], [0], [0], [1], [0, 0, 1, 1], [], []>} : vector<16x1024xbf16>, vector<1024x256xbf16>, vector<16x256xf32> -> vector<16x256xf32>
    %c0_3 = arith.constant 0 : index
    %c0_4 = arith.constant 0 : index
    %3 = vector.load %arg3[%c0_3, %c0_4] : memref<1x256xf32, #tpu.memory_space<vmem>>, vector<1x256xf32>
    %4 = vector.broadcast %3 : vector<1x256xf32> to vector<16x256xf32>
    %5 = arith.addf %2, %4 : vector<16x256xf32>
    %cst_5 = arith.constant 0.000000e+00 : f32
    %6 = vector.broadcast %cst_5 : f32 to vector<16x256xf32>
    %7 = arith.maximumf %5, %6 : vector<16x256xf32>
    %8 = arith.truncf %7 : vector<16x256xf32> to vector<16x256xbf16>
    %c0_6 = arith.constant 0 : index
    %c0_7 = arith.constant 0 : index
    %9 = vector.load %arg4[%c0_6, %c0_7] : memref<16x256xbf16, #tpu.memory_space<vmem>>, vector<16x256xbf16>
    tpu.vector_store %arg4[%c0_6, %c0_7], %8 {strides = array<i32>} : memref<16x256xbf16, #tpu.memory_space<vmem>>, vector<16x256xbf16>,
    return
  }
  func.func @transform_0(%arg0: i32) -> (i32, i32) {
    %c0_i32 = arith.constant 0 : i32
    %c0_i32_0 = arith.constant 0 : i32
    return %arg0, %c0_i32 : i32, i32
  }
  func.func @transform_1(%arg0: i32) -> (i32, i32) {
    %c0_i32 = arith.constant 0 : i32
    %c0_i32_0 = arith.constant 0 : i32
    %c0_i32_1 = arith.constant 0 : i32
    return %c0_i32, %c0_i32_0 : i32, i32
  }
  func.func @transform_2(%arg0: i32) -> (i32, i32) {
    %c0_i32 = arith.constant 0 : i32
    %c0_i32_0 = arith.constant 0 : i32
    %c0_i32_1 = arith.constant 0 : i32
    return %c0_i32, %c0_i32_0 : i32, i32
  }
  func.func @transform_3(%arg0: i32) -> (i32, i32) {
    %c0_i32 = arith.constant 0 : i32
    %c0_i32_0 = arith.constant 0 : i32
    return %arg0, %c0_i32 : i32, i32
  }
}

module attributes {stable_mosaic.version = 11 : i64} {
  func.func @_mse_kernel(%arg0: i32, %arg1: memref<2x4096xbf16, #tpu.memory_space<vmem>>, %arg2: memref<2x4096xbf16, #tpu.memory_space<vmem>>, %arg3: memref<2x1xf32, #tpu.memory_space<vmem>>, %arg4: memref<2x1xf32, #tpu.memory_space<vmem>>) attributes {dimension_semantics = [#tpu.dimension_semantics<arbitrary>], iteration_bounds = array<i64: 1>, scalar_prefetch = 0 : i64, scratch_operands = 1 : i64, tpu.core_type = #tpu.core_type<tc>, window_params = [{transform_indices = @transform_0, window_bounds = array<i64: 2, 4096>}, {transform_indices = @transform_1, window_bounds = array<i64: 2, 4096>}, {pipeline_mode = #tpu.pipeline_mode<synchronous>, transform_indices = @transform_2, window_bounds = array<i64: 2, 1>}]} {
    %c0_i32 = arith.constant 0 : i32
    %0 = arith.cmpi eq, %arg0, %c0_i32 : i32
    %1 = arith.extui %0 : i1 to i32
    %c0_i32_0 = arith.constant 0 : i32
    %2 = arith.cmpi ne, %1, %c0_i32_0 : i32
    scf.if %2 {
      %cst_10 = arith.constant 0.000000e+00 : f32
      %17 = vector.broadcast %cst_10 : f32 to vector<2x1xf32>
      %c0_11 = arith.constant 0 : index
      %c0_12 = arith.constant 0 : index
      %18 = vector.load %arg4[%c0_11, %c0_12] : memref<2x1xf32, #tpu.memory_space<vmem>>, vector<2x1xf32>
      tpu.vector_store %arg4[%c0_11, %c0_12], %17 {strides = array<i32>} : memref<2x1xf32, #tpu.memory_space<vmem>>, vector<2x1xf32>,
    } else {
    }
    %c0 = arith.constant 0 : index
    %c0_1 = arith.constant 0 : index
    %3 = vector.load %arg1[%c0, %c0_1] : memref<2x4096xbf16, #tpu.memory_space<vmem>>, vector<2x4096xbf16>
    %4 = arith.extf %3 : vector<2x4096xbf16> to vector<2x4096xf32>
    %c0_2 = arith.constant 0 : index
    %c0_3 = arith.constant 0 : index
    %5 = vector.load %arg2[%c0_2, %c0_3] : memref<2x4096xbf16, #tpu.memory_space<vmem>>, vector<2x4096xbf16>
    %6 = arith.extf %5 : vector<2x4096xbf16> to vector<2x4096xf32>
    %7 = arith.subf %4, %6 : vector<2x4096xf32>
    %c0_4 = arith.constant 0 : index
    %c0_5 = arith.constant 0 : index
    %8 = vector.load %arg4[%c0_4, %c0_5] : memref<2x1xf32, #tpu.memory_space<vmem>>, vector<2x1xf32>
    %9 = arith.mulf %7, %7 : vector<2x4096xf32>
    %cst = arith.constant dense<0.000000e+00> : vector<2xf32>
    %10 = vector.multi_reduction <add>, %9, %cst [1] : vector<2x4096xf32> to vector<2xf32>
    %11 = vector.shape_cast %10 : vector<2xf32> to vector<2x1xf32>
    %12 = arith.addf %8, %11 : vector<2x1xf32>
    %c0_6 = arith.constant 0 : index
    %c0_7 = arith.constant 0 : index
    %13 = vector.load %arg4[%c0_6, %c0_7] : memref<2x1xf32, #tpu.memory_space<vmem>>, vector<2x1xf32>
    tpu.vector_store %arg4[%c0_6, %c0_7], %12 {strides = array<i32>} : memref<2x1xf32, #tpu.memory_space<vmem>>, vector<2x1xf32>,
    %c0_i32_8 = arith.constant 0 : i32
    %14 = arith.cmpi eq, %arg0, %c0_i32_8 : i32
    %15 = arith.extui %14 : i1 to i32
    %c0_i32_9 = arith.constant 0 : i32
    %16 = arith.cmpi ne, %15, %c0_i32_9 : i32
    scf.if %16 {
      %c0_10 = arith.constant 0 : index
      %c0_11 = arith.constant 0 : index
      %17 = vector.load %arg4[%c0_10, %c0_11] : memref<2x1xf32, #tpu.memory_space<vmem>>, vector<2x1xf32>
      %cst_12 = arith.constant 2.44140625E-4 : f32
      %18 = vector.broadcast %cst_12 : f32 to vector<2x1xf32>
      %19 = arith.mulf %17, %18 : vector<2x1xf32>
      %c0_13 = arith.constant 0 : index
      %c0_14 = arith.constant 0 : index
      %20 = vector.load %arg3[%c0_13, %c0_14] : memref<2x1xf32, #tpu.memory_space<vmem>>, vector<2x1xf32>
      tpu.vector_store %arg3[%c0_13, %c0_14], %19 {strides = array<i32>} : memref<2x1xf32, #tpu.memory_space<vmem>>, vector<2x1xf32>,
    } else {
    }
    return
  }
  func.func @transform_0(%arg0: i32) -> (i32, i32) {
    %c0_i32 = arith.constant 0 : i32
    %c0_i32_0 = arith.constant 0 : i32
    return %c0_i32, %arg0 : i32, i32
  }
  func.func @transform_1(%arg0: i32) -> (i32, i32) {
    %c0_i32 = arith.constant 0 : i32
    %c0_i32_0 = arith.constant 0 : i32
    return %c0_i32, %arg0 : i32, i32
  }
  func.func @transform_2(%arg0: i32) -> (i32, i32) {
    %c0_i32 = arith.constant 0 : i32
    %c0_i32_0 = arith.constant 0 : i32
    %c0_i32_1 = arith.constant 0 : i32
    return %c0_i32, %c0_i32_0 : i32, i32
  }
}

module attributes {stable_mosaic.version = 11 : i64} {
  func.func @_mse_kernel(%arg0: i32, %arg1: memref<2x8192xbf16, #tpu.memory_space<vmem>>, %arg2: memref<2x8192xbf16, #tpu.memory_space<vmem>>, %arg3: memref<2x1xf32, #tpu.memory_space<vmem>>, %arg4: memref<2x1xf32, #tpu.memory_space<vmem>>) attributes {dimension_semantics = [#tpu.dimension_semantics<arbitrary>], iteration_bounds = array<i64: 1>, scalar_prefetch = 0 : i64, scratch_operands = 1 : i64, tpu.core_type = #tpu.core_type<tc>, window_params = [{transform_indices = @transform_0, window_bounds = array<i64: 2, 8192>}, {transform_indices = @transform_1, window_bounds = array<i64: 2, 8192>}, {pipeline_mode = #tpu.pipeline_mode<synchronous>, transform_indices = @transform_2, window_bounds = array<i64: 2, 1>}]} {
    %c0_i32 = arith.constant 0 : i32
    %0 = arith.cmpi eq, %arg0, %c0_i32 : i32
    %1 = arith.extui %0 : i1 to i32
    %c0_i32_0 = arith.constant 0 : i32
    %2 = arith.cmpi ne, %1, %c0_i32_0 : i32
    scf.if %2 {
      %cst_10 = arith.constant 0.000000e+00 : f32
      %17 = vector.broadcast %cst_10 : f32 to vector<2x1xf32>
      %c0_11 = arith.constant 0 : index
      %c0_12 = arith.constant 0 : index
      %18 = vector.load %arg4[%c0_11, %c0_12] : memref<2x1xf32, #tpu.memory_space<vmem>>, vector<2x1xf32>
      tpu.vector_store %arg4[%c0_11, %c0_12], %17 {strides = array<i32>} : memref<2x1xf32, #tpu.memory_space<vmem>>, vector<2x1xf32>,
    } else {
    }
    %c0 = arith.constant 0 : index
    %c0_1 = arith.constant 0 : index
    %3 = vector.load %arg1[%c0, %c0_1] : memref<2x8192xbf16, #tpu.memory_space<vmem>>, vector<2x8192xbf16>
    %4 = arith.extf %3 : vector<2x8192xbf16> to vector<2x8192xf32>
    %c0_2 = arith.constant 0 : index
    %c0_3 = arith.constant 0 : index
    %5 = vector.load %arg2[%c0_2, %c0_3] : memref<2x8192xbf16, #tpu.memory_space<vmem>>, vector<2x8192xbf16>
    %6 = arith.extf %5 : vector<2x8192xbf16> to vector<2x8192xf32>
    %7 = arith.subf %4, %6 : vector<2x8192xf32>
    %c0_4 = arith.constant 0 : index
    %c0_5 = arith.constant 0 : index
    %8 = vector.load %arg4[%c0_4, %c0_5] : memref<2x1xf32, #tpu.memory_space<vmem>>, vector<2x1xf32>
    %9 = arith.mulf %7, %7 : vector<2x8192xf32>
    %cst = arith.constant dense<0.000000e+00> : vector<2xf32>
    %10 = vector.multi_reduction <add>, %9, %cst [1] : vector<2x8192xf32> to vector<2xf32>
    %11 = vector.shape_cast %10 : vector<2xf32> to vector<2x1xf32>
    %12 = arith.addf %8, %11 : vector<2x1xf32>
    %c0_6 = arith.constant 0 : index
    %c0_7 = arith.constant 0 : index
    %13 = vector.load %arg4[%c0_6, %c0_7] : memref<2x1xf32, #tpu.memory_space<vmem>>, vector<2x1xf32>
    tpu.vector_store %arg4[%c0_6, %c0_7], %12 {strides = array<i32>} : memref<2x1xf32, #tpu.memory_space<vmem>>, vector<2x1xf32>,
    %c0_i32_8 = arith.constant 0 : i32
    %14 = arith.cmpi eq, %arg0, %c0_i32_8 : i32
    %15 = arith.extui %14 : i1 to i32
    %c0_i32_9 = arith.constant 0 : i32
    %16 = arith.cmpi ne, %15, %c0_i32_9 : i32
    scf.if %16 {
      %c0_10 = arith.constant 0 : index
      %c0_11 = arith.constant 0 : index
      %17 = vector.load %arg4[%c0_10, %c0_11] : memref<2x1xf32, #tpu.memory_space<vmem>>, vector<2x1xf32>
      %cst_12 = arith.constant 1.22070313E-4 : f32
      %18 = vector.broadcast %cst_12 : f32 to vector<2x1xf32>
      %19 = arith.mulf %17, %18 : vector<2x1xf32>
      %c0_13 = arith.constant 0 : index
      %c0_14 = arith.constant 0 : index
      %20 = vector.load %arg3[%c0_13, %c0_14] : memref<2x1xf32, #tpu.memory_space<vmem>>, vector<2x1xf32>
      tpu.vector_store %arg3[%c0_13, %c0_14], %19 {strides = array<i32>} : memref<2x1xf32, #tpu.memory_space<vmem>>, vector<2x1xf32>,
    } else {
    }
    return
  }
  func.func @transform_0(%arg0: i32) -> (i32, i32) {
    %c0_i32 = arith.constant 0 : i32
    %c0_i32_0 = arith.constant 0 : i32
    return %c0_i32, %arg0 : i32, i32
  }
  func.func @transform_1(%arg0: i32) -> (i32, i32) {
    %c0_i32 = arith.constant 0 : i32
    %c0_i32_0 = arith.constant 0 : i32
    return %c0_i32, %arg0 : i32, i32
  }
  func.func @transform_2(%arg0: i32) -> (i32, i32) {
    %c0_i32 = arith.constant 0 : i32
    %c0_i32_0 = arith.constant 0 : i32
    %c0_i32_1 = arith.constant 0 : i32
    return %c0_i32, %c0_i32_0 : i32, i32
  }
}

module attributes {stable_mosaic.version = 11 : i64} {
  func.func @_mse_kernel(%arg0: i32, %arg1: memref<2x16384xbf16, #tpu.memory_space<vmem>>, %arg2: memref<2x16384xbf16, #tpu.memory_space<vmem>>, %arg3: memref<2x1xf32, #tpu.memory_space<vmem>>, %arg4: memref<2x1xf32, #tpu.memory_space<vmem>>) attributes {dimension_semantics = [#tpu.dimension_semantics<arbitrary>], iteration_bounds = array<i64: 1>, scalar_prefetch = 0 : i64, scratch_operands = 1 : i64, tpu.core_type = #tpu.core_type<tc>, window_params = [{transform_indices = @transform_0, window_bounds = array<i64: 2, 16384>}, {transform_indices = @transform_1, window_bounds = array<i64: 2, 16384>}, {pipeline_mode = #tpu.pipeline_mode<synchronous>, transform_indices = @transform_2, window_bounds = array<i64: 2, 1>}]} {
    %c0_i32 = arith.constant 0 : i32
    %0 = arith.cmpi eq, %arg0, %c0_i32 : i32
    %1 = arith.extui %0 : i1 to i32
    %c0_i32_0 = arith.constant 0 : i32
    %2 = arith.cmpi ne, %1, %c0_i32_0 : i32
    scf.if %2 {
      %cst_10 = arith.constant 0.000000e+00 : f32
      %17 = vector.broadcast %cst_10 : f32 to vector<2x1xf32>
      %c0_11 = arith.constant 0 : index
      %c0_12 = arith.constant 0 : index
      %18 = vector.load %arg4[%c0_11, %c0_12] : memref<2x1xf32, #tpu.memory_space<vmem>>, vector<2x1xf32>
      tpu.vector_store %arg4[%c0_11, %c0_12], %17 {strides = array<i32>} : memref<2x1xf32, #tpu.memory_space<vmem>>, vector<2x1xf32>,
    } else {
    }
    %c0 = arith.constant 0 : index
    %c0_1 = arith.constant 0 : index
    %3 = vector.load %arg1[%c0, %c0_1] : memref<2x16384xbf16, #tpu.memory_space<vmem>>, vector<2x16384xbf16>
    %4 = arith.extf %3 : vector<2x16384xbf16> to vector<2x16384xf32>
    %c0_2 = arith.constant 0 : index
    %c0_3 = arith.constant 0 : index
    %5 = vector.load %arg2[%c0_2, %c0_3] : memref<2x16384xbf16, #tpu.memory_space<vmem>>, vector<2x16384xbf16>
    %6 = arith.extf %5 : vector<2x16384xbf16> to vector<2x16384xf32>
    %7 = arith.subf %4, %6 : vector<2x16384xf32>
    %c0_4 = arith.constant 0 : index
    %c0_5 = arith.constant 0 : index
    %8 = vector.load %arg4[%c0_4, %c0_5] : memref<2x1xf32, #tpu.memory_space<vmem>>, vector<2x1xf32>
    %9 = arith.mulf %7, %7 : vector<2x16384xf32>
    %cst = arith.constant dense<0.000000e+00> : vector<2xf32>
    %10 = vector.multi_reduction <add>, %9, %cst [1] : vector<2x16384xf32> to vector<2xf32>
    %11 = vector.shape_cast %10 : vector<2xf32> to vector<2x1xf32>
    %12 = arith.addf %8, %11 : vector<2x1xf32>
    %c0_6 = arith.constant 0 : index
    %c0_7 = arith.constant 0 : index
    %13 = vector.load %arg4[%c0_6, %c0_7] : memref<2x1xf32, #tpu.memory_space<vmem>>, vector<2x1xf32>
    tpu.vector_store %arg4[%c0_6, %c0_7], %12 {strides = array<i32>} : memref<2x1xf32, #tpu.memory_space<vmem>>, vector<2x1xf32>,
    %c0_i32_8 = arith.constant 0 : i32
    %14 = arith.cmpi eq, %arg0, %c0_i32_8 : i32
    %15 = arith.extui %14 : i1 to i32
    %c0_i32_9 = arith.constant 0 : i32
    %16 = arith.cmpi ne, %15, %c0_i32_9 : i32
    scf.if %16 {
      %c0_10 = arith.constant 0 : index
      %c0_11 = arith.constant 0 : index
      %17 = vector.load %arg4[%c0_10, %c0_11] : memref<2x1xf32, #tpu.memory_space<vmem>>, vector<2x1xf32>
      %cst_12 = arith.constant 6.10351563E-5 : f32
      %18 = vector.broadcast %cst_12 : f32 to vector<2x1xf32>
      %19 = arith.mulf %17, %18 : vector<2x1xf32>
      %c0_13 = arith.constant 0 : index
      %c0_14 = arith.constant 0 : index
      %20 = vector.load %arg3[%c0_13, %c0_14] : memref<2x1xf32, #tpu.memory_space<vmem>>, vector<2x1xf32>
      tpu.vector_store %arg3[%c0_13, %c0_14], %19 {strides = array<i32>} : memref<2x1xf32, #tpu.memory_space<vmem>>, vector<2x1xf32>,
    } else {
    }
    return
  }
  func.func @transform_0(%arg0: i32) -> (i32, i32) {
    %c0_i32 = arith.constant 0 : i32
    %c0_i32_0 = arith.constant 0 : i32
    return %c0_i32, %arg0 : i32, i32
  }
  func.func @transform_1(%arg0: i32) -> (i32, i32) {
    %c0_i32 = arith.constant 0 : i32
    %c0_i32_0 = arith.constant 0 : i32
    return %c0_i32, %arg0 : i32, i32
  }
  func.func @transform_2(%arg0: i32) -> (i32, i32) {
    %c0_i32 = arith.constant 0 : i32
    %c0_i32_0 = arith.constant 0 : i32
    %c0_i32_1 = arith.constant 0 : i32
    return %c0_i32, %c0_i32_0 : i32, i32
  }
}

</mosaic_0001>

<llo_original>
// kernel: _lambda_.33
$region0: #{_lambda_.33}
  #allocation0 [shape = 'u32[]', space=smem, size = 0x4, offset = 0x4, fixed_abs, tag = 'smem constant byte address 0x4 - core index']
  #allocation1 [shape = 'u32[144,128]{1,0:T(1,128)}', space=vmem, size = 0x12000, scoped, tag = 'internal scratch']
  %s0 = inlined_call_operand.vmem [shape: bf16[256,64], index: 0, kind: input, shape index: {}]
  %s1 = inlined_call_operand.vmem [shape: bf16[64,64], index: 1, kind: input, shape index: {}]
  %s2 = inlined_call_operand.vmem [shape: f32[1,64], index: 2, kind: input, shape index: {}]
  %s3 = inlined_call_operand.vmem [shape: bf16[256,64], index: 3, kind: output, shape index: {}]
  %s4 = sld [smem:[#allocation0]]
  $region22: #{_lambda_.33} parent=0
    _
  %s6 = ssub.s32 1, %s4
  %s7 = scalar_select 0, %s6, %s4
  // Predicated region
  $region2: #{_lambda_.33} parent=0 // pred_check
    _
  $region3: #{_lambda_.33} parent=0 // pred_check_branch
    %9 = sbr.rel (0) target = $region5
  $region4: #{_lambda_.33} parent=0 // pred_region
    _
  $region5: #{_lambda_.33} parent=0 // pred_fallthru
    _
  // Predicated region
  $region6: #{_lambda_.33} parent=0 // pred_check
    _
  $region7: #{_lambda_.33} parent=0 // pred_check_branch
    %11 = sbr.rel (0) target = $region9
  $region8: #{_lambda_.33} parent=0 // pred_region
    _
  $region9: #{_lambda_.33} parent=0 // pred_fallthru
    _
  // Predicated region
  $region10: #{_lambda_.33} parent=0 // pred_check
    _
  $region11: #{_lambda_.33} parent=0 // pred_check_branch
    %13 = sbr.rel (0) target = $region13
  $region12: #{_lambda_.33} parent=0 // pred_region
    _
  $region13: #{_lambda_.33} parent=0 // pred_fallthru
    _
  %v15 = vld [vmem:[%s0] sm:$0xf]
  %v16 = vld [vmem:[%s0 + $0x4] sm:$0xf]
  %v17 = vld [vmem:[%s0 + $0x8] sm:$0xf]
  %v18 = vld [vmem:[%s0 + $0xc] sm:$0xf]
  %v19 = vld [vmem:[%s0 + $0x10] sm:$0xf]
  %v20 = vld [vmem:[%s0 + $0x14] sm:$0xf]
  %v21 = vld [vmem:[%s0 + $0x18] sm:$0xf]
  %v22 = vld [vmem:[%s0 + $0x1c] sm:$0xf]
  %v23 = vld [vmem:[%s0 + $0x20] sm:$0xf]
  %v24 = vld [vmem:[%s0 + $0x24] sm:$0xf]
  %v25 = vld [vmem:[%s0 + $0x28] sm:$0xf]
  %v26 = vld [vmem:[%s0 + $0x2c] sm:$0xf]
  %v27 = vld [vmem:[%s0 + $0x30] sm:$0xf]
  %v28 = vld [vmem:[%s0 + $0x34] sm:$0xf]
  %v29 = vld [vmem:[%s0 + $0x38] sm:$0xf]
  %v30 = vld [vmem:[%s0 + $0x3c] sm:$0xf]
  %v31 = vld [vmem:[%s0 + $0x40] sm:$0xf]
  %v32 = vld [vmem:[%s0 + $0x44] sm:$0xf]
  %v33 = vld [vmem:[%s0 + $0x48] sm:$0xf]
  %v34 = vld [vmem:[%s0 + $0x4c] sm:$0xf]
  %v35 = vld [vmem:[%s0 + $0x50] sm:$0xf]
  %v36 = vld [vmem:[%s0 + $0x54] sm:$0xf]
  %v37 = vld [vmem:[%s0 + $0x58] sm:$0xf]
  %v38 = vld [vmem:[%s0 + $0x5c] sm:$0xf]
  %v39 = vld [vmem:[%s0 + $0x60] sm:$0xf]
  %v40 = vld [vmem:[%s0 + $0x64] sm:$0xf]
  %v41 = vld [vmem:[%s0 + $0x68] sm:$0xf]
  %v42 = vld [vmem:[%s0 + $0x6c] sm:$0xf]
  %v43 = vld [vmem:[%s0 + $0x70] sm:$0xf]
  %v44 = vld [vmem:[%s0 + $0x74] sm:$0xf]
  %v45 = vld [vmem:[%s0 + $0x78] sm:$0xf]
  %v46 = vld [vmem:[%s0 + $0x7c] sm:$0xf]
  %v47 = vld [vmem:[%s1] sm:$0xf]
  %v48 = vld [vmem:[%s1 + $0x4] sm:$0xf]
  %v49 = vld [vmem:[%s1 + $0x8] sm:$0xf]
  %v50 = vld [vmem:[%s1 + $0xc] sm:$0xf]
  %v51 = vld [vmem:[%s1 + $0x10] sm:$0xf]
  %v52 = vld [vmem:[%s1 + $0x14] sm:$0xf]
  %v53 = vld [vmem:[%s1 + $0x18] sm:$0xf]
  %v54 = vld [vmem:[%s1 + $0x1c] sm:$0xf]
  %v55 = vld [vmem:[%s2] sm:$0x1]
  %v57 = vlaneseq
  %v58 = vshrl.u32 %v57, 7
  %v59 = vsub.s32 0, %v58
  %v60 = vrot.slane %v55, %v59
  %v94 = vunpack.c.l.b16 %v15
  %v95 = vunpack.c.l.b16 %v16
  %v96 = vunpack.c.l.b16 %v17
  %v97 = vunpack.c.l.b16 %v18
  %v98 = vunpack.c.l.b16 %v19
  %v99 = vunpack.c.l.b16 %v20
  %v100 = vunpack.c.l.b16 %v21
  %v101 = vunpack.c.l.b16 %v22
  %v102 = vunpack.c.l.b16 %v23
  %v103 = vunpack.c.l.b16 %v24
  %v104 = vunpack.c.l.b16 %v25
  %v105 = vunpack.c.l.b16 %v26
  %v106 = vunpack.c.l.b16 %v27
  %v107 = vunpack.c.l.b16 %v28
  %v108 = vunpack.c.l.b16 %v29
  %v109 = vunpack.c.l.b16 %v30
  %v110 = vunpack.c.l.b16 %v31
  %v111 = vunpack.c.l.b16 %v32
  %v112 = vunpack.c.l.b16 %v33
  %v113 = vunpack.c.l.b16 %v34
  %v114 = vunpack.c.l.b16 %v35
  %v115 = vunpack.c.l.b16 %v36
  %v116 = vunpack.c.l.b16 %v37
  %v117 = vunpack.c.l.b16 %v38
  %v118 = vunpack.c.l.b16 %v39
  %v119 = vunpack.c.l.b16 %v40
  %v120 = vunpack.c.l.b16 %v41
  %v121 = vunpack.c.l.b16 %v42
  %v122 = vunpack.c.l.b16 %v43
  %v123 = vunpack.c.l.b16 %v44
  %v124 = vunpack.c.l.b16 %v45
  %v125 = vunpack.c.l.b16 %v46
  %v126 = vpack.c.b16 %v95, %v94
  %v127 = vpack.c.b16 %v97, %v96
  %v128 = vpack.c.b16 %v99, %v98
  %v129 = vpack.c.b16 %v101, %v100
  %v130 = vpack.c.b16 %v103, %v102
  %v131 = vpack.c.b16 %v105, %v104
  %v132 = vpack.c.b16 %v107, %v106
  %v133 = vpack.c.b16 %v109, %v108
  %v134 = vpack.c.b16 %v111, %v110
  %v135 = vpack.c.b16 %v113, %v112
  %v136 = vpack.c.b16 %v115, %v114
  %v137 = vpack.c.b16 %v117, %v116
  %v138 = vpack.c.b16 %v119, %v118
  %v139 = vpack.c.b16 %v121, %v120
  %v140 = vpack.c.b16 %v123, %v122
  %v141 = vpack.c.b16 %v125, %v124
  %v150 = vunpack.c.l.b16 %v47
  %v151 = vunpack.c.l.b16 %v48
  %v152 = vunpack.c.l.b16 %v49
  %v153 = vunpack.c.l.b16 %v50
  %v154 = vunpack.c.l.b16 %v51
  %v155 = vunpack.c.l.b16 %v52
  %v156 = vunpack.c.l.b16 %v53
  %v157 = vunpack.c.l.b16 %v54
  %v158 = vpack.c.b16 %v151, %v150
  %v159 = vpack.c.b16 %v153, %v152
  %v160 = vpack.c.b16 %v155, %v154
  %v161 = vpack.c.b16 %v157, %v156
  %vm166 = vcmask 523264
  %v168 = vsel %vm166, %v126, 0
  %v171 = vsel %vm166, %v127, 0
  %v174 = vsel %vm166, %v128, 0
  %v177 = vsel %vm166, %v129, 0
  %v180 = vsel %vm166, %v130, 0
  %v183 = vsel %vm166, %v131, 0
  %v186 = vsel %vm166, %v132, 0
  %v189 = vsel %vm166, %v133, 0
  %v192 = vsel %vm166, %v134, 0
  %v195 = vsel %vm166, %v135, 0
  %v198 = vsel %vm166, %v136, 0
  %v201 = vsel %vm166, %v137, 0
  %v204 = vsel %vm166, %v138, 0
  %v207 = vsel %vm166, %v139, 0
  %v210 = vsel %vm166, %v140, 0
  %v213 = vsel %vm166, %v141, 0
  %215 = vmatprep.subr.bf16.mxu0 0
  %216 = vmatpush1.bf16.msra.mxu0 %v158
  %217 = vmatprep.subr.bf16.mxu0 0
  %218 = vmatpush1.bf16.msra.mxu0 %v159
  %219 = vmatprep.subr.bf16.mxu0 0
  %220 = vmatpush1.bf16.msra.mxu0 %v160
  %221 = vmatprep.subr.bf16.mxu0 0
  %222 = vmatpush1.bf16.msra.mxu0 %v161
  %223 = vmatprep.subr.bf16.mxu0 0
  %224 = vmatpush1.bf16.msra.mxu0 0
  %225 = vmatprep.subr.bf16.mxu0 0
  %226 = vmatpush1.bf16.msra.mxu0 0
  %227 = vmatprep.subr.bf16.mxu0 0
  %228 = vmatpush1.bf16.msra.mxu0 0
  %229 = vmatprep.subr.bf16.mxu0 0
  %230 = vmatpush1.bf16.msra.mxu0 0
  %231 = vmatprep.subr.bf16.mxu0 0
  %232 = vmatpush1.bf16.msra.mxu0 0
  %233 = vmatprep.subr.bf16.mxu0 0
  %234 = vmatpush1.bf16.msra.mxu0 0
  %235 = vmatprep.subr.bf16.mxu0 0
  %236 = vmatpush1.bf16.msra.mxu0 0
  %237 = vmatprep.subr.bf16.mxu0 0
  %238 = vmatpush1.bf16.msra.mxu0 0
  %239 = vmatprep.subr.bf16.mxu0 0
  %240 = vmatpush1.bf16.msra.mxu0 0
  %241 = vmatprep.subr.bf16.mxu0 0
  %242 = vmatpush1.bf16.msra.mxu0 0
  %243 = vmatprep.subr.bf16.mxu0 0
  %244 = vmatpush1.bf16.msra.mxu0 0
  %245 = vmatprep.subr.bf16.mxu0 0
  %246 = vmatpush1.bf16.msra.mxu0 0
  %247 = vmatprep.mubr.bf16.mxu0 0
  %248 = vmatmul.mubr.bf16.gmra.mrb[0].mxu0 %v168
  %v249 = vpop.f32.mrb[0].mxu0
  %v250 = vadd.f32 %v60, %v249
  %v251 = vpop.f32.mrb[0].mxu0
  %v252 = vpop.f32.mrb[0].mxu0
  %v253 = vadd.f32 %v60, %v252
  %v254 = vpop.f32.mrb[0].mxu0
  %255 = vmatprep.mubr.bf16.mxu0 0
  %256 = vmatmul.mubr.bf16.gmra.mrb[0].mxu0 %v171
  %v257 = vpop.f32.mrb[0].mxu0
  %v258 = vadd.f32 %v60, %v257
  %v259 = vpop.f32.mrb[0].mxu0
  %v260 = vpop.f32.mrb[0].mxu0
  %v261 = vadd.f32 %v60, %v260
  %v262 = vpop.f32.mrb[0].mxu0
  %263 = vmatprep.mubr.bf16.mxu0 0
  %264 = vmatmul.mubr.bf16.gmra.mrb[0].mxu0 %v174
  %v265 = vpop.f32.mrb[0].mxu0
  %v266 = vadd.f32 %v60, %v265
  %v267 = vpop.f32.mrb[0].mxu0
  %v268 = vpop.f32.mrb[0].mxu0
  %v269 = vadd.f32 %v60, %v268
  %v270 = vpop.f32.mrb[0].mxu0
  %271 = vmatprep.mubr.bf16.mxu0 0
  %272 = vmatmul.mubr.bf16.gmra.mrb[0].mxu0 %v177
  %v273 = vpop.f32.mrb[0].mxu0
  %v274 = vadd.f32 %v60, %v273
  %v275 = vpop.f32.mrb[0].mxu0
  %v276 = vpop.f32.mrb[0].mxu0
  %v277 = vadd.f32 %v60, %v276
  %v278 = vpop.f32.mrb[0].mxu0
  %279 = vmatprep.mubr.bf16.mxu0 0
  %280 = vmatmul.mubr.bf16.gmra.mrb[0].mxu0 %v180
  %v281 = vpop.f32.mrb[0].mxu0
  %v282 = vadd.f32 %v60, %v281
  %v283 = vpop.f32.mrb[0].mxu0
  %v284 = vpop.f32.mrb[0].mxu0
  %v285 = vadd.f32 %v60, %v284
  %v286 = vpop.f32.mrb[0].mxu0
  %287 = vmatprep.mubr.bf16.mxu0 0
  %288 = vmatmul.mubr.bf16.gmra.mrb[0].mxu0 %v183
  %v289 = vpop.f32.mrb[0].mxu0
  %v290 = vadd.f32 %v60, %v289
  %v291 = vpop.f32.mrb[0].mxu0
  %v292 = vpop.f32.mrb[0].mxu0
  %v293 = vadd.f32 %v60, %v292
  %v294 = vpop.f32.mrb[0].mxu0
  %295 = vmatprep.mubr.bf16.mxu0 0
  %296 = vmatmul.mubr.bf16.gmra.mrb[0].mxu0 %v186
  %v297 = vpop.f32.mrb[0].mxu0
  %v298 = vadd.f32 %v60, %v297
  %v299 = vpop.f32.mrb[0].mxu0
  %v300 = vpop.f32.mrb[0].mxu0
  %v301 = vadd.f32 %v60, %v300
  %v302 = vpop.f32.mrb[0].mxu0
  %303 = vmatprep.mubr.bf16.mxu0 0
  %304 = vmatmul.mubr.bf16.gmra.mrb[0].mxu0 %v189
  %v305 = vpop.f32.mrb[0].mxu0
  %v306 = vadd.f32 %v60, %v305
  %v307 = vpop.f32.mrb[0].mxu0
  %v308 = vpop.f32.mrb[0].mxu0
  %v309 = vadd.f32 %v60, %v308
  %v310 = vpop.f32.mrb[0].mxu0
  %311 = vmatprep.mubr.bf16.mxu0 0
  %312 = vmatmul.mubr.bf16.gmra.mrb[0].mxu0 %v192
  %v313 = vpop.f32.mrb[0].mxu0
  %v314 = vadd.f32 %v60, %v313
  %v315 = vpop.f32.mrb[0].mxu0
  %v316 = vpop.f32.mrb[0].mxu0
  %v317 = vadd.f32 %v60, %v316
  %v318 = vpop.f32.mrb[0].mxu0
  %319 = vmatprep.mubr.bf16.mxu0 0
  %320 = vmatmul.mubr.bf16.gmra.mrb[0].mxu0 %v195
  %v321 = vpop.f32.mrb[0].mxu0
  %v322 = vadd.f32 %v60, %v321
  %v323 = vpop.f32.mrb[0].mxu0
  %v324 = vpop.f32.mrb[0].mxu0
  %v325 = vadd.f32 %v60, %v324
  %v326 = vpop.f32.mrb[0].mxu0
  %327 = vmatprep.mubr.bf16.mxu0 0
  %328 = vmatmul.mubr.bf16.gmra.mrb[0].mxu0 %v198
  %v329 = vpop.f32.mrb[0].mxu0
  %v330 = vadd.f32 %v60, %v329
  %v331 = vpop.f32.mrb[0].mxu0
  %v332 = vpop.f32.mrb[0].mxu0
  %v333 = vadd.f32 %v60, %v332
  %v334 = vpop.f32.mrb[0].mxu0
  %335 = vmatprep.mubr.bf16.mxu0 0
  %336 = vmatmul.mubr.bf16.gmra.mrb[0].mxu0 %v201
  %v337 = vpop.f32.mrb[0].mxu0
  %v338 = vadd.f32 %v60, %v337
  %v339 = vpop.f32.mrb[0].mxu0
  %v340 = vpop.f32.mrb[0].mxu0
  %v341 = vadd.f32 %v60, %v340
  %v342 = vpop.f32.mrb[0].mxu0
  %343 = vmatprep.mubr.bf16.mxu0 0
  %344 = vmatmul.mubr.bf16.gmra.mrb[0].mxu0 %v204
  %v345 = vpop.f32.mrb[0].mxu0
  %v346 = vadd.f32 %v60, %v345
  %v347 = vpop.f32.mrb[0].mxu0
  %v348 = vpop.f32.mrb[0].mxu0
  %v349 = vadd.f32 %v60, %v348
  %v350 = vpop.f32.mrb[0].mxu0
  %351 = vmatprep.mubr.bf16.mxu0 0
  %352 = vmatmul.mubr.bf16.gmra.mrb[0].mxu0 %v207
  %v353 = vpop.f32.mrb[0].mxu0
  %v354 = vadd.f32 %v60, %v353
  %v355 = vpop.f32.mrb[0].mxu0
  %v356 = vpop.f32.mrb[0].mxu0
  %v357 = vadd.f32 %v60, %v356
  %v358 = vpop.f32.mrb[0].mxu0
  %359 = vmatprep.mubr.bf16.mxu0 0
  %360 = vmatmul.mubr.bf16.gmra.mrb[0].mxu0 %v210
  %v361 = vpop.f32.mrb[0].mxu0
  %v362 = vadd.f32 %v60, %v361
  %v363 = vpop.f32.mrb[0].mxu0
  %v364 = vpop.f32.mrb[0].mxu0
  %v365 = vadd.f32 %v60, %v364
  %v366 = vpop.f32.mrb[0].mxu0
  %367 = vmatprep.mubr.bf16.mxu0 0
  %368 = vmatmul.mubr.bf16.gmra.mrb[0].mxu0 %v213
  %v369 = vpop.f32.mrb[0].mxu0
  %v370 = vadd.f32 %v60, %v369
  %v371 = vpop.f32.mrb[0].mxu0
  %v372 = vpop.f32.mrb[0].mxu0
  %v373 = vadd.f32 %v60, %v372
  %v374 = vpop.f32.mrb[0].mxu0
  %375 = vdwg.mxu0
  %v376 = vmax.f32 %v250, 0.0
  %v377 = vmax.f32 %v253, 0.0
  %v378 = vmax.f32 %v258, 0.0
  %v379 = vmax.f32 %v261, 0.0
  %v380 = vmax.f32 %v266, 0.0
  %v381 = vmax.f32 %v269, 0.0
  %v382 = vmax.f32 %v274, 0.0
  %v383 = vmax.f32 %v277, 0.0
  %v384 = vmax.f32 %v282, 0.0
  %v385 = vmax.f32 %v285, 0.0
  %v386 = vmax.f32 %v290, 0.0
  %v387 = vmax.f32 %v293, 0.0
  %v388 = vmax.f32 %v298, 0.0
  %v389 = vmax.f32 %v301, 0.0
  %v390 = vmax.f32 %v306, 0.0
  %v391 = vmax.f32 %v309, 0.0
  %v392 = vmax.f32 %v314, 0.0
  %v393 = vmax.f32 %v317, 0.0
  %v394 = vmax.f32 %v322, 0.0
  %v395 = vmax.f32 %v325, 0.0
  %v396 = vmax.f32 %v330, 0.0
  %v397 = vmax.f32 %v333, 0.0
  %v398 = vmax.f32 %v338, 0.0
  %v399 = vmax.f32 %v341, 0.0
  %v400 = vmax.f32 %v346, 0.0
  %v401 = vmax.f32 %v349, 0.0
  %v402 = vmax.f32 %v354, 0.0
  %v403 = vmax.f32 %v357, 0.0
  %v404 = vmax.f32 %v362, 0.0
  %v405 = vmax.f32 %v365, 0.0
  %v406 = vmax.f32 %v370, 0.0
  %v407 = vmax.f32 %v373, 0.0
  %v408 = vpack.c.bf16 %v377, %v376
  %v409 = vpack.c.bf16 %v379, %v378
  %v410 = vpack.c.bf16 %v381, %v380
  %v411 = vpack.c.bf16 %v383, %v382
  %v412 = vpack.c.bf16 %v385, %v384
  %v413 = vpack.c.bf16 %v387, %v386
  %v414 = vpack.c.bf16 %v389, %v388
  %v415 = vpack.c.bf16 %v391, %v390
  %v416 = vpack.c.bf16 %v393, %v392
  %v417 = vpack.c.bf16 %v395, %v394
  %v418 = vpack.c.bf16 %v397, %v396
  %v419 = vpack.c.bf16 %v399, %v398
  %v420 = vpack.c.bf16 %v401, %v400
  %v421 = vpack.c.bf16 %v403, %v402
  %v422 = vpack.c.bf16 %v405, %v404
  %v423 = vpack.c.bf16 %v407, %v406
  %v440 = vunpack.c.l.b16 %v408
  %v441 = vunpack.c.h.b16 %v408
  %v442 = vunpack.c.l.b16 %v409
  %v443 = vunpack.c.h.b16 %v409
  %v444 = vunpack.c.l.b16 %v410
  %v445 = vunpack.c.h.b16 %v410
  %v446 = vunpack.c.l.b16 %v411
  %v447 = vunpack.c.h.b16 %v411
  %v448 = vunpack.c.l.b16 %v412
  %v449 = vunpack.c.h.b16 %v412
  %v450 = vunpack.c.l.b16 %v413
  %v451 = vunpack.c.h.b16 %v413
  %v452 = vunpack.c.l.b16 %v414
  %v453 = vunpack.c.h.b16 %v414
  %v454 = vunpack.c.l.b16 %v415
  %v455 = vunpack.c.h.b16 %v415
  %v456 = vunpack.c.l.b16 %v416
  %v457 = vunpack.c.h.b16 %v416
  %v458 = vunpack.c.l.b16 %v417
  %v459 = vunpack.c.h.b16 %v417
  %v460 = vunpack.c.l.b16 %v418
  %v461 = vunpack.c.h.b16 %v418
  %v462 = vunpack.c.l.b16 %v419
  %v463 = vunpack.c.h.b16 %v419
  %v464 = vunpack.c.l.b16 %v420
  %v465 = vunpack.c.h.b16 %v420
  %v466 = vunpack.c.l.b16 %v421
  %v467 = vunpack.c.h.b16 %v421
  %v468 = vunpack.c.l.b16 %v422
  %v469 = vunpack.c.h.b16 %v422
  %v470 = vunpack.c.l.b16 %v423
  %v471 = vunpack.c.h.b16 %v423
  %v472 = vpack.c.b16 %v440, %v440
  %v473 = vpack.c.b16 %v441, %v441
  %v474 = vpack.c.b16 %v442, %v442
  %v475 = vpack.c.b16 %v443, %v443
  %v476 = vpack.c.b16 %v444, %v444
  %v477 = vpack.c.b16 %v445, %v445
  %v478 = vpack.c.b16 %v446, %v446
  %v479 = vpack.c.b16 %v447, %v447
  %v480 = vpack.c.b16 %v448, %v448
  %v481 = vpack.c.b16 %v449, %v449
  %v482 = vpack.c.b16 %v450, %v450
  %v483 = vpack.c.b16 %v451, %v451
  %v484 = vpack.c.b16 %v452, %v452
  %v485 = vpack.c.b16 %v453, %v453
  %v486 = vpack.c.b16 %v454, %v454
  %v487 = vpack.c.b16 %v455, %v455
  %v488 = vpack.c.b16 %v456, %v456
  %v489 = vpack.c.b16 %v457, %v457
  %v490 = vpack.c.b16 %v458, %v458
  %v491 = vpack.c.b16 %v459, %v459
  %v492 = vpack.c.b16 %v460, %v460
  %v493 = vpack.c.b16 %v461, %v461
  %v494 = vpack.c.b16 %v462, %v462
  %v495 = vpack.c.b16 %v463, %v463
  %v496 = vpack.c.b16 %v464, %v464
  %v497 = vpack.c.b16 %v465, %v465
  %v498 = vpack.c.b16 %v466, %v466
  %v499 = vpack.c.b16 %v467, %v467
  %v500 = vpack.c.b16 %v468, %v468
  %v501 = vpack.c.b16 %v469, %v469
  %v502 = vpack.c.b16 %v470, %v470
  %v503 = vpack.c.b16 %v471, %v471
  %vm536 = vcmask 519168
  %537 = vst.msk [vmem:[%s3] sm:$0xf] %vm536, %v472
  %538 = vst.msk [vmem:[%s3 + $0x4] sm:$0xf] %vm536, %v473
  %539 = vst.msk [vmem:[%s3 + $0x8] sm:$0xf] %vm536, %v474
  %540 = vst.msk [vmem:[%s3 + $0xc] sm:$0xf] %vm536, %v475
  %541 = vst.msk [vmem:[%s3 + $0x10] sm:$0xf] %vm536, %v476
  %542 = vst.msk [vmem:[%s3 + $0x14] sm:$0xf] %vm536, %v477
  %543 = vst.msk [vmem:[%s3 + $0x18] sm:$0xf] %vm536, %v478
  %544 = vst.msk [vmem:[%s3 + $0x1c] sm:$0xf] %vm536, %v479
  %545 = vst.msk [vmem:[%s3 + $0x20] sm:$0xf] %vm536, %v480
  %546 = vst.msk [vmem:[%s3 + $0x24] sm:$0xf] %vm536, %v481
  %547 = vst.msk [vmem:[%s3 + $0x28] sm:$0xf] %vm536, %v482
  %548 = vst.msk [vmem:[%s3 + $0x2c] sm:$0xf] %vm536, %v483
  %549 = vst.msk [vmem:[%s3 + $0x30] sm:$0xf] %vm536, %v484
  %550 = vst.msk [vmem:[%s3 + $0x34] sm:$0xf] %vm536, %v485
  %551 = vst.msk [vmem:[%s3 + $0x38] sm:$0xf] %vm536, %v486
  %552 = vst.msk [vmem:[%s3 + $0x3c] sm:$0xf] %vm536, %v487
  %553 = vst.msk [vmem:[%s3 + $0x40] sm:$0xf] %vm536, %v488
  %554 = vst.msk [vmem:[%s3 + $0x44] sm:$0xf] %vm536, %v489
  %555 = vst.msk [vmem:[%s3 + $0x48] sm:$0xf] %vm536, %v490
  %556 = vst.msk [vmem:[%s3 + $0x4c] sm:$0xf] %vm536, %v491
  %557 = vst.msk [vmem:[%s3 + $0x50] sm:$0xf] %vm536, %v492
  %558 = vst.msk [vmem:[%s3 + $0x54] sm:$0xf] %vm536, %v493
  %559 = vst.msk [vmem:[%s3 + $0x58] sm:$0xf] %vm536, %v494
  %560 = vst.msk [vmem:[%s3 + $0x5c] sm:$0xf] %vm536, %v495
  %561 = vst.msk [vmem:[%s3 + $0x60] sm:$0xf] %vm536, %v496
  %562 = vst.msk [vmem:[%s3 + $0x64] sm:$0xf] %vm536, %v497
  %563 = vst.msk [vmem:[%s3 + $0x68] sm:$0xf] %vm536, %v498
  %564 = vst.msk [vmem:[%s3 + $0x6c] sm:$0xf] %vm536, %v499
  %565 = vst.msk [vmem:[%s3 + $0x70] sm:$0xf] %vm536, %v500
  %566 = vst.msk [vmem:[%s3 + $0x74] sm:$0xf] %vm536, %v501
  %567 = vst.msk [vmem:[%s3 + $0x78] sm:$0xf] %vm536, %v502
  %568 = vst.msk [vmem:[%s3 + $0x7c] sm:$0xf] %vm536, %v503
  // Predicated region
  $region14: #{_lambda_.33} parent=0 // pred_check
    _
  $region15: #{_lambda_.33} parent=0 // pred_check_branch
    %570 = sbr.rel (0) target = $region17
  $region16: #{_lambda_.33} parent=0 // pred_region
    _
  $region17: #{_lambda_.33} parent=0 // pred_fallthru
    _
  // Predicated region
  $region18: #{_lambda_.33} parent=0 // pred_check
    _
  $region19: #{_lambda_.33} parent=0 // pred_check_branch
    %572 = sbr.rel (0) target = $region21
  $region20: #{_lambda_.33} parent=0 // pred_region
    _
  $region21: #{_lambda_.33} parent=0 // pred_fallthru
    _

// kernel: _lambda_.32
$region0: #{_lambda_.32}
  #allocation0 [shape = 'u32[]', space=smem, size = 0x4, offset = 0x4, fixed_abs, tag = 'smem constant byte address 0x4 - core index']
  #allocation1 [shape = 'u32[144,128]{1,0:T(1,128)}', space=vmem, size = 0x12000, scoped, tag = 'internal scratch']
  %s0 = inlined_call_operand.vmem [shape: bf16[256,64], index: 0, kind: input, shape index: {}]
  %s1 = inlined_call_operand.vmem [shape: bf16[64,256], index: 1, kind: input, shape index: {}]
  %s2 = inlined_call_operand.vmem [shape: f32[1,256], index: 2, kind: input, shape index: {}]
  %s3 = inlined_call_operand.vmem [shape: bf16[256,256], index: 3, kind: output, shape index: {}]
  %s4 = sld [smem:[#allocation0]]
  $region22: #{_lambda_.32} parent=0
    _
  %s6 = ssub.s32 1, %s4
  %s7 = scalar_select 0, %s6, %s4
  // Predicated region
  $region2: #{_lambda_.32} parent=0 // pred_check
    _
  $region3: #{_lambda_.32} parent=0 // pred_check_branch
    %9 = sbr.rel (0) target = $region5
  $region4: #{_lambda_.32} parent=0 // pred_region
    _
  $region5: #{_lambda_.32} parent=0 // pred_fallthru
    _
  // Predicated region
  $region6: #{_lambda_.32} parent=0 // pred_check
    _
  $region7: #{_lambda_.32} parent=0 // pred_check_branch
    %11 = sbr.rel (0) target = $region9
  $region8: #{_lambda_.32} parent=0 // pred_region
    _
  $region9: #{_lambda_.32} parent=0 // pred_fallthru
    _
  // Predicated region
  $region10: #{_lambda_.32} parent=0 // pred_check
    _
  $region11: #{_lambda_.32} parent=0 // pred_check_branch
    %13 = sbr.rel (0) target = $region13
  $region12: #{_lambda_.32} parent=0 // pred_region
    _
  $region13: #{_lambda_.32} parent=0 // pred_fallthru
    _
  %v15 = vld [vmem:[%s0] sm:$0xf]
  %v16 = vld [vmem:[%s0 + $0x4] sm:$0xf]
  %v17 = vld [vmem:[%s0 + $0x8] sm:$0xf]
  %v18 = vld [vmem:[%s0 + $0xc] sm:$0xf]
  %v19 = vld [vmem:[%s0 + $0x10] sm:$0xf]
  %v20 = vld [vmem:[%s0 + $0x14] sm:$0xf]
  %v21 = vld [vmem:[%s0 + $0x18] sm:$0xf]
  %v22 = vld [vmem:[%s0 + $0x1c] sm:$0xf]
  %v23 = vld [vmem:[%s0 + $0x20] sm:$0xf]
  %v24 = vld [vmem:[%s0 + $0x24] sm:$0xf]
  %v25 = vld [vmem:[%s0 + $0x28] sm:$0xf]
  %v26 = vld [vmem:[%s0 + $0x2c] sm:$0xf]
  %v27 = vld [vmem:[%s0 + $0x30] sm:$0xf]
  %v28 = vld [vmem:[%s0 + $0x34] sm:$0xf]
  %v29 = vld [vmem:[%s0 + $0x38] sm:$0xf]
  %v30 = vld [vmem:[%s0 + $0x3c] sm:$0xf]
  %v31 = vld [vmem:[%s0 + $0x40] sm:$0xf]
  %v32 = vld [vmem:[%s0 + $0x44] sm:$0xf]
  %v33 = vld [vmem:[%s0 + $0x48] sm:$0xf]
  %v34 = vld [vmem:[%s0 + $0x4c] sm:$0xf]
  %v35 = vld [vmem:[%s0 + $0x50] sm:$0xf]
  %v36 = vld [vmem:[%s0 + $0x54] sm:$0xf]
  %v37 = vld [vmem:[%s0 + $0x58] sm:$0xf]
  %v38 = vld [vmem:[%s0 + $0x5c] sm:$0xf]
  %v39 = vld [vmem:[%s0 + $0x60] sm:$0xf]
  %v40 = vld [vmem:[%s0 + $0x64] sm:$0xf]
  %v41 = vld [vmem:[%s0 + $0x68] sm:$0xf]
  %v42 = vld [vmem:[%s0 + $0x6c] sm:$0xf]
  %v43 = vld [vmem:[%s0 + $0x70] sm:$0xf]
  %v44 = vld [vmem:[%s0 + $0x74] sm:$0xf]
  %v45 = vld [vmem:[%s0 + $0x78] sm:$0xf]
  %v46 = vld [vmem:[%s0 + $0x7c] sm:$0xf]
  %v47 = vld [vmem:[%s1] sm:$0xff]
  %v48 = vld [vmem:[%s1 + $0x8] sm:$0xff]
  %v49 = vld [vmem:[%s1 + $0x10] sm:$0xff]
  %v50 = vld [vmem:[%s1 + $0x18] sm:$0xff]
  %v51 = vld [vmem:[%s1 + $0x20] sm:$0xff]
  %v52 = vld [vmem:[%s1 + $0x28] sm:$0xff]
  %v53 = vld [vmem:[%s1 + $0x30] sm:$0xff]
  %v54 = vld [vmem:[%s1 + $0x38] sm:$0xff]
  %v55 = vld [vmem:[%s2] sm:$0x3]
  %v57 = vlaneseq
  %v58 = vshrl.u32 %v57, 7
  %v59 = vsub.s32 0, %v58
  %v60 = vrot.slane %v55, %v59
  %v61 = vlaneseq
  %v62 = vshrl.u32 %v61, 7
  %v63 = vsub.s32 1, %v62
  %v64 = vrot.slane %v55, %v63
  %v99 = vunpack.c.l.b16 %v15
  %v100 = vunpack.c.l.b16 %v16
  %v101 = vunpack.c.l.b16 %v17
  %v102 = vunpack.c.l.b16 %v18
  %v103 = vunpack.c.l.b16 %v19
  %v104 = vunpack.c.l.b16 %v20
  %v105 = vunpack.c.l.b16 %v21
  %v106 = vunpack.c.l.b16 %v22
  %v107 = vunpack.c.l.b16 %v23
  %v108 = vunpack.c.l.b16 %v24
  %v109 = vunpack.c.l.b16 %v25
  %v110 = vunpack.c.l.b16 %v26
  %v111 = vunpack.c.l.b16 %v27
  %v112 = vunpack.c.l.b16 %v28
  %v113 = vunpack.c.l.b16 %v29
  %v114 = vunpack.c.l.b16 %v30
  %v115 = vunpack.c.l.b16 %v31
  %v116 = vunpack.c.l.b16 %v32
  %v117 = vunpack.c.l.b16 %v33
  %v118 = vunpack.c.l.b16 %v34
  %v119 = vunpack.c.l.b16 %v35
  %v120 = vunpack.c.l.b16 %v36
  %v121 = vunpack.c.l.b16 %v37
  %v122 = vunpack.c.l.b16 %v38
  %v123 = vunpack.c.l.b16 %v39
  %v124 = vunpack.c.l.b16 %v40
  %v125 = vunpack.c.l.b16 %v41
  %v126 = vunpack.c.l.b16 %v42
  %v127 = vunpack.c.l.b16 %v43
  %v128 = vunpack.c.l.b16 %v44
  %v129 = vunpack.c.l.b16 %v45
  %v130 = vunpack.c.l.b16 %v46
  %v131 = vpack.c.b16 %v100, %v99
  %v132 = vpack.c.b16 %v102, %v101
  %v133 = vpack.c.b16 %v104, %v103
  %v134 = vpack.c.b16 %v106, %v105
  %v135 = vpack.c.b16 %v108, %v107
  %v136 = vpack.c.b16 %v110, %v109
  %v137 = vpack.c.b16 %v112, %v111
  %v138 = vpack.c.b16 %v114, %v113
  %v139 = vpack.c.b16 %v116, %v115
  %v140 = vpack.c.b16 %v118, %v117
  %v141 = vpack.c.b16 %v120, %v119
  %v142 = vpack.c.b16 %v122, %v121
  %v143 = vpack.c.b16 %v124, %v123
  %v144 = vpack.c.b16 %v126, %v125
  %v145 = vpack.c.b16 %v128, %v127
  %v146 = vpack.c.b16 %v130, %v129
  %v155 = vunpack.c.l.b16 %v47
  %v156 = vunpack.c.h.b16 %v47
  %v157 = vunpack.c.l.b16 %v48
  %v158 = vunpack.c.h.b16 %v48
  %v159 = vunpack.c.l.b16 %v49
  %v160 = vunpack.c.h.b16 %v49
  %v161 = vunpack.c.l.b16 %v50
  %v162 = vunpack.c.h.b16 %v50
  %v163 = vunpack.c.l.b16 %v51
  %v164 = vunpack.c.h.b16 %v51
  %v165 = vunpack.c.l.b16 %v52
  %v166 = vunpack.c.h.b16 %v52
  %v167 = vunpack.c.l.b16 %v53
  %v168 = vunpack.c.h.b16 %v53
  %v169 = vunpack.c.l.b16 %v54
  %v170 = vunpack.c.h.b16 %v54
  %v171 = vpack.c.b16 %v157, %v155
  %v172 = vpack.c.b16 %v158, %v156
  %v173 = vpack.c.b16 %v161, %v159
  %v174 = vpack.c.b16 %v162, %v160
  %v175 = vpack.c.b16 %v165, %v163
  %v176 = vpack.c.b16 %v166, %v164
  %v177 = vpack.c.b16 %v169, %v167
  %v178 = vpack.c.b16 %v170, %v168
  %vm187 = vcmask 523264
  %v189 = vsel %vm187, %v131, 0
  %v192 = vsel %vm187, %v132, 0
  %v195 = vsel %vm187, %v133, 0
  %v198 = vsel %vm187, %v134, 0
  %v201 = vsel %vm187, %v135, 0
  %v204 = vsel %vm187, %v136, 0
  %v207 = vsel %vm187, %v137, 0
  %v210 = vsel %vm187, %v138, 0
  %v213 = vsel %vm187, %v139, 0
  %v216 = vsel %vm187, %v140, 0
  %v219 = vsel %vm187, %v141, 0
  %v222 = vsel %vm187, %v142, 0
  %v225 = vsel %vm187, %v143, 0
  %v228 = vsel %vm187, %v144, 0
  %v231 = vsel %vm187, %v145, 0
  %v234 = vsel %vm187, %v146, 0
  %236 = vmatprep.subr.bf16.mxu0 %v172
  %237 = vmatpush1.bf16.msra.mxu0 %v171
  %238 = vmatprep.subr.bf16.mxu0 %v174
  %239 = vmatpush1.bf16.msra.mxu0 %v173
  %240 = vmatprep.subr.bf16.mxu0 %v176
  %241 = vmatpush1.bf16.msra.mxu0 %v175
  %242 = vmatprep.subr.bf16.mxu0 %v178
  %243 = vmatpush1.bf16.msra.mxu0 %v177
  %244 = vmatprep.subr.bf16.mxu0 0
  %245 = vmatpush1.bf16.msra.mxu0 0
  %246 = vmatprep.subr.bf16.mxu0 0
  %247 = vmatpush1.bf16.msra.mxu0 0
  %248 = vmatprep.subr.bf16.mxu0 0
  %249 = vmatpush1.bf16.msra.mxu0 0
  %250 = vmatprep.subr.bf16.mxu0 0
  %251 = vmatpush1.bf16.msra.mxu0 0
  %252 = vmatprep.subr.bf16.mxu0 0
  %253 = vmatpush1.bf16.msra.mxu0 0
  %254 = vmatprep.subr.bf16.mxu0 0
  %255 = vmatpush1.bf16.msra.mxu0 0
  %256 = vmatprep.subr.bf16.mxu0 0
  %257 = vmatpush1.bf16.msra.mxu0 0
  %258 = vmatprep.subr.bf16.mxu0 0
  %259 = vmatpush1.bf16.msra.mxu0 0
  %260 = vmatprep.subr.bf16.mxu0 0
  %261 = vmatpush1.bf16.msra.mxu0 0
  %262 = vmatprep.subr.bf16.mxu0 0
  %263 = vmatpush1.bf16.msra.mxu0 0
  %264 = vmatprep.subr.bf16.mxu0 0
  %265 = vmatpush1.bf16.msra.mxu0 0
  %266 = vmatprep.subr.bf16.mxu0 0
  %267 = vmatpush1.bf16.msra.mxu0 0
  %268 = vmatprep.mubr.bf16.mxu0 0
  %269 = vmatmul.mubr.bf16.gmra.mrb[0].mxu0 %v189
  %v270 = vpop.f32.mrb[0].mxu0
  %v271 = vadd.f32 %v60, %v270
  %v272 = vpop.f32.mrb[0].mxu0
  %v273 = vadd.f32 %v64, %v272
  %v274 = vpop.f32.mrb[0].mxu0
  %v275 = vadd.f32 %v60, %v274
  %v276 = vpop.f32.mrb[0].mxu0
  %v277 = vadd.f32 %v64, %v276
  %278 = vmatprep.mubr.bf16.mxu0 0
  %279 = vmatmul.mubr.bf16.gmra.mrb[0].mxu0 %v192
  %v280 = vpop.f32.mrb[0].mxu0
  %v281 = vadd.f32 %v60, %v280
  %v282 = vpop.f32.mrb[0].mxu0
  %v283 = vadd.f32 %v64, %v282
  %v284 = vpop.f32.mrb[0].mxu0
  %v285 = vadd.f32 %v60, %v284
  %v286 = vpop.f32.mrb[0].mxu0
  %v287 = vadd.f32 %v64, %v286
  %288 = vmatprep.mubr.bf16.mxu0 0
  %289 = vmatmul.mubr.bf16.gmra.mrb[0].mxu0 %v195
  %v290 = vpop.f32.mrb[0].mxu0
  %v291 = vadd.f32 %v60, %v290
  %v292 = vpop.f32.mrb[0].mxu0
  %v293 = vadd.f32 %v64, %v292
  %v294 = vpop.f32.mrb[0].mxu0
  %v295 = vadd.f32 %v60, %v294
  %v296 = vpop.f32.mrb[0].mxu0
  %v297 = vadd.f32 %v64, %v296
  %298 = vmatprep.mubr.bf16.mxu0 0
  %299 = vmatmul.mubr.bf16.gmra.mrb[0].mxu0 %v198
  %v300 = vpop.f32.mrb[0].mxu0
  %v301 = vadd.f32 %v60, %v300
  %v302 = vpop.f32.mrb[0].mxu0
  %v303 = vadd.f32 %v64, %v302
  %v304 = vpop.f32.mrb[0].mxu0
  %v305 = vadd.f32 %v60, %v304
  %v306 = vpop.f32.mrb[0].mxu0
  %v307 = vadd.f32 %v64, %v306
  %308 = vmatprep.mubr.bf16.mxu0 0
  %309 = vmatmul.mubr.bf16.gmra.mrb[0].mxu0 %v201
  %v310 = vpop.f32.mrb[0].mxu0
  %v311 = vadd.f32 %v60, %v310
  %v312 = vpop.f32.mrb[0].mxu0
  %v313 = vadd.f32 %v64, %v312
  %v314 = vpop.f32.mrb[0].mxu0
  %v315 = vadd.f32 %v60, %v314
  %v316 = vpop.f32.mrb[0].mxu0
  %v317 = vadd.f32 %v64, %v316
  %318 = vmatprep.mubr.bf16.mxu0 0
  %319 = vmatmul.mubr.bf16.gmra.mrb[0].mxu0 %v204
  %v320 = vpop.f32.mrb[0].mxu0
  %v321 = vadd.f32 %v60, %v320
  %v322 = vpop.f32.mrb[0].mxu0
  %v323 = vadd.f32 %v64, %v322
  %v324 = vpop.f32.mrb[0].mxu0
  %v325 = vadd.f32 %v60, %v324
  %v326 = vpop.f32.mrb[0].mxu0
  %v327 = vadd.f32 %v64, %v326
  %328 = vmatprep.mubr.bf16.mxu0 0
  %329 = vmatmul.mubr.bf16.gmra.mrb[0].mxu0 %v207
  %v330 = vpop.f32.mrb[0].mxu0
  %v331 = vadd.f32 %v60, %v330
  %v332 = vpop.f32.mrb[0].mxu0
  %v333 = vadd.f32 %v64, %v332
  %v334 = vpop.f32.mrb[0].mxu0
  %v335 = vadd.f32 %v60, %v334
  %v336 = vpop.f32.mrb[0].mxu0
  %v337 = vadd.f32 %v64, %v336
  %338 = vmatprep.mubr.bf16.mxu0 0
  %339 = vmatmul.mubr.bf16.gmra.mrb[0].mxu0 %v210
  %v340 = vpop.f32.mrb[0].mxu0
  %v341 = vadd.f32 %v60, %v340
  %v342 = vpop.f32.mrb[0].mxu0
  %v343 = vadd.f32 %v64, %v342
  %v344 = vpop.f32.mrb[0].mxu0
  %v345 = vadd.f32 %v60, %v344
  %v346 = vpop.f32.mrb[0].mxu0
  %v347 = vadd.f32 %v64, %v346
  %348 = vmatprep.mubr.bf16.mxu0 0
  %349 = vmatmul.mubr.bf16.gmra.mrb[0].mxu0 %v213
  %v350 = vpop.f32.mrb[0].mxu0
  %v351 = vadd.f32 %v60, %v350
  %v352 = vpop.f32.mrb[0].mxu0
  %v353 = vadd.f32 %v64, %v352
  %v354 = vpop.f32.mrb[0].mxu0
  %v355 = vadd.f32 %v60, %v354
  %v356 = vpop.f32.mrb[0].mxu0
  %v357 = vadd.f32 %v64, %v356
  %358 = vmatprep.mubr.bf16.mxu0 0
  %359 = vmatmul.mubr.bf16.gmra.mrb[0].mxu0 %v216
  %v360 = vpop.f32.mrb[0].mxu0
  %v361 = vadd.f32 %v60, %v360
  %v362 = vpop.f32.mrb[0].mxu0
  %v363 = vadd.f32 %v64, %v362
  %v364 = vpop.f32.mrb[0].mxu0
  %v365 = vadd.f32 %v60, %v364
  %v366 = vpop.f32.mrb[0].mxu0
  %v367 = vadd.f32 %v64, %v366
  %368 = vmatprep.mubr.bf16.mxu0 0
  %369 = vmatmul.mubr.bf16.gmra.mrb[0].mxu0 %v219
  %v370 = vpop.f32.mrb[0].mxu0
  %v371 = vadd.f32 %v60, %v370
  %v372 = vpop.f32.mrb[0].mxu0
  %v373 = vadd.f32 %v64, %v372
  %v374 = vpop.f32.mrb[0].mxu0
  %v375 = vadd.f32 %v60, %v374
  %v376 = vpop.f32.mrb[0].mxu0
  %v377 = vadd.f32 %v64, %v376
  %378 = vmatprep.mubr.bf16.mxu0 0
  %379 = vmatmul.mubr.bf16.gmra.mrb[0].mxu0 %v222
  %v380 = vpop.f32.mrb[0].mxu0
  %v381 = vadd.f32 %v60, %v380
  %v382 = vpop.f32.mrb[0].mxu0
  %v383 = vadd.f32 %v64, %v382
  %v384 = vpop.f32.mrb[0].mxu0
  %v385 = vadd.f32 %v60, %v384
  %v386 = vpop.f32.mrb[0].mxu0
  %v387 = vadd.f32 %v64, %v386
  %388 = vmatprep.mubr.bf16.mxu0 0
  %389 = vmatmul.mubr.bf16.gmra.mrb[0].mxu0 %v225
  %v390 = vpop.f32.mrb[0].mxu0
  %v391 = vadd.f32 %v60, %v390
  %v392 = vpop.f32.mrb[0].mxu0
  %v393 = vadd.f32 %v64, %v392
  %v394 = vpop.f32.mrb[0].mxu0
  %v395 = vadd.f32 %v60, %v394
  %v396 = vpop.f32.mrb[0].mxu0
  %v397 = vadd.f32 %v64, %v396
  %398 = vmatprep.mubr.bf16.mxu0 0
  %399 = vmatmul.mubr.bf16.gmra.mrb[0].mxu0 %v228
  %v400 = vpop.f32.mrb[0].mxu0
  %v401 = vadd.f32 %v60, %v400
  %v402 = vpop.f32.mrb[0].mxu0
  %v403 = vadd.f32 %v64, %v402
  %v404 = vpop.f32.mrb[0].mxu0
  %v405 = vadd.f32 %v60, %v404
  %v406 = vpop.f32.mrb[0].mxu0
  %v407 = vadd.f32 %v64, %v406
  %408 = vmatprep.mubr.bf16.mxu0 0
  %409 = vmatmul.mubr.bf16.gmra.mrb[0].mxu0 %v231
  %v410 = vpop.f32.mrb[0].mxu0
  %v411 = vadd.f32 %v60, %v410
  %v412 = vpop.f32.mrb[0].mxu0
  %v413 = vadd.f32 %v64, %v412
  %v414 = vpop.f32.mrb[0].mxu0
  %v415 = vadd.f32 %v60, %v414
  %v416 = vpop.f32.mrb[0].mxu0
  %v417 = vadd.f32 %v64, %v416
  %418 = vmatprep.mubr.bf16.mxu0 0
  %419 = vmatmul.mubr.bf16.gmra.mrb[0].mxu0 %v234
  %v420 = vpop.f32.mrb[0].mxu0
  %v421 = vadd.f32 %v60, %v420
  %v422 = vpop.f32.mrb[0].mxu0
  %v423 = vadd.f32 %v64, %v422
  %v424 = vpop.f32.mrb[0].mxu0
  %v425 = vadd.f32 %v60, %v424
  %v426 = vpop.f32.mrb[0].mxu0
  %v427 = vadd.f32 %v64, %v426
  %428 = vdwg.mxu0
  %v429 = vpack.c.bf16 %v275, %v271
  %v430 = vpack.c.bf16 %v277, %v273
  %v431 = vpack.c.bf16 %v285, %v281
  %v432 = vpack.c.bf16 %v287, %v283
  %v433 = vpack.c.bf16 %v295, %v291
  %v434 = vpack.c.bf16 %v297, %v293
  %v435 = vpack.c.bf16 %v305, %v301
  %v436 = vpack.c.bf16 %v307, %v303
  %v437 = vpack.c.bf16 %v315, %v311
  %v438 = vpack.c.bf16 %v317, %v313
  %v439 = vpack.c.bf16 %v325, %v321
  %v440 = vpack.c.bf16 %v327, %v323
  %v441 = vpack.c.bf16 %v335, %v331
  %v442 = vpack.c.bf16 %v337, %v333
  %v443 = vpack.c.bf16 %v345, %v341
  %v444 = vpack.c.bf16 %v347, %v343
  %v445 = vpack.c.bf16 %v355, %v351
  %v446 = vpack.c.bf16 %v357, %v353
  %v447 = vpack.c.bf16 %v365, %v361
  %v448 = vpack.c.bf16 %v367, %v363
  %v449 = vpack.c.bf16 %v375, %v371
  %v450 = vpack.c.bf16 %v377, %v373
  %v451 = vpack.c.bf16 %v385, %v381
  %v452 = vpack.c.bf16 %v387, %v383
  %v453 = vpack.c.bf16 %v395, %v391
  %v454 = vpack.c.bf16 %v397, %v393
  %v455 = vpack.c.bf16 %v405, %v401
  %v456 = vpack.c.bf16 %v407, %v403
  %v457 = vpack.c.bf16 %v415, %v411
  %v458 = vpack.c.bf16 %v417, %v413
  %v459 = vpack.c.bf16 %v425, %v421
  %v460 = vpack.c.bf16 %v427, %v423
  %v493 = vunpack.c.l.b16 %v429
  %v494 = vunpack.c.l.b16 %v430
  %v495 = vunpack.c.h.b16 %v429
  %v496 = vunpack.c.h.b16 %v430
  %v497 = vunpack.c.l.b16 %v431
  %v498 = vunpack.c.l.b16 %v432
  %v499 = vunpack.c.h.b16 %v431
  %v500 = vunpack.c.h.b16 %v432
  %v501 = vunpack.c.l.b16 %v433
  %v502 = vunpack.c.l.b16 %v434
  %v503 = vunpack.c.h.b16 %v433
  %v504 = vunpack.c.h.b16 %v434
  %v505 = vunpack.c.l.b16 %v435
  %v506 = vunpack.c.l.b16 %v436
  %v507 = vunpack.c.h.b16 %v435
  %v508 = vunpack.c.h.b16 %v436
  %v509 = vunpack.c.l.b16 %v437
  %v510 = vunpack.c.l.b16 %v438
  %v511 = vunpack.c.h.b16 %v437
  %v512 = vunpack.c.h.b16 %v438
  %v513 = vunpack.c.l.b16 %v439
  %v514 = vunpack.c.l.b16 %v440
  %v515 = vunpack.c.h.b16 %v439
  %v516 = vunpack.c.h.b16 %v440
  %v517 = vunpack.c.l.b16 %v441
  %v518 = vunpack.c.l.b16 %v442
  %v519 = vunpack.c.h.b16 %v441
  %v520 = vunpack.c.h.b16 %v442
  %v521 = vunpack.c.l.b16 %v443
  %v522 = vunpack.c.l.b16 %v444
  %v523 = vunpack.c.h.b16 %v443
  %v524 = vunpack.c.h.b16 %v444
  %v525 = vunpack.c.l.b16 %v445
  %v526 = vunpack.c.l.b16 %v446
  %v527 = vunpack.c.h.b16 %v445
  %v528 = vunpack.c.h.b16 %v446
  %v529 = vunpack.c.l.b16 %v447
  %v530 = vunpack.c.l.b16 %v448
  %v531 = vunpack.c.h.b16 %v447
  %v532 = vunpack.c.h.b16 %v448
  %v533 = vunpack.c.l.b16 %v449
  %v534 = vunpack.c.l.b16 %v450
  %v535 = vunpack.c.h.b16 %v449
  %v536 = vunpack.c.h.b16 %v450
  %v537 = vunpack.c.l.b16 %v451
  %v538 = vunpack.c.l.b16 %v452
  %v539 = vunpack.c.h.b16 %v451
  %v540 = vunpack.c.h.b16 %v452
  %v541 = vunpack.c.l.b16 %v453
  %v542 = vunpack.c.l.b16 %v454
  %v543 = vunpack.c.h.b16 %v453
  %v544 = vunpack.c.h.b16 %v454
  %v545 = vunpack.c.l.b16 %v455
  %v546 = vunpack.c.l.b16 %v456
  %v547 = vunpack.c.h.b16 %v455
  %v548 = vunpack.c.h.b16 %v456
  %v549 = vunpack.c.l.b16 %v457
  %v550 = vunpack.c.l.b16 %v458
  %v551 = vunpack.c.h.b16 %v457
  %v552 = vunpack.c.h.b16 %v458
  %v553 = vunpack.c.l.b16 %v459
  %v554 = vunpack.c.l.b16 %v460
  %v555 = vunpack.c.h.b16 %v459
  %v556 = vunpack.c.h.b16 %v460
  %v557 = vpack.c.b16 %v494, %v493
  %v558 = vpack.c.b16 %v496, %v495
  %v559 = vpack.c.b16 %v498, %v497
  %v560 = vpack.c.b16 %v500, %v499
  %v561 = vpack.c.b16 %v502, %v501
  %v562 = vpack.c.b16 %v504, %v503
  %v563 = vpack.c.b16 %v506, %v505
  %v564 = vpack.c.b16 %v508, %v507
  %v565 = vpack.c.b16 %v510, %v509
  %v566 = vpack.c.b16 %v512, %v511
  %v567 = vpack.c.b16 %v514, %v513
  %v568 = vpack.c.b16 %v516, %v515
  %v569 = vpack.c.b16 %v518, %v517
  %v570 = vpack.c.b16 %v520, %v519
  %v571 = vpack.c.b16 %v522, %v521
  %v572 = vpack.c.b16 %v524, %v523
  %v573 = vpack.c.b16 %v526, %v525
  %v574 = vpack.c.b16 %v528, %v527
  %v575 = vpack.c.b16 %v530, %v529
  %v576 = vpack.c.b16 %v532, %v531
  %v577 = vpack.c.b16 %v534, %v533
  %v578 = vpack.c.b16 %v536, %v535
  %v579 = vpack.c.b16 %v538, %v537
  %v580 = vpack.c.b16 %v540, %v539
  %v581 = vpack.c.b16 %v542, %v541
  %v582 = vpack.c.b16 %v544, %v543
  %v583 = vpack.c.b16 %v546, %v545
  %v584 = vpack.c.b16 %v548, %v547
  %v585 = vpack.c.b16 %v550, %v549
  %v586 = vpack.c.b16 %v552, %v551
  %v587 = vpack.c.b16 %v554, %v553
  %v588 = vpack.c.b16 %v556, %v555
  %621 = vst [vmem:[%s3] sm:$0xff] %v557
  %622 = vst [vmem:[%s3 + $0x8] sm:$0xff] %v558
  %623 = vst [vmem:[%s3 + $0x10] sm:$0xff] %v559
  %624 = vst [vmem:[%s3 + $0x18] sm:$0xff] %v560
  %625 = vst [vmem:[%s3 + $0x20] sm:$0xff] %v561
  %626 = vst [vmem:[%s3 + $0x28] sm:$0xff] %v562
  %627 = vst [vmem:[%s3 + $0x30] sm:$0xff] %v563
  %628 = vst [vmem:[%s3 + $0x38] sm:$0xff] %v564
  %629 = vst [vmem:[%s3 + $0x40] sm:$0xff] %v565
  %630 = vst [vmem:[%s3 + $0x48] sm:$0xff] %v566
  %631 = vst [vmem:[%s3 + $0x50] sm:$0xff] %v567
  %632 = vst [vmem:[%s3 + $0x58] sm:$0xff] %v568
  %633 = vst [vmem:[%s3 + $0x60] sm:$0xff] %v569
  %634 = vst [vmem:[%s3 + $0x68] sm:$0xff] %v570
  %635 = vst [vmem:[%s3 + $0x70] sm:$0xff] %v571
  %636 = vst [vmem:[%s3 + $0x78] sm:$0xff] %v572
  %637 = vst [vmem:[%s3 + $0x80] sm:$0xff] %v573
  %638 = vst [vmem:[%s3 + $0x88] sm:$0xff] %v574
  %639 = vst [vmem:[%s3 + $0x90] sm:$0xff] %v575
  %640 = vst [vmem:[%s3 + $0x98] sm:$0xff] %v576
  %641 = vst [vmem:[%s3 + $0xa0] sm:$0xff] %v577
  %642 = vst [vmem:[%s3 + $0xa8] sm:$0xff] %v578
  %643 = vst [vmem:[%s3 + $0xb0] sm:$0xff] %v579
  %644 = vst [vmem:[%s3 + $0xb8] sm:$0xff] %v580
  %645 = vst [vmem:[%s3 + $0xc0] sm:$0xff] %v581
  %646 = vst [vmem:[%s3 + $0xc8] sm:$0xff] %v582
  %647 = vst [vmem:[%s3 + $0xd0] sm:$0xff] %v583
  %648 = vst [vmem:[%s3 + $0xd8] sm:$0xff] %v584
  %649 = vst [vmem:[%s3 + $0xe0] sm:$0xff] %v585
  %650 = vst [vmem:[%s3 + $0xe8] sm:$0xff] %v586
  %651 = vst [vmem:[%s3 + $0xf0] sm:$0xff] %v587
  %652 = vst [vmem:[%s3 + $0xf8] sm:$0xff] %v588
  // Predicated region
  $region14: #{_lambda_.32} parent=0 // pred_check
    _
  $region15: #{_lambda_.32} parent=0 // pred_check_branch
    %654 = sbr.rel (0) target = $region17
  $region16: #{_lambda_.32} parent=0 // pred_region
    _
  $region17: #{_lambda_.32} parent=0 // pred_fallthru
    _
  // Predicated region
  $region18: #{_lambda_.32} parent=0 // pred_check
    _
  $region19: #{_lambda_.32} parent=0 // pred_check_branch
    %656 = sbr.rel (0) target = $region21
  $region20: #{_lambda_.32} parent=0 // pred_region
    _
  $region21: #{_lambda_.32} parent=0 // pred_fallthru
    _

// kernel: _lambda_.34
$region0: #{_lambda_.34}
  #allocation0 [shape = 'u32[]', space=smem, size = 0x4, offset = 0x4, fixed_abs, tag = 'smem constant byte address 0x4 - core index']
  #allocation1 [shape = 'u32[144,128]{1,0:T(1,128)}', space=vmem, size = 0x12000, scoped, tag = 'internal scratch']
  %s0 = inlined_call_operand.vmem [shape: bf16[256,64], index: 0, kind: input, shape index: {}]
  %s1 = inlined_call_operand.vmem [shape: bf16[64,256], index: 1, kind: input, shape index: {}]
  %s2 = inlined_call_operand.vmem [shape: f32[1,256], index: 2, kind: input, shape index: {}]
  %s3 = inlined_call_operand.vmem [shape: f32[1,64], index: 3, kind: input, shape index: {}]
  %s4 = inlined_call_operand.vmem [shape: bf16[256,256], index: 4, kind: input, shape index: {}]
  %s5 = inlined_call_operand.vmem [shape: bf16[256,256], index: 5, kind: output, shape index: {}]
  %s6 = sld [smem:[#allocation0]]
  $region30: #{_lambda_.34} parent=0
    _
  %s8 = ssub.s32 1, %s6
  %s9 = scalar_select 0, %s8, %s6
  // Predicated region
  $region2: #{_lambda_.34} parent=0 // pred_check
    _
  $region3: #{_lambda_.34} parent=0 // pred_check_branch
    %11 = sbr.rel (0) target = $region5
  $region4: #{_lambda_.34} parent=0 // pred_region
    _
  $region5: #{_lambda_.34} parent=0 // pred_fallthru
    _
  // Predicated region
  $region6: #{_lambda_.34} parent=0 // pred_check
    _
  $region7: #{_lambda_.34} parent=0 // pred_check_branch
    %13 = sbr.rel (0) target = $region9
  $region8: #{_lambda_.34} parent=0 // pred_region
    _
  $region9: #{_lambda_.34} parent=0 // pred_fallthru
    _
  // Predicated region
  $region10: #{_lambda_.34} parent=0 // pred_check
    _
  $region11: #{_lambda_.34} parent=0 // pred_check_branch
    %15 = sbr.rel (0) target = $region13
  $region12: #{_lambda_.34} parent=0 // pred_region
    _
  $region13: #{_lambda_.34} parent=0 // pred_fallthru
    _
  // Predicated region
  $region14: #{_lambda_.34} parent=0 // pred_check
    _
  $region15: #{_lambda_.34} parent=0 // pred_check_branch
    %17 = sbr.rel (0) target = $region17
  $region16: #{_lambda_.34} parent=0 // pred_region
    _
  $region17: #{_lambda_.34} parent=0 // pred_fallthru
    _
  // Predicated region
  $region18: #{_lambda_.34} parent=0 // pred_check
    _
  $region19: #{_lambda_.34} parent=0 // pred_check_branch
    %19 = sbr.rel (0) target = $region21
  $region20: #{_lambda_.34} parent=0 // pred_region
    _
  $region21: #{_lambda_.34} parent=0 // pred_fallthru
    _
  %v21 = vld [vmem:[%s0] sm:$0xf]
  %v22 = vld [vmem:[%s0 + $0x4] sm:$0xf]
  %v23 = vld [vmem:[%s0 + $0x8] sm:$0xf]
  %v24 = vld [vmem:[%s0 + $0xc] sm:$0xf]
  %v25 = vld [vmem:[%s0 + $0x10] sm:$0xf]
  %v26 = vld [vmem:[%s0 + $0x14] sm:$0xf]
  %v27 = vld [vmem:[%s0 + $0x18] sm:$0xf]
  %v28 = vld [vmem:[%s0 + $0x1c] sm:$0xf]
  %v29 = vld [vmem:[%s0 + $0x20] sm:$0xf]
  %v30 = vld [vmem:[%s0 + $0x24] sm:$0xf]
  %v31 = vld [vmem:[%s0 + $0x28] sm:$0xf]
  %v32 = vld [vmem:[%s0 + $0x2c] sm:$0xf]
  %v33 = vld [vmem:[%s0 + $0x30] sm:$0xf]
  %v34 = vld [vmem:[%s0 + $0x34] sm:$0xf]
  %v35 = vld [vmem:[%s0 + $0x38] sm:$0xf]
  %v36 = vld [vmem:[%s0 + $0x3c] sm:$0xf]
  %v37 = vld [vmem:[%s0 + $0x40] sm:$0xf]
  %v38 = vld [vmem:[%s0 + $0x44] sm:$0xf]
  %v39 = vld [vmem:[%s0 + $0x48] sm:$0xf]
  %v40 = vld [vmem:[%s0 + $0x4c] sm:$0xf]
  %v41 = vld [vmem:[%s0 + $0x50] sm:$0xf]
  %v42 = vld [vmem:[%s0 + $0x54] sm:$0xf]
  %v43 = vld [vmem:[%s0 + $0x58] sm:$0xf]
  %v44 = vld [vmem:[%s0 + $0x5c] sm:$0xf]
  %v45 = vld [vmem:[%s0 + $0x60] sm:$0xf]
  %v46 = vld [vmem:[%s0 + $0x64] sm:$0xf]
  %v47 = vld [vmem:[%s0 + $0x68] sm:$0xf]
  %v48 = vld [vmem:[%s0 + $0x6c] sm:$0xf]
  %v49 = vld [vmem:[%s0 + $0x70] sm:$0xf]
  %v50 = vld [vmem:[%s0 + $0x74] sm:$0xf]
  %v51 = vld [vmem:[%s0 + $0x78] sm:$0xf]
  %v52 = vld [vmem:[%s0 + $0x7c] sm:$0xf]
  %v53 = vunpack.c.l.bf16 %v21
  %v54 = vunpack.c.l.bf16 %v22
  %v55 = vunpack.c.l.bf16 %v23
  %v56 = vunpack.c.l.bf16 %v24
  %v57 = vunpack.c.l.bf16 %v25
  %v58 = vunpack.c.l.bf16 %v26
  %v59 = vunpack.c.l.bf16 %v27
  %v60 = vunpack.c.l.bf16 %v28
  %v61 = vunpack.c.l.bf16 %v29
  %v62 = vunpack.c.l.bf16 %v30
  %v63 = vunpack.c.l.bf16 %v31
  %v64 = vunpack.c.l.bf16 %v32
  %v65 = vunpack.c.l.bf16 %v33
  %v66 = vunpack.c.l.bf16 %v34
  %v67 = vunpack.c.l.bf16 %v35
  %v68 = vunpack.c.l.bf16 %v36
  %v69 = vunpack.c.l.bf16 %v37
  %v70 = vunpack.c.l.bf16 %v38
  %v71 = vunpack.c.l.bf16 %v39
  %v72 = vunpack.c.l.bf16 %v40
  %v73 = vunpack.c.l.bf16 %v41
  %v74 = vunpack.c.l.bf16 %v42
  %v75 = vunpack.c.l.bf16 %v43
  %v76 = vunpack.c.l.bf16 %v44
  %v77 = vunpack.c.l.bf16 %v45
  %v78 = vunpack.c.l.bf16 %v46
  %v79 = vunpack.c.l.bf16 %v47
  %v80 = vunpack.c.l.bf16 %v48
  %v81 = vunpack.c.l.bf16 %v49
  %v82 = vunpack.c.l.bf16 %v50
  %v83 = vunpack.c.l.bf16 %v51
  %v84 = vunpack.c.l.bf16 %v52
  %v85 = vld [vmem:[%s3] sm:$0x1]
  %v87 = vlaneseq
  %v88 = vshrl.u32 %v87, 7
  %v89 = vsub.s32 0, %v88
  %v90 = vrot.slane %v85, %v89
  %v92 = vadd.f32 %v53, %v90
  %v93 = vadd.f32 %v54, %v90
  %v94 = vadd.f32 %v55, %v90
  %v95 = vadd.f32 %v56, %v90
  %v96 = vadd.f32 %v57, %v90
  %v97 = vadd.f32 %v58, %v90
  %v98 = vadd.f32 %v59, %v90
  %v99 = vadd.f32 %v60, %v90
  %v100 = vadd.f32 %v61, %v90
  %v101 = vadd.f32 %v62, %v90
  %v102 = vadd.f32 %v63, %v90
  %v103 = vadd.f32 %v64, %v90
  %v104 = vadd.f32 %v65, %v90
  %v105 = vadd.f32 %v66, %v90
  %v106 = vadd.f32 %v67, %v90
  %v107 = vadd.f32 %v68, %v90
  %v108 = vadd.f32 %v69, %v90
  %v109 = vadd.f32 %v70, %v90
  %v110 = vadd.f32 %v71, %v90
  %v111 = vadd.f32 %v72, %v90
  %v112 = vadd.f32 %v73, %v90
  %v113 = vadd.f32 %v74, %v90
  %v114 = vadd.f32 %v75, %v90
  %v115 = vadd.f32 %v76, %v90
  %v116 = vadd.f32 %v77, %v90
  %v117 = vadd.f32 %v78, %v90
  %v118 = vadd.f32 %v79, %v90
  %v119 = vadd.f32 %v80, %v90
  %v120 = vadd.f32 %v81, %v90
  %v121 = vadd.f32 %v82, %v90
  %v122 = vadd.f32 %v83, %v90
  %v123 = vadd.f32 %v84, %v90
  %v124 = vmax.f32 %v92, 0.0
  %v125 = vmax.f32 %v93, 0.0
  %v126 = vmax.f32 %v94, 0.0
  %v127 = vmax.f32 %v95, 0.0
  %v128 = vmax.f32 %v96, 0.0
  %v129 = vmax.f32 %v97, 0.0
  %v130 = vmax.f32 %v98, 0.0
  %v131 = vmax.f32 %v99, 0.0
  %v132 = vmax.f32 %v100, 0.0
  %v133 = vmax.f32 %v101, 0.0
  %v134 = vmax.f32 %v102, 0.0
  %v135 = vmax.f32 %v103, 0.0
  %v136 = vmax.f32 %v104, 0.0
  %v137 = vmax.f32 %v105, 0.0
  %v138 = vmax.f32 %v106, 0.0
  %v139 = vmax.f32 %v107, 0.0
  %v140 = vmax.f32 %v108, 0.0
  %v141 = vmax.f32 %v109, 0.0
  %v142 = vmax.f32 %v110, 0.0
  %v143 = vmax.f32 %v111, 0.0
  %v144 = vmax.f32 %v112, 0.0
  %v145 = vmax.f32 %v113, 0.0
  %v146 = vmax.f32 %v114, 0.0
  %v147 = vmax.f32 %v115, 0.0
  %v148 = vmax.f32 %v116, 0.0
  %v149 = vmax.f32 %v117, 0.0
  %v150 = vmax.f32 %v118, 0.0
  %v151 = vmax.f32 %v119, 0.0
  %v152 = vmax.f32 %v120, 0.0
  %v153 = vmax.f32 %v121, 0.0
  %v154 = vmax.f32 %v122, 0.0
  %v155 = vmax.f32 %v123, 0.0
  %v156 = vpack.c.bf16 %v125, %v124
  %v157 = vpack.c.bf16 %v127, %v126
  %v158 = vpack.c.bf16 %v129, %v128
  %v159 = vpack.c.bf16 %v131, %v130
  %v160 = vpack.c.bf16 %v133, %v132
  %v161 = vpack.c.bf16 %v135, %v134
  %v162 = vpack.c.bf16 %v137, %v136
  %v163 = vpack.c.bf16 %v139, %v138
  %v164 = vpack.c.bf16 %v141, %v140
  %v165 = vpack.c.bf16 %v143, %v142
  %v166 = vpack.c.bf16 %v145, %v144
  %v167 = vpack.c.bf16 %v147, %v146
  %v168 = vpack.c.bf16 %v149, %v148
  %v169 = vpack.c.bf16 %v151, %v150
  %v170 = vpack.c.bf16 %v153, %v152
  %v171 = vpack.c.bf16 %v155, %v154
  %v172 = vld [vmem:[%s1] sm:$0xff]
  %v173 = vld [vmem:[%s1 + $0x8] sm:$0xff]
  %v174 = vld [vmem:[%s1 + $0x10] sm:$0xff]
  %v175 = vld [vmem:[%s1 + $0x18] sm:$0xff]
  %v176 = vld [vmem:[%s1 + $0x20] sm:$0xff]
  %v177 = vld [vmem:[%s1 + $0x28] sm:$0xff]
  %v178 = vld [vmem:[%s1 + $0x30] sm:$0xff]
  %v179 = vld [vmem:[%s1 + $0x38] sm:$0xff]
  %v180 = vld [vmem:[%s2] sm:$0x3]
  %v182 = vlaneseq
  %v183 = vshrl.u32 %v182, 7
  %v184 = vsub.s32 0, %v183
  %v185 = vrot.slane %v180, %v184
  %v186 = vlaneseq
  %v187 = vshrl.u32 %v186, 7
  %v188 = vsub.s32 1, %v187
  %v189 = vrot.slane %v180, %v188
  %v200 = vunpack.c.l.b16 %v172
  %v201 = vunpack.c.h.b16 %v172
  %v202 = vunpack.c.l.b16 %v173
  %v203 = vunpack.c.h.b16 %v173
  %v204 = vunpack.c.l.b16 %v174
  %v205 = vunpack.c.h.b16 %v174
  %v206 = vunpack.c.l.b16 %v175
  %v207 = vunpack.c.h.b16 %v175
  %v208 = vunpack.c.l.b16 %v176
  %v209 = vunpack.c.h.b16 %v176
  %v210 = vunpack.c.l.b16 %v177
  %v211 = vunpack.c.h.b16 %v177
  %v212 = vunpack.c.l.b16 %v178
  %v213 = vunpack.c.h.b16 %v178
  %v214 = vunpack.c.l.b16 %v179
  %v215 = vunpack.c.h.b16 %v179
  %v216 = vpack.c.b16 %v202, %v200
  %v217 = vpack.c.b16 %v203, %v201
  %v218 = vpack.c.b16 %v206, %v204
  %v219 = vpack.c.b16 %v207, %v205
  %v220 = vpack.c.b16 %v210, %v208
  %v221 = vpack.c.b16 %v211, %v209
  %v222 = vpack.c.b16 %v214, %v212
  %v223 = vpack.c.b16 %v215, %v213
  %vm232 = vcmask 523264
  %v234 = vsel %vm232, %v156, 0
  %v237 = vsel %vm232, %v157, 0
  %v240 = vsel %vm232, %v158, 0
  %v243 = vsel %vm232, %v159, 0
  %v246 = vsel %vm232, %v160, 0
  %v249 = vsel %vm232, %v161, 0
  %v252 = vsel %vm232, %v162, 0
  %v255 = vsel %vm232, %v163, 0
  %v258 = vsel %vm232, %v164, 0
  %v261 = vsel %vm232, %v165, 0
  %v264 = vsel %vm232, %v166, 0
  %v267 = vsel %vm232, %v167, 0
  %v270 = vsel %vm232, %v168, 0
  %v273 = vsel %vm232, %v169, 0
  %v276 = vsel %vm232, %v170, 0
  %v279 = vsel %vm232, %v171, 0
  %281 = vmatprep.subr.bf16.mxu0 %v217
  %282 = vmatpush1.bf16.msra.mxu0 %v216
  %283 = vmatprep.subr.bf16.mxu0 %v219
  %284 = vmatpush1.bf16.msra.mxu0 %v218
  %285 = vmatprep.subr.bf16.mxu0 %v221
  %286 = vmatpush1.bf16.msra.mxu0 %v220
  %287 = vmatprep.subr.bf16.mxu0 %v223
  %288 = vmatpush1.bf16.msra.mxu0 %v222
  %289 = vmatprep.subr.bf16.mxu0 0
  %290 = vmatpush1.bf16.msra.mxu0 0
  %291 = vmatprep.subr.bf16.mxu0 0
  %292 = vmatpush1.bf16.msra.mxu0 0
  %293 = vmatprep.subr.bf16.mxu0 0
  %294 = vmatpush1.bf16.msra.mxu0 0
  %295 = vmatprep.subr.bf16.mxu0 0
  %296 = vmatpush1.bf16.msra.mxu0 0
  %297 = vmatprep.subr.bf16.mxu0 0
  %298 = vmatpush1.bf16.msra.mxu0 0
  %299 = vmatprep.subr.bf16.mxu0 0
  %300 = vmatpush1.bf16.msra.mxu0 0
  %301 = vmatprep.subr.bf16.mxu0 0
  %302 = vmatpush1.bf16.msra.mxu0 0
  %303 = vmatprep.subr.bf16.mxu0 0
  %304 = vmatpush1.bf16.msra.mxu0 0
  %305 = vmatprep.subr.bf16.mxu0 0
  %306 = vmatpush1.bf16.msra.mxu0 0
  %307 = vmatprep.subr.bf16.mxu0 0
  %308 = vmatpush1.bf16.msra.mxu0 0
  %309 = vmatprep.subr.bf16.mxu0 0
  %310 = vmatpush1.bf16.msra.mxu0 0
  %311 = vmatprep.subr.bf16.mxu0 0
  %312 = vmatpush1.bf16.msra.mxu0 0
  %313 = vmatprep.mubr.bf16.mxu0 0
  %314 = vmatmul.mubr.bf16.gmra.mrb[0].mxu0 %v234
  %v315 = vpop.f32.mrb[0].mxu0
  %v316 = vadd.f32 %v185, %v315
  %v317 = vpop.f32.mrb[0].mxu0
  %v318 = vadd.f32 %v189, %v317
  %v319 = vpop.f32.mrb[0].mxu0
  %v320 = vadd.f32 %v185, %v319
  %v321 = vpop.f32.mrb[0].mxu0
  %v322 = vadd.f32 %v189, %v321
  %323 = vmatprep.mubr.bf16.mxu0 0
  %324 = vmatmul.mubr.bf16.gmra.mrb[0].mxu0 %v237
  %v325 = vpop.f32.mrb[0].mxu0
  %v326 = vadd.f32 %v185, %v325
  %v327 = vpop.f32.mrb[0].mxu0
  %v328 = vadd.f32 %v189, %v327
  %v329 = vpop.f32.mrb[0].mxu0
  %v330 = vadd.f32 %v185, %v329
  %v331 = vpop.f32.mrb[0].mxu0
  %v332 = vadd.f32 %v189, %v331
  %333 = vmatprep.mubr.bf16.mxu0 0
  %334 = vmatmul.mubr.bf16.gmra.mrb[0].mxu0 %v240
  %v335 = vpop.f32.mrb[0].mxu0
  %v336 = vadd.f32 %v185, %v335
  %v337 = vpop.f32.mrb[0].mxu0
  %v338 = vadd.f32 %v189, %v337
  %v339 = vpop.f32.mrb[0].mxu0
  %v340 = vadd.f32 %v185, %v339
  %v341 = vpop.f32.mrb[0].mxu0
  %v342 = vadd.f32 %v189, %v341
  %343 = vmatprep.mubr.bf16.mxu0 0
  %344 = vmatmul.mubr.bf16.gmra.mrb[0].mxu0 %v243
  %v345 = vpop.f32.mrb[0].mxu0
  %v346 = vadd.f32 %v185, %v345
  %v347 = vpop.f32.mrb[0].mxu0
  %v348 = vadd.f32 %v189, %v347
  %v349 = vpop.f32.mrb[0].mxu0
  %v350 = vadd.f32 %v185, %v349
  %v351 = vpop.f32.mrb[0].mxu0
  %v352 = vadd.f32 %v189, %v351
  %353 = vmatprep.mubr.bf16.mxu0 0
  %354 = vmatmul.mubr.bf16.gmra.mrb[0].mxu0 %v246
  %v355 = vpop.f32.mrb[0].mxu0
  %v356 = vadd.f32 %v185, %v355
  %v357 = vpop.f32.mrb[0].mxu0
  %v358 = vadd.f32 %v189, %v357
  %v359 = vpop.f32.mrb[0].mxu0
  %v360 = vadd.f32 %v185, %v359
  %v361 = vpop.f32.mrb[0].mxu0
  %v362 = vadd.f32 %v189, %v361
  %363 = vmatprep.mubr.bf16.mxu0 0
  %364 = vmatmul.mubr.bf16.gmra.mrb[0].mxu0 %v249
  %v365 = vpop.f32.mrb[0].mxu0
  %v366 = vadd.f32 %v185, %v365
  %v367 = vpop.f32.mrb[0].mxu0
  %v368 = vadd.f32 %v189, %v367
  %v369 = vpop.f32.mrb[0].mxu0
  %v370 = vadd.f32 %v185, %v369
  %v371 = vpop.f32.mrb[0].mxu0
  %v372 = vadd.f32 %v189, %v371
  %373 = vmatprep.mubr.bf16.mxu0 0
  %374 = vmatmul.mubr.bf16.gmra.mrb[0].mxu0 %v252
  %v375 = vpop.f32.mrb[0].mxu0
  %v376 = vadd.f32 %v185, %v375
  %v377 = vpop.f32.mrb[0].mxu0
  %v378 = vadd.f32 %v189, %v377
  %v379 = vpop.f32.mrb[0].mxu0
  %v380 = vadd.f32 %v185, %v379
  %v381 = vpop.f32.mrb[0].mxu0
  %v382 = vadd.f32 %v189, %v381
  %383 = vmatprep.mubr.bf16.mxu0 0
  %384 = vmatmul.mubr.bf16.gmra.mrb[0].mxu0 %v255
  %v385 = vpop.f32.mrb[0].mxu0
  %v386 = vadd.f32 %v185, %v385
  %v387 = vpop.f32.mrb[0].mxu0
  %v388 = vadd.f32 %v189, %v387
  %v389 = vpop.f32.mrb[0].mxu0
  %v390 = vadd.f32 %v185, %v389
  %v391 = vpop.f32.mrb[0].mxu0
  %v392 = vadd.f32 %v189, %v391
  %393 = vmatprep.mubr.bf16.mxu0 0
  %394 = vmatmul.mubr.bf16.gmra.mrb[0].mxu0 %v258
  %v395 = vpop.f32.mrb[0].mxu0
  %v396 = vadd.f32 %v185, %v395
  %v397 = vpop.f32.mrb[0].mxu0
  %v398 = vadd.f32 %v189, %v397
  %v399 = vpop.f32.mrb[0].mxu0
  %v400 = vadd.f32 %v185, %v399
  %v401 = vpop.f32.mrb[0].mxu0
  %v402 = vadd.f32 %v189, %v401
  %403 = vmatprep.mubr.bf16.mxu0 0
  %404 = vmatmul.mubr.bf16.gmra.mrb[0].mxu0 %v261
  %v405 = vpop.f32.mrb[0].mxu0
  %v406 = vadd.f32 %v185, %v405
  %v407 = vpop.f32.mrb[0].mxu0
  %v408 = vadd.f32 %v189, %v407
  %v409 = vpop.f32.mrb[0].mxu0
  %v410 = vadd.f32 %v185, %v409
  %v411 = vpop.f32.mrb[0].mxu0
  %v412 = vadd.f32 %v189, %v411
  %413 = vmatprep.mubr.bf16.mxu0 0
  %414 = vmatmul.mubr.bf16.gmra.mrb[0].mxu0 %v264
  %v415 = vpop.f32.mrb[0].mxu0
  %v416 = vadd.f32 %v185, %v415
  %v417 = vpop.f32.mrb[0].mxu0
  %v418 = vadd.f32 %v189, %v417
  %v419 = vpop.f32.mrb[0].mxu0
  %v420 = vadd.f32 %v185, %v419
  %v421 = vpop.f32.mrb[0].mxu0
  %v422 = vadd.f32 %v189, %v421
  %423 = vmatprep.mubr.bf16.mxu0 0
  %424 = vmatmul.mubr.bf16.gmra.mrb[0].mxu0 %v267
  %v425 = vpop.f32.mrb[0].mxu0
  %v426 = vadd.f32 %v185, %v425
  %v427 = vpop.f32.mrb[0].mxu0
  %v428 = vadd.f32 %v189, %v427
  %v429 = vpop.f32.mrb[0].mxu0
  %v430 = vadd.f32 %v185, %v429
  %v431 = vpop.f32.mrb[0].mxu0
  %v432 = vadd.f32 %v189, %v431
  %433 = vmatprep.mubr.bf16.mxu0 0
  %434 = vmatmul.mubr.bf16.gmra.mrb[0].mxu0 %v270
  %v435 = vpop.f32.mrb[0].mxu0
  %v436 = vadd.f32 %v185, %v435
  %v437 = vpop.f32.mrb[0].mxu0
  %v438 = vadd.f32 %v189, %v437
  %v439 = vpop.f32.mrb[0].mxu0
  %v440 = vadd.f32 %v185, %v439
  %v441 = vpop.f32.mrb[0].mxu0
  %v442 = vadd.f32 %v189, %v441
  %443 = vmatprep.mubr.bf16.mxu0 0
  %444 = vmatmul.mubr.bf16.gmra.mrb[0].mxu0 %v273
  %v445 = vpop.f32.mrb[0].mxu0
  %v446 = vadd.f32 %v185, %v445
  %v447 = vpop.f32.mrb[0].mxu0
  %v448 = vadd.f32 %v189, %v447
  %v449 = vpop.f32.mrb[0].mxu0
  %v450 = vadd.f32 %v185, %v449
  %v451 = vpop.f32.mrb[0].mxu0
  %v452 = vadd.f32 %v189, %v451
  %453 = vmatprep.mubr.bf16.mxu0 0
  %454 = vmatmul.mubr.bf16.gmra.mrb[0].mxu0 %v276
  %v455 = vpop.f32.mrb[0].mxu0
  %v456 = vadd.f32 %v185, %v455
  %v457 = vpop.f32.mrb[0].mxu0
  %v458 = vadd.f32 %v189, %v457
  %v459 = vpop.f32.mrb[0].mxu0
  %v460 = vadd.f32 %v185, %v459
  %v461 = vpop.f32.mrb[0].mxu0
  %v462 = vadd.f32 %v189, %v461
  %463 = vmatprep.mubr.bf16.mxu0 0
  %464 = vmatmul.mubr.bf16.gmra.mrb[0].mxu0 %v279
  %v465 = vpop.f32.mrb[0].mxu0
  %v466 = vadd.f32 %v185, %v465
  %v467 = vpop.f32.mrb[0].mxu0
  %v468 = vadd.f32 %v189, %v467
  %v469 = vpop.f32.mrb[0].mxu0
  %v470 = vadd.f32 %v185, %v469
  %v471 = vpop.f32.mrb[0].mxu0
  %v472 = vadd.f32 %v189, %v471
  %473 = vdwg.mxu0
  %v474 = vld [vmem:[%s4] sm:$0xff]
  %v475 = vld [vmem:[%s4 + $0x8] sm:$0xff]
  %v476 = vld [vmem:[%s4 + $0x10] sm:$0xff]
  %v477 = vld [vmem:[%s4 + $0x18] sm:$0xff]
  %v478 = vld [vmem:[%s4 + $0x20] sm:$0xff]
  %v479 = vld [vmem:[%s4 + $0x28] sm:$0xff]
  %v480 = vld [vmem:[%s4 + $0x30] sm:$0xff]
  %v481 = vld [vmem:[%s4 + $0x38] sm:$0xff]
  %v482 = vld [vmem:[%s4 + $0x40] sm:$0xff]
  %v483 = vld [vmem:[%s4 + $0x48] sm:$0xff]
  %v484 = vld [vmem:[%s4 + $0x50] sm:$0xff]
  %v485 = vld [vmem:[%s4 + $0x58] sm:$0xff]
  %v486 = vld [vmem:[%s4 + $0x60] sm:$0xff]
  %v487 = vld [vmem:[%s4 + $0x68] sm:$0xff]
  %v488 = vld [vmem:[%s4 + $0x70] sm:$0xff]
  %v489 = vld [vmem:[%s4 + $0x78] sm:$0xff]
  %v490 = vld [vmem:[%s4 + $0x80] sm:$0xff]
  %v491 = vld [vmem:[%s4 + $0x88] sm:$0xff]
  %v492 = vld [vmem:[%s4 + $0x90] sm:$0xff]
  %v493 = vld [vmem:[%s4 + $0x98] sm:$0xff]
  %v494 = vld [vmem:[%s4 + $0xa0] sm:$0xff]
  %v495 = vld [vmem:[%s4 + $0xa8] sm:$0xff]
  %v496 = vld [vmem:[%s4 + $0xb0] sm:$0xff]
  %v497 = vld [vmem:[%s4 + $0xb8] sm:$0xff]
  %v498 = vld [vmem:[%s4 + $0xc0] sm:$0xff]
  %v499 = vld [vmem:[%s4 + $0xc8] sm:$0xff]
  %v500 = vld [vmem:[%s4 + $0xd0] sm:$0xff]
  %v501 = vld [vmem:[%s4 + $0xd8] sm:$0xff]
  %v502 = vld [vmem:[%s4 + $0xe0] sm:$0xff]
  %v503 = vld [vmem:[%s4 + $0xe8] sm:$0xff]
  %v504 = vld [vmem:[%s4 + $0xf0] sm:$0xff]
  %v505 = vld [vmem:[%s4 + $0xf8] sm:$0xff]
  %v506 = vunpack.c.l.bf16 %v474
  %v507 = vunpack.c.h.bf16 %v474
  %v508 = vunpack.c.l.bf16 %v475
  %v509 = vunpack.c.h.bf16 %v475
  %v510 = vunpack.c.l.bf16 %v476
  %v511 = vunpack.c.h.bf16 %v476
  %v512 = vunpack.c.l.bf16 %v477
  %v513 = vunpack.c.h.bf16 %v477
  %v514 = vunpack.c.l.bf16 %v478
  %v515 = vunpack.c.h.bf16 %v478
  %v516 = vunpack.c.l.bf16 %v479
  %v517 = vunpack.c.h.bf16 %v479
  %v518 = vunpack.c.l.bf16 %v480
  %v519 = vunpack.c.h.bf16 %v480
  %v520 = vunpack.c.l.bf16 %v481
  %v521 = vunpack.c.h.bf16 %v481
  %v522 = vunpack.c.l.bf16 %v482
  %v523 = vunpack.c.h.bf16 %v482
  %v524 = vunpack.c.l.bf16 %v483
  %v525 = vunpack.c.h.bf16 %v483
  %v526 = vunpack.c.l.bf16 %v484
  %v527 = vunpack.c.h.bf16 %v484
  %v528 = vunpack.c.l.bf16 %v485
  %v529 = vunpack.c.h.bf16 %v485
  %v530 = vunpack.c.l.bf16 %v486
  %v531 = vunpack.c.h.bf16 %v486
  %v532 = vunpack.c.l.bf16 %v487
  %v533 = vunpack.c.h.bf16 %v487
  %v534 = vunpack.c.l.bf16 %v488
  %v535 = vunpack.c.h.bf16 %v488
  %v536 = vunpack.c.l.bf16 %v489
  %v537 = vunpack.c.h.bf16 %v489
  %v538 = vunpack.c.l.bf16 %v490
  %v539 = vunpack.c.h.bf16 %v490
  %v540 = vunpack.c.l.bf16 %v491
  %v541 = vunpack.c.h.bf16 %v491
  %v542 = vunpack.c.l.bf16 %v492
  %v543 = vunpack.c.h.bf16 %v492
  %v544 = vunpack.c.l.bf16 %v493
  %v545 = vunpack.c.h.bf16 %v493
  %v546 = vunpack.c.l.bf16 %v494
  %v547 = vunpack.c.h.bf16 %v494
  %v548 = vunpack.c.l.bf16 %v495
  %v549 = vunpack.c.h.bf16 %v495
  %v550 = vunpack.c.l.bf16 %v496
  %v551 = vunpack.c.h.bf16 %v496
  %v552 = vunpack.c.l.bf16 %v497
  %v553 = vunpack.c.h.bf16 %v497
  %v554 = vunpack.c.l.bf16 %v498
  %v555 = vunpack.c.h.bf16 %v498
  %v556 = vunpack.c.l.bf16 %v499
  %v557 = vunpack.c.h.bf16 %v499
  %v558 = vunpack.c.l.bf16 %v500
  %v559 = vunpack.c.h.bf16 %v500
  %v560 = vunpack.c.l.bf16 %v501
  %v561 = vunpack.c.h.bf16 %v501
  %v562 = vunpack.c.l.bf16 %v502
  %v563 = vunpack.c.h.bf16 %v502
  %v564 = vunpack.c.l.bf16 %v503
  %v565 = vunpack.c.h.bf16 %v503
  %v566 = vunpack.c.l.bf16 %v504
  %v567 = vunpack.c.h.bf16 %v504
  %v568 = vunpack.c.l.bf16 %v505
  %v569 = vunpack.c.h.bf16 %v505
  %v570 = vadd.f32 %v316, %v506
  %v571 = vadd.f32 %v318, %v507
  %v572 = vadd.f32 %v320, %v508
  %v573 = vadd.f32 %v322, %v509
  %v574 = vadd.f32 %v326, %v510
  %v575 = vadd.f32 %v328, %v511
  %v576 = vadd.f32 %v330, %v512
  %v577 = vadd.f32 %v332, %v513
  %v578 = vadd.f32 %v336, %v514
  %v579 = vadd.f32 %v338, %v515
  %v580 = vadd.f32 %v340, %v516
  %v581 = vadd.f32 %v342, %v517
  %v582 = vadd.f32 %v346, %v518
  %v583 = vadd.f32 %v348, %v519
  %v584 = vadd.f32 %v350, %v520
  %v585 = vadd.f32 %v352, %v521
  %v586 = vadd.f32 %v356, %v522
  %v587 = vadd.f32 %v358, %v523
  %v588 = vadd.f32 %v360, %v524
  %v589 = vadd.f32 %v362, %v525
  %v590 = vadd.f32 %v366, %v526
  %v591 = vadd.f32 %v368, %v527
  %v592 = vadd.f32 %v370, %v528
  %v593 = vadd.f32 %v372, %v529
  %v594 = vadd.f32 %v376, %v530
  %v595 = vadd.f32 %v378, %v531
  %v596 = vadd.f32 %v380, %v532
  %v597 = vadd.f32 %v382, %v533
  %v598 = vadd.f32 %v386, %v534
  %v599 = vadd.f32 %v388, %v535
  %v600 = vadd.f32 %v390, %v536
  %v601 = vadd.f32 %v392, %v537
  %v602 = vadd.f32 %v396, %v538
  %v603 = vadd.f32 %v398, %v539
  %v604 = vadd.f32 %v400, %v540
  %v605 = vadd.f32 %v402, %v541
  %v606 = vadd.f32 %v406, %v542
  %v607 = vadd.f32 %v408, %v543
  %v608 = vadd.f32 %v410, %v544
  %v609 = vadd.f32 %v412, %v545
  %v610 = vadd.f32 %v416, %v546
  %v611 = vadd.f32 %v418, %v547
  %v612 = vadd.f32 %v420, %v548
  %v613 = vadd.f32 %v422, %v549
  %v614 = vadd.f32 %v426, %v550
  %v615 = vadd.f32 %v428, %v551
  %v616 = vadd.f32 %v430, %v552
  %v617 = vadd.f32 %v432, %v553
  %v618 = vadd.f32 %v436, %v554
  %v619 = vadd.f32 %v438, %v555
  %v620 = vadd.f32 %v440, %v556
  %v621 = vadd.f32 %v442, %v557
  %v622 = vadd.f32 %v446, %v558
  %v623 = vadd.f32 %v448, %v559
  %v624 = vadd.f32 %v450, %v560
  %v625 = vadd.f32 %v452, %v561
  %v626 = vadd.f32 %v456, %v562
  %v627 = vadd.f32 %v458, %v563
  %v628 = vadd.f32 %v460, %v564
  %v629 = vadd.f32 %v462, %v565
  %v630 = vadd.f32 %v466, %v566
  %v631 = vadd.f32 %v468, %v567
  %v632 = vadd.f32 %v470, %v568
  %v633 = vadd.f32 %v472, %v569
  %v634 = vmax.f32 %v570, 0.0
  %v635 = vmax.f32 %v571, 0.0
  %v636 = vmax.f32 %v572, 0.0
  %v637 = vmax.f32 %v573, 0.0
  %v638 = vmax.f32 %v574, 0.0
  %v639 = vmax.f32 %v575, 0.0
  %v640 = vmax.f32 %v576, 0.0
  %v641 = vmax.f32 %v577, 0.0
  %v642 = vmax.f32 %v578, 0.0
  %v643 = vmax.f32 %v579, 0.0
  %v644 = vmax.f32 %v580, 0.0
  %v645 = vmax.f32 %v581, 0.0
  %v646 = vmax.f32 %v582, 0.0
  %v647 = vmax.f32 %v583, 0.0
  %v648 = vmax.f32 %v584, 0.0
  %v649 = vmax.f32 %v585, 0.0
  %v650 = vmax.f32 %v586, 0.0
  %v651 = vmax.f32 %v587, 0.0
  %v652 = vmax.f32 %v588, 0.0
  %v653 = vmax.f32 %v589, 0.0
  %v654 = vmax.f32 %v590, 0.0
  %v655 = vmax.f32 %v591, 0.0
  %v656 = vmax.f32 %v592, 0.0
  %v657 = vmax.f32 %v593, 0.0
  %v658 = vmax.f32 %v594, 0.0
  %v659 = vmax.f32 %v595, 0.0
  %v660 = vmax.f32 %v596, 0.0
  %v661 = vmax.f32 %v597, 0.0
  %v662 = vmax.f32 %v598, 0.0
  %v663 = vmax.f32 %v599, 0.0
  %v664 = vmax.f32 %v600, 0.0
  %v665 = vmax.f32 %v601, 0.0
  %v666 = vmax.f32 %v602, 0.0
  %v667 = vmax.f32 %v603, 0.0
  %v668 = vmax.f32 %v604, 0.0
  %v669 = vmax.f32 %v605, 0.0
  %v670 = vmax.f32 %v606, 0.0
  %v671 = vmax.f32 %v607, 0.0
  %v672 = vmax.f32 %v608, 0.0
  %v673 = vmax.f32 %v609, 0.0
  %v674 = vmax.f32 %v610, 0.0
  %v675 = vmax.f32 %v611, 0.0
  %v676 = vmax.f32 %v612, 0.0
  %v677 = vmax.f32 %v613, 0.0
  %v678 = vmax.f32 %v614, 0.0
  %v679 = vmax.f32 %v615, 0.0
  %v680 = vmax.f32 %v616, 0.0
  %v681 = vmax.f32 %v617, 0.0
  %v682 = vmax.f32 %v618, 0.0
  %v683 = vmax.f32 %v619, 0.0
  %v684 = vmax.f32 %v620, 0.0
  %v685 = vmax.f32 %v621, 0.0
  %v686 = vmax.f32 %v622, 0.0
  %v687 = vmax.f32 %v623, 0.0
  %v688 = vmax.f32 %v624, 0.0
  %v689 = vmax.f32 %v625, 0.0
  %v690 = vmax.f32 %v626, 0.0
  %v691 = vmax.f32 %v627, 0.0
  %v692 = vmax.f32 %v628, 0.0
  %v693 = vmax.f32 %v629, 0.0
  %v694 = vmax.f32 %v630, 0.0
  %v695 = vmax.f32 %v631, 0.0
  %v696 = vmax.f32 %v632, 0.0
  %v697 = vmax.f32 %v633, 0.0
  %v698 = vpack.c.bf16 %v636, %v634
  %v699 = vpack.c.bf16 %v637, %v635
  %v700 = vpack.c.bf16 %v640, %v638
  %v701 = vpack.c.bf16 %v641, %v639
  %v702 = vpack.c.bf16 %v644, %v642
  %v703 = vpack.c.bf16 %v645, %v643
  %v704 = vpack.c.bf16 %v648, %v646
  %v705 = vpack.c.bf16 %v649, %v647
  %v706 = vpack.c.bf16 %v652, %v650
  %v707 = vpack.c.bf16 %v653, %v651
  %v708 = vpack.c.bf16 %v656, %v654
  %v709 = vpack.c.bf16 %v657, %v655
  %v710 = vpack.c.bf16 %v660, %v658
  %v711 = vpack.c.bf16 %v661, %v659
  %v712 = vpack.c.bf16 %v664, %v662
  %v713 = vpack.c.bf16 %v665, %v663
  %v714 = vpack.c.bf16 %v668, %v666
  %v715 = vpack.c.bf16 %v669, %v667
  %v716 = vpack.c.bf16 %v672, %v670
  %v717 = vpack.c.bf16 %v673, %v671
  %v718 = vpack.c.bf16 %v676, %v674
  %v719 = vpack.c.bf16 %v677, %v675
  %v720 = vpack.c.bf16 %v680, %v678
  %v721 = vpack.c.bf16 %v681, %v679
  %v722 = vpack.c.bf16 %v684, %v682
  %v723 = vpack.c.bf16 %v685, %v683
  %v724 = vpack.c.bf16 %v688, %v686
  %v725 = vpack.c.bf16 %v689, %v687
  %v726 = vpack.c.bf16 %v692, %v690
  %v727 = vpack.c.bf16 %v693, %v691
  %v728 = vpack.c.bf16 %v696, %v694
  %v729 = vpack.c.bf16 %v697, %v695
  %v762 = vunpack.c.l.b16 %v698
  %v763 = vunpack.c.l.b16 %v699
  %v764 = vunpack.c.h.b16 %v698
  %v765 = vunpack.c.h.b16 %v699
  %v766 = vunpack.c.l.b16 %v700
  %v767 = vunpack.c.l.b16 %v701
  %v768 = vunpack.c.h.b16 %v700
  %v769 = vunpack.c.h.b16 %v701
  %v770 = vunpack.c.l.b16 %v702
  %v771 = vunpack.c.l.b16 %v703
  %v772 = vunpack.c.h.b16 %v702
  %v773 = vunpack.c.h.b16 %v703
  %v774 = vunpack.c.l.b16 %v704
  %v775 = vunpack.c.l.b16 %v705
  %v776 = vunpack.c.h.b16 %v704
  %v777 = vunpack.c.h.b16 %v705
  %v778 = vunpack.c.l.b16 %v706
  %v779 = vunpack.c.l.b16 %v707
  %v780 = vunpack.c.h.b16 %v706
  %v781 = vunpack.c.h.b16 %v707
  %v782 = vunpack.c.l.b16 %v708
  %v783 = vunpack.c.l.b16 %v709
  %v784 = vunpack.c.h.b16 %v708
  %v785 = vunpack.c.h.b16 %v709
  %v786 = vunpack.c.l.b16 %v710
  %v787 = vunpack.c.l.b16 %v711
  %v788 = vunpack.c.h.b16 %v710
  %v789 = vunpack.c.h.b16 %v711
  %v790 = vunpack.c.l.b16 %v712
  %v791 = vunpack.c.l.b16 %v713
  %v792 = vunpack.c.h.b16 %v712
  %v793 = vunpack.c.h.b16 %v713
  %v794 = vunpack.c.l.b16 %v714
  %v795 = vunpack.c.l.b16 %v715
  %v796 = vunpack.c.h.b16 %v714
  %v797 = vunpack.c.h.b16 %v715
  %v798 = vunpack.c.l.b16 %v716
  %v799 = vunpack.c.l.b16 %v717
  %v800 = vunpack.c.h.b16 %v716
  %v801 = vunpack.c.h.b16 %v717
  %v802 = vunpack.c.l.b16 %v718
  %v803 = vunpack.c.l.b16 %v719
  %v804 = vunpack.c.h.b16 %v718
  %v805 = vunpack.c.h.b16 %v719
  %v806 = vunpack.c.l.b16 %v720
  %v807 = vunpack.c.l.b16 %v721
  %v808 = vunpack.c.h.b16 %v720
  %v809 = vunpack.c.h.b16 %v721
  %v810 = vunpack.c.l.b16 %v722
  %v811 = vunpack.c.l.b16 %v723
  %v812 = vunpack.c.h.b16 %v722
  %v813 = vunpack.c.h.b16 %v723
  %v814 = vunpack.c.l.b16 %v724
  %v815 = vunpack.c.l.b16 %v725
  %v816 = vunpack.c.h.b16 %v724
  %v817 = vunpack.c.h.b16 %v725
  %v818 = vunpack.c.l.b16 %v726
  %v819 = vunpack.c.l.b16 %v727
  %v820 = vunpack.c.h.b16 %v726
  %v821 = vunpack.c.h.b16 %v727
  %v822 = vunpack.c.l.b16 %v728
  %v823 = vunpack.c.l.b16 %v729
  %v824 = vunpack.c.h.b16 %v728
  %v825 = vunpack.c.h.b16 %v729
  %v826 = vpack.c.b16 %v763, %v762
  %v827 = vpack.c.b16 %v765, %v764
  %v828 = vpack.c.b16 %v767, %v766
  %v829 = vpack.c.b16 %v769, %v768
  %v830 = vpack.c.b16 %v771, %v770
  %v831 = vpack.c.b16 %v773, %v772
  %v832 = vpack.c.b16 %v775, %v774
  %v833 = vpack.c.b16 %v777, %v776
  %v834 = vpack.c.b16 %v779, %v778
  %v835 = vpack.c.b16 %v781, %v780
  %v836 = vpack.c.b16 %v783, %v782
  %v837 = vpack.c.b16 %v785, %v784
  %v838 = vpack.c.b16 %v787, %v786
  %v839 = vpack.c.b16 %v789, %v788
  %v840 = vpack.c.b16 %v791, %v790
  %v841 = vpack.c.b16 %v793, %v792
  %v842 = vpack.c.b16 %v795, %v794
  %v843 = vpack.c.b16 %v797, %v796
  %v844 = vpack.c.b16 %v799, %v798
  %v845 = vpack.c.b16 %v801, %v800
  %v846 = vpack.c.b16 %v803, %v802
  %v847 = vpack.c.b16 %v805, %v804
  %v848 = vpack.c.b16 %v807, %v806
  %v849 = vpack.c.b16 %v809, %v808
  %v850 = vpack.c.b16 %v811, %v810
  %v851 = vpack.c.b16 %v813, %v812
  %v852 = vpack.c.b16 %v815, %v814
  %v853 = vpack.c.b16 %v817, %v816
  %v854 = vpack.c.b16 %v819, %v818
  %v855 = vpack.c.b16 %v821, %v820
  %v856 = vpack.c.b16 %v823, %v822
  %v857 = vpack.c.b16 %v825, %v824
  %890 = vst [vmem:[%s5] sm:$0xff] %v826
  %891 = vst [vmem:[%s5 + $0x8] sm:$0xff] %v827
  %892 = vst [vmem:[%s5 + $0x10] sm:$0xff] %v828
  %893 = vst [vmem:[%s5 + $0x18] sm:$0xff] %v829
  %894 = vst [vmem:[%s5 + $0x20] sm:$0xff] %v830
  %895 = vst [vmem:[%s5 + $0x28] sm:$0xff] %v831
  %896 = vst [vmem:[%s5 + $0x30] sm:$0xff] %v832
  %897 = vst [vmem:[%s5 + $0x38] sm:$0xff] %v833
  %898 = vst [vmem:[%s5 + $0x40] sm:$0xff] %v834
  %899 = vst [vmem:[%s5 + $0x48] sm:$0xff] %v835
  %900 = vst [vmem:[%s5 + $0x50] sm:$0xff] %v836
  %901 = vst [vmem:[%s5 + $0x58] sm:$0xff] %v837
  %902 = vst [vmem:[%s5 + $0x60] sm:$0xff] %v838
  %903 = vst [vmem:[%s5 + $0x68] sm:$0xff] %v839
  %904 = vst [vmem:[%s5 + $0x70] sm:$0xff] %v840
  %905 = vst [vmem:[%s5 + $0x78] sm:$0xff] %v841
  %906 = vst [vmem:[%s5 + $0x80] sm:$0xff] %v842
  %907 = vst [vmem:[%s5 + $0x88] sm:$0xff] %v843
  %908 = vst [vmem:[%s5 + $0x90] sm:$0xff] %v844
  %909 = vst [vmem:[%s5 + $0x98] sm:$0xff] %v845
  %910 = vst [vmem:[%s5 + $0xa0] sm:$0xff] %v846
  %911 = vst [vmem:[%s5 + $0xa8] sm:$0xff] %v847
  %912 = vst [vmem:[%s5 + $0xb0] sm:$0xff] %v848
  %913 = vst [vmem:[%s5 + $0xb8] sm:$0xff] %v849
  %914 = vst [vmem:[%s5 + $0xc0] sm:$0xff] %v850
  %915 = vst [vmem:[%s5 + $0xc8] sm:$0xff] %v851
  %916 = vst [vmem:[%s5 + $0xd0] sm:$0xff] %v852
  %917 = vst [vmem:[%s5 + $0xd8] sm:$0xff] %v853
  %918 = vst [vmem:[%s5 + $0xe0] sm:$0xff] %v854
  %919 = vst [vmem:[%s5 + $0xe8] sm:$0xff] %v855
  %920 = vst [vmem:[%s5 + $0xf0] sm:$0xff] %v856
  %921 = vst [vmem:[%s5 + $0xf8] sm:$0xff] %v857
  // Predicated region
  $region22: #{_lambda_.34} parent=0 // pred_check
    _
  $region23: #{_lambda_.34} parent=0 // pred_check_branch
    %923 = sbr.rel (0) target = $region25
  $region24: #{_lambda_.34} parent=0 // pred_region
    _
  $region25: #{_lambda_.34} parent=0 // pred_fallthru
    _
  // Predicated region
  $region26: #{_lambda_.34} parent=0 // pred_check
    _
  $region27: #{_lambda_.34} parent=0 // pred_check_branch
    %925 = sbr.rel (0) target = $region29
  $region28: #{_lambda_.34} parent=0 // pred_region
    _
  $region29: #{_lambda_.34} parent=0 // pred_fallthru
    _

// kernel: _lambda_.35
$region0: #{_lambda_.35}
  #allocation0 [shape = 'u32[]', space=smem, size = 0x4, offset = 0x4, fixed_abs, tag = 'smem constant byte address 0x4 - core index']
  #allocation1 [shape = 'u32[144,128]{1,0:T(1,128)}', space=vmem, size = 0x12000, scoped, tag = 'internal scratch']
  %s0 = inlined_call_operand.vmem [shape: bf16[256,256], index: 0, kind: input, shape index: {}]
  %s1 = inlined_call_operand.vmem [shape: bf16[256,64], index: 1, kind: input, shape index: {}]
  %s2 = inlined_call_operand.vmem [shape: f32[1,64], index: 2, kind: input, shape index: {}]
  %s3 = inlined_call_operand.vmem [shape: bf16[256,64], index: 3, kind: output, shape index: {}]
  %s4 = sld [smem:[#allocation0]]
  $region22: #{_lambda_.35} parent=0
    _
  %s6 = ssub.s32 1, %s4
  %s7 = scalar_select 0, %s6, %s4
  // Predicated region
  $region2: #{_lambda_.35} parent=0 // pred_check
    _
  $region3: #{_lambda_.35} parent=0 // pred_check_branch
    %9 = sbr.rel (0) target = $region5
  $region4: #{_lambda_.35} parent=0 // pred_region
    _
  $region5: #{_lambda_.35} parent=0 // pred_fallthru
    _
  // Predicated region
  $region6: #{_lambda_.35} parent=0 // pred_check
    _
  $region7: #{_lambda_.35} parent=0 // pred_check_branch
    %11 = sbr.rel (0) target = $region9
  $region8: #{_lambda_.35} parent=0 // pred_region
    _
  $region9: #{_lambda_.35} parent=0 // pred_fallthru
    _
  // Predicated region
  $region10: #{_lambda_.35} parent=0 // pred_check
    _
  $region11: #{_lambda_.35} parent=0 // pred_check_branch
    %13 = sbr.rel (0) target = $region13
  $region12: #{_lambda_.35} parent=0 // pred_region
    _
  $region13: #{_lambda_.35} parent=0 // pred_fallthru
    _
  %v15 = vld [vmem:[%s0] sm:$0xff]
  %v16 = vld [vmem:[%s0 + $0x8] sm:$0xff]
  %v17 = vld [vmem:[%s0 + $0x10] sm:$0xff]
  %v18 = vld [vmem:[%s0 + $0x18] sm:$0xff]
  %v19 = vld [vmem:[%s0 + $0x20] sm:$0xff]
  %v20 = vld [vmem:[%s0 + $0x28] sm:$0xff]
  %v21 = vld [vmem:[%s0 + $0x30] sm:$0xff]
  %v22 = vld [vmem:[%s0 + $0x38] sm:$0xff]
  %v23 = vld [vmem:[%s0 + $0x40] sm:$0xff]
  %v24 = vld [vmem:[%s0 + $0x48] sm:$0xff]
  %v25 = vld [vmem:[%s0 + $0x50] sm:$0xff]
  %v26 = vld [vmem:[%s0 + $0x58] sm:$0xff]
  %v27 = vld [vmem:[%s0 + $0x60] sm:$0xff]
  %v28 = vld [vmem:[%s0 + $0x68] sm:$0xff]
  %v29 = vld [vmem:[%s0 + $0x70] sm:$0xff]
  %v30 = vld [vmem:[%s0 + $0x78] sm:$0xff]
  %v31 = vld [vmem:[%s0 + $0x80] sm:$0xff]
  %v32 = vld [vmem:[%s0 + $0x88] sm:$0xff]
  %v33 = vld [vmem:[%s0 + $0x90] sm:$0xff]
  %v34 = vld [vmem:[%s0 + $0x98] sm:$0xff]
  %v35 = vld [vmem:[%s0 + $0xa0] sm:$0xff]
  %v36 = vld [vmem:[%s0 + $0xa8] sm:$0xff]
  %v37 = vld [vmem:[%s0 + $0xb0] sm:$0xff]
  %v38 = vld [vmem:[%s0 + $0xb8] sm:$0xff]
  %v39 = vld [vmem:[%s0 + $0xc0] sm:$0xff]
  %v40 = vld [vmem:[%s0 + $0xc8] sm:$0xff]
  %v41 = vld [vmem:[%s0 + $0xd0] sm:$0xff]
  %v42 = vld [vmem:[%s0 + $0xd8] sm:$0xff]
  %v43 = vld [vmem:[%s0 + $0xe0] sm:$0xff]
  %v44 = vld [vmem:[%s0 + $0xe8] sm:$0xff]
  %v45 = vld [vmem:[%s0 + $0xf0] sm:$0xff]
  %v46 = vld [vmem:[%s0 + $0xf8] sm:$0xff]
  %v47 = vld [vmem:[%s1] sm:$0xf]
  %v48 = vld [vmem:[%s1 + $0x4] sm:$0xf]
  %v49 = vld [vmem:[%s1 + $0x8] sm:$0xf]
  %v50 = vld [vmem:[%s1 + $0xc] sm:$0xf]
  %v51 = vld [vmem:[%s1 + $0x10] sm:$0xf]
  %v52 = vld [vmem:[%s1 + $0x14] sm:$0xf]
  %v53 = vld [vmem:[%s1 + $0x18] sm:$0xf]
  %v54 = vld [vmem:[%s1 + $0x1c] sm:$0xf]
  %v55 = vld [vmem:[%s1 + $0x20] sm:$0xf]
  %v56 = vld [vmem:[%s1 + $0x24] sm:$0xf]
  %v57 = vld [vmem:[%s1 + $0x28] sm:$0xf]
  %v58 = vld [vmem:[%s1 + $0x2c] sm:$0xf]
  %v59 = vld [vmem:[%s1 + $0x30] sm:$0xf]
  %v60 = vld [vmem:[%s1 + $0x34] sm:$0xf]
  %v61 = vld [vmem:[%s1 + $0x38] sm:$0xf]
  %v62 = vld [vmem:[%s1 + $0x3c] sm:$0xf]
  %v63 = vld [vmem:[%s1 + $0x40] sm:$0xf]
  %v64 = vld [vmem:[%s1 + $0x44] sm:$0xf]
  %v65 = vld [vmem:[%s1 + $0x48] sm:$0xf]
  %v66 = vld [vmem:[%s1 + $0x4c] sm:$0xf]
  %v67 = vld [vmem:[%s1 + $0x50] sm:$0xf]
  %v68 = vld [vmem:[%s1 + $0x54] sm:$0xf]
  %v69 = vld [vmem:[%s1 + $0x58] sm:$0xf]
  %v70 = vld [vmem:[%s1 + $0x5c] sm:$0xf]
  %v71 = vld [vmem:[%s1 + $0x60] sm:$0xf]
  %v72 = vld [vmem:[%s1 + $0x64] sm:$0xf]
  %v73 = vld [vmem:[%s1 + $0x68] sm:$0xf]
  %v74 = vld [vmem:[%s1 + $0x6c] sm:$0xf]
  %v75 = vld [vmem:[%s1 + $0x70] sm:$0xf]
  %v76 = vld [vmem:[%s1 + $0x74] sm:$0xf]
  %v77 = vld [vmem:[%s1 + $0x78] sm:$0xf]
  %v78 = vld [vmem:[%s1 + $0x7c] sm:$0xf]
  %v79 = vld [vmem:[%s2] sm:$0x1]
  %v81 = vlaneseq
  %v82 = vshrl.u32 %v81, 7
  %v83 = vsub.s32 0, %v82
  %v84 = vrot.slane %v79, %v83
  %v118 = vunpack.c.l.b16 %v15
  %v119 = vunpack.c.h.b16 %v15
  %v120 = vunpack.c.l.b16 %v16
  %v121 = vunpack.c.h.b16 %v16
  %v122 = vunpack.c.l.b16 %v17
  %v123 = vunpack.c.h.b16 %v17
  %v124 = vunpack.c.l.b16 %v18
  %v125 = vunpack.c.h.b16 %v18
  %v126 = vunpack.c.l.b16 %v19
  %v127 = vunpack.c.h.b16 %v19
  %v128 = vunpack.c.l.b16 %v20
  %v129 = vunpack.c.h.b16 %v20
  %v130 = vunpack.c.l.b16 %v21
  %v131 = vunpack.c.h.b16 %v21
  %v132 = vunpack.c.l.b16 %v22
  %v133 = vunpack.c.h.b16 %v22
  %v134 = vunpack.c.l.b16 %v23
  %v135 = vunpack.c.h.b16 %v23
  %v136 = vunpack.c.l.b16 %v24
  %v137 = vunpack.c.h.b16 %v24
  %v138 = vunpack.c.l.b16 %v25
  %v139 = vunpack.c.h.b16 %v25
  %v140 = vunpack.c.l.b16 %v26
  %v141 = vunpack.c.h.b16 %v26
  %v142 = vunpack.c.l.b16 %v27
  %v143 = vunpack.c.h.b16 %v27
  %v144 = vunpack.c.l.b16 %v28
  %v145 = vunpack.c.h.b16 %v28
  %v146 = vunpack.c.l.b16 %v29
  %v147 = vunpack.c.h.b16 %v29
  %v148 = vunpack.c.l.b16 %v30
  %v149 = vunpack.c.h.b16 %v30
  %v150 = vunpack.c.l.b16 %v31
  %v151 = vunpack.c.h.b16 %v31
  %v152 = vunpack.c.l.b16 %v32
  %v153 = vunpack.c.h.b16 %v32
  %v154 = vunpack.c.l.b16 %v33
  %v155 = vunpack.c.h.b16 %v33
  %v156 = vunpack.c.l.b16 %v34
  %v157 = vunpack.c.h.b16 %v34
  %v158 = vunpack.c.l.b16 %v35
  %v159 = vunpack.c.h.b16 %v35
  %v160 = vunpack.c.l.b16 %v36
  %v161 = vunpack.c.h.b16 %v36
  %v162 = vunpack.c.l.b16 %v37
  %v163 = vunpack.c.h.b16 %v37
  %v164 = vunpack.c.l.b16 %v38
  %v165 = vunpack.c.h.b16 %v38
  %v166 = vunpack.c.l.b16 %v39
  %v167 = vunpack.c.h.b16 %v39
  %v168 = vunpack.c.l.b16 %v40
  %v169 = vunpack.c.h.b16 %v40
  %v170 = vunpack.c.l.b16 %v41
  %v171 = vunpack.c.h.b16 %v41
  %v172 = vunpack.c.l.b16 %v42
  %v173 = vunpack.c.h.b16 %v42
  %v174 = vunpack.c.l.b16 %v43
  %v175 = vunpack.c.h.b16 %v43
  %v176 = vunpack.c.l.b16 %v44
  %v177 = vunpack.c.h.b16 %v44
  %v178 = vunpack.c.l.b16 %v45
  %v179 = vunpack.c.h.b16 %v45
  %v180 = vunpack.c.l.b16 %v46
  %v181 = vunpack.c.h.b16 %v46
  %v182 = vpack.c.b16 %v120, %v118
  %v183 = vpack.c.b16 %v121, %v119
  %v184 = vpack.c.b16 %v124, %v122
  %v185 = vpack.c.b16 %v125, %v123
  %v186 = vpack.c.b16 %v128, %v126
  %v187 = vpack.c.b16 %v129, %v127
  %v188 = vpack.c.b16 %v132, %v130
  %v189 = vpack.c.b16 %v133, %v131
  %v190 = vpack.c.b16 %v136, %v134
  %v191 = vpack.c.b16 %v137, %v135
  %v192 = vpack.c.b16 %v140, %v138
  %v193 = vpack.c.b16 %v141, %v139
  %v194 = vpack.c.b16 %v144, %v142
  %v195 = vpack.c.b16 %v145, %v143
  %v196 = vpack.c.b16 %v148, %v146
  %v197 = vpack.c.b16 %v149, %v147
  %v198 = vpack.c.b16 %v152, %v150
  %v199 = vpack.c.b16 %v153, %v151
  %v200 = vpack.c.b16 %v156, %v154
  %v201 = vpack.c.b16 %v157, %v155
  %v202 = vpack.c.b16 %v160, %v158
  %v203 = vpack.c.b16 %v161, %v159
  %v204 = vpack.c.b16 %v164, %v162
  %v205 = vpack.c.b16 %v165, %v163
  %v206 = vpack.c.b16 %v168, %v166
  %v207 = vpack.c.b16 %v169, %v167
  %v208 = vpack.c.b16 %v172, %v170
  %v209 = vpack.c.b16 %v173, %v171
  %v210 = vpack.c.b16 %v176, %v174
  %v211 = vpack.c.b16 %v177, %v175
  %v212 = vpack.c.b16 %v180, %v178
  %v213 = vpack.c.b16 %v181, %v179
  %v278 = vunpack.c.l.b16 %v47
  %v279 = vunpack.c.l.b16 %v48
  %v280 = vunpack.c.l.b16 %v49
  %v281 = vunpack.c.l.b16 %v50
  %v282 = vunpack.c.l.b16 %v51
  %v283 = vunpack.c.l.b16 %v52
  %v284 = vunpack.c.l.b16 %v53
  %v285 = vunpack.c.l.b16 %v54
  %v286 = vunpack.c.l.b16 %v55
  %v287 = vunpack.c.l.b16 %v56
  %v288 = vunpack.c.l.b16 %v57
  %v289 = vunpack.c.l.b16 %v58
  %v290 = vunpack.c.l.b16 %v59
  %v291 = vunpack.c.l.b16 %v60
  %v292 = vunpack.c.l.b16 %v61
  %v293 = vunpack.c.l.b16 %v62
  %v294 = vunpack.c.l.b16 %v63
  %v295 = vunpack.c.l.b16 %v64
  %v296 = vunpack.c.l.b16 %v65
  %v297 = vunpack.c.l.b16 %v66
  %v298 = vunpack.c.l.b16 %v67
  %v299 = vunpack.c.l.b16 %v68
  %v300 = vunpack.c.l.b16 %v69
  %v301 = vunpack.c.l.b16 %v70
  %v302 = vunpack.c.l.b16 %v71
  %v303 = vunpack.c.l.b16 %v72
  %v304 = vunpack.c.l.b16 %v73
  %v305 = vunpack.c.l.b16 %v74
  %v306 = vunpack.c.l.b16 %v75
  %v307 = vunpack.c.l.b16 %v76
  %v308 = vunpack.c.l.b16 %v77
  %v309 = vunpack.c.l.b16 %v78
  %v310 = vpack.c.b16 %v279, %v278
  %v311 = vpack.c.b16 %v281, %v280
  %v312 = vpack.c.b16 %v283, %v282
  %v313 = vpack.c.b16 %v285, %v284
  %v314 = vpack.c.b16 %v287, %v286
  %v315 = vpack.c.b16 %v289, %v288
  %v316 = vpack.c.b16 %v291, %v290
  %v317 = vpack.c.b16 %v293, %v292
  %v318 = vpack.c.b16 %v295, %v294
  %v319 = vpack.c.b16 %v297, %v296
  %v320 = vpack.c.b16 %v299, %v298
  %v321 = vpack.c.b16 %v301, %v300
  %v322 = vpack.c.b16 %v303, %v302
  %v323 = vpack.c.b16 %v305, %v304
  %v324 = vpack.c.b16 %v307, %v306
  %v325 = vpack.c.b16 %v309, %v308
  %342 = vmatprep.subr.bf16.mxu0 0
  %343 = vmatpush1.bf16.msra.mxu0 %v310
  %344 = vmatprep.subr.bf16.mxu0 0
  %345 = vmatpush1.bf16.msra.mxu0 %v311
  %346 = vmatprep.subr.bf16.mxu0 0
  %347 = vmatpush1.bf16.msra.mxu0 %v312
  %348 = vmatprep.subr.bf16.mxu0 0
  %349 = vmatpush1.bf16.msra.mxu0 %v313
  %350 = vmatprep.subr.bf16.mxu0 0
  %351 = vmatpush1.bf16.msra.mxu0 %v314
  %352 = vmatprep.subr.bf16.mxu0 0
  %353 = vmatpush1.bf16.msra.mxu0 %v315
  %354 = vmatprep.subr.bf16.mxu0 0
  %355 = vmatpush1.bf16.msra.mxu0 %v316
  %356 = vmatprep.subr.bf16.mxu0 0
  %357 = vmatpush1.bf16.msra.mxu0 %v317
  %358 = vmatprep.subr.bf16.mxu0 0
  %359 = vmatpush1.bf16.msra.mxu0 %v318
  %360 = vmatprep.subr.bf16.mxu0 0
  %361 = vmatpush1.bf16.msra.mxu0 %v319
  %362 = vmatprep.subr.bf16.mxu0 0
  %363 = vmatpush1.bf16.msra.mxu0 %v320
  %364 = vmatprep.subr.bf16.mxu0 0
  %365 = vmatpush1.bf16.msra.mxu0 %v321
  %366 = vmatprep.subr.bf16.mxu0 0
  %367 = vmatpush1.bf16.msra.mxu0 %v322
  %368 = vmatprep.subr.bf16.mxu0 0
  %369 = vmatpush1.bf16.msra.mxu0 %v323
  %370 = vmatprep.subr.bf16.mxu0 0
  %371 = vmatpush1.bf16.msra.mxu0 %v324
  %372 = vmatprep.subr.bf16.mxu0 0
  %373 = vmatpush1.bf16.msra.mxu0 %v325
  %374 = vmatprep.mubr.bf16.mxu0 %v183
  %375 = vmatmul.mubr.bf16.gmra.mrb[0].mxu0 %v182
  %v376 = vpop.f32.mrb[0].mxu0
  %v377 = vadd.f32 %v84, %v376
  %v378 = vpop.f32.mrb[0].mxu0
  %v379 = vpop.f32.mrb[0].mxu0
  %v380 = vadd.f32 %v84, %v379
  %v381 = vpop.f32.mrb[0].mxu0
  %382 = vmatprep.mubr.bf16.mxu0 %v185
  %383 = vmatmul.mubr.bf16.gmra.mrb[0].mxu0 %v184
  %v384 = vpop.f32.mrb[0].mxu0
  %v385 = vadd.f32 %v84, %v384
  %v386 = vpop.f32.mrb[0].mxu0
  %v387 = vpop.f32.mrb[0].mxu0
  %v388 = vadd.f32 %v84, %v387
  %v389 = vpop.f32.mrb[0].mxu0
  %390 = vmatprep.mubr.bf16.mxu0 %v187
  %391 = vmatmul.mubr.bf16.gmra.mrb[0].mxu0 %v186
  %v392 = vpop.f32.mrb[0].mxu0
  %v393 = vadd.f32 %v84, %v392
  %v394 = vpop.f32.mrb[0].mxu0
  %v395 = vpop.f32.mrb[0].mxu0
  %v396 = vadd.f32 %v84, %v395
  %v397 = vpop.f32.mrb[0].mxu0
  %398 = vmatprep.mubr.bf16.mxu0 %v189
  %399 = vmatmul.mubr.bf16.gmra.mrb[0].mxu0 %v188
  %v400 = vpop.f32.mrb[0].mxu0
  %v401 = vadd.f32 %v84, %v400
  %v402 = vpop.f32.mrb[0].mxu0
  %v403 = vpop.f32.mrb[0].mxu0
  %v404 = vadd.f32 %v84, %v403
  %v405 = vpop.f32.mrb[0].mxu0
  %406 = vmatprep.mubr.bf16.mxu0 %v191
  %407 = vmatmul.mubr.bf16.gmra.mrb[0].mxu0 %v190
  %v408 = vpop.f32.mrb[0].mxu0
  %v409 = vadd.f32 %v84, %v408
  %v410 = vpop.f32.mrb[0].mxu0
  %v411 = vpop.f32.mrb[0].mxu0
  %v412 = vadd.f32 %v84, %v411
  %v413 = vpop.f32.mrb[0].mxu0
  %414 = vmatprep.mubr.bf16.mxu0 %v193
  %415 = vmatmul.mubr.bf16.gmra.mrb[0].mxu0 %v192
  %v416 = vpop.f32.mrb[0].mxu0
  %v417 = vadd.f32 %v84, %v416
  %v418 = vpop.f32.mrb[0].mxu0
  %v419 = vpop.f32.mrb[0].mxu0
  %v420 = vadd.f32 %v84, %v419
  %v421 = vpop.f32.mrb[0].mxu0
  %422 = vmatprep.mubr.bf16.mxu0 %v195
  %423 = vmatmul.mubr.bf16.gmra.mrb[0].mxu0 %v194
  %v424 = vpop.f32.mrb[0].mxu0
  %v425 = vadd.f32 %v84, %v424
  %v426 = vpop.f32.mrb[0].mxu0
  %v427 = vpop.f32.mrb[0].mxu0
  %v428 = vadd.f32 %v84, %v427
  %v429 = vpop.f32.mrb[0].mxu0
  %430 = vmatprep.mubr.bf16.mxu0 %v197
  %431 = vmatmul.mubr.bf16.gmra.mrb[0].mxu0 %v196
  %v432 = vpop.f32.mrb[0].mxu0
  %v433 = vadd.f32 %v84, %v432
  %v434 = vpop.f32.mrb[0].mxu0
  %v435 = vpop.f32.mrb[0].mxu0
  %v436 = vadd.f32 %v84, %v435
  %v437 = vpop.f32.mrb[0].mxu0
  %438 = vmatprep.mubr.bf16.mxu0 %v199
  %439 = vmatmul.mubr.bf16.gmra.mrb[0].mxu0 %v198
  %v440 = vpop.f32.mrb[0].mxu0
  %v441 = vadd.f32 %v84, %v440
  %v442 = vpop.f32.mrb[0].mxu0
  %v443 = vpop.f32.mrb[0].mxu0
  %v444 = vadd.f32 %v84, %v443
  %v445 = vpop.f32.mrb[0].mxu0
  %446 = vmatprep.mubr.bf16.mxu0 %v201
  %447 = vmatmul.mubr.bf16.gmra.mrb[0].mxu0 %v200
  %v448 = vpop.f32.mrb[0].mxu0
  %v449 = vadd.f32 %v84, %v448
  %v450 = vpop.f32.mrb[0].mxu0
  %v451 = vpop.f32.mrb[0].mxu0
  %v452 = vadd.f32 %v84, %v451
  %v453 = vpop.f32.mrb[0].mxu0
  %454 = vmatprep.mubr.bf16.mxu0 %v203
  %455 = vmatmul.mubr.bf16.gmra.mrb[0].mxu0 %v202
  %v456 = vpop.f32.mrb[0].mxu0
  %v457 = vadd.f32 %v84, %v456
  %v458 = vpop.f32.mrb[0].mxu0
  %v459 = vpop.f32.mrb[0].mxu0
  %v460 = vadd.f32 %v84, %v459
  %v461 = vpop.f32.mrb[0].mxu0
  %462 = vmatprep.mubr.bf16.mxu0 %v205
  %463 = vmatmul.mubr.bf16.gmra.mrb[0].mxu0 %v204
  %v464 = vpop.f32.mrb[0].mxu0
  %v465 = vadd.f32 %v84, %v464
  %v466 = vpop.f32.mrb[0].mxu0
  %v467 = vpop.f32.mrb[0].mxu0
  %v468 = vadd.f32 %v84, %v467
  %v469 = vpop.f32.mrb[0].mxu0
  %470 = vmatprep.mubr.bf16.mxu0 %v207
  %471 = vmatmul.mubr.bf16.gmra.mrb[0].mxu0 %v206
  %v472 = vpop.f32.mrb[0].mxu0
  %v473 = vadd.f32 %v84, %v472
  %v474 = vpop.f32.mrb[0].mxu0
  %v475 = vpop.f32.mrb[0].mxu0
  %v476 = vadd.f32 %v84, %v475
  %v477 = vpop.f32.mrb[0].mxu0
  %478 = vmatprep.mubr.bf16.mxu0 %v209
  %479 = vmatmul.mubr.bf16.gmra.mrb[0].mxu0 %v208
  %v480 = vpop.f32.mrb[0].mxu0
  %v481 = vadd.f32 %v84, %v480
  %v482 = vpop.f32.mrb[0].mxu0
  %v483 = vpop.f32.mrb[0].mxu0
  %v484 = vadd.f32 %v84, %v483
  %v485 = vpop.f32.mrb[0].mxu0
  %486 = vmatprep.mubr.bf16.mxu0 %v211
  %487 = vmatmul.mubr.bf16.gmra.mrb[0].mxu0 %v210
  %v488 = vpop.f32.mrb[0].mxu0
  %v489 = vadd.f32 %v84, %v488
  %v490 = vpop.f32.mrb[0].mxu0
  %v491 = vpop.f32.mrb[0].mxu0
  %v492 = vadd.f32 %v84, %v491
  %v493 = vpop.f32.mrb[0].mxu0
  %494 = vmatprep.mubr.bf16.mxu0 %v213
  %495 = vmatmul.mubr.bf16.gmra.mrb[0].mxu0 %v212
  %v496 = vpop.f32.mrb[0].mxu0
  %v497 = vadd.f32 %v84, %v496
  %v498 = vpop.f32.mrb[0].mxu0
  %v499 = vpop.f32.mrb[0].mxu0
  %v500 = vadd.f32 %v84, %v499
  %v501 = vpop.f32.mrb[0].mxu0
  %502 = vdwg.mxu0
  %v503 = vmax.f32 %v377, 0.0
  %v504 = vmax.f32 %v380, 0.0
  %v505 = vmax.f32 %v385, 0.0
  %v506 = vmax.f32 %v388, 0.0
  %v507 = vmax.f32 %v393, 0.0
  %v508 = vmax.f32 %v396, 0.0
  %v509 = vmax.f32 %v401, 0.0
  %v510 = vmax.f32 %v404, 0.0
  %v511 = vmax.f32 %v409, 0.0
  %v512 = vmax.f32 %v412, 0.0
  %v513 = vmax.f32 %v417, 0.0
  %v514 = vmax.f32 %v420, 0.0
  %v515 = vmax.f32 %v425, 0.0
  %v516 = vmax.f32 %v428, 0.0
  %v517 = vmax.f32 %v433, 0.0
  %v518 = vmax.f32 %v436, 0.0
  %v519 = vmax.f32 %v441, 0.0
  %v520 = vmax.f32 %v444, 0.0
  %v521 = vmax.f32 %v449, 0.0
  %v522 = vmax.f32 %v452, 0.0
  %v523 = vmax.f32 %v457, 0.0
  %v524 = vmax.f32 %v460, 0.0
  %v525 = vmax.f32 %v465, 0.0
  %v526 = vmax.f32 %v468, 0.0
  %v527 = vmax.f32 %v473, 0.0
  %v528 = vmax.f32 %v476, 0.0
  %v529 = vmax.f32 %v481, 0.0
  %v530 = vmax.f32 %v484, 0.0
  %v531 = vmax.f32 %v489, 0.0
  %v532 = vmax.f32 %v492, 0.0
  %v533 = vmax.f32 %v497, 0.0
  %v534 = vmax.f32 %v500, 0.0
  %v535 = vpack.c.bf16 %v504, %v503
  %v536 = vpack.c.bf16 %v506, %v505
  %v537 = vpack.c.bf16 %v508, %v507
  %v538 = vpack.c.bf16 %v510, %v509
  %v539 = vpack.c.bf16 %v512, %v511
  %v540 = vpack.c.bf16 %v514, %v513
  %v541 = vpack.c.bf16 %v516, %v515
  %v542 = vpack.c.bf16 %v518, %v517
  %v543 = vpack.c.bf16 %v520, %v519
  %v544 = vpack.c.bf16 %v522, %v521
  %v545 = vpack.c.bf16 %v524, %v523
  %v546 = vpack.c.bf16 %v526, %v525
  %v547 = vpack.c.bf16 %v528, %v527
  %v548 = vpack.c.bf16 %v530, %v529
  %v549 = vpack.c.bf16 %v532, %v531
  %v550 = vpack.c.bf16 %v534, %v533
  %v567 = vunpack.c.l.b16 %v535
  %v568 = vunpack.c.h.b16 %v535
  %v569 = vunpack.c.l.b16 %v536
  %v570 = vunpack.c.h.b16 %v536
  %v571 = vunpack.c.l.b16 %v537
  %v572 = vunpack.c.h.b16 %v537
  %v573 = vunpack.c.l.b16 %v538
  %v574 = vunpack.c.h.b16 %v538
  %v575 = vunpack.c.l.b16 %v539
  %v576 = vunpack.c.h.b16 %v539
  %v577 = vunpack.c.l.b16 %v540
  %v578 = vunpack.c.h.b16 %v540
  %v579 = vunpack.c.l.b16 %v541
  %v580 = vunpack.c.h.b16 %v541
  %v581 = vunpack.c.l.b16 %v542
  %v582 = vunpack.c.h.b16 %v542
  %v583 = vunpack.c.l.b16 %v543
  %v584 = vunpack.c.h.b16 %v543
  %v585 = vunpack.c.l.b16 %v544
  %v586 = vunpack.c.h.b16 %v544
  %v587 = vunpack.c.l.b16 %v545
  %v588 = vunpack.c.h.b16 %v545
  %v589 = vunpack.c.l.b16 %v546
  %v590 = vunpack.c.h.b16 %v546
  %v591 = vunpack.c.l.b16 %v547
  %v592 = vunpack.c.h.b16 %v547
  %v593 = vunpack.c.l.b16 %v548
  %v594 = vunpack.c.h.b16 %v548
  %v595 = vunpack.c.l.b16 %v549
  %v596 = vunpack.c.h.b16 %v549
  %v597 = vunpack.c.l.b16 %v550
  %v598 = vunpack.c.h.b16 %v550
  %v599 = vpack.c.b16 %v567, %v567
  %v600 = vpack.c.b16 %v568, %v568
  %v601 = vpack.c.b16 %v569, %v569
  %v602 = vpack.c.b16 %v570, %v570
  %v603 = vpack.c.b16 %v571, %v571
  %v604 = vpack.c.b16 %v572, %v572
  %v605 = vpack.c.b16 %v573, %v573
  %v606 = vpack.c.b16 %v574, %v574
  %v607 = vpack.c.b16 %v575, %v575
  %v608 = vpack.c.b16 %v576, %v576
  %v609 = vpack.c.b16 %v577, %v577
  %v610 = vpack.c.b16 %v578, %v578
  %v611 = vpack.c.b16 %v579, %v579
  %v612 = vpack.c.b16 %v580, %v580
  %v613 = vpack.c.b16 %v581, %v581
  %v614 = vpack.c.b16 %v582, %v582
  %v615 = vpack.c.b16 %v583, %v583
  %v616 = vpack.c.b16 %v584, %v584
  %v617 = vpack.c.b16 %v585, %v585
  %v618 = vpack.c.b16 %v586, %v586
  %v619 = vpack.c.b16 %v587, %v587
  %v620 = vpack.c.b16 %v588, %v588
  %v621 = vpack.c.b16 %v589, %v589
  %v622 = vpack.c.b16 %v590, %v590
  %v623 = vpack.c.b16 %v591, %v591
  %v624 = vpack.c.b16 %v592, %v592
  %v625 = vpack.c.b16 %v593, %v593
  %v626 = vpack.c.b16 %v594, %v594
  %v627 = vpack.c.b16 %v595, %v595
  %v628 = vpack.c.b16 %v596, %v596
  %v629 = vpack.c.b16 %v597, %v597
  %v630 = vpack.c.b16 %v598, %v598
  %vm663 = vcmask 519168
  %664 = vst.msk [vmem:[%s3] sm:$0xf] %vm663, %v599
  %665 = vst.msk [vmem:[%s3 + $0x4] sm:$0xf] %vm663, %v600
  %666 = vst.msk [vmem:[%s3 + $0x8] sm:$0xf] %vm663, %v601
  %667 = vst.msk [vmem:[%s3 + $0xc] sm:$0xf] %vm663, %v602
  %668 = vst.msk [vmem:[%s3 + $0x10] sm:$0xf] %vm663, %v603
  %669 = vst.msk [vmem:[%s3 + $0x14] sm:$0xf] %vm663, %v604
  %670 = vst.msk [vmem:[%s3 + $0x18] sm:$0xf] %vm663, %v605
  %671 = vst.msk [vmem:[%s3 + $0x1c] sm:$0xf] %vm663, %v606
  %672 = vst.msk [vmem:[%s3 + $0x20] sm:$0xf] %vm663, %v607
  %673 = vst.msk [vmem:[%s3 + $0x24] sm:$0xf] %vm663, %v608
  %674 = vst.msk [vmem:[%s3 + $0x28] sm:$0xf] %vm663, %v609
  %675 = vst.msk [vmem:[%s3 + $0x2c] sm:$0xf] %vm663, %v610
  %676 = vst.msk [vmem:[%s3 + $0x30] sm:$0xf] %vm663, %v611
  %677 = vst.msk [vmem:[%s3 + $0x34] sm:$0xf] %vm663, %v612
  %678 = vst.msk [vmem:[%s3 + $0x38] sm:$0xf] %vm663, %v613
  %679 = vst.msk [vmem:[%s3 + $0x3c] sm:$0xf] %vm663, %v614
  %680 = vst.msk [vmem:[%s3 + $0x40] sm:$0xf] %vm663, %v615
  %681 = vst.msk [vmem:[%s3 + $0x44] sm:$0xf] %vm663, %v616
  %682 = vst.msk [vmem:[%s3 + $0x48] sm:$0xf] %vm663, %v617
  %683 = vst.msk [vmem:[%s3 + $0x4c] sm:$0xf] %vm663, %v618
  %684 = vst.msk [vmem:[%s3 + $0x50] sm:$0xf] %vm663, %v619
  %685 = vst.msk [vmem:[%s3 + $0x54] sm:$0xf] %vm663, %v620
  %686 = vst.msk [vmem:[%s3 + $0x58] sm:$0xf] %vm663, %v621
  %687 = vst.msk [vmem:[%s3 + $0x5c] sm:$0xf] %vm663, %v622
  %688 = vst.msk [vmem:[%s3 + $0x60] sm:$0xf] %vm663, %v623
  %689 = vst.msk [vmem:[%s3 + $0x64] sm:$0xf] %vm663, %v624
  %690 = vst.msk [vmem:[%s3 + $0x68] sm:$0xf] %vm663, %v625
  %691 = vst.msk [vmem:[%s3 + $0x6c] sm:$0xf] %vm663, %v626
  %692 = vst.msk [vmem:[%s3 + $0x70] sm:$0xf] %vm663, %v627
  %693 = vst.msk [vmem:[%s3 + $0x74] sm:$0xf] %vm663, %v628
  %694 = vst.msk [vmem:[%s3 + $0x78] sm:$0xf] %vm663, %v629
  %695 = vst.msk [vmem:[%s3 + $0x7c] sm:$0xf] %vm663, %v630
  // Predicated region
  $region14: #{_lambda_.35} parent=0 // pred_check
    _
  $region15: #{_lambda_.35} parent=0 // pred_check_branch
    %697 = sbr.rel (0) target = $region17
  $region16: #{_lambda_.35} parent=0 // pred_region
    _
  $region17: #{_lambda_.35} parent=0 // pred_fallthru
    _
  // Predicated region
  $region18: #{_lambda_.35} parent=0 // pred_check
    _
  $region19: #{_lambda_.35} parent=0 // pred_check_branch
    %699 = sbr.rel (0) target = $region21
  $region20: #{_lambda_.35} parent=0 // pred_region
    _
  $region21: #{_lambda_.35} parent=0 // pred_fallthru
    _

// kernel: _lambda_.40
$region0: #{_lambda_.40}
  #allocation0 [shape = 'u32[]', space=smem, size = 0x4, offset = 0x4, fixed_abs, tag = 'smem constant byte address 0x4 - core index']
  #allocation1 [shape = 'u32[144,128]{1,0:T(1,128)}', space=vmem, size = 0x12000, scoped, tag = 'internal scratch']
  %s0 = inlined_call_operand.vmem [shape: bf16[64,256], index: 0, kind: input, shape index: {}]
  %s1 = inlined_call_operand.vmem [shape: bf16[256,512], index: 1, kind: input, shape index: {}]
  %s2 = inlined_call_operand.vmem [shape: f32[1,512], index: 2, kind: input, shape index: {}]
  %s3 = inlined_call_operand.vmem [shape: bf16[64,512], index: 3, kind: output, shape index: {}]
  %s4 = sld [smem:[#allocation0]]
  $region22: #{_lambda_.40} parent=0
    _
  %s6 = ssub.s32 1, %s4
  %s7 = scalar_select 0, %s6, %s4
  // Predicated region
  $region2: #{_lambda_.40} parent=0 // pred_check
    _
  $region3: #{_lambda_.40} parent=0 // pred_check_branch
    %9 = sbr.rel (0) target = $region5
  $region4: #{_lambda_.40} parent=0 // pred_region
    _
  $region5: #{_lambda_.40} parent=0 // pred_fallthru
    _
  // Predicated region
  $region6: #{_lambda_.40} parent=0 // pred_check
    _
  $region7: #{_lambda_.40} parent=0 // pred_check_branch
    %11 = sbr.rel (0) target = $region9
  $region8: #{_lambda_.40} parent=0 // pred_region
    _
  $region9: #{_lambda_.40} parent=0 // pred_fallthru
    _
  // Predicated region
  $region10: #{_lambda_.40} parent=0 // pred_check
    _
  $region11: #{_lambda_.40} parent=0 // pred_check_branch
    %13 = sbr.rel (0) target = $region13
  $region12: #{_lambda_.40} parent=0 // pred_region
    _
  $region13: #{_lambda_.40} parent=0 // pred_fallthru
    _
  %v14 = vld [vmem:[%s0] sm:$0xff]
  %v15 = vld [vmem:[%s0 + $0x8] sm:$0xff]
  %v16 = vld [vmem:[%s0 + $0x10] sm:$0xff]
  %v17 = vld [vmem:[%s0 + $0x18] sm:$0xff]
  %v18 = vld [vmem:[%s0 + $0x20] sm:$0xff]
  %v19 = vld [vmem:[%s0 + $0x28] sm:$0xff]
  %v20 = vld [vmem:[%s0 + $0x30] sm:$0xff]
  %v21 = vld [vmem:[%s0 + $0x38] sm:$0xff]
  %v22 = vld [vmem:[%s1] sm:$0xff]
  %v23 = vld [vmem:[%s1 + $0x8] sm:$0xff]
  %v24 = vld [vmem:[%s1 + $0x10] sm:$0xff]
  %v25 = vld [vmem:[%s1 + $0x18] sm:$0xff]
  %v26 = vld [vmem:[%s1 + $0x20] sm:$0xff]
  %v27 = vld [vmem:[%s1 + $0x28] sm:$0xff]
  %v28 = vld [vmem:[%s1 + $0x30] sm:$0xff]
  %v29 = vld [vmem:[%s1 + $0x38] sm:$0xff]
  %v30 = vld [vmem:[%s1 + $0x40] sm:$0xff]
  %v31 = vld [vmem:[%s1 + $0x48] sm:$0xff]
  %v32 = vld [vmem:[%s1 + $0x50] sm:$0xff]
  %v33 = vld [vmem:[%s1 + $0x58] sm:$0xff]
  %v34 = vld [vmem:[%s1 + $0x60] sm:$0xff]
  %v35 = vld [vmem:[%s1 + $0x68] sm:$0xff]
  %v36 = vld [vmem:[%s1 + $0x70] sm:$0xff]
  %v37 = vld [vmem:[%s1 + $0x78] sm:$0xff]
  %v38 = vld [vmem:[%s1 + $0x80] sm:$0xff]
  %v39 = vld [vmem:[%s1 + $0x88] sm:$0xff]
  %v40 = vld [vmem:[%s1 + $0x90] sm:$0xff]
  %v41 = vld [vmem:[%s1 + $0x98] sm:$0xff]
  %v42 = vld [vmem:[%s1 + $0xa0] sm:$0xff]
  %v43 = vld [vmem:[%s1 + $0xa8] sm:$0xff]
  %v44 = vld [vmem:[%s1 + $0xb0] sm:$0xff]
  %v45 = vld [vmem:[%s1 + $0xb8] sm:$0xff]
  %v46 = vld [vmem:[%s1 + $0xc0] sm:$0xff]
  %v47 = vld [vmem:[%s1 + $0xc8] sm:$0xff]
  %v48 = vld [vmem:[%s1 + $0xd0] sm:$0xff]
  %v49 = vld [vmem:[%s1 + $0xd8] sm:$0xff]
  %v50 = vld [vmem:[%s1 + $0xe0] sm:$0xff]
  %v51 = vld [vmem:[%s1 + $0xe8] sm:$0xff]
  %v52 = vld [vmem:[%s1 + $0xf0] sm:$0xff]
  %v53 = vld [vmem:[%s1 + $0xf8] sm:$0xff]
  %v54 = vld [vmem:[%s1 + $0x100] sm:$0xff]
  %v55 = vld [vmem:[%s1 + $0x108] sm:$0xff]
  %v56 = vld [vmem:[%s1 + $0x110] sm:$0xff]
  %v57 = vld [vmem:[%s1 + $0x118] sm:$0xff]
  %v58 = vld [vmem:[%s1 + $0x120] sm:$0xff]
  %v59 = vld [vmem:[%s1 + $0x128] sm:$0xff]
  %v60 = vld [vmem:[%s1 + $0x130] sm:$0xff]
  %v61 = vld [vmem:[%s1 + $0x138] sm:$0xff]
  %v62 = vld [vmem:[%s1 + $0x140] sm:$0xff]
  %v63 = vld [vmem:[%s1 + $0x148] sm:$0xff]
  %v64 = vld [vmem:[%s1 + $0x150] sm:$0xff]
  %v65 = vld [vmem:[%s1 + $0x158] sm:$0xff]
  %v66 = vld [vmem:[%s1 + $0x160] sm:$0xff]
  %v67 = vld [vmem:[%s1 + $0x168] sm:$0xff]
  %v68 = vld [vmem:[%s1 + $0x170] sm:$0xff]
  %v69 = vld [vmem:[%s1 + $0x178] sm:$0xff]
  %v70 = vld [vmem:[%s1 + $0x180] sm:$0xff]
  %v71 = vld [vmem:[%s1 + $0x188] sm:$0xff]
  %v72 = vld [vmem:[%s1 + $0x190] sm:$0xff]
  %v73 = vld [vmem:[%s1 + $0x198] sm:$0xff]
  %v74 = vld [vmem:[%s1 + $0x1a0] sm:$0xff]
  %v75 = vld [vmem:[%s1 + $0x1a8] sm:$0xff]
  %v76 = vld [vmem:[%s1 + $0x1b0] sm:$0xff]
  %v77 = vld [vmem:[%s1 + $0x1b8] sm:$0xff]
  %v78 = vld [vmem:[%s1 + $0x1c0] sm:$0xff]
  %v79 = vld [vmem:[%s1 + $0x1c8] sm:$0xff]
  %v80 = vld [vmem:[%s1 + $0x1d0] sm:$0xff]
  %v81 = vld [vmem:[%s1 + $0x1d8] sm:$0xff]
  %v82 = vld [vmem:[%s1 + $0x1e0] sm:$0xff]
  %v83 = vld [vmem:[%s1 + $0x1e8] sm:$0xff]
  %v84 = vld [vmem:[%s1 + $0x1f0] sm:$0xff]
  %v85 = vld [vmem:[%s1 + $0x1f8] sm:$0xff]
  %v86 = vld [vmem:[%s2] sm:$0xf]
  %v88 = vlaneseq
  %v89 = vshrl.u32 %v88, 7
  %v90 = vsub.s32 0, %v89
  %v91 = vrot.slane %v86, %v90
  %v92 = vlaneseq
  %v93 = vshrl.u32 %v92, 7
  %v94 = vsub.s32 1, %v93
  %v95 = vrot.slane %v86, %v94
  %v96 = vlaneseq
  %v97 = vshrl.u32 %v96, 7
  %v98 = vsub.s32 2, %v97
  %v99 = vrot.slane %v86, %v98
  %v100 = vlaneseq
  %v101 = vshrl.u32 %v100, 7
  %v102 = vsub.s32 3, %v101
  %v103 = vrot.slane %v86, %v102
  %v116 = vunpack.c.l.b16 %v14
  %v117 = vunpack.c.h.b16 %v14
  %v118 = vunpack.c.l.b16 %v15
  %v119 = vunpack.c.h.b16 %v15
  %v120 = vunpack.c.l.b16 %v16
  %v121 = vunpack.c.h.b16 %v16
  %v122 = vunpack.c.l.b16 %v17
  %v123 = vunpack.c.h.b16 %v17
  %v124 = vunpack.c.l.b16 %v18
  %v125 = vunpack.c.h.b16 %v18
  %v126 = vunpack.c.l.b16 %v19
  %v127 = vunpack.c.h.b16 %v19
  %v128 = vunpack.c.l.b16 %v20
  %v129 = vunpack.c.h.b16 %v20
  %v130 = vunpack.c.l.b16 %v21
  %v131 = vunpack.c.h.b16 %v21
  %v132 = vpack.c.b16 %v118, %v116
  %v133 = vpack.c.b16 %v119, %v117
  %v134 = vpack.c.b16 %v122, %v120
  %v135 = vpack.c.b16 %v123, %v121
  %v136 = vpack.c.b16 %v126, %v124
  %v137 = vpack.c.b16 %v127, %v125
  %v138 = vpack.c.b16 %v130, %v128
  %v139 = vpack.c.b16 %v131, %v129
  %v212 = vunpack.c.l.b16 %v22
  %v213 = vunpack.c.h.b16 %v22
  %v214 = vunpack.c.l.b16 %v23
  %v215 = vunpack.c.h.b16 %v23
  %v216 = vunpack.c.l.b16 %v24
  %v217 = vunpack.c.h.b16 %v24
  %v218 = vunpack.c.l.b16 %v25
  %v219 = vunpack.c.h.b16 %v25
  %v220 = vunpack.c.l.b16 %v26
  %v221 = vunpack.c.h.b16 %v26
  %v222 = vunpack.c.l.b16 %v27
  %v223 = vunpack.c.h.b16 %v27
  %v224 = vunpack.c.l.b16 %v28
  %v225 = vunpack.c.h.b16 %v28
  %v226 = vunpack.c.l.b16 %v29
  %v227 = vunpack.c.h.b16 %v29
  %v228 = vunpack.c.l.b16 %v30
  %v229 = vunpack.c.h.b16 %v30
  %v230 = vunpack.c.l.b16 %v31
  %v231 = vunpack.c.h.b16 %v31
  %v232 = vunpack.c.l.b16 %v32
  %v233 = vunpack.c.h.b16 %v32
  %v234 = vunpack.c.l.b16 %v33
  %v235 = vunpack.c.h.b16 %v33
  %v236 = vunpack.c.l.b16 %v34
  %v237 = vunpack.c.h.b16 %v34
  %v238 = vunpack.c.l.b16 %v35
  %v239 = vunpack.c.h.b16 %v35
  %v240 = vunpack.c.l.b16 %v36
  %v241 = vunpack.c.h.b16 %v36
  %v242 = vunpack.c.l.b16 %v37
  %v243 = vunpack.c.h.b16 %v37
  %v244 = vunpack.c.l.b16 %v38
  %v245 = vunpack.c.h.b16 %v38
  %v246 = vunpack.c.l.b16 %v39
  %v247 = vunpack.c.h.b16 %v39
  %v248 = vunpack.c.l.b16 %v40
  %v249 = vunpack.c.h.b16 %v40
  %v250 = vunpack.c.l.b16 %v41
  %v251 = vunpack.c.h.b16 %v41
  %v252 = vunpack.c.l.b16 %v42
  %v253 = vunpack.c.h.b16 %v42
  %v254 = vunpack.c.l.b16 %v43
  %v255 = vunpack.c.h.b16 %v43
  %v256 = vunpack.c.l.b16 %v44
  %v257 = vunpack.c.h.b16 %v44
  %v258 = vunpack.c.l.b16 %v45
  %v259 = vunpack.c.h.b16 %v45
  %v260 = vunpack.c.l.b16 %v46
  %v261 = vunpack.c.h.b16 %v46
  %v262 = vunpack.c.l.b16 %v47
  %v263 = vunpack.c.h.b16 %v47
  %v264 = vunpack.c.l.b16 %v48
  %v265 = vunpack.c.h.b16 %v48
  %v266 = vunpack.c.l.b16 %v49
  %v267 = vunpack.c.h.b16 %v49
  %v268 = vunpack.c.l.b16 %v50
  %v269 = vunpack.c.h.b16 %v50
  %v270 = vunpack.c.l.b16 %v51
  %v271 = vunpack.c.h.b16 %v51
  %v272 = vunpack.c.l.b16 %v52
  %v273 = vunpack.c.h.b16 %v52
  %v274 = vunpack.c.l.b16 %v53
  %v275 = vunpack.c.h.b16 %v53
  %v276 = vunpack.c.l.b16 %v54
  %v277 = vunpack.c.h.b16 %v54
  %v278 = vunpack.c.l.b16 %v55
  %v279 = vunpack.c.h.b16 %v55
  %v280 = vunpack.c.l.b16 %v56
  %v281 = vunpack.c.h.b16 %v56
  %v282 = vunpack.c.l.b16 %v57
  %v283 = vunpack.c.h.b16 %v57
  %v284 = vunpack.c.l.b16 %v58
  %v285 = vunpack.c.h.b16 %v58
  %v286 = vunpack.c.l.b16 %v59
  %v287 = vunpack.c.h.b16 %v59
  %v288 = vunpack.c.l.b16 %v60
  %v289 = vunpack.c.h.b16 %v60
  %v290 = vunpack.c.l.b16 %v61
  %v291 = vunpack.c.h.b16 %v61
  %v292 = vunpack.c.l.b16 %v62
  %v293 = vunpack.c.h.b16 %v62
  %v294 = vunpack.c.l.b16 %v63
  %v295 = vunpack.c.h.b16 %v63
  %v296 = vunpack.c.l.b16 %v64
  %v297 = vunpack.c.h.b16 %v64
  %v298 = vunpack.c.l.b16 %v65
  %v299 = vunpack.c.h.b16 %v65
  %v300 = vunpack.c.l.b16 %v66
  %v301 = vunpack.c.h.b16 %v66
  %v302 = vunpack.c.l.b16 %v67
  %v303 = vunpack.c.h.b16 %v67
  %v304 = vunpack.c.l.b16 %v68
  %v305 = vunpack.c.h.b16 %v68
  %v306 = vunpack.c.l.b16 %v69
  %v307 = vunpack.c.h.b16 %v69
  %v308 = vunpack.c.l.b16 %v70
  %v309 = vunpack.c.h.b16 %v70
  %v310 = vunpack.c.l.b16 %v71
  %v311 = vunpack.c.h.b16 %v71
  %v312 = vunpack.c.l.b16 %v72
  %v313 = vunpack.c.h.b16 %v72
  %v314 = vunpack.c.l.b16 %v73
  %v315 = vunpack.c.h.b16 %v73
  %v316 = vunpack.c.l.b16 %v74
  %v317 = vunpack.c.h.b16 %v74
  %v318 = vunpack.c.l.b16 %v75
  %v319 = vunpack.c.h.b16 %v75
  %v320 = vunpack.c.l.b16 %v76
  %v321 = vunpack.c.h.b16 %v76
  %v322 = vunpack.c.l.b16 %v77
  %v323 = vunpack.c.h.b16 %v77
  %v324 = vunpack.c.l.b16 %v78
  %v325 = vunpack.c.h.b16 %v78
  %v326 = vunpack.c.l.b16 %v79
  %v327 = vunpack.c.h.b16 %v79
  %v328 = vunpack.c.l.b16 %v80
  %v329 = vunpack.c.h.b16 %v80
  %v330 = vunpack.c.l.b16 %v81
  %v331 = vunpack.c.h.b16 %v81
  %v332 = vunpack.c.l.b16 %v82
  %v333 = vunpack.c.h.b16 %v82
  %v334 = vunpack.c.l.b16 %v83
  %v335 = vunpack.c.h.b16 %v83
  %v336 = vunpack.c.l.b16 %v84
  %v337 = vunpack.c.h.b16 %v84
  %v338 = vunpack.c.l.b16 %v85
  %v339 = vunpack.c.h.b16 %v85
  %v340 = vpack.c.b16 %v216, %v212
  %v341 = vpack.c.b16 %v217, %v213
  %v342 = vpack.c.b16 %v218, %v214
  %v343 = vpack.c.b16 %v219, %v215
  %v344 = vpack.c.b16 %v224, %v220
  %v345 = vpack.c.b16 %v225, %v221
  %v346 = vpack.c.b16 %v226, %v222
  %v347 = vpack.c.b16 %v227, %v223
  %v348 = vpack.c.b16 %v232, %v228
  %v349 = vpack.c.b16 %v233, %v229
  %v350 = vpack.c.b16 %v234, %v230
  %v351 = vpack.c.b16 %v235, %v231
  %v352 = vpack.c.b16 %v240, %v236
  %v353 = vpack.c.b16 %v241, %v237
  %v354 = vpack.c.b16 %v242, %v238
  %v355 = vpack.c.b16 %v243, %v239
  %v356 = vpack.c.b16 %v248, %v244
  %v357 = vpack.c.b16 %v249, %v245
  %v358 = vpack.c.b16 %v250, %v246
  %v359 = vpack.c.b16 %v251, %v247
  %v360 = vpack.c.b16 %v256, %v252
  %v361 = vpack.c.b16 %v257, %v253
  %v362 = vpack.c.b16 %v258, %v254
  %v363 = vpack.c.b16 %v259, %v255
  %v364 = vpack.c.b16 %v264, %v260
  %v365 = vpack.c.b16 %v265, %v261
  %v366 = vpack.c.b16 %v266, %v262
  %v367 = vpack.c.b16 %v267, %v263
  %v368 = vpack.c.b16 %v272, %v268
  %v369 = vpack.c.b16 %v273, %v269
  %v370 = vpack.c.b16 %v274, %v270
  %v371 = vpack.c.b16 %v275, %v271
  %v372 = vpack.c.b16 %v280, %v276
  %v373 = vpack.c.b16 %v281, %v277
  %v374 = vpack.c.b16 %v282, %v278
  %v375 = vpack.c.b16 %v283, %v279
  %v376 = vpack.c.b16 %v288, %v284
  %v377 = vpack.c.b16 %v289, %v285
  %v378 = vpack.c.b16 %v290, %v286
  %v379 = vpack.c.b16 %v291, %v287
  %v380 = vpack.c.b16 %v296, %v292
  %v381 = vpack.c.b16 %v297, %v293
  %v382 = vpack.c.b16 %v298, %v294
  %v383 = vpack.c.b16 %v299, %v295
  %v384 = vpack.c.b16 %v304, %v300
  %v385 = vpack.c.b16 %v305, %v301
  %v386 = vpack.c.b16 %v306, %v302
  %v387 = vpack.c.b16 %v307, %v303
  %v388 = vpack.c.b16 %v312, %v308
  %v389 = vpack.c.b16 %v313, %v309
  %v390 = vpack.c.b16 %v314, %v310
  %v391 = vpack.c.b16 %v315, %v311
  %v392 = vpack.c.b16 %v320, %v316
  %v393 = vpack.c.b16 %v321, %v317
  %v394 = vpack.c.b16 %v322, %v318
  %v395 = vpack.c.b16 %v323, %v319
  %v396 = vpack.c.b16 %v328, %v324
  %v397 = vpack.c.b16 %v329, %v325
  %v398 = vpack.c.b16 %v330, %v326
  %v399 = vpack.c.b16 %v331, %v327
  %v400 = vpack.c.b16 %v336, %v332
  %v401 = vpack.c.b16 %v337, %v333
  %v402 = vpack.c.b16 %v338, %v334
  %v403 = vpack.c.b16 %v339, %v335
  %468 = vmatprep.subr.bf16.mxu0 %v341
  %469 = vmatpush1.bf16.msra.mxu0 %v340
  %470 = vmatprep.subr.bf16.mxu0 %v345
  %471 = vmatpush1.bf16.msra.mxu0 %v344
  %472 = vmatprep.subr.bf16.mxu0 %v349
  %473 = vmatpush1.bf16.msra.mxu0 %v348
  %474 = vmatprep.subr.bf16.mxu0 %v353
  %475 = vmatpush1.bf16.msra.mxu0 %v352
  %476 = vmatprep.subr.bf16.mxu0 %v357
  %477 = vmatpush1.bf16.msra.mxu0 %v356
  %478 = vmatprep.subr.bf16.mxu0 %v361
  %479 = vmatpush1.bf16.msra.mxu0 %v360
  %480 = vmatprep.subr.bf16.mxu0 %v365
  %481 = vmatpush1.bf16.msra.mxu0 %v364
  %482 = vmatprep.subr.bf16.mxu0 %v369
  %483 = vmatpush1.bf16.msra.mxu0 %v368
  %484 = vmatprep.subr.bf16.mxu0 %v373
  %485 = vmatpush1.bf16.msra.mxu0 %v372
  %486 = vmatprep.subr.bf16.mxu0 %v377
  %487 = vmatpush1.bf16.msra.mxu0 %v376
  %488 = vmatprep.subr.bf16.mxu0 %v381
  %489 = vmatpush1.bf16.msra.mxu0 %v380
  %490 = vmatprep.subr.bf16.mxu0 %v385
  %491 = vmatpush1.bf16.msra.mxu0 %v384
  %492 = vmatprep.subr.bf16.mxu0 %v389
  %493 = vmatpush1.bf16.msra.mxu0 %v388
  %494 = vmatprep.subr.bf16.mxu0 %v393
  %495 = vmatpush1.bf16.msra.mxu0 %v392
  %496 = vmatprep.subr.bf16.mxu0 %v397
  %497 = vmatpush1.bf16.msra.mxu0 %v396
  %498 = vmatprep.subr.bf16.mxu0 %v401
  %499 = vmatpush1.bf16.msra.mxu0 %v400
  %500 = vmatprep.mubr.bf16.mxu0 %v133
  %501 = vmatmul.mubr.bf16.gmra.mrb[0].mxu0 %v132
  %v502 = vpop.f32.mrb[0].mxu0
  %v503 = vadd.f32 %v91, %v502
  %v504 = vpop.f32.mrb[0].mxu0
  %v505 = vadd.f32 %v95, %v504
  %v506 = vpop.f32.mrb[0].mxu0
  %v507 = vadd.f32 %v91, %v506
  %v508 = vpop.f32.mrb[0].mxu0
  %v509 = vadd.f32 %v95, %v508
  %510 = vmatprep.mubr.bf16.mxu0 %v135
  %511 = vmatmul.mubr.bf16.gmra.mrb[0].mxu0 %v134
  %v512 = vpop.f32.mrb[0].mxu0
  %v513 = vadd.f32 %v91, %v512
  %v514 = vpop.f32.mrb[0].mxu0
  %v515 = vadd.f32 %v95, %v514
  %v516 = vpop.f32.mrb[0].mxu0
  %v517 = vadd.f32 %v91, %v516
  %v518 = vpop.f32.mrb[0].mxu0
  %v519 = vadd.f32 %v95, %v518
  %520 = vmatprep.mubr.bf16.mxu0 %v137
  %521 = vmatmul.mubr.bf16.gmra.mrb[0].mxu0 %v136
  %v522 = vpop.f32.mrb[0].mxu0
  %v523 = vadd.f32 %v91, %v522
  %v524 = vpop.f32.mrb[0].mxu0
  %v525 = vadd.f32 %v95, %v524
  %v526 = vpop.f32.mrb[0].mxu0
  %v527 = vadd.f32 %v91, %v526
  %v528 = vpop.f32.mrb[0].mxu0
  %v529 = vadd.f32 %v95, %v528
  %530 = vmatprep.mubr.bf16.mxu0 %v139
  %531 = vmatmul.mubr.bf16.gmra.mrb[0].mxu0 %v138
  %v532 = vpop.f32.mrb[0].mxu0
  %v533 = vadd.f32 %v91, %v532
  %v534 = vpop.f32.mrb[0].mxu0
  %v535 = vadd.f32 %v95, %v534
  %v536 = vpop.f32.mrb[0].mxu0
  %v537 = vadd.f32 %v91, %v536
  %v538 = vpop.f32.mrb[0].mxu0
  %v539 = vadd.f32 %v95, %v538
  %540 = vdwg.mxu0
  %541 = vmatprep.subr.bf16.mxu0 %v343
  %542 = vmatpush1.bf16.msra.mxu0 %v342
  %543 = vmatprep.subr.bf16.mxu0 %v347
  %544 = vmatpush1.bf16.msra.mxu0 %v346
  %545 = vmatprep.subr.bf16.mxu0 %v351
  %546 = vmatpush1.bf16.msra.mxu0 %v350
  %547 = vmatprep.subr.bf16.mxu0 %v355
  %548 = vmatpush1.bf16.msra.mxu0 %v354
  %549 = vmatprep.subr.bf16.mxu0 %v359
  %550 = vmatpush1.bf16.msra.mxu0 %v358
  %551 = vmatprep.subr.bf16.mxu0 %v363
  %552 = vmatpush1.bf16.msra.mxu0 %v362
  %553 = vmatprep.subr.bf16.mxu0 %v367
  %554 = vmatpush1.bf16.msra.mxu0 %v366
  %555 = vmatprep.subr.bf16.mxu0 %v371
  %556 = vmatpush1.bf16.msra.mxu0 %v370
  %557 = vmatprep.subr.bf16.mxu0 %v375
  %558 = vmatpush1.bf16.msra.mxu0 %v374
  %559 = vmatprep.subr.bf16.mxu0 %v379
  %560 = vmatpush1.bf16.msra.mxu0 %v378
  %561 = vmatprep.subr.bf16.mxu0 %v383
  %562 = vmatpush1.bf16.msra.mxu0 %v382
  %563 = vmatprep.subr.bf16.mxu0 %v387
  %564 = vmatpush1.bf16.msra.mxu0 %v386
  %565 = vmatprep.subr.bf16.mxu0 %v391
  %566 = vmatpush1.bf16.msra.mxu0 %v390
  %567 = vmatprep.subr.bf16.mxu0 %v395
  %568 = vmatpush1.bf16.msra.mxu0 %v394
  %569 = vmatprep.subr.bf16.mxu0 %v399
  %570 = vmatpush1.bf16.msra.mxu0 %v398
  %571 = vmatprep.subr.bf16.mxu0 %v403
  %572 = vmatpush1.bf16.msra.mxu0 %v402
  %573 = vmatprep.mubr.bf16.mxu0 %v133
  %574 = vmatmul.mubr.bf16.gmra.mrb[0].mxu0 %v132
  %v575 = vpop.f32.mrb[0].mxu0
  %v576 = vadd.f32 %v99, %v575
  %v577 = vpop.f32.mrb[0].mxu0
  %v578 = vadd.f32 %v103, %v577
  %v579 = vpop.f32.mrb[0].mxu0
  %v580 = vadd.f32 %v99, %v579
  %v581 = vpop.f32.mrb[0].mxu0
  %v582 = vadd.f32 %v103, %v581
  %583 = vmatprep.mubr.bf16.mxu0 %v135
  %584 = vmatmul.mubr.bf16.gmra.mrb[0].mxu0 %v134
  %v585 = vpop.f32.mrb[0].mxu0
  %v586 = vadd.f32 %v99, %v585
  %v587 = vpop.f32.mrb[0].mxu0
  %v588 = vadd.f32 %v103, %v587
  %v589 = vpop.f32.mrb[0].mxu0
  %v590 = vadd.f32 %v99, %v589
  %v591 = vpop.f32.mrb[0].mxu0
  %v592 = vadd.f32 %v103, %v591
  %593 = vmatprep.mubr.bf16.mxu0 %v137
  %594 = vmatmul.mubr.bf16.gmra.mrb[0].mxu0 %v136
  %v595 = vpop.f32.mrb[0].mxu0
  %v596 = vadd.f32 %v99, %v595
  %v597 = vpop.f32.mrb[0].mxu0
  %v598 = vadd.f32 %v103, %v597
  %v599 = vpop.f32.mrb[0].mxu0
  %v600 = vadd.f32 %v99, %v599
  %v601 = vpop.f32.mrb[0].mxu0
  %v602 = vadd.f32 %v103, %v601
  %603 = vmatprep.mubr.bf16.mxu0 %v139
  %604 = vmatmul.mubr.bf16.gmra.mrb[0].mxu0 %v138
  %v605 = vpop.f32.mrb[0].mxu0
  %v606 = vadd.f32 %v99, %v605
  %v607 = vpop.f32.mrb[0].mxu0
  %v608 = vadd.f32 %v103, %v607
  %v609 = vpop.f32.mrb[0].mxu0
  %v610 = vadd.f32 %v99, %v609
  %v611 = vpop.f32.mrb[0].mxu0
  %v612 = vadd.f32 %v103, %v611
  %613 = vdwg.mxu0
  %v614 = vpack.c.bf16 %v507, %v503
  %v615 = vpack.c.bf16 %v509, %v505
  %v616 = vpack.c.bf16 %v580, %v576
  %v617 = vpack.c.bf16 %v582, %v578
  %v618 = vpack.c.bf16 %v517, %v513
  %v619 = vpack.c.bf16 %v519, %v515
  %v620 = vpack.c.bf16 %v590, %v586
  %v621 = vpack.c.bf16 %v592, %v588
  %v622 = vpack.c.bf16 %v527, %v523
  %v623 = vpack.c.bf16 %v529, %v525
  %v624 = vpack.c.bf16 %v600, %v596
  %v625 = vpack.c.bf16 %v602, %v598
  %v626 = vpack.c.bf16 %v537, %v533
  %v627 = vpack.c.bf16 %v539, %v535
  %v628 = vpack.c.bf16 %v610, %v606
  %v629 = vpack.c.bf16 %v612, %v608
  %v646 = vunpack.c.l.b16 %v614
  %v647 = vunpack.c.l.b16 %v615
  %v648 = vunpack.c.l.b16 %v616
  %v649 = vunpack.c.l.b16 %v617
  %v650 = vunpack.c.h.b16 %v614
  %v651 = vunpack.c.h.b16 %v615
  %v652 = vunpack.c.h.b16 %v616
  %v653 = vunpack.c.h.b16 %v617
  %v654 = vunpack.c.l.b16 %v618
  %v655 = vunpack.c.l.b16 %v619
  %v656 = vunpack.c.l.b16 %v620
  %v657 = vunpack.c.l.b16 %v621
  %v658 = vunpack.c.h.b16 %v618
  %v659 = vunpack.c.h.b16 %v619
  %v660 = vunpack.c.h.b16 %v620
  %v661 = vunpack.c.h.b16 %v621
  %v662 = vunpack.c.l.b16 %v622
  %v663 = vunpack.c.l.b16 %v623
  %v664 = vunpack.c.l.b16 %v624
  %v665 = vunpack.c.l.b16 %v625
  %v666 = vunpack.c.h.b16 %v622
  %v667 = vunpack.c.h.b16 %v623
  %v668 = vunpack.c.h.b16 %v624
  %v669 = vunpack.c.h.b16 %v625
  %v670 = vunpack.c.l.b16 %v626
  %v671 = vunpack.c.l.b16 %v627
  %v672 = vunpack.c.l.b16 %v628
  %v673 = vunpack.c.l.b16 %v629
  %v674 = vunpack.c.h.b16 %v626
  %v675 = vunpack.c.h.b16 %v627
  %v676 = vunpack.c.h.b16 %v628
  %v677 = vunpack.c.h.b16 %v629
  %v678 = vpack.c.b16 %v647, %v646
  %v679 = vpack.c.b16 %v649, %v648
  %v680 = vpack.c.b16 %v651, %v650
  %v681 = vpack.c.b16 %v653, %v652
  %v682 = vpack.c.b16 %v655, %v654
  %v683 = vpack.c.b16 %v657, %v656
  %v684 = vpack.c.b16 %v659, %v658
  %v685 = vpack.c.b16 %v661, %v660
  %v686 = vpack.c.b16 %v663, %v662
  %v687 = vpack.c.b16 %v665, %v664
  %v688 = vpack.c.b16 %v667, %v666
  %v689 = vpack.c.b16 %v669, %v668
  %v690 = vpack.c.b16 %v671, %v670
  %v691 = vpack.c.b16 %v673, %v672
  %v692 = vpack.c.b16 %v675, %v674
  %v693 = vpack.c.b16 %v677, %v676
  %710 = vst [vmem:[%s3] sm:$0xff] %v678
  %711 = vst [vmem:[%s3 + $0x8] sm:$0xff] %v679
  %712 = vst [vmem:[%s3 + $0x10] sm:$0xff] %v680
  %713 = vst [vmem:[%s3 + $0x18] sm:$0xff] %v681
  %714 = vst [vmem:[%s3 + $0x20] sm:$0xff] %v682
  %715 = vst [vmem:[%s3 + $0x28] sm:$0xff] %v683
  %716 = vst [vmem:[%s3 + $0x30] sm:$0xff] %v684
  %717 = vst [vmem:[%s3 + $0x38] sm:$0xff] %v685
  %718 = vst [vmem:[%s3 + $0x40] sm:$0xff] %v686
  %719 = vst [vmem:[%s3 + $0x48] sm:$0xff] %v687
  %720 = vst [vmem:[%s3 + $0x50] sm:$0xff] %v688
  %721 = vst [vmem:[%s3 + $0x58] sm:$0xff] %v689
  %722 = vst [vmem:[%s3 + $0x60] sm:$0xff] %v690
  %723 = vst [vmem:[%s3 + $0x68] sm:$0xff] %v691
  %724 = vst [vmem:[%s3 + $0x70] sm:$0xff] %v692
  %725 = vst [vmem:[%s3 + $0x78] sm:$0xff] %v693
  // Predicated region
  $region14: #{_lambda_.40} parent=0 // pred_check
    _
  $region15: #{_lambda_.40} parent=0 // pred_check_branch
    %727 = sbr.rel (0) target = $region17
  $region16: #{_lambda_.40} parent=0 // pred_region
    _
  $region17: #{_lambda_.40} parent=0 // pred_fallthru
    _
  // Predicated region
  $region18: #{_lambda_.40} parent=0 // pred_check
    _
  $region19: #{_lambda_.40} parent=0 // pred_check_branch
    %729 = sbr.rel (0) target = $region21
  $region20: #{_lambda_.40} parent=0 // pred_region
    _
  $region21: #{_lambda_.40} parent=0 // pred_fallthru
    _

// kernel: _lambda_.41
$region0: #{_lambda_.41}
  #allocation0 [shape = 'u32[]', space=smem, size = 0x4, offset = 0x4, fixed_abs, tag = 'smem constant byte address 0x4 - core index']
  #allocation1 [shape = 'u32[144,128]{1,0:T(1,128)}', space=vmem, size = 0x12000, scoped, tag = 'internal scratch']
  %s0 = inlined_call_operand.vmem [shape: bf16[256,256], index: 0, kind: input, shape index: {}]
  %s1 = inlined_call_operand.vmem [shape: bf16[256,128], index: 1, kind: input, shape index: {}]
  %s2 = inlined_call_operand.vmem [shape: f32[1,128], index: 2, kind: input, shape index: {}]
  %s3 = inlined_call_operand.vmem [shape: bf16[256,128], index: 3, kind: output, shape index: {}]
  %s4 = sld [smem:[#allocation0]]
  $region22: #{_lambda_.41} parent=0
    _
  %s6 = ssub.s32 1, %s4
  %s7 = scalar_select 0, %s6, %s4
  // Predicated region
  $region2: #{_lambda_.41} parent=0 // pred_check
    _
  $region3: #{_lambda_.41} parent=0 // pred_check_branch
    %9 = sbr.rel (0) target = $region5
  $region4: #{_lambda_.41} parent=0 // pred_region
    _
  $region5: #{_lambda_.41} parent=0 // pred_fallthru
    _
  // Predicated region
  $region6: #{_lambda_.41} parent=0 // pred_check
    _
  $region7: #{_lambda_.41} parent=0 // pred_check_branch
    %11 = sbr.rel (0) target = $region9
  $region8: #{_lambda_.41} parent=0 // pred_region
    _
  $region9: #{_lambda_.41} parent=0 // pred_fallthru
    _
  // Predicated region
  $region10: #{_lambda_.41} parent=0 // pred_check
    _
  $region11: #{_lambda_.41} parent=0 // pred_check_branch
    %13 = sbr.rel (0) target = $region13
  $region12: #{_lambda_.41} parent=0 // pred_region
    _
  $region13: #{_lambda_.41} parent=0 // pred_fallthru
    _
  %v15 = vld [vmem:[%s0] sm:$0xff]
  %v16 = vld [vmem:[%s0 + $0x8] sm:$0xff]
  %v17 = vld [vmem:[%s0 + $0x10] sm:$0xff]
  %v18 = vld [vmem:[%s0 + $0x18] sm:$0xff]
  %v19 = vld [vmem:[%s0 + $0x20] sm:$0xff]
  %v20 = vld [vmem:[%s0 + $0x28] sm:$0xff]
  %v21 = vld [vmem:[%s0 + $0x30] sm:$0xff]
  %v22 = vld [vmem:[%s0 + $0x38] sm:$0xff]
  %v23 = vld [vmem:[%s0 + $0x40] sm:$0xff]
  %v24 = vld [vmem:[%s0 + $0x48] sm:$0xff]
  %v25 = vld [vmem:[%s0 + $0x50] sm:$0xff]
  %v26 = vld [vmem:[%s0 + $0x58] sm:$0xff]
  %v27 = vld [vmem:[%s0 + $0x60] sm:$0xff]
  %v28 = vld [vmem:[%s0 + $0x68] sm:$0xff]
  %v29 = vld [vmem:[%s0 + $0x70] sm:$0xff]
  %v30 = vld [vmem:[%s0 + $0x78] sm:$0xff]
  %v31 = vld [vmem:[%s0 + $0x80] sm:$0xff]
  %v32 = vld [vmem:[%s0 + $0x88] sm:$0xff]
  %v33 = vld [vmem:[%s0 + $0x90] sm:$0xff]
  %v34 = vld [vmem:[%s0 + $0x98] sm:$0xff]
  %v35 = vld [vmem:[%s0 + $0xa0] sm:$0xff]
  %v36 = vld [vmem:[%s0 + $0xa8] sm:$0xff]
  %v37 = vld [vmem:[%s0 + $0xb0] sm:$0xff]
  %v38 = vld [vmem:[%s0 + $0xb8] sm:$0xff]
  %v39 = vld [vmem:[%s0 + $0xc0] sm:$0xff]
  %v40 = vld [vmem:[%s0 + $0xc8] sm:$0xff]
  %v41 = vld [vmem:[%s0 + $0xd0] sm:$0xff]
  %v42 = vld [vmem:[%s0 + $0xd8] sm:$0xff]
  %v43 = vld [vmem:[%s0 + $0xe0] sm:$0xff]
  %v44 = vld [vmem:[%s0 + $0xe8] sm:$0xff]
  %v45 = vld [vmem:[%s0 + $0xf0] sm:$0xff]
  %v46 = vld [vmem:[%s0 + $0xf8] sm:$0xff]
  %v47 = vld [vmem:[%s1] sm:$0xf]
  %v48 = vld [vmem:[%s1 + $0x4] sm:$0xf]
  %v49 = vld [vmem:[%s1 + $0x8] sm:$0xf]
  %v50 = vld [vmem:[%s1 + $0xc] sm:$0xf]
  %v51 = vld [vmem:[%s1 + $0x10] sm:$0xf]
  %v52 = vld [vmem:[%s1 + $0x14] sm:$0xf]
  %v53 = vld [vmem:[%s1 + $0x18] sm:$0xf]
  %v54 = vld [vmem:[%s1 + $0x1c] sm:$0xf]
  %v55 = vld [vmem:[%s1 + $0x20] sm:$0xf]
  %v56 = vld [vmem:[%s1 + $0x24] sm:$0xf]
  %v57 = vld [vmem:[%s1 + $0x28] sm:$0xf]
  %v58 = vld [vmem:[%s1 + $0x2c] sm:$0xf]
  %v59 = vld [vmem:[%s1 + $0x30] sm:$0xf]
  %v60 = vld [vmem:[%s1 + $0x34] sm:$0xf]
  %v61 = vld [vmem:[%s1 + $0x38] sm:$0xf]
  %v62 = vld [vmem:[%s1 + $0x3c] sm:$0xf]
  %v63 = vld [vmem:[%s1 + $0x40] sm:$0xf]
  %v64 = vld [vmem:[%s1 + $0x44] sm:$0xf]
  %v65 = vld [vmem:[%s1 + $0x48] sm:$0xf]
  %v66 = vld [vmem:[%s1 + $0x4c] sm:$0xf]
  %v67 = vld [vmem:[%s1 + $0x50] sm:$0xf]
  %v68 = vld [vmem:[%s1 + $0x54] sm:$0xf]
  %v69 = vld [vmem:[%s1 + $0x58] sm:$0xf]
  %v70 = vld [vmem:[%s1 + $0x5c] sm:$0xf]
  %v71 = vld [vmem:[%s1 + $0x60] sm:$0xf]
  %v72 = vld [vmem:[%s1 + $0x64] sm:$0xf]
  %v73 = vld [vmem:[%s1 + $0x68] sm:$0xf]
  %v74 = vld [vmem:[%s1 + $0x6c] sm:$0xf]
  %v75 = vld [vmem:[%s1 + $0x70] sm:$0xf]
  %v76 = vld [vmem:[%s1 + $0x74] sm:$0xf]
  %v77 = vld [vmem:[%s1 + $0x78] sm:$0xf]
  %v78 = vld [vmem:[%s1 + $0x7c] sm:$0xf]
  %v79 = vld [vmem:[%s2] sm:$0x1]
  %v81 = vlaneseq
  %v82 = vshrl.u32 %v81, 7
  %v83 = vsub.s32 0, %v82
  %v84 = vrot.slane %v79, %v83
  %v118 = vunpack.c.l.b16 %v15
  %v119 = vunpack.c.h.b16 %v15
  %v120 = vunpack.c.l.b16 %v16
  %v121 = vunpack.c.h.b16 %v16
  %v122 = vunpack.c.l.b16 %v17
  %v123 = vunpack.c.h.b16 %v17
  %v124 = vunpack.c.l.b16 %v18
  %v125 = vunpack.c.h.b16 %v18
  %v126 = vunpack.c.l.b16 %v19
  %v127 = vunpack.c.h.b16 %v19
  %v128 = vunpack.c.l.b16 %v20
  %v129 = vunpack.c.h.b16 %v20
  %v130 = vunpack.c.l.b16 %v21
  %v131 = vunpack.c.h.b16 %v21
  %v132 = vunpack.c.l.b16 %v22
  %v133 = vunpack.c.h.b16 %v22
  %v134 = vunpack.c.l.b16 %v23
  %v135 = vunpack.c.h.b16 %v23
  %v136 = vunpack.c.l.b16 %v24
  %v137 = vunpack.c.h.b16 %v24
  %v138 = vunpack.c.l.b16 %v25
  %v139 = vunpack.c.h.b16 %v25
  %v140 = vunpack.c.l.b16 %v26
  %v141 = vunpack.c.h.b16 %v26
  %v142 = vunpack.c.l.b16 %v27
  %v143 = vunpack.c.h.b16 %v27
  %v144 = vunpack.c.l.b16 %v28
  %v145 = vunpack.c.h.b16 %v28
  %v146 = vunpack.c.l.b16 %v29
  %v147 = vunpack.c.h.b16 %v29
  %v148 = vunpack.c.l.b16 %v30
  %v149 = vunpack.c.h.b16 %v30
  %v150 = vunpack.c.l.b16 %v31
  %v151 = vunpack.c.h.b16 %v31
  %v152 = vunpack.c.l.b16 %v32
  %v153 = vunpack.c.h.b16 %v32
  %v154 = vunpack.c.l.b16 %v33
  %v155 = vunpack.c.h.b16 %v33
  %v156 = vunpack.c.l.b16 %v34
  %v157 = vunpack.c.h.b16 %v34
  %v158 = vunpack.c.l.b16 %v35
  %v159 = vunpack.c.h.b16 %v35
  %v160 = vunpack.c.l.b16 %v36
  %v161 = vunpack.c.h.b16 %v36
  %v162 = vunpack.c.l.b16 %v37
  %v163 = vunpack.c.h.b16 %v37
  %v164 = vunpack.c.l.b16 %v38
  %v165 = vunpack.c.h.b16 %v38
  %v166 = vunpack.c.l.b16 %v39
  %v167 = vunpack.c.h.b16 %v39
  %v168 = vunpack.c.l.b16 %v40
  %v169 = vunpack.c.h.b16 %v40
  %v170 = vunpack.c.l.b16 %v41
  %v171 = vunpack.c.h.b16 %v41
  %v172 = vunpack.c.l.b16 %v42
  %v173 = vunpack.c.h.b16 %v42
  %v174 = vunpack.c.l.b16 %v43
  %v175 = vunpack.c.h.b16 %v43
  %v176 = vunpack.c.l.b16 %v44
  %v177 = vunpack.c.h.b16 %v44
  %v178 = vunpack.c.l.b16 %v45
  %v179 = vunpack.c.h.b16 %v45
  %v180 = vunpack.c.l.b16 %v46
  %v181 = vunpack.c.h.b16 %v46
  %v182 = vpack.c.b16 %v120, %v118
  %v183 = vpack.c.b16 %v121, %v119
  %v184 = vpack.c.b16 %v124, %v122
  %v185 = vpack.c.b16 %v125, %v123
  %v186 = vpack.c.b16 %v128, %v126
  %v187 = vpack.c.b16 %v129, %v127
  %v188 = vpack.c.b16 %v132, %v130
  %v189 = vpack.c.b16 %v133, %v131
  %v190 = vpack.c.b16 %v136, %v134
  %v191 = vpack.c.b16 %v137, %v135
  %v192 = vpack.c.b16 %v140, %v138
  %v193 = vpack.c.b16 %v141, %v139
  %v194 = vpack.c.b16 %v144, %v142
  %v195 = vpack.c.b16 %v145, %v143
  %v196 = vpack.c.b16 %v148, %v146
  %v197 = vpack.c.b16 %v149, %v147
  %v198 = vpack.c.b16 %v152, %v150
  %v199 = vpack.c.b16 %v153, %v151
  %v200 = vpack.c.b16 %v156, %v154
  %v201 = vpack.c.b16 %v157, %v155
  %v202 = vpack.c.b16 %v160, %v158
  %v203 = vpack.c.b16 %v161, %v159
  %v204 = vpack.c.b16 %v164, %v162
  %v205 = vpack.c.b16 %v165, %v163
  %v206 = vpack.c.b16 %v168, %v166
  %v207 = vpack.c.b16 %v169, %v167
  %v208 = vpack.c.b16 %v172, %v170
  %v209 = vpack.c.b16 %v173, %v171
  %v210 = vpack.c.b16 %v176, %v174
  %v211 = vpack.c.b16 %v177, %v175
  %v212 = vpack.c.b16 %v180, %v178
  %v213 = vpack.c.b16 %v181, %v179
  %v278 = vunpack.c.l.b16 %v47
  %v279 = vunpack.c.l.b16 %v48
  %v280 = vunpack.c.l.b16 %v49
  %v281 = vunpack.c.l.b16 %v50
  %v282 = vunpack.c.l.b16 %v51
  %v283 = vunpack.c.l.b16 %v52
  %v284 = vunpack.c.l.b16 %v53
  %v285 = vunpack.c.l.b16 %v54
  %v286 = vunpack.c.l.b16 %v55
  %v287 = vunpack.c.l.b16 %v56
  %v288 = vunpack.c.l.b16 %v57
  %v289 = vunpack.c.l.b16 %v58
  %v290 = vunpack.c.l.b16 %v59
  %v291 = vunpack.c.l.b16 %v60
  %v292 = vunpack.c.l.b16 %v61
  %v293 = vunpack.c.l.b16 %v62
  %v294 = vunpack.c.l.b16 %v63
  %v295 = vunpack.c.l.b16 %v64
  %v296 = vunpack.c.l.b16 %v65
  %v297 = vunpack.c.l.b16 %v66
  %v298 = vunpack.c.l.b16 %v67
  %v299 = vunpack.c.l.b16 %v68
  %v300 = vunpack.c.l.b16 %v69
  %v301 = vunpack.c.l.b16 %v70
  %v302 = vunpack.c.l.b16 %v71
  %v303 = vunpack.c.l.b16 %v72
  %v304 = vunpack.c.l.b16 %v73
  %v305 = vunpack.c.l.b16 %v74
  %v306 = vunpack.c.l.b16 %v75
  %v307 = vunpack.c.l.b16 %v76
  %v308 = vunpack.c.l.b16 %v77
  %v309 = vunpack.c.l.b16 %v78
  %v310 = vpack.c.b16 %v279, %v278
  %v311 = vpack.c.b16 %v281, %v280
  %v312 = vpack.c.b16 %v283, %v282
  %v313 = vpack.c.b16 %v285, %v284
  %v314 = vpack.c.b16 %v287, %v286
  %v315 = vpack.c.b16 %v289, %v288
  %v316 = vpack.c.b16 %v291, %v290
  %v317 = vpack.c.b16 %v293, %v292
  %v318 = vpack.c.b16 %v295, %v294
  %v319 = vpack.c.b16 %v297, %v296
  %v320 = vpack.c.b16 %v299, %v298
  %v321 = vpack.c.b16 %v301, %v300
  %v322 = vpack.c.b16 %v303, %v302
  %v323 = vpack.c.b16 %v305, %v304
  %v324 = vpack.c.b16 %v307, %v306
  %v325 = vpack.c.b16 %v309, %v308
  %342 = vmatprep.subr.bf16.mxu0 0
  %343 = vmatpush1.bf16.msra.mxu0 %v310
  %344 = vmatprep.subr.bf16.mxu0 0
  %345 = vmatpush1.bf16.msra.mxu0 %v311
  %346 = vmatprep.subr.bf16.mxu0 0
  %347 = vmatpush1.bf16.msra.mxu0 %v312
  %348 = vmatprep.subr.bf16.mxu0 0
  %349 = vmatpush1.bf16.msra.mxu0 %v313
  %350 = vmatprep.subr.bf16.mxu0 0
  %351 = vmatpush1.bf16.msra.mxu0 %v314
  %352 = vmatprep.subr.bf16.mxu0 0
  %353 = vmatpush1.bf16.msra.mxu0 %v315
  %354 = vmatprep.subr.bf16.mxu0 0
  %355 = vmatpush1.bf16.msra.mxu0 %v316
  %356 = vmatprep.subr.bf16.mxu0 0
  %357 = vmatpush1.bf16.msra.mxu0 %v317
  %358 = vmatprep.subr.bf16.mxu0 0
  %359 = vmatpush1.bf16.msra.mxu0 %v318
  %360 = vmatprep.subr.bf16.mxu0 0
  %361 = vmatpush1.bf16.msra.mxu0 %v319
  %362 = vmatprep.subr.bf16.mxu0 0
  %363 = vmatpush1.bf16.msra.mxu0 %v320
  %364 = vmatprep.subr.bf16.mxu0 0
  %365 = vmatpush1.bf16.msra.mxu0 %v321
  %366 = vmatprep.subr.bf16.mxu0 0
  %367 = vmatpush1.bf16.msra.mxu0 %v322
  %368 = vmatprep.subr.bf16.mxu0 0
  %369 = vmatpush1.bf16.msra.mxu0 %v323
  %370 = vmatprep.subr.bf16.mxu0 0
  %371 = vmatpush1.bf16.msra.mxu0 %v324
  %372 = vmatprep.subr.bf16.mxu0 0
  %373 = vmatpush1.bf16.msra.mxu0 %v325
  %374 = vmatprep.mubr.bf16.mxu0 %v183
  %375 = vmatmul.mubr.bf16.gmra.mrb[0].mxu0 %v182
  %v376 = vpop.f32.mrb[0].mxu0
  %v377 = vadd.f32 %v84, %v376
  %v378 = vpop.f32.mrb[0].mxu0
  %v379 = vpop.f32.mrb[0].mxu0
  %v380 = vadd.f32 %v84, %v379
  %v381 = vpop.f32.mrb[0].mxu0
  %382 = vmatprep.mubr.bf16.mxu0 %v185
  %383 = vmatmul.mubr.bf16.gmra.mrb[0].mxu0 %v184
  %v384 = vpop.f32.mrb[0].mxu0
  %v385 = vadd.f32 %v84, %v384
  %v386 = vpop.f32.mrb[0].mxu0
  %v387 = vpop.f32.mrb[0].mxu0
  %v388 = vadd.f32 %v84, %v387
  %v389 = vpop.f32.mrb[0].mxu0
  %390 = vmatprep.mubr.bf16.mxu0 %v187
  %391 = vmatmul.mubr.bf16.gmra.mrb[0].mxu0 %v186
  %v392 = vpop.f32.mrb[0].mxu0
  %v393 = vadd.f32 %v84, %v392
  %v394 = vpop.f32.mrb[0].mxu0
  %v395 = vpop.f32.mrb[0].mxu0
  %v396 = vadd.f32 %v84, %v395
  %v397 = vpop.f32.mrb[0].mxu0
  %398 = vmatprep.mubr.bf16.mxu0 %v189
  %399 = vmatmul.mubr.bf16.gmra.mrb[0].mxu0 %v188
  %v400 = vpop.f32.mrb[0].mxu0
  %v401 = vadd.f32 %v84, %v400
  %v402 = vpop.f32.mrb[0].mxu0
  %v403 = vpop.f32.mrb[0].mxu0
  %v404 = vadd.f32 %v84, %v403
  %v405 = vpop.f32.mrb[0].mxu0
  %406 = vmatprep.mubr.bf16.mxu0 %v191
  %407 = vmatmul.mubr.bf16.gmra.mrb[0].mxu0 %v190
  %v408 = vpop.f32.mrb[0].mxu0
  %v409 = vadd.f32 %v84, %v408
  %v410 = vpop.f32.mrb[0].mxu0
  %v411 = vpop.f32.mrb[0].mxu0
  %v412 = vadd.f32 %v84, %v411
  %v413 = vpop.f32.mrb[0].mxu0
  %414 = vmatprep.mubr.bf16.mxu0 %v193
  %415 = vmatmul.mubr.bf16.gmra.mrb[0].mxu0 %v192
  %v416 = vpop.f32.mrb[0].mxu0
  %v417 = vadd.f32 %v84, %v416
  %v418 = vpop.f32.mrb[0].mxu0
  %v419 = vpop.f32.mrb[0].mxu0
  %v420 = vadd.f32 %v84, %v419
  %v421 = vpop.f32.mrb[0].mxu0
  %422 = vmatprep.mubr.bf16.mxu0 %v195
  %423 = vmatmul.mubr.bf16.gmra.mrb[0].mxu0 %v194
  %v424 = vpop.f32.mrb[0].mxu0
  %v425 = vadd.f32 %v84, %v424
  %v426 = vpop.f32.mrb[0].mxu0
  %v427 = vpop.f32.mrb[0].mxu0
  %v428 = vadd.f32 %v84, %v427
  %v429 = vpop.f32.mrb[0].mxu0
  %430 = vmatprep.mubr.bf16.mxu0 %v197
  %431 = vmatmul.mubr.bf16.gmra.mrb[0].mxu0 %v196
  %v432 = vpop.f32.mrb[0].mxu0
  %v433 = vadd.f32 %v84, %v432
  %v434 = vpop.f32.mrb[0].mxu0
  %v435 = vpop.f32.mrb[0].mxu0
  %v436 = vadd.f32 %v84, %v435
  %v437 = vpop.f32.mrb[0].mxu0
  %438 = vmatprep.mubr.bf16.mxu0 %v199
  %439 = vmatmul.mubr.bf16.gmra.mrb[0].mxu0 %v198
  %v440 = vpop.f32.mrb[0].mxu0
  %v441 = vadd.f32 %v84, %v440
  %v442 = vpop.f32.mrb[0].mxu0
  %v443 = vpop.f32.mrb[0].mxu0
  %v444 = vadd.f32 %v84, %v443
  %v445 = vpop.f32.mrb[0].mxu0
  %446 = vmatprep.mubr.bf16.mxu0 %v201
  %447 = vmatmul.mubr.bf16.gmra.mrb[0].mxu0 %v200
  %v448 = vpop.f32.mrb[0].mxu0
  %v449 = vadd.f32 %v84, %v448
  %v450 = vpop.f32.mrb[0].mxu0
  %v451 = vpop.f32.mrb[0].mxu0
  %v452 = vadd.f32 %v84, %v451
  %v453 = vpop.f32.mrb[0].mxu0
  %454 = vmatprep.mubr.bf16.mxu0 %v203
  %455 = vmatmul.mubr.bf16.gmra.mrb[0].mxu0 %v202
  %v456 = vpop.f32.mrb[0].mxu0
  %v457 = vadd.f32 %v84, %v456
  %v458 = vpop.f32.mrb[0].mxu0
  %v459 = vpop.f32.mrb[0].mxu0
  %v460 = vadd.f32 %v84, %v459
  %v461 = vpop.f32.mrb[0].mxu0
  %462 = vmatprep.mubr.bf16.mxu0 %v205
  %463 = vmatmul.mubr.bf16.gmra.mrb[0].mxu0 %v204
  %v464 = vpop.f32.mrb[0].mxu0
  %v465 = vadd.f32 %v84, %v464
  %v466 = vpop.f32.mrb[0].mxu0
  %v467 = vpop.f32.mrb[0].mxu0
  %v468 = vadd.f32 %v84, %v467
  %v469 = vpop.f32.mrb[0].mxu0
  %470 = vmatprep.mubr.bf16.mxu0 %v207
  %471 = vmatmul.mubr.bf16.gmra.mrb[0].mxu0 %v206
  %v472 = vpop.f32.mrb[0].mxu0
  %v473 = vadd.f32 %v84, %v472
  %v474 = vpop.f32.mrb[0].mxu0
  %v475 = vpop.f32.mrb[0].mxu0
  %v476 = vadd.f32 %v84, %v475
  %v477 = vpop.f32.mrb[0].mxu0
  %478 = vmatprep.mubr.bf16.mxu0 %v209
  %479 = vmatmul.mubr.bf16.gmra.mrb[0].mxu0 %v208
  %v480 = vpop.f32.mrb[0].mxu0
  %v481 = vadd.f32 %v84, %v480
  %v482 = vpop.f32.mrb[0].mxu0
  %v483 = vpop.f32.mrb[0].mxu0
  %v484 = vadd.f32 %v84, %v483
  %v485 = vpop.f32.mrb[0].mxu0
  %486 = vmatprep.mubr.bf16.mxu0 %v211
  %487 = vmatmul.mubr.bf16.gmra.mrb[0].mxu0 %v210
  %v488 = vpop.f32.mrb[0].mxu0
  %v489 = vadd.f32 %v84, %v488
  %v490 = vpop.f32.mrb[0].mxu0
  %v491 = vpop.f32.mrb[0].mxu0
  %v492 = vadd.f32 %v84, %v491
  %v493 = vpop.f32.mrb[0].mxu0
  %494 = vmatprep.mubr.bf16.mxu0 %v213
  %495 = vmatmul.mubr.bf16.gmra.mrb[0].mxu0 %v212
  %v496 = vpop.f32.mrb[0].mxu0
  %v497 = vadd.f32 %v84, %v496
  %v498 = vpop.f32.mrb[0].mxu0
  %v499 = vpop.f32.mrb[0].mxu0
  %v500 = vadd.f32 %v84, %v499
  %v501 = vpop.f32.mrb[0].mxu0
  %502 = vdwg.mxu0
  %v503 = vmax.f32 %v377, 0.0
  %v504 = vmax.f32 %v380, 0.0
  %v505 = vmax.f32 %v385, 0.0
  %v506 = vmax.f32 %v388, 0.0
  %v507 = vmax.f32 %v393, 0.0
  %v508 = vmax.f32 %v396, 0.0
  %v509 = vmax.f32 %v401, 0.0
  %v510 = vmax.f32 %v404, 0.0
  %v511 = vmax.f32 %v409, 0.0
  %v512 = vmax.f32 %v412, 0.0
  %v513 = vmax.f32 %v417, 0.0
  %v514 = vmax.f32 %v420, 0.0
  %v515 = vmax.f32 %v425, 0.0
  %v516 = vmax.f32 %v428, 0.0
  %v517 = vmax.f32 %v433, 0.0
  %v518 = vmax.f32 %v436, 0.0
  %v519 = vmax.f32 %v441, 0.0
  %v520 = vmax.f32 %v444, 0.0
  %v521 = vmax.f32 %v449, 0.0
  %v522 = vmax.f32 %v452, 0.0
  %v523 = vmax.f32 %v457, 0.0
  %v524 = vmax.f32 %v460, 0.0
  %v525 = vmax.f32 %v465, 0.0
  %v526 = vmax.f32 %v468, 0.0
  %v527 = vmax.f32 %v473, 0.0
  %v528 = vmax.f32 %v476, 0.0
  %v529 = vmax.f32 %v481, 0.0
  %v530 = vmax.f32 %v484, 0.0
  %v531 = vmax.f32 %v489, 0.0
  %v532 = vmax.f32 %v492, 0.0
  %v533 = vmax.f32 %v497, 0.0
  %v534 = vmax.f32 %v500, 0.0
  %v535 = vpack.c.bf16 %v504, %v503
  %v536 = vpack.c.bf16 %v506, %v505
  %v537 = vpack.c.bf16 %v508, %v507
  %v538 = vpack.c.bf16 %v510, %v509
  %v539 = vpack.c.bf16 %v512, %v511
  %v540 = vpack.c.bf16 %v514, %v513
  %v541 = vpack.c.bf16 %v516, %v515
  %v542 = vpack.c.bf16 %v518, %v517
  %v543 = vpack.c.bf16 %v520, %v519
  %v544 = vpack.c.bf16 %v522, %v521
  %v545 = vpack.c.bf16 %v524, %v523
  %v546 = vpack.c.bf16 %v526, %v525
  %v547 = vpack.c.bf16 %v528, %v527
  %v548 = vpack.c.bf16 %v530, %v529
  %v549 = vpack.c.bf16 %v532, %v531
  %v550 = vpack.c.bf16 %v534, %v533
  %v567 = vunpack.c.l.b16 %v535
  %v568 = vunpack.c.h.b16 %v535
  %v569 = vunpack.c.l.b16 %v536
  %v570 = vunpack.c.h.b16 %v536
  %v571 = vunpack.c.l.b16 %v537
  %v572 = vunpack.c.h.b16 %v537
  %v573 = vunpack.c.l.b16 %v538
  %v574 = vunpack.c.h.b16 %v538
  %v575 = vunpack.c.l.b16 %v539
  %v576 = vunpack.c.h.b16 %v539
  %v577 = vunpack.c.l.b16 %v540
  %v578 = vunpack.c.h.b16 %v540
  %v579 = vunpack.c.l.b16 %v541
  %v580 = vunpack.c.h.b16 %v541
  %v581 = vunpack.c.l.b16 %v542
  %v582 = vunpack.c.h.b16 %v542
  %v583 = vunpack.c.l.b16 %v543
  %v584 = vunpack.c.h.b16 %v543
  %v585 = vunpack.c.l.b16 %v544
  %v586 = vunpack.c.h.b16 %v544
  %v587 = vunpack.c.l.b16 %v545
  %v588 = vunpack.c.h.b16 %v545
  %v589 = vunpack.c.l.b16 %v546
  %v590 = vunpack.c.h.b16 %v546
  %v591 = vunpack.c.l.b16 %v547
  %v592 = vunpack.c.h.b16 %v547
  %v593 = vunpack.c.l.b16 %v548
  %v594 = vunpack.c.h.b16 %v548
  %v595 = vunpack.c.l.b16 %v549
  %v596 = vunpack.c.h.b16 %v549
  %v597 = vunpack.c.l.b16 %v550
  %v598 = vunpack.c.h.b16 %v550
  %v599 = vpack.c.b16 %v567, %v567
  %v600 = vpack.c.b16 %v568, %v568
  %v601 = vpack.c.b16 %v569, %v569
  %v602 = vpack.c.b16 %v570, %v570
  %v603 = vpack.c.b16 %v571, %v571
  %v604 = vpack.c.b16 %v572, %v572
  %v605 = vpack.c.b16 %v573, %v573
  %v606 = vpack.c.b16 %v574, %v574
  %v607 = vpack.c.b16 %v575, %v575
  %v608 = vpack.c.b16 %v576, %v576
  %v609 = vpack.c.b16 %v577, %v577
  %v610 = vpack.c.b16 %v578, %v578
  %v611 = vpack.c.b16 %v579, %v579
  %v612 = vpack.c.b16 %v580, %v580
  %v613 = vpack.c.b16 %v581, %v581
  %v614 = vpack.c.b16 %v582, %v582
  %v615 = vpack.c.b16 %v583, %v583
  %v616 = vpack.c.b16 %v584, %v584
  %v617 = vpack.c.b16 %v585, %v585
  %v618 = vpack.c.b16 %v586, %v586
  %v619 = vpack.c.b16 %v587, %v587
  %v620 = vpack.c.b16 %v588, %v588
  %v621 = vpack.c.b16 %v589, %v589
  %v622 = vpack.c.b16 %v590, %v590
  %v623 = vpack.c.b16 %v591, %v591
  %v624 = vpack.c.b16 %v592, %v592
  %v625 = vpack.c.b16 %v593, %v593
  %v626 = vpack.c.b16 %v594, %v594
  %v627 = vpack.c.b16 %v595, %v595
  %v628 = vpack.c.b16 %v596, %v596
  %v629 = vpack.c.b16 %v597, %v597
  %v630 = vpack.c.b16 %v598, %v598
  %663 = vst [vmem:[%s3] sm:$0xf] %v599
  %664 = vst [vmem:[%s3 + $0x4] sm:$0xf] %v600
  %665 = vst [vmem:[%s3 + $0x8] sm:$0xf] %v601
  %666 = vst [vmem:[%s3 + $0xc] sm:$0xf] %v602
  %667 = vst [vmem:[%s3 + $0x10] sm:$0xf] %v603
  %668 = vst [vmem:[%s3 + $0x14] sm:$0xf] %v604
  %669 = vst [vmem:[%s3 + $0x18] sm:$0xf] %v605
  %670 = vst [vmem:[%s3 + $0x1c] sm:$0xf] %v606
  %671 = vst [vmem:[%s3 + $0x20] sm:$0xf] %v607
  %672 = vst [vmem:[%s3 + $0x24] sm:$0xf] %v608
  %673 = vst [vmem:[%s3 + $0x28] sm:$0xf] %v609
  %674 = vst [vmem:[%s3 + $0x2c] sm:$0xf] %v610
  %675 = vst [vmem:[%s3 + $0x30] sm:$0xf] %v611
  %676 = vst [vmem:[%s3 + $0x34] sm:$0xf] %v612
  %677 = vst [vmem:[%s3 + $0x38] sm:$0xf] %v613
  %678 = vst [vmem:[%s3 + $0x3c] sm:$0xf] %v614
  %679 = vst [vmem:[%s3 + $0x40] sm:$0xf] %v615
  %680 = vst [vmem:[%s3 + $0x44] sm:$0xf] %v616
  %681 = vst [vmem:[%s3 + $0x48] sm:$0xf] %v617
  %682 = vst [vmem:[%s3 + $0x4c] sm:$0xf] %v618
  %683 = vst [vmem:[%s3 + $0x50] sm:$0xf] %v619
  %684 = vst [vmem:[%s3 + $0x54] sm:$0xf] %v620
  %685 = vst [vmem:[%s3 + $0x58] sm:$0xf] %v621
  %686 = vst [vmem:[%s3 + $0x5c] sm:$0xf] %v622
  %687 = vst [vmem:[%s3 + $0x60] sm:$0xf] %v623
  %688 = vst [vmem:[%s3 + $0x64] sm:$0xf] %v624
  %689 = vst [vmem:[%s3 + $0x68] sm:$0xf] %v625
  %690 = vst [vmem:[%s3 + $0x6c] sm:$0xf] %v626
  %691 = vst [vmem:[%s3 + $0x70] sm:$0xf] %v627
  %692 = vst [vmem:[%s3 + $0x74] sm:$0xf] %v628
  %693 = vst [vmem:[%s3 + $0x78] sm:$0xf] %v629
  %694 = vst [vmem:[%s3 + $0x7c] sm:$0xf] %v630
  // Predicated region
  $region14: #{_lambda_.41} parent=0 // pred_check
    _
  $region15: #{_lambda_.41} parent=0 // pred_check_branch
    %696 = sbr.rel (0) target = $region17
  $region16: #{_lambda_.41} parent=0 // pred_region
    _
  $region17: #{_lambda_.41} parent=0 // pred_fallthru
    _
  // Predicated region
  $region18: #{_lambda_.41} parent=0 // pred_check
    _
  $region19: #{_lambda_.41} parent=0 // pred_check_branch
    %698 = sbr.rel (0) target = $region21
  $region20: #{_lambda_.41} parent=0 // pred_region
    _
  $region21: #{_lambda_.41} parent=0 // pred_fallthru
    _

// kernel: _lambda_.43
$region0: #{_lambda_.43}
  #allocation0 [shape = 'u32[]', space=smem, size = 0x4, offset = 0x4, fixed_abs, tag = 'smem constant byte address 0x4 - core index']
  #allocation1 [shape = 'u32[144,128]{1,0:T(1,128)}', space=vmem, size = 0x12000, scoped, tag = 'internal scratch']
  %s0 = inlined_call_operand.vmem [shape: bf16[64,512], index: 0, kind: input, shape index: {}]
  %s1 = inlined_call_operand.vmem [shape: bf16[512,128], index: 1, kind: input, shape index: {}]
  %s2 = inlined_call_operand.vmem [shape: f32[1,128], index: 2, kind: input, shape index: {}]
  %s3 = inlined_call_operand.vmem [shape: bf16[64,128], index: 3, kind: output, shape index: {}]
  %s4 = sld [smem:[#allocation0]]
  $region22: #{_lambda_.43} parent=0
    _
  %s6 = ssub.s32 1, %s4
  %s7 = scalar_select 0, %s6, %s4
  // Predicated region
  $region2: #{_lambda_.43} parent=0 // pred_check
    _
  $region3: #{_lambda_.43} parent=0 // pred_check_branch
    %9 = sbr.rel (0) target = $region5
  $region4: #{_lambda_.43} parent=0 // pred_region
    _
  $region5: #{_lambda_.43} parent=0 // pred_fallthru
    _
  // Predicated region
  $region6: #{_lambda_.43} parent=0 // pred_check
    _
  $region7: #{_lambda_.43} parent=0 // pred_check_branch
    %11 = sbr.rel (0) target = $region9
  $region8: #{_lambda_.43} parent=0 // pred_region
    _
  $region9: #{_lambda_.43} parent=0 // pred_fallthru
    _
  // Predicated region
  $region10: #{_lambda_.43} parent=0 // pred_check
    _
  $region11: #{_lambda_.43} parent=0 // pred_check_branch
    %13 = sbr.rel (0) target = $region13
  $region12: #{_lambda_.43} parent=0 // pred_region
    _
  $region13: #{_lambda_.43} parent=0 // pred_fallthru
    _
  %v15 = vld [vmem:[%s0] sm:$0xff]
  %v16 = vld [vmem:[%s0 + $0x8] sm:$0xff]
  %v17 = vld [vmem:[%s0 + $0x10] sm:$0xff]
  %v18 = vld [vmem:[%s0 + $0x18] sm:$0xff]
  %v19 = vld [vmem:[%s0 + $0x20] sm:$0xff]
  %v20 = vld [vmem:[%s0 + $0x28] sm:$0xff]
  %v21 = vld [vmem:[%s0 + $0x30] sm:$0xff]
  %v22 = vld [vmem:[%s0 + $0x38] sm:$0xff]
  %v23 = vld [vmem:[%s0 + $0x40] sm:$0xff]
  %v24 = vld [vmem:[%s0 + $0x48] sm:$0xff]
  %v25 = vld [vmem:[%s0 + $0x50] sm:$0xff]
  %v26 = vld [vmem:[%s0 + $0x58] sm:$0xff]
  %v27 = vld [vmem:[%s0 + $0x60] sm:$0xff]
  %v28 = vld [vmem:[%s0 + $0x68] sm:$0xff]
  %v29 = vld [vmem:[%s0 + $0x70] sm:$0xff]
  %v30 = vld [vmem:[%s0 + $0x78] sm:$0xff]
  %v31 = vld [vmem:[%s1] sm:$0xf]
  %v32 = vld [vmem:[%s1 + $0x4] sm:$0xf]
  %v33 = vld [vmem:[%s1 + $0x8] sm:$0xf]
  %v34 = vld [vmem:[%s1 + $0xc] sm:$0xf]
  %v35 = vld [vmem:[%s1 + $0x10] sm:$0xf]
  %v36 = vld [vmem:[%s1 + $0x14] sm:$0xf]
  %v37 = vld [vmem:[%s1 + $0x18] sm:$0xf]
  %v38 = vld [vmem:[%s1 + $0x1c] sm:$0xf]
  %v39 = vld [vmem:[%s1 + $0x20] sm:$0xf]
  %v40 = vld [vmem:[%s1 + $0x24] sm:$0xf]
  %v41 = vld [vmem:[%s1 + $0x28] sm:$0xf]
  %v42 = vld [vmem:[%s1 + $0x2c] sm:$0xf]
  %v43 = vld [vmem:[%s1 + $0x30] sm:$0xf]
  %v44 = vld [vmem:[%s1 + $0x34] sm:$0xf]
  %v45 = vld [vmem:[%s1 + $0x38] sm:$0xf]
  %v46 = vld [vmem:[%s1 + $0x3c] sm:$0xf]
  %v47 = vld [vmem:[%s1 + $0x40] sm:$0xf]
  %v48 = vld [vmem:[%s1 + $0x44] sm:$0xf]
  %v49 = vld [vmem:[%s1 + $0x48] sm:$0xf]
  %v50 = vld [vmem:[%s1 + $0x4c] sm:$0xf]
  %v51 = vld [vmem:[%s1 + $0x50] sm:$0xf]
  %v52 = vld [vmem:[%s1 + $0x54] sm:$0xf]
  %v53 = vld [vmem:[%s1 + $0x58] sm:$0xf]
  %v54 = vld [vmem:[%s1 + $0x5c] sm:$0xf]
  %v55 = vld [vmem:[%s1 + $0x60] sm:$0xf]
  %v56 = vld [vmem:[%s1 + $0x64] sm:$0xf]
  %v57 = vld [vmem:[%s1 + $0x68] sm:$0xf]
  %v58 = vld [vmem:[%s1 + $0x6c] sm:$0xf]
  %v59 = vld [vmem:[%s1 + $0x70] sm:$0xf]
  %v60 = vld [vmem:[%s1 + $0x74] sm:$0xf]
  %v61 = vld [vmem:[%s1 + $0x78] sm:$0xf]
  %v62 = vld [vmem:[%s1 + $0x7c] sm:$0xf]
  %v63 = vld [vmem:[%s1 + $0x80] sm:$0xf]
  %v64 = vld [vmem:[%s1 + $0x84] sm:$0xf]
  %v65 = vld [vmem:[%s1 + $0x88] sm:$0xf]
  %v66 = vld [vmem:[%s1 + $0x8c] sm:$0xf]
  %v67 = vld [vmem:[%s1 + $0x90] sm:$0xf]
  %v68 = vld [vmem:[%s1 + $0x94] sm:$0xf]
  %v69 = vld [vmem:[%s1 + $0x98] sm:$0xf]
  %v70 = vld [vmem:[%s1 + $0x9c] sm:$0xf]
  %v71 = vld [vmem:[%s1 + $0xa0] sm:$0xf]
  %v72 = vld [vmem:[%s1 + $0xa4] sm:$0xf]
  %v73 = vld [vmem:[%s1 + $0xa8] sm:$0xf]
  %v74 = vld [vmem:[%s1 + $0xac] sm:$0xf]
  %v75 = vld [vmem:[%s1 + $0xb0] sm:$0xf]
  %v76 = vld [vmem:[%s1 + $0xb4] sm:$0xf]
  %v77 = vld [vmem:[%s1 + $0xb8] sm:$0xf]
  %v78 = vld [vmem:[%s1 + $0xbc] sm:$0xf]
  %v79 = vld [vmem:[%s1 + $0xc0] sm:$0xf]
  %v80 = vld [vmem:[%s1 + $0xc4] sm:$0xf]
  %v81 = vld [vmem:[%s1 + $0xc8] sm:$0xf]
  %v82 = vld [vmem:[%s1 + $0xcc] sm:$0xf]
  %v83 = vld [vmem:[%s1 + $0xd0] sm:$0xf]
  %v84 = vld [vmem:[%s1 + $0xd4] sm:$0xf]
  %v85 = vld [vmem:[%s1 + $0xd8] sm:$0xf]
  %v86 = vld [vmem:[%s1 + $0xdc] sm:$0xf]
  %v87 = vld [vmem:[%s1 + $0xe0] sm:$0xf]
  %v88 = vld [vmem:[%s1 + $0xe4] sm:$0xf]
  %v89 = vld [vmem:[%s1 + $0xe8] sm:$0xf]
  %v90 = vld [vmem:[%s1 + $0xec] sm:$0xf]
  %v91 = vld [vmem:[%s1 + $0xf0] sm:$0xf]
  %v92 = vld [vmem:[%s1 + $0xf4] sm:$0xf]
  %v93 = vld [vmem:[%s1 + $0xf8] sm:$0xf]
  %v94 = vld [vmem:[%s1 + $0xfc] sm:$0xf]
  %v95 = vld [vmem:[%s2] sm:$0x1]
  %v97 = vlaneseq
  %v98 = vshrl.u32 %v97, 7
  %v99 = vsub.s32 0, %v98
  %v100 = vrot.slane %v95, %v99
  %v118 = vunpack.c.l.b16 %v15
  %v119 = vunpack.c.h.b16 %v15
  %v120 = vunpack.c.l.b16 %v16
  %v121 = vunpack.c.h.b16 %v16
  %v122 = vunpack.c.l.b16 %v17
  %v123 = vunpack.c.h.b16 %v17
  %v124 = vunpack.c.l.b16 %v18
  %v125 = vunpack.c.h.b16 %v18
  %v126 = vunpack.c.l.b16 %v19
  %v127 = vunpack.c.h.b16 %v19
  %v128 = vunpack.c.l.b16 %v20
  %v129 = vunpack.c.h.b16 %v20
  %v130 = vunpack.c.l.b16 %v21
  %v131 = vunpack.c.h.b16 %v21
  %v132 = vunpack.c.l.b16 %v22
  %v133 = vunpack.c.h.b16 %v22
  %v134 = vunpack.c.l.b16 %v23
  %v135 = vunpack.c.h.b16 %v23
  %v136 = vunpack.c.l.b16 %v24
  %v137 = vunpack.c.h.b16 %v24
  %v138 = vunpack.c.l.b16 %v25
  %v139 = vunpack.c.h.b16 %v25
  %v140 = vunpack.c.l.b16 %v26
  %v141 = vunpack.c.h.b16 %v26
  %v142 = vunpack.c.l.b16 %v27
  %v143 = vunpack.c.h.b16 %v27
  %v144 = vunpack.c.l.b16 %v28
  %v145 = vunpack.c.h.b16 %v28
  %v146 = vunpack.c.l.b16 %v29
  %v147 = vunpack.c.h.b16 %v29
  %v148 = vunpack.c.l.b16 %v30
  %v149 = vunpack.c.h.b16 %v30
  %v150 = vpack.c.b16 %v122, %v118
  %v151 = vpack.c.b16 %v123, %v119
  %v152 = vpack.c.b16 %v124, %v120
  %v153 = vpack.c.b16 %v125, %v121
  %v154 = vpack.c.b16 %v130, %v126
  %v155 = vpack.c.b16 %v131, %v127
  %v156 = vpack.c.b16 %v132, %v128
  %v157 = vpack.c.b16 %v133, %v129
  %v158 = vpack.c.b16 %v138, %v134
  %v159 = vpack.c.b16 %v139, %v135
  %v160 = vpack.c.b16 %v140, %v136
  %v161 = vpack.c.b16 %v141, %v137
  %v162 = vpack.c.b16 %v146, %v142
  %v163 = vpack.c.b16 %v147, %v143
  %v164 = vpack.c.b16 %v148, %v144
  %v165 = vpack.c.b16 %v149, %v145
  %v246 = vunpack.c.l.b16 %v31
  %v247 = vunpack.c.l.b16 %v32
  %v248 = vunpack.c.l.b16 %v33
  %v249 = vunpack.c.l.b16 %v34
  %v250 = vunpack.c.l.b16 %v35
  %v251 = vunpack.c.l.b16 %v36
  %v252 = vunpack.c.l.b16 %v37
  %v253 = vunpack.c.l.b16 %v38
  %v254 = vunpack.c.l.b16 %v39
  %v255 = vunpack.c.l.b16 %v40
  %v256 = vunpack.c.l.b16 %v41
  %v257 = vunpack.c.l.b16 %v42
  %v258 = vunpack.c.l.b16 %v43
  %v259 = vunpack.c.l.b16 %v44
  %v260 = vunpack.c.l.b16 %v45
  %v261 = vunpack.c.l.b16 %v46
  %v262 = vunpack.c.l.b16 %v47
  %v263 = vunpack.c.l.b16 %v48
  %v264 = vunpack.c.l.b16 %v49
  %v265 = vunpack.c.l.b16 %v50
  %v266 = vunpack.c.l.b16 %v51
  %v267 = vunpack.c.l.b16 %v52
  %v268 = vunpack.c.l.b16 %v53
  %v269 = vunpack.c.l.b16 %v54
  %v270 = vunpack.c.l.b16 %v55
  %v271 = vunpack.c.l.b16 %v56
  %v272 = vunpack.c.l.b16 %v57
  %v273 = vunpack.c.l.b16 %v58
  %v274 = vunpack.c.l.b16 %v59
  %v275 = vunpack.c.l.b16 %v60
  %v276 = vunpack.c.l.b16 %v61
  %v277 = vunpack.c.l.b16 %v62
  %v278 = vunpack.c.l.b16 %v63
  %v279 = vunpack.c.l.b16 %v64
  %v280 = vunpack.c.l.b16 %v65
  %v281 = vunpack.c.l.b16 %v66
  %v282 = vunpack.c.l.b16 %v67
  %v283 = vunpack.c.l.b16 %v68
  %v284 = vunpack.c.l.b16 %v69
  %v285 = vunpack.c.l.b16 %v70
  %v286 = vunpack.c.l.b16 %v71
  %v287 = vunpack.c.l.b16 %v72
  %v288 = vunpack.c.l.b16 %v73
  %v289 = vunpack.c.l.b16 %v74
  %v290 = vunpack.c.l.b16 %v75
  %v291 = vunpack.c.l.b16 %v76
  %v292 = vunpack.c.l.b16 %v77
  %v293 = vunpack.c.l.b16 %v78
  %v294 = vunpack.c.l.b16 %v79
  %v295 = vunpack.c.l.b16 %v80
  %v296 = vunpack.c.l.b16 %v81
  %v297 = vunpack.c.l.b16 %v82
  %v298 = vunpack.c.l.b16 %v83
  %v299 = vunpack.c.l.b16 %v84
  %v300 = vunpack.c.l.b16 %v85
  %v301 = vunpack.c.l.b16 %v86
  %v302 = vunpack.c.l.b16 %v87
  %v303 = vunpack.c.l.b16 %v88
  %v304 = vunpack.c.l.b16 %v89
  %v305 = vunpack.c.l.b16 %v90
  %v306 = vunpack.c.l.b16 %v91
  %v307 = vunpack.c.l.b16 %v92
  %v308 = vunpack.c.l.b16 %v93
  %v309 = vunpack.c.l.b16 %v94
  %v310 = vpack.c.b16 %v247, %v246
  %v311 = vpack.c.b16 %v249, %v248
  %v312 = vpack.c.b16 %v251, %v250
  %v313 = vpack.c.b16 %v253, %v252
  %v314 = vpack.c.b16 %v255, %v254
  %v315 = vpack.c.b16 %v257, %v256
  %v316 = vpack.c.b16 %v259, %v258
  %v317 = vpack.c.b16 %v261, %v260
  %v318 = vpack.c.b16 %v263, %v262
  %v319 = vpack.c.b16 %v265, %v264
  %v320 = vpack.c.b16 %v267, %v266
  %v321 = vpack.c.b16 %v269, %v268
  %v322 = vpack.c.b16 %v271, %v270
  %v323 = vpack.c.b16 %v273, %v272
  %v324 = vpack.c.b16 %v275, %v274
  %v325 = vpack.c.b16 %v277, %v276
  %v326 = vpack.c.b16 %v279, %v278
  %v327 = vpack.c.b16 %v281, %v280
  %v328 = vpack.c.b16 %v283, %v282
  %v329 = vpack.c.b16 %v285, %v284
  %v330 = vpack.c.b16 %v287, %v286
  %v331 = vpack.c.b16 %v289, %v288
  %v332 = vpack.c.b16 %v291, %v290
  %v333 = vpack.c.b16 %v293, %v292
  %v334 = vpack.c.b16 %v295, %v294
  %v335 = vpack.c.b16 %v297, %v296
  %v336 = vpack.c.b16 %v299, %v298
  %v337 = vpack.c.b16 %v301, %v300
  %v338 = vpack.c.b16 %v303, %v302
  %v339 = vpack.c.b16 %v305, %v304
  %v340 = vpack.c.b16 %v307, %v306
  %v341 = vpack.c.b16 %v309, %v308
  %374 = vmatprep.subr.bf16.mxu0 0
  %375 = vmatpush1.bf16.msra.mxu0 %v310
  %376 = vmatprep.subr.bf16.mxu0 0
  %377 = vmatpush1.bf16.msra.mxu0 %v311
  %378 = vmatprep.subr.bf16.mxu0 0
  %379 = vmatpush1.bf16.msra.mxu0 %v312
  %380 = vmatprep.subr.bf16.mxu0 0
  %381 = vmatpush1.bf16.msra.mxu0 %v313
  %382 = vmatprep.subr.bf16.mxu0 0
  %383 = vmatpush1.bf16.msra.mxu0 %v314
  %384 = vmatprep.subr.bf16.mxu0 0
  %385 = vmatpush1.bf16.msra.mxu0 %v315
  %386 = vmatprep.subr.bf16.mxu0 0
  %387 = vmatpush1.bf16.msra.mxu0 %v316
  %388 = vmatprep.subr.bf16.mxu0 0
  %389 = vmatpush1.bf16.msra.mxu0 %v317
  %390 = vmatprep.subr.bf16.mxu0 0
  %391 = vmatpush1.bf16.msra.mxu0 %v318
  %392 = vmatprep.subr.bf16.mxu0 0
  %393 = vmatpush1.bf16.msra.mxu0 %v319
  %394 = vmatprep.subr.bf16.mxu0 0
  %395 = vmatpush1.bf16.msra.mxu0 %v320
  %396 = vmatprep.subr.bf16.mxu0 0
  %397 = vmatpush1.bf16.msra.mxu0 %v321
  %398 = vmatprep.subr.bf16.mxu0 0
  %399 = vmatpush1.bf16.msra.mxu0 %v322
  %400 = vmatprep.subr.bf16.mxu0 0
  %401 = vmatpush1.bf16.msra.mxu0 %v323
  %402 = vmatprep.subr.bf16.mxu0 0
  %403 = vmatpush1.bf16.msra.mxu0 %v324
  %404 = vmatprep.subr.bf16.mxu0 0
  %405 = vmatpush1.bf16.msra.mxu0 %v325
  %406 = vmatprep.mubr.bf16.mxu0 %v151
  %407 = vmatmul.mubr.bf16.gmra.mrb[0].mxu0 %v150
  %v408 = vpop.f32.mrb[0].mxu0
  %v409 = vadd.f32 %v100, %v408
  %v410 = vpop.f32.mrb[0].mxu0
  %v411 = vpop.f32.mrb[0].mxu0
  %v412 = vadd.f32 %v100, %v411
  %v413 = vpop.f32.mrb[0].mxu0
  %414 = vmatprep.mubr.bf16.mxu0 %v155
  %415 = vmatmul.mubr.bf16.gmra.mrb[0].mxu0 %v154
  %v416 = vpop.f32.mrb[0].mxu0
  %v417 = vadd.f32 %v100, %v416
  %v418 = vpop.f32.mrb[0].mxu0
  %v419 = vpop.f32.mrb[0].mxu0
  %v420 = vadd.f32 %v100, %v419
  %v421 = vpop.f32.mrb[0].mxu0
  %422 = vmatprep.mubr.bf16.mxu0 %v159
  %423 = vmatmul.mubr.bf16.gmra.mrb[0].mxu0 %v158
  %v424 = vpop.f32.mrb[0].mxu0
  %v425 = vadd.f32 %v100, %v424
  %v426 = vpop.f32.mrb[0].mxu0
  %v427 = vpop.f32.mrb[0].mxu0
  %v428 = vadd.f32 %v100, %v427
  %v429 = vpop.f32.mrb[0].mxu0
  %430 = vmatprep.mubr.bf16.mxu0 %v163
  %431 = vmatmul.mubr.bf16.gmra.mrb[0].mxu0 %v162
  %v432 = vpop.f32.mrb[0].mxu0
  %v433 = vadd.f32 %v100, %v432
  %v434 = vpop.f32.mrb[0].mxu0
  %v435 = vpop.f32.mrb[0].mxu0
  %v436 = vadd.f32 %v100, %v435
  %v437 = vpop.f32.mrb[0].mxu0
  %438 = vdwg.mxu0
  %439 = vmatprep.subr.bf16.mxu0 0
  %440 = vmatpush1.bf16.msra.mxu0 %v326
  %441 = vmatprep.subr.bf16.mxu0 0
  %442 = vmatpush1.bf16.msra.mxu0 %v327
  %443 = vmatprep.subr.bf16.mxu0 0
  %444 = vmatpush1.bf16.msra.mxu0 %v328
  %445 = vmatprep.subr.bf16.mxu0 0
  %446 = vmatpush1.bf16.msra.mxu0 %v329
  %447 = vmatprep.subr.bf16.mxu0 0
  %448 = vmatpush1.bf16.msra.mxu0 %v330
  %449 = vmatprep.subr.bf16.mxu0 0
  %450 = vmatpush1.bf16.msra.mxu0 %v331
  %451 = vmatprep.subr.bf16.mxu0 0
  %452 = vmatpush1.bf16.msra.mxu0 %v332
  %453 = vmatprep.subr.bf16.mxu0 0
  %454 = vmatpush1.bf16.msra.mxu0 %v333
  %455 = vmatprep.subr.bf16.mxu0 0
  %456 = vmatpush1.bf16.msra.mxu0 %v334
  %457 = vmatprep.subr.bf16.mxu0 0
  %458 = vmatpush1.bf16.msra.mxu0 %v335
  %459 = vmatprep.subr.bf16.mxu0 0
  %460 = vmatpush1.bf16.msra.mxu0 %v336
  %461 = vmatprep.subr.bf16.mxu0 0
  %462 = vmatpush1.bf16.msra.mxu0 %v337
  %463 = vmatprep.subr.bf16.mxu0 0
  %464 = vmatpush1.bf16.msra.mxu0 %v338
  %465 = vmatprep.subr.bf16.mxu0 0
  %466 = vmatpush1.bf16.msra.mxu0 %v339
  %467 = vmatprep.subr.bf16.mxu0 0
  %468 = vmatpush1.bf16.msra.mxu0 %v340
  %469 = vmatprep.subr.bf16.mxu0 0
  %470 = vmatpush1.bf16.msra.mxu0 %v341
  %471 = vmatprep.mubr.bf16.mxu0 %v153
  %472 = vmatmul.mubr.bf16.gmra.mrb[0].mxu0 %v152
  %v473 = vpop.f32.mrb[0].mxu0
  %v474 = vadd.f32 %v409, %v473
  %v475 = vpop.f32.mrb[0].mxu0
  %v476 = vpop.f32.mrb[0].mxu0
  %v477 = vadd.f32 %v412, %v476
  %v478 = vpop.f32.mrb[0].mxu0
  %479 = vmatprep.mubr.bf16.mxu0 %v157
  %480 = vmatmul.mubr.bf16.gmra.mrb[0].mxu0 %v156
  %v481 = vpop.f32.mrb[0].mxu0
  %v482 = vadd.f32 %v417, %v481
  %v483 = vpop.f32.mrb[0].mxu0
  %v484 = vpop.f32.mrb[0].mxu0
  %v485 = vadd.f32 %v420, %v484
  %v486 = vpop.f32.mrb[0].mxu0
  %487 = vmatprep.mubr.bf16.mxu0 %v161
  %488 = vmatmul.mubr.bf16.gmra.mrb[0].mxu0 %v160
  %v489 = vpop.f32.mrb[0].mxu0
  %v490 = vadd.f32 %v425, %v489
  %v491 = vpop.f32.mrb[0].mxu0
  %v492 = vpop.f32.mrb[0].mxu0
  %v493 = vadd.f32 %v428, %v492
  %v494 = vpop.f32.mrb[0].mxu0
  %495 = vmatprep.mubr.bf16.mxu0 %v165
  %496 = vmatmul.mubr.bf16.gmra.mrb[0].mxu0 %v164
  %v497 = vpop.f32.mrb[0].mxu0
  %v498 = vadd.f32 %v433, %v497
  %v499 = vpop.f32.mrb[0].mxu0
  %v500 = vpop.f32.mrb[0].mxu0
  %v501 = vadd.f32 %v436, %v500
  %v502 = vpop.f32.mrb[0].mxu0
  %503 = vdwg.mxu0
  %v504 = vmax.f32 %v474, 0.0
  %v505 = vmax.f32 %v477, 0.0
  %v506 = vmax.f32 %v482, 0.0
  %v507 = vmax.f32 %v485, 0.0
  %v508 = vmax.f32 %v490, 0.0
  %v509 = vmax.f32 %v493, 0.0
  %v510 = vmax.f32 %v498, 0.0
  %v511 = vmax.f32 %v501, 0.0
  %v512 = vpack.c.bf16 %v505, %v504
  %v513 = vpack.c.bf16 %v507, %v506
  %v514 = vpack.c.bf16 %v509, %v508
  %v515 = vpack.c.bf16 %v511, %v510
  %v520 = vunpack.c.l.b16 %v512
  %v521 = vunpack.c.h.b16 %v512
  %v522 = vunpack.c.l.b16 %v513
  %v523 = vunpack.c.h.b16 %v513
  %v524 = vunpack.c.l.b16 %v514
  %v525 = vunpack.c.h.b16 %v514
  %v526 = vunpack.c.l.b16 %v515
  %v527 = vunpack.c.h.b16 %v515
  %v528 = vpack.c.b16 %v520, %v520
  %v529 = vpack.c.b16 %v521, %v521
  %v530 = vpack.c.b16 %v522, %v522
  %v531 = vpack.c.b16 %v523, %v523
  %v532 = vpack.c.b16 %v524, %v524
  %v533 = vpack.c.b16 %v525, %v525
  %v534 = vpack.c.b16 %v526, %v526
  %v535 = vpack.c.b16 %v527, %v527
  %544 = vst [vmem:[%s3] sm:$0xf] %v528
  %545 = vst [vmem:[%s3 + $0x4] sm:$0xf] %v529
  %546 = vst [vmem:[%s3 + $0x8] sm:$0xf] %v530
  %547 = vst [vmem:[%s3 + $0xc] sm:$0xf] %v531
  %548 = vst [vmem:[%s3 + $0x10] sm:$0xf] %v532
  %549 = vst [vmem:[%s3 + $0x14] sm:$0xf] %v533
  %550 = vst [vmem:[%s3 + $0x18] sm:$0xf] %v534
  %551 = vst [vmem:[%s3 + $0x1c] sm:$0xf] %v535
  // Predicated region
  $region14: #{_lambda_.43} parent=0 // pred_check
    _
  $region15: #{_lambda_.43} parent=0 // pred_check_branch
    %553 = sbr.rel (0) target = $region17
  $region16: #{_lambda_.43} parent=0 // pred_region
    _
  $region17: #{_lambda_.43} parent=0 // pred_fallthru
    _
  // Predicated region
  $region18: #{_lambda_.43} parent=0 // pred_check
    _
  $region19: #{_lambda_.43} parent=0 // pred_check_branch
    %555 = sbr.rel (0) target = $region21
  $region20: #{_lambda_.43} parent=0 // pred_region
    _
  $region21: #{_lambda_.43} parent=0 // pred_fallthru
    _

// kernel: _lambda_.42
$region0: #{_lambda_.42}
  #allocation0 [shape = 'u32[]', space=smem, size = 0x4, offset = 0x4, fixed_abs, tag = 'smem constant byte address 0x4 - core index']
  #allocation1 [shape = 'u32[144,128]{1,0:T(1,128)}', space=vmem, size = 0x12000, scoped, tag = 'internal scratch']
  %s0 = inlined_call_operand.vmem [shape: bf16[64,128], index: 0, kind: input, shape index: {}]
  %s1 = inlined_call_operand.vmem [shape: bf16[128,512], index: 1, kind: input, shape index: {}]
  %s2 = inlined_call_operand.vmem [shape: f32[1,512], index: 2, kind: input, shape index: {}]
  %s3 = inlined_call_operand.vmem [shape: f32[1,128], index: 3, kind: input, shape index: {}]
  %s4 = inlined_call_operand.vmem [shape: bf16[64,512], index: 4, kind: input, shape index: {}]
  %s5 = inlined_call_operand.vmem [shape: bf16[64,512], index: 5, kind: output, shape index: {}]
  %s6 = sld [smem:[#allocation0]]
  $region30: #{_lambda_.42} parent=0
    _
  %s8 = ssub.s32 1, %s6
  %s9 = scalar_select 0, %s8, %s6
  // Predicated region
  $region2: #{_lambda_.42} parent=0 // pred_check
    _
  $region3: #{_lambda_.42} parent=0 // pred_check_branch
    %11 = sbr.rel (0) target = $region5
  $region4: #{_lambda_.42} parent=0 // pred_region
    _
  $region5: #{_lambda_.42} parent=0 // pred_fallthru
    _
  // Predicated region
  $region6: #{_lambda_.42} parent=0 // pred_check
    _
  $region7: #{_lambda_.42} parent=0 // pred_check_branch
    %13 = sbr.rel (0) target = $region9
  $region8: #{_lambda_.42} parent=0 // pred_region
    _
  $region9: #{_lambda_.42} parent=0 // pred_fallthru
    _
  // Predicated region
  $region10: #{_lambda_.42} parent=0 // pred_check
    _
  $region11: #{_lambda_.42} parent=0 // pred_check_branch
    %15 = sbr.rel (0) target = $region13
  $region12: #{_lambda_.42} parent=0 // pred_region
    _
  $region13: #{_lambda_.42} parent=0 // pred_fallthru
    _
  // Predicated region
  $region14: #{_lambda_.42} parent=0 // pred_check
    _
  $region15: #{_lambda_.42} parent=0 // pred_check_branch
    %17 = sbr.rel (0) target = $region17
  $region16: #{_lambda_.42} parent=0 // pred_region
    _
  $region17: #{_lambda_.42} parent=0 // pred_fallthru
    _
  // Predicated region
  $region18: #{_lambda_.42} parent=0 // pred_check
    _
  $region19: #{_lambda_.42} parent=0 // pred_check_branch
    %19 = sbr.rel (0) target = $region21
  $region20: #{_lambda_.42} parent=0 // pred_region
    _
  $region21: #{_lambda_.42} parent=0 // pred_fallthru
    _
  %v21 = vld [vmem:[%s0] sm:$0xf]
  %v22 = vld [vmem:[%s0 + $0x4] sm:$0xf]
  %v23 = vld [vmem:[%s0 + $0x8] sm:$0xf]
  %v24 = vld [vmem:[%s0 + $0xc] sm:$0xf]
  %v25 = vld [vmem:[%s0 + $0x10] sm:$0xf]
  %v26 = vld [vmem:[%s0 + $0x14] sm:$0xf]
  %v27 = vld [vmem:[%s0 + $0x18] sm:$0xf]
  %v28 = vld [vmem:[%s0 + $0x1c] sm:$0xf]
  %v29 = vunpack.c.l.bf16 %v21
  %v30 = vunpack.c.l.bf16 %v22
  %v31 = vunpack.c.l.bf16 %v23
  %v32 = vunpack.c.l.bf16 %v24
  %v33 = vunpack.c.l.bf16 %v25
  %v34 = vunpack.c.l.bf16 %v26
  %v35 = vunpack.c.l.bf16 %v27
  %v36 = vunpack.c.l.bf16 %v28
  %v37 = vld [vmem:[%s3] sm:$0x1]
  %v39 = vlaneseq
  %v40 = vshrl.u32 %v39, 7
  %v41 = vsub.s32 0, %v40
  %v42 = vrot.slane %v37, %v41
  %v44 = vadd.f32 %v29, %v42
  %v45 = vadd.f32 %v30, %v42
  %v46 = vadd.f32 %v31, %v42
  %v47 = vadd.f32 %v32, %v42
  %v48 = vadd.f32 %v33, %v42
  %v49 = vadd.f32 %v34, %v42
  %v50 = vadd.f32 %v35, %v42
  %v51 = vadd.f32 %v36, %v42
  %v52 = vmax.f32 %v44, 0.0
  %v53 = vmax.f32 %v45, 0.0
  %v54 = vmax.f32 %v46, 0.0
  %v55 = vmax.f32 %v47, 0.0
  %v56 = vmax.f32 %v48, 0.0
  %v57 = vmax.f32 %v49, 0.0
  %v58 = vmax.f32 %v50, 0.0
  %v59 = vmax.f32 %v51, 0.0
  %v60 = vpack.c.bf16 %v53, %v52
  %v61 = vpack.c.bf16 %v55, %v54
  %v62 = vpack.c.bf16 %v57, %v56
  %v63 = vpack.c.bf16 %v59, %v58
  %v64 = vld [vmem:[%s1] sm:$0xff]
  %v65 = vld [vmem:[%s1 + $0x8] sm:$0xff]
  %v66 = vld [vmem:[%s1 + $0x10] sm:$0xff]
  %v67 = vld [vmem:[%s1 + $0x18] sm:$0xff]
  %v68 = vld [vmem:[%s1 + $0x20] sm:$0xff]
  %v69 = vld [vmem:[%s1 + $0x28] sm:$0xff]
  %v70 = vld [vmem:[%s1 + $0x30] sm:$0xff]
  %v71 = vld [vmem:[%s1 + $0x38] sm:$0xff]
  %v72 = vld [vmem:[%s1 + $0x40] sm:$0xff]
  %v73 = vld [vmem:[%s1 + $0x48] sm:$0xff]
  %v74 = vld [vmem:[%s1 + $0x50] sm:$0xff]
  %v75 = vld [vmem:[%s1 + $0x58] sm:$0xff]
  %v76 = vld [vmem:[%s1 + $0x60] sm:$0xff]
  %v77 = vld [vmem:[%s1 + $0x68] sm:$0xff]
  %v78 = vld [vmem:[%s1 + $0x70] sm:$0xff]
  %v79 = vld [vmem:[%s1 + $0x78] sm:$0xff]
  %v80 = vld [vmem:[%s1 + $0x80] sm:$0xff]
  %v81 = vld [vmem:[%s1 + $0x88] sm:$0xff]
  %v82 = vld [vmem:[%s1 + $0x90] sm:$0xff]
  %v83 = vld [vmem:[%s1 + $0x98] sm:$0xff]
  %v84 = vld [vmem:[%s1 + $0xa0] sm:$0xff]
  %v85 = vld [vmem:[%s1 + $0xa8] sm:$0xff]
  %v86 = vld [vmem:[%s1 + $0xb0] sm:$0xff]
  %v87 = vld [vmem:[%s1 + $0xb8] sm:$0xff]
  %v88 = vld [vmem:[%s1 + $0xc0] sm:$0xff]
  %v89 = vld [vmem:[%s1 + $0xc8] sm:$0xff]
  %v90 = vld [vmem:[%s1 + $0xd0] sm:$0xff]
  %v91 = vld [vmem:[%s1 + $0xd8] sm:$0xff]
  %v92 = vld [vmem:[%s1 + $0xe0] sm:$0xff]
  %v93 = vld [vmem:[%s1 + $0xe8] sm:$0xff]
  %v94 = vld [vmem:[%s1 + $0xf0] sm:$0xff]
  %v95 = vld [vmem:[%s1 + $0xf8] sm:$0xff]
  %v96 = vld [vmem:[%s2] sm:$0xf]
  %v98 = vlaneseq
  %v99 = vshrl.u32 %v98, 7
  %v100 = vsub.s32 0, %v99
  %v101 = vrot.slane %v96, %v100
  %v102 = vlaneseq
  %v103 = vshrl.u32 %v102, 7
  %v104 = vsub.s32 1, %v103
  %v105 = vrot.slane %v96, %v104
  %v106 = vlaneseq
  %v107 = vshrl.u32 %v106, 7
  %v108 = vsub.s32 2, %v107
  %v109 = vrot.slane %v96, %v108
  %v110 = vlaneseq
  %v111 = vshrl.u32 %v110, 7
  %v112 = vsub.s32 3, %v111
  %v113 = vrot.slane %v96, %v112
  %v150 = vunpack.c.l.b16 %v64
  %v151 = vunpack.c.h.b16 %v64
  %v152 = vunpack.c.l.b16 %v65
  %v153 = vunpack.c.h.b16 %v65
  %v154 = vunpack.c.l.b16 %v66
  %v155 = vunpack.c.h.b16 %v66
  %v156 = vunpack.c.l.b16 %v67
  %v157 = vunpack.c.h.b16 %v67
  %v158 = vunpack.c.l.b16 %v68
  %v159 = vunpack.c.h.b16 %v68
  %v160 = vunpack.c.l.b16 %v69
  %v161 = vunpack.c.h.b16 %v69
  %v162 = vunpack.c.l.b16 %v70
  %v163 = vunpack.c.h.b16 %v70
  %v164 = vunpack.c.l.b16 %v71
  %v165 = vunpack.c.h.b16 %v71
  %v166 = vunpack.c.l.b16 %v72
  %v167 = vunpack.c.h.b16 %v72
  %v168 = vunpack.c.l.b16 %v73
  %v169 = vunpack.c.h.b16 %v73
  %v170 = vunpack.c.l.b16 %v74
  %v171 = vunpack.c.h.b16 %v74
  %v172 = vunpack.c.l.b16 %v75
  %v173 = vunpack.c.h.b16 %v75
  %v174 = vunpack.c.l.b16 %v76
  %v175 = vunpack.c.h.b16 %v76
  %v176 = vunpack.c.l.b16 %v77
  %v177 = vunpack.c.h.b16 %v77
  %v178 = vunpack.c.l.b16 %v78
  %v179 = vunpack.c.h.b16 %v78
  %v180 = vunpack.c.l.b16 %v79
  %v181 = vunpack.c.h.b16 %v79
  %v182 = vunpack.c.l.b16 %v80
  %v183 = vunpack.c.h.b16 %v80
  %v184 = vunpack.c.l.b16 %v81
  %v185 = vunpack.c.h.b16 %v81
  %v186 = vunpack.c.l.b16 %v82
  %v187 = vunpack.c.h.b16 %v82
  %v188 = vunpack.c.l.b16 %v83
  %v189 = vunpack.c.h.b16 %v83
  %v190 = vunpack.c.l.b16 %v84
  %v191 = vunpack.c.h.b16 %v84
  %v192 = vunpack.c.l.b16 %v85
  %v193 = vunpack.c.h.b16 %v85
  %v194 = vunpack.c.l.b16 %v86
  %v195 = vunpack.c.h.b16 %v86
  %v196 = vunpack.c.l.b16 %v87
  %v197 = vunpack.c.h.b16 %v87
  %v198 = vunpack.c.l.b16 %v88
  %v199 = vunpack.c.h.b16 %v88
  %v200 = vunpack.c.l.b16 %v89
  %v201 = vunpack.c.h.b16 %v89
  %v202 = vunpack.c.l.b16 %v90
  %v203 = vunpack.c.h.b16 %v90
  %v204 = vunpack.c.l.b16 %v91
  %v205 = vunpack.c.h.b16 %v91
  %v206 = vunpack.c.l.b16 %v92
  %v207 = vunpack.c.h.b16 %v92
  %v208 = vunpack.c.l.b16 %v93
  %v209 = vunpack.c.h.b16 %v93
  %v210 = vunpack.c.l.b16 %v94
  %v211 = vunpack.c.h.b16 %v94
  %v212 = vunpack.c.l.b16 %v95
  %v213 = vunpack.c.h.b16 %v95
  %v214 = vpack.c.b16 %v154, %v150
  %v215 = vpack.c.b16 %v155, %v151
  %v216 = vpack.c.b16 %v156, %v152
  %v217 = vpack.c.b16 %v157, %v153
  %v218 = vpack.c.b16 %v162, %v158
  %v219 = vpack.c.b16 %v163, %v159
  %v220 = vpack.c.b16 %v164, %v160
  %v221 = vpack.c.b16 %v165, %v161
  %v222 = vpack.c.b16 %v170, %v166
  %v223 = vpack.c.b16 %v171, %v167
  %v224 = vpack.c.b16 %v172, %v168
  %v225 = vpack.c.b16 %v173, %v169
  %v226 = vpack.c.b16 %v178, %v174
  %v227 = vpack.c.b16 %v179, %v175
  %v228 = vpack.c.b16 %v180, %v176
  %v229 = vpack.c.b16 %v181, %v177
  %v230 = vpack.c.b16 %v186, %v182
  %v231 = vpack.c.b16 %v187, %v183
  %v232 = vpack.c.b16 %v188, %v184
  %v233 = vpack.c.b16 %v189, %v185
  %v234 = vpack.c.b16 %v194, %v190
  %v235 = vpack.c.b16 %v195, %v191
  %v236 = vpack.c.b16 %v196, %v192
  %v237 = vpack.c.b16 %v197, %v193
  %v238 = vpack.c.b16 %v202, %v198
  %v239 = vpack.c.b16 %v203, %v199
  %v240 = vpack.c.b16 %v204, %v200
  %v241 = vpack.c.b16 %v205, %v201
  %v242 = vpack.c.b16 %v210, %v206
  %v243 = vpack.c.b16 %v211, %v207
  %v244 = vpack.c.b16 %v212, %v208
  %v245 = vpack.c.b16 %v213, %v209
  %278 = vmatprep.subr.bf16.mxu0 %v215
  %279 = vmatpush1.bf16.msra.mxu0 %v214
  %280 = vmatprep.subr.bf16.mxu0 %v219
  %281 = vmatpush1.bf16.msra.mxu0 %v218
  %282 = vmatprep.subr.bf16.mxu0 %v223
  %283 = vmatpush1.bf16.msra.mxu0 %v222
  %284 = vmatprep.subr.bf16.mxu0 %v227
  %285 = vmatpush1.bf16.msra.mxu0 %v226
  %286 = vmatprep.subr.bf16.mxu0 %v231
  %287 = vmatpush1.bf16.msra.mxu0 %v230
  %288 = vmatprep.subr.bf16.mxu0 %v235
  %289 = vmatpush1.bf16.msra.mxu0 %v234
  %290 = vmatprep.subr.bf16.mxu0 %v239
  %291 = vmatpush1.bf16.msra.mxu0 %v238
  %292 = vmatprep.subr.bf16.mxu0 %v243
  %293 = vmatpush1.bf16.msra.mxu0 %v242
  %294 = vmatprep.subr.bf16.mxu0 0
  %295 = vmatpush1.bf16.msra.mxu0 0
  %296 = vmatprep.subr.bf16.mxu0 0
  %297 = vmatpush1.bf16.msra.mxu0 0
  %298 = vmatprep.subr.bf16.mxu0 0
  %299 = vmatpush1.bf16.msra.mxu0 0
  %300 = vmatprep.subr.bf16.mxu0 0
  %301 = vmatpush1.bf16.msra.mxu0 0
  %302 = vmatprep.subr.bf16.mxu0 0
  %303 = vmatpush1.bf16.msra.mxu0 0
  %304 = vmatprep.subr.bf16.mxu0 0
  %305 = vmatpush1.bf16.msra.mxu0 0
  %306 = vmatprep.subr.bf16.mxu0 0
  %307 = vmatpush1.bf16.msra.mxu0 0
  %308 = vmatprep.subr.bf16.mxu0 0
  %309 = vmatpush1.bf16.msra.mxu0 0
  %310 = vmatprep.mubr.bf16.mxu0 0
  %311 = vmatmul.mubr.bf16.gmra.mrb[0].mxu0 %v60
  %v312 = vpop.f32.mrb[0].mxu0
  %v313 = vadd.f32 %v101, %v312
  %v314 = vpop.f32.mrb[0].mxu0
  %v315 = vadd.f32 %v105, %v314
  %v316 = vpop.f32.mrb[0].mxu0
  %v317 = vadd.f32 %v101, %v316
  %v318 = vpop.f32.mrb[0].mxu0
  %v319 = vadd.f32 %v105, %v318
  %320 = vmatprep.mubr.bf16.mxu0 0
  %321 = vmatmul.mubr.bf16.gmra.mrb[0].mxu0 %v61
  %v322 = vpop.f32.mrb[0].mxu0
  %v323 = vadd.f32 %v101, %v322
  %v324 = vpop.f32.mrb[0].mxu0
  %v325 = vadd.f32 %v105, %v324
  %v326 = vpop.f32.mrb[0].mxu0
  %v327 = vadd.f32 %v101, %v326
  %v328 = vpop.f32.mrb[0].mxu0
  %v329 = vadd.f32 %v105, %v328
  %330 = vmatprep.mubr.bf16.mxu0 0
  %331 = vmatmul.mubr.bf16.gmra.mrb[0].mxu0 %v62
  %v332 = vpop.f32.mrb[0].mxu0
  %v333 = vadd.f32 %v101, %v332
  %v334 = vpop.f32.mrb[0].mxu0
  %v335 = vadd.f32 %v105, %v334
  %v336 = vpop.f32.mrb[0].mxu0
  %v337 = vadd.f32 %v101, %v336
  %v338 = vpop.f32.mrb[0].mxu0
  %v339 = vadd.f32 %v105, %v338
  %340 = vmatprep.mubr.bf16.mxu0 0
  %341 = vmatmul.mubr.bf16.gmra.mrb[0].mxu0 %v63
  %v342 = vpop.f32.mrb[0].mxu0
  %v343 = vadd.f32 %v101, %v342
  %v344 = vpop.f32.mrb[0].mxu0
  %v345 = vadd.f32 %v105, %v344
  %v346 = vpop.f32.mrb[0].mxu0
  %v347 = vadd.f32 %v101, %v346
  %v348 = vpop.f32.mrb[0].mxu0
  %v349 = vadd.f32 %v105, %v348
  %350 = vdwg.mxu0
  %351 = vmatprep.subr.bf16.mxu0 %v217
  %352 = vmatpush1.bf16.msra.mxu0 %v216
  %353 = vmatprep.subr.bf16.mxu0 %v221
  %354 = vmatpush1.bf16.msra.mxu0 %v220
  %355 = vmatprep.subr.bf16.mxu0 %v225
  %356 = vmatpush1.bf16.msra.mxu0 %v224
  %357 = vmatprep.subr.bf16.mxu0 %v229
  %358 = vmatpush1.bf16.msra.mxu0 %v228
  %359 = vmatprep.subr.bf16.mxu0 %v233
  %360 = vmatpush1.bf16.msra.mxu0 %v232
  %361 = vmatprep.subr.bf16.mxu0 %v237
  %362 = vmatpush1.bf16.msra.mxu0 %v236
  %363 = vmatprep.subr.bf16.mxu0 %v241
  %364 = vmatpush1.bf16.msra.mxu0 %v240
  %365 = vmatprep.subr.bf16.mxu0 %v245
  %366 = vmatpush1.bf16.msra.mxu0 %v244
  %367 = vmatprep.subr.bf16.mxu0 0
  %368 = vmatpush1.bf16.msra.mxu0 0
  %369 = vmatprep.subr.bf16.mxu0 0
  %370 = vmatpush1.bf16.msra.mxu0 0
  %371 = vmatprep.subr.bf16.mxu0 0
  %372 = vmatpush1.bf16.msra.mxu0 0
  %373 = vmatprep.subr.bf16.mxu0 0
  %374 = vmatpush1.bf16.msra.mxu0 0
  %375 = vmatprep.subr.bf16.mxu0 0
  %376 = vmatpush1.bf16.msra.mxu0 0
  %377 = vmatprep.subr.bf16.mxu0 0
  %378 = vmatpush1.bf16.msra.mxu0 0
  %379 = vmatprep.subr.bf16.mxu0 0
  %380 = vmatpush1.bf16.msra.mxu0 0
  %381 = vmatprep.subr.bf16.mxu0 0
  %382 = vmatpush1.bf16.msra.mxu0 0
  %383 = vmatprep.mubr.bf16.mxu0 0
  %384 = vmatmul.mubr.bf16.gmra.mrb[0].mxu0 %v60
  %v385 = vpop.f32.mrb[0].mxu0
  %v386 = vadd.f32 %v109, %v385
  %v387 = vpop.f32.mrb[0].mxu0
  %v388 = vadd.f32 %v113, %v387
  %v389 = vpop.f32.mrb[0].mxu0
  %v390 = vadd.f32 %v109, %v389
  %v391 = vpop.f32.mrb[0].mxu0
  %v392 = vadd.f32 %v113, %v391
  %393 = vmatprep.mubr.bf16.mxu0 0
  %394 = vmatmul.mubr.bf16.gmra.mrb[0].mxu0 %v61
  %v395 = vpop.f32.mrb[0].mxu0
  %v396 = vadd.f32 %v109, %v395
  %v397 = vpop.f32.mrb[0].mxu0
  %v398 = vadd.f32 %v113, %v397
  %v399 = vpop.f32.mrb[0].mxu0
  %v400 = vadd.f32 %v109, %v399
  %v401 = vpop.f32.mrb[0].mxu0
  %v402 = vadd.f32 %v113, %v401
  %403 = vmatprep.mubr.bf16.mxu0 0
  %404 = vmatmul.mubr.bf16.gmra.mrb[0].mxu0 %v62
  %v405 = vpop.f32.mrb[0].mxu0
  %v406 = vadd.f32 %v109, %v405
  %v407 = vpop.f32.mrb[0].mxu0
  %v408 = vadd.f32 %v113, %v407
  %v409 = vpop.f32.mrb[0].mxu0
  %v410 = vadd.f32 %v109, %v409
  %v411 = vpop.f32.mrb[0].mxu0
  %v412 = vadd.f32 %v113, %v411
  %413 = vmatprep.mubr.bf16.mxu0 0
  %414 = vmatmul.mubr.bf16.gmra.mrb[0].mxu0 %v63
  %v415 = vpop.f32.mrb[0].mxu0
  %v416 = vadd.f32 %v109, %v415
  %v417 = vpop.f32.mrb[0].mxu0
  %v418 = vadd.f32 %v113, %v417
  %v419 = vpop.f32.mrb[0].mxu0
  %v420 = vadd.f32 %v109, %v419
  %v421 = vpop.f32.mrb[0].mxu0
  %v422 = vadd.f32 %v113, %v421
  %423 = vdwg.mxu0
  %v424 = vld [vmem:[%s4] sm:$0xff]
  %v425 = vld [vmem:[%s4 + $0x8] sm:$0xff]
  %v426 = vld [vmem:[%s4 + $0x10] sm:$0xff]
  %v427 = vld [vmem:[%s4 + $0x18] sm:$0xff]
  %v428 = vld [vmem:[%s4 + $0x20] sm:$0xff]
  %v429 = vld [vmem:[%s4 + $0x28] sm:$0xff]
  %v430 = vld [vmem:[%s4 + $0x30] sm:$0xff]
  %v431 = vld [vmem:[%s4 + $0x38] sm:$0xff]
  %v432 = vld [vmem:[%s4 + $0x40] sm:$0xff]
  %v433 = vld [vmem:[%s4 + $0x48] sm:$0xff]
  %v434 = vld [vmem:[%s4 + $0x50] sm:$0xff]
  %v435 = vld [vmem:[%s4 + $0x58] sm:$0xff]
  %v436 = vld [vmem:[%s4 + $0x60] sm:$0xff]
  %v437 = vld [vmem:[%s4 + $0x68] sm:$0xff]
  %v438 = vld [vmem:[%s4 + $0x70] sm:$0xff]
  %v439 = vld [vmem:[%s4 + $0x78] sm:$0xff]
  %v440 = vunpack.c.l.bf16 %v424
  %v441 = vunpack.c.h.bf16 %v424
  %v442 = vunpack.c.l.bf16 %v425
  %v443 = vunpack.c.h.bf16 %v425
  %v444 = vunpack.c.l.bf16 %v426
  %v445 = vunpack.c.h.bf16 %v426
  %v446 = vunpack.c.l.bf16 %v427
  %v447 = vunpack.c.h.bf16 %v427
  %v448 = vunpack.c.l.bf16 %v428
  %v449 = vunpack.c.h.bf16 %v428
  %v450 = vunpack.c.l.bf16 %v429
  %v451 = vunpack.c.h.bf16 %v429
  %v452 = vunpack.c.l.bf16 %v430
  %v453 = vunpack.c.h.bf16 %v430
  %v454 = vunpack.c.l.bf16 %v431
  %v455 = vunpack.c.h.bf16 %v431
  %v456 = vunpack.c.l.bf16 %v432
  %v457 = vunpack.c.h.bf16 %v432
  %v458 = vunpack.c.l.bf16 %v433
  %v459 = vunpack.c.h.bf16 %v433
  %v460 = vunpack.c.l.bf16 %v434
  %v461 = vunpack.c.h.bf16 %v434
  %v462 = vunpack.c.l.bf16 %v435
  %v463 = vunpack.c.h.bf16 %v435
  %v464 = vunpack.c.l.bf16 %v436
  %v465 = vunpack.c.h.bf16 %v436
  %v466 = vunpack.c.l.bf16 %v437
  %v467 = vunpack.c.h.bf16 %v437
  %v468 = vunpack.c.l.bf16 %v438
  %v469 = vunpack.c.h.bf16 %v438
  %v470 = vunpack.c.l.bf16 %v439
  %v471 = vunpack.c.h.bf16 %v439
  %v472 = vadd.f32 %v313, %v440
  %v473 = vadd.f32 %v315, %v441
  %v474 = vadd.f32 %v386, %v442
  %v475 = vadd.f32 %v388, %v443
  %v476 = vadd.f32 %v317, %v444
  %v477 = vadd.f32 %v319, %v445
  %v478 = vadd.f32 %v390, %v446
  %v479 = vadd.f32 %v392, %v447
  %v480 = vadd.f32 %v323, %v448
  %v481 = vadd.f32 %v325, %v449
  %v482 = vadd.f32 %v396, %v450
  %v483 = vadd.f32 %v398, %v451
  %v484 = vadd.f32 %v327, %v452
  %v485 = vadd.f32 %v329, %v453
  %v486 = vadd.f32 %v400, %v454
  %v487 = vadd.f32 %v402, %v455
  %v488 = vadd.f32 %v333, %v456
  %v489 = vadd.f32 %v335, %v457
  %v490 = vadd.f32 %v406, %v458
  %v491 = vadd.f32 %v408, %v459
  %v492 = vadd.f32 %v337, %v460
  %v493 = vadd.f32 %v339, %v461
  %v494 = vadd.f32 %v410, %v462
  %v495 = vadd.f32 %v412, %v463
  %v496 = vadd.f32 %v343, %v464
  %v497 = vadd.f32 %v345, %v465
  %v498 = vadd.f32 %v416, %v466
  %v499 = vadd.f32 %v418, %v467
  %v500 = vadd.f32 %v347, %v468
  %v501 = vadd.f32 %v349, %v469
  %v502 = vadd.f32 %v420, %v470
  %v503 = vadd.f32 %v422, %v471
  %v504 = vmax.f32 %v472, 0.0
  %v505 = vmax.f32 %v473, 0.0
  %v506 = vmax.f32 %v474, 0.0
  %v507 = vmax.f32 %v475, 0.0
  %v508 = vmax.f32 %v476, 0.0
  %v509 = vmax.f32 %v477, 0.0
  %v510 = vmax.f32 %v478, 0.0
  %v511 = vmax.f32 %v479, 0.0
  %v512 = vmax.f32 %v480, 0.0
  %v513 = vmax.f32 %v481, 0.0
  %v514 = vmax.f32 %v482, 0.0
  %v515 = vmax.f32 %v483, 0.0
  %v516 = vmax.f32 %v484, 0.0
  %v517 = vmax.f32 %v485, 0.0
  %v518 = vmax.f32 %v486, 0.0
  %v519 = vmax.f32 %v487, 0.0
  %v520 = vmax.f32 %v488, 0.0
  %v521 = vmax.f32 %v489, 0.0
  %v522 = vmax.f32 %v490, 0.0
  %v523 = vmax.f32 %v491, 0.0
  %v524 = vmax.f32 %v492, 0.0
  %v525 = vmax.f32 %v493, 0.0
  %v526 = vmax.f32 %v494, 0.0
  %v527 = vmax.f32 %v495, 0.0
  %v528 = vmax.f32 %v496, 0.0
  %v529 = vmax.f32 %v497, 0.0
  %v530 = vmax.f32 %v498, 0.0
  %v531 = vmax.f32 %v499, 0.0
  %v532 = vmax.f32 %v500, 0.0
  %v533 = vmax.f32 %v501, 0.0
  %v534 = vmax.f32 %v502, 0.0
  %v535 = vmax.f32 %v503, 0.0
  %v536 = vpack.c.bf16 %v508, %v504
  %v537 = vpack.c.bf16 %v509, %v505
  %v538 = vpack.c.bf16 %v510, %v506
  %v539 = vpack.c.bf16 %v511, %v507
  %v540 = vpack.c.bf16 %v516, %v512
  %v541 = vpack.c.bf16 %v517, %v513
  %v542 = vpack.c.bf16 %v518, %v514
  %v543 = vpack.c.bf16 %v519, %v515
  %v544 = vpack.c.bf16 %v524, %v520
  %v545 = vpack.c.bf16 %v525, %v521
  %v546 = vpack.c.bf16 %v526, %v522
  %v547 = vpack.c.bf16 %v527, %v523
  %v548 = vpack.c.bf16 %v532, %v528
  %v549 = vpack.c.bf16 %v533, %v529
  %v550 = vpack.c.bf16 %v534, %v530
  %v551 = vpack.c.bf16 %v535, %v531
  %v568 = vunpack.c.l.b16 %v536
  %v569 = vunpack.c.l.b16 %v537
  %v570 = vunpack.c.l.b16 %v538
  %v571 = vunpack.c.l.b16 %v539
  %v572 = vunpack.c.h.b16 %v536
  %v573 = vunpack.c.h.b16 %v537
  %v574 = vunpack.c.h.b16 %v538
  %v575 = vunpack.c.h.b16 %v539
  %v576 = vunpack.c.l.b16 %v540
  %v577 = vunpack.c.l.b16 %v541
  %v578 = vunpack.c.l.b16 %v542
  %v579 = vunpack.c.l.b16 %v543
  %v580 = vunpack.c.h.b16 %v540
  %v581 = vunpack.c.h.b16 %v541
  %v582 = vunpack.c.h.b16 %v542
  %v583 = vunpack.c.h.b16 %v543
  %v584 = vunpack.c.l.b16 %v544
  %v585 = vunpack.c.l.b16 %v545
  %v586 = vunpack.c.l.b16 %v546
  %v587 = vunpack.c.l.b16 %v547
  %v588 = vunpack.c.h.b16 %v544
  %v589 = vunpack.c.h.b16 %v545
  %v590 = vunpack.c.h.b16 %v546
  %v591 = vunpack.c.h.b16 %v547
  %v592 = vunpack.c.l.b16 %v548
  %v593 = vunpack.c.l.b16 %v549
  %v594 = vunpack.c.l.b16 %v550
  %v595 = vunpack.c.l.b16 %v551
  %v596 = vunpack.c.h.b16 %v548
  %v597 = vunpack.c.h.b16 %v549
  %v598 = vunpack.c.h.b16 %v550
  %v599 = vunpack.c.h.b16 %v551
  %v600 = vpack.c.b16 %v569, %v568
  %v601 = vpack.c.b16 %v571, %v570
  %v602 = vpack.c.b16 %v573, %v572
  %v603 = vpack.c.b16 %v575, %v574
  %v604 = vpack.c.b16 %v577, %v576
  %v605 = vpack.c.b16 %v579, %v578
  %v606 = vpack.c.b16 %v581, %v580
  %v607 = vpack.c.b16 %v583, %v582
  %v608 = vpack.c.b16 %v585, %v584
  %v609 = vpack.c.b16 %v587, %v586
  %v610 = vpack.c.b16 %v589, %v588
  %v611 = vpack.c.b16 %v591, %v590
  %v612 = vpack.c.b16 %v593, %v592
  %v613 = vpack.c.b16 %v595, %v594
  %v614 = vpack.c.b16 %v597, %v596
  %v615 = vpack.c.b16 %v599, %v598
  %632 = vst [vmem:[%s5] sm:$0xff] %v600
  %633 = vst [vmem:[%s5 + $0x8] sm:$0xff] %v601
  %634 = vst [vmem:[%s5 + $0x10] sm:$0xff] %v602
  %635 = vst [vmem:[%s5 + $0x18] sm:$0xff] %v603
  %636 = vst [vmem:[%s5 + $0x20] sm:$0xff] %v604
  %637 = vst [vmem:[%s5 + $0x28] sm:$0xff] %v605
  %638 = vst [vmem:[%s5 + $0x30] sm:$0xff] %v606
  %639 = vst [vmem:[%s5 + $0x38] sm:$0xff] %v607
  %640 = vst [vmem:[%s5 + $0x40] sm:$0xff] %v608
  %641 = vst [vmem:[%s5 + $0x48] sm:$0xff] %v609
  %642 = vst [vmem:[%s5 + $0x50] sm:$0xff] %v610
  %643 = vst [vmem:[%s5 + $0x58] sm:$0xff] %v611
  %644 = vst [vmem:[%s5 + $0x60] sm:$0xff] %v612
  %645 = vst [vmem:[%s5 + $0x68] sm:$0xff] %v613
  %646 = vst [vmem:[%s5 + $0x70] sm:$0xff] %v614
  %647 = vst [vmem:[%s5 + $0x78] sm:$0xff] %v615
  // Predicated region
  $region22: #{_lambda_.42} parent=0 // pred_check
    _
  $region23: #{_lambda_.42} parent=0 // pred_check_branch
    %649 = sbr.rel (0) target = $region25
  $region24: #{_lambda_.42} parent=0 // pred_region
    _
  $region25: #{_lambda_.42} parent=0 // pred_fallthru
    _
  // Predicated region
  $region26: #{_lambda_.42} parent=0 // pred_check
    _
  $region27: #{_lambda_.42} parent=0 // pred_check_branch
    %651 = sbr.rel (0) target = $region29
  $region28: #{_lambda_.42} parent=0 // pred_region
    _
  $region29: #{_lambda_.42} parent=0 // pred_fallthru
    _

// kernel: _lambda_.50
$region0: #{_lambda_.50}
  #allocation0 [shape = 'u32[]', space=smem, size = 0x4, offset = 0x4, fixed_abs, tag = 'smem constant byte address 0x4 - core index']
  #allocation1 [shape = 'u32[144,128]{1,0:T(1,128)}', space=vmem, size = 0x12000, scoped, tag = 'internal scratch']
  %s0 = inlined_call_operand.vmem [shape: bf16[16,512], index: 0, kind: input, shape index: {}]
  %s1 = inlined_call_operand.vmem [shape: bf16[512,1024], index: 1, kind: input, shape index: {}]
  %s2 = inlined_call_operand.vmem [shape: f32[1,1024], index: 2, kind: input, shape index: {}]
  %s3 = inlined_call_operand.vmem [shape: bf16[16,1024], index: 3, kind: output, shape index: {}]
  %s4 = sld [smem:[#allocation0]]
  $region22: #{_lambda_.50} parent=0
    _
  %s6 = ssub.s32 1, %s4
  %s7 = scalar_select 0, %s6, %s4
  // Predicated region
  $region2: #{_lambda_.50} parent=0 // pred_check
    _
  $region3: #{_lambda_.50} parent=0 // pred_check_branch
    %9 = sbr.rel (0) target = $region5
  $region4: #{_lambda_.50} parent=0 // pred_region
    _
  $region5: #{_lambda_.50} parent=0 // pred_fallthru
    _
  // Predicated region
  $region6: #{_lambda_.50} parent=0 // pred_check
    _
  $region7: #{_lambda_.50} parent=0 // pred_check_branch
    %11 = sbr.rel (0) target = $region9
  $region8: #{_lambda_.50} parent=0 // pred_region
    _
  $region9: #{_lambda_.50} parent=0 // pred_fallthru
    _
  // Predicated region
  $region10: #{_lambda_.50} parent=0 // pred_check
    _
  $region11: #{_lambda_.50} parent=0 // pred_check_branch
    %13 = sbr.rel (0) target = $region13
  $region12: #{_lambda_.50} parent=0 // pred_region
    _
  $region13: #{_lambda_.50} parent=0 // pred_fallthru
    _
  %v14 = vld [vmem:[%s0] sm:$0xff]
  %v15 = vld [vmem:[%s0 + $0x8] sm:$0xff]
  %v16 = vld [vmem:[%s0 + $0x10] sm:$0xff]
  %v17 = vld [vmem:[%s0 + $0x18] sm:$0xff]
  %v18 = vld [vmem:[%s1] sm:$0xff]
  %v19 = vld [vmem:[%s1 + $0x8] sm:$0xff]
  %v20 = vld [vmem:[%s1 + $0x10] sm:$0xff]
  %v21 = vld [vmem:[%s1 + $0x18] sm:$0xff]
  %v22 = vld [vmem:[%s1 + $0x20] sm:$0xff]
  %v23 = vld [vmem:[%s1 + $0x28] sm:$0xff]
  %v24 = vld [vmem:[%s1 + $0x30] sm:$0xff]
  %v25 = vld [vmem:[%s1 + $0x38] sm:$0xff]
  %v26 = vld [vmem:[%s1 + $0x40] sm:$0xff]
  %v27 = vld [vmem:[%s1 + $0x48] sm:$0xff]
  %v28 = vld [vmem:[%s1 + $0x50] sm:$0xff]
  %v29 = vld [vmem:[%s1 + $0x58] sm:$0xff]
  %v30 = vld [vmem:[%s1 + $0x60] sm:$0xff]
  %v31 = vld [vmem:[%s1 + $0x68] sm:$0xff]
  %v32 = vld [vmem:[%s1 + $0x70] sm:$0xff]
  %v33 = vld [vmem:[%s1 + $0x78] sm:$0xff]
  %v34 = vld [vmem:[%s1 + $0x80] sm:$0xff]
  %v35 = vld [vmem:[%s1 + $0x88] sm:$0xff]
  %v36 = vld [vmem:[%s1 + $0x90] sm:$0xff]
  %v37 = vld [vmem:[%s1 + $0x98] sm:$0xff]
  %v38 = vld [vmem:[%s1 + $0xa0] sm:$0xff]
  %v39 = vld [vmem:[%s1 + $0xa8] sm:$0xff]
  %v40 = vld [vmem:[%s1 + $0xb0] sm:$0xff]
  %v41 = vld [vmem:[%s1 + $0xb8] sm:$0xff]
  %v42 = vld [vmem:[%s1 + $0xc0] sm:$0xff]
  %v43 = vld [vmem:[%s1 + $0xc8] sm:$0xff]
  %v44 = vld [vmem:[%s1 + $0xd0] sm:$0xff]
  %v45 = vld [vmem:[%s1 + $0xd8] sm:$0xff]
  %v46 = vld [vmem:[%s1 + $0xe0] sm:$0xff]
  %v47 = vld [vmem:[%s1 + $0xe8] sm:$0xff]
  %v48 = vld [vmem:[%s1 + $0xf0] sm:$0xff]
  %v49 = vld [vmem:[%s1 + $0xf8] sm:$0xff]
  %v50 = vld [vmem:[%s1 + $0x100] sm:$0xff]
  %v51 = vld [vmem:[%s1 + $0x108] sm:$0xff]
  %v52 = vld [vmem:[%s1 + $0x110] sm:$0xff]
  %v53 = vld [vmem:[%s1 + $0x118] sm:$0xff]
  %v54 = vld [vmem:[%s1 + $0x120] sm:$0xff]
  %v55 = vld [vmem:[%s1 + $0x128] sm:$0xff]
  %v56 = vld [vmem:[%s1 + $0x130] sm:$0xff]
  %v57 = vld [vmem:[%s1 + $0x138] sm:$0xff]
  %v58 = vld [vmem:[%s1 + $0x140] sm:$0xff]
  %v59 = vld [vmem:[%s1 + $0x148] sm:$0xff]
  %v60 = vld [vmem:[%s1 + $0x150] sm:$0xff]
  %v61 = vld [vmem:[%s1 + $0x158] sm:$0xff]
  %v62 = vld [vmem:[%s1 + $0x160] sm:$0xff]
  %v63 = vld [vmem:[%s1 + $0x168] sm:$0xff]
  %v64 = vld [vmem:[%s1 + $0x170] sm:$0xff]
  %v65 = vld [vmem:[%s1 + $0x178] sm:$0xff]
  %v66 = vld [vmem:[%s1 + $0x180] sm:$0xff]
  %v67 = vld [vmem:[%s1 + $0x188] sm:$0xff]
  %v68 = vld [vmem:[%s1 + $0x190] sm:$0xff]
  %v69 = vld [vmem:[%s1 + $0x198] sm:$0xff]
  %v70 = vld [vmem:[%s1 + $0x1a0] sm:$0xff]
  %v71 = vld [vmem:[%s1 + $0x1a8] sm:$0xff]
  %v72 = vld [vmem:[%s1 + $0x1b0] sm:$0xff]
  %v73 = vld [vmem:[%s1 + $0x1b8] sm:$0xff]
  %v74 = vld [vmem:[%s1 + $0x1c0] sm:$0xff]
  %v75 = vld [vmem:[%s1 + $0x1c8] sm:$0xff]
  %v76 = vld [vmem:[%s1 + $0x1d0] sm:$0xff]
  %v77 = vld [vmem:[%s1 + $0x1d8] sm:$0xff]
  %v78 = vld [vmem:[%s1 + $0x1e0] sm:$0xff]
  %v79 = vld [vmem:[%s1 + $0x1e8] sm:$0xff]
  %v80 = vld [vmem:[%s1 + $0x1f0] sm:$0xff]
  %v81 = vld [vmem:[%s1 + $0x1f8] sm:$0xff]
  %v82 = vld [vmem:[%s1 + $0x200] sm:$0xff]
  %v83 = vld [vmem:[%s1 + $0x208] sm:$0xff]
  %v84 = vld [vmem:[%s1 + $0x210] sm:$0xff]
  %v85 = vld [vmem:[%s1 + $0x218] sm:$0xff]
  %v86 = vld [vmem:[%s1 + $0x220] sm:$0xff]
  %v87 = vld [vmem:[%s1 + $0x228] sm:$0xff]
  %v88 = vld [vmem:[%s1 + $0x230] sm:$0xff]
  %v89 = vld [vmem:[%s1 + $0x238] sm:$0xff]
  %v90 = vld [vmem:[%s1 + $0x240] sm:$0xff]
  %v91 = vld [vmem:[%s1 + $0x248] sm:$0xff]
  %v92 = vld [vmem:[%s1 + $0x250] sm:$0xff]
  %v93 = vld [vmem:[%s1 + $0x258] sm:$0xff]
  %v94 = vld [vmem:[%s1 + $0x260] sm:$0xff]
  %v95 = vld [vmem:[%s1 + $0x268] sm:$0xff]
  %v96 = vld [vmem:[%s1 + $0x270] sm:$0xff]
  %v97 = vld [vmem:[%s1 + $0x278] sm:$0xff]
  %v98 = vld [vmem:[%s1 + $0x280] sm:$0xff]
  %v99 = vld [vmem:[%s1 + $0x288] sm:$0xff]
  %v100 = vld [vmem:[%s1 + $0x290] sm:$0xff]
  %v101 = vld [vmem:[%s1 + $0x298] sm:$0xff]
  %v102 = vld [vmem:[%s1 + $0x2a0] sm:$0xff]
  %v103 = vld [vmem:[%s1 + $0x2a8] sm:$0xff]
  %v104 = vld [vmem:[%s1 + $0x2b0] sm:$0xff]
  %v105 = vld [vmem:[%s1 + $0x2b8] sm:$0xff]
  %v106 = vld [vmem:[%s1 + $0x2c0] sm:$0xff]
  %v107 = vld [vmem:[%s1 + $0x2c8] sm:$0xff]
  %v108 = vld [vmem:[%s1 + $0x2d0] sm:$0xff]
  %v109 = vld [vmem:[%s1 + $0x2d8] sm:$0xff]
  %v110 = vld [vmem:[%s1 + $0x2e0] sm:$0xff]
  %v111 = vld [vmem:[%s1 + $0x2e8] sm:$0xff]
  %v112 = vld [vmem:[%s1 + $0x2f0] sm:$0xff]
  %v113 = vld [vmem:[%s1 + $0x2f8] sm:$0xff]
  %v114 = vld [vmem:[%s1 + $0x300] sm:$0xff]
  %v115 = vld [vmem:[%s1 + $0x308] sm:$0xff]
  %v116 = vld [vmem:[%s1 + $0x310] sm:$0xff]
  %v117 = vld [vmem:[%s1 + $0x318] sm:$0xff]
  %v118 = vld [vmem:[%s1 + $0x320] sm:$0xff]
  %v119 = vld [vmem:[%s1 + $0x328] sm:$0xff]
  %v120 = vld [vmem:[%s1 + $0x330] sm:$0xff]
  %v121 = vld [vmem:[%s1 + $0x338] sm:$0xff]
  %v122 = vld [vmem:[%s1 + $0x340] sm:$0xff]
  %v123 = vld [vmem:[%s1 + $0x348] sm:$0xff]
  %v124 = vld [vmem:[%s1 + $0x350] sm:$0xff]
  %v125 = vld [vmem:[%s1 + $0x358] sm:$0xff]
  %v126 = vld [vmem:[%s1 + $0x360] sm:$0xff]
  %v127 = vld [vmem:[%s1 + $0x368] sm:$0xff]
  %v128 = vld [vmem:[%s1 + $0x370] sm:$0xff]
  %v129 = vld [vmem:[%s1 + $0x378] sm:$0xff]
  %v130 = vld [vmem:[%s1 + $0x380] sm:$0xff]
  %v131 = vld [vmem:[%s1 + $0x388] sm:$0xff]
  %v132 = vld [vmem:[%s1 + $0x390] sm:$0xff]
  %v133 = vld [vmem:[%s1 + $0x398] sm:$0xff]
  %v134 = vld [vmem:[%s1 + $0x3a0] sm:$0xff]
  %v135 = vld [vmem:[%s1 + $0x3a8] sm:$0xff]
  %v136 = vld [vmem:[%s1 + $0x3b0] sm:$0xff]
  %v137 = vld [vmem:[%s1 + $0x3b8] sm:$0xff]
  %v138 = vld [vmem:[%s1 + $0x3c0] sm:$0xff]
  %v139 = vld [vmem:[%s1 + $0x3c8] sm:$0xff]
  %v140 = vld [vmem:[%s1 + $0x3d0] sm:$0xff]
  %v141 = vld [vmem:[%s1 + $0x3d8] sm:$0xff]
  %v142 = vld [vmem:[%s1 + $0x3e0] sm:$0xff]
  %v143 = vld [vmem:[%s1 + $0x3e8] sm:$0xff]
  %v144 = vld [vmem:[%s1 + $0x3f0] sm:$0xff]
  %v145 = vld [vmem:[%s1 + $0x3f8] sm:$0xff]
  %v146 = vld [vmem:[%s1 + $0x400] sm:$0xff]
  %v147 = vld [vmem:[%s1 + $0x408] sm:$0xff]
  %v148 = vld [vmem:[%s1 + $0x410] sm:$0xff]
  %v149 = vld [vmem:[%s1 + $0x418] sm:$0xff]
  %v150 = vld [vmem:[%s1 + $0x420] sm:$0xff]
  %v151 = vld [vmem:[%s1 + $0x428] sm:$0xff]
  %v152 = vld [vmem:[%s1 + $0x430] sm:$0xff]
  %v153 = vld [vmem:[%s1 + $0x438] sm:$0xff]
  %v154 = vld [vmem:[%s1 + $0x440] sm:$0xff]
  %v155 = vld [vmem:[%s1 + $0x448] sm:$0xff]
  %v156 = vld [vmem:[%s1 + $0x450] sm:$0xff]
  %v157 = vld [vmem:[%s1 + $0x458] sm:$0xff]
  %v158 = vld [vmem:[%s1 + $0x460] sm:$0xff]
  %v159 = vld [vmem:[%s1 + $0x468] sm:$0xff]
  %v160 = vld [vmem:[%s1 + $0x470] sm:$0xff]
  %v161 = vld [vmem:[%s1 + $0x478] sm:$0xff]
  %v162 = vld [vmem:[%s1 + $0x480] sm:$0xff]
  %v163 = vld [vmem:[%s1 + $0x488] sm:$0xff]
  %v164 = vld [vmem:[%s1 + $0x490] sm:$0xff]
  %v165 = vld [vmem:[%s1 + $0x498] sm:$0xff]
  %v166 = vld [vmem:[%s1 + $0x4a0] sm:$0xff]
  %v167 = vld [vmem:[%s1 + $0x4a8] sm:$0xff]
  %v168 = vld [vmem:[%s1 + $0x4b0] sm:$0xff]
  %v169 = vld [vmem:[%s1 + $0x4b8] sm:$0xff]
  %v170 = vld [vmem:[%s1 + $0x4c0] sm:$0xff]
  %v171 = vld [vmem:[%s1 + $0x4c8] sm:$0xff]
  %v172 = vld [vmem:[%s1 + $0x4d0] sm:$0xff]
  %v173 = vld [vmem:[%s1 + $0x4d8] sm:$0xff]
  %v174 = vld [vmem:[%s1 + $0x4e0] sm:$0xff]
  %v175 = vld [vmem:[%s1 + $0x4e8] sm:$0xff]
  %v176 = vld [vmem:[%s1 + $0x4f0] sm:$0xff]
  %v177 = vld [vmem:[%s1 + $0x4f8] sm:$0xff]
  %v178 = vld [vmem:[%s1 + $0x500] sm:$0xff]
  %v179 = vld [vmem:[%s1 + $0x508] sm:$0xff]
  %v180 = vld [vmem:[%s1 + $0x510] sm:$0xff]
  %v181 = vld [vmem:[%s1 + $0x518] sm:$0xff]
  %v182 = vld [vmem:[%s1 + $0x520] sm:$0xff]
  %v183 = vld [vmem:[%s1 + $0x528] sm:$0xff]
  %v184 = vld [vmem:[%s1 + $0x530] sm:$0xff]
  %v185 = vld [vmem:[%s1 + $0x538] sm:$0xff]
  %v186 = vld [vmem:[%s1 + $0x540] sm:$0xff]
  %v187 = vld [vmem:[%s1 + $0x548] sm:$0xff]
  %v188 = vld [vmem:[%s1 + $0x550] sm:$0xff]
  %v189 = vld [vmem:[%s1 + $0x558] sm:$0xff]
  %v190 = vld [vmem:[%s1 + $0x560] sm:$0xff]
  %v191 = vld [vmem:[%s1 + $0x568] sm:$0xff]
  %v192 = vld [vmem:[%s1 + $0x570] sm:$0xff]
  %v193 = vld [vmem:[%s1 + $0x578] sm:$0xff]
  %v194 = vld [vmem:[%s1 + $0x580] sm:$0xff]
  %v195 = vld [vmem:[%s1 + $0x588] sm:$0xff]
  %v196 = vld [vmem:[%s1 + $0x590] sm:$0xff]
  %v197 = vld [vmem:[%s1 + $0x598] sm:$0xff]
  %v198 = vld [vmem:[%s1 + $0x5a0] sm:$0xff]
  %v199 = vld [vmem:[%s1 + $0x5a8] sm:$0xff]
  %v200 = vld [vmem:[%s1 + $0x5b0] sm:$0xff]
  %v201 = vld [vmem:[%s1 + $0x5b8] sm:$0xff]
  %v202 = vld [vmem:[%s1 + $0x5c0] sm:$0xff]
  %v203 = vld [vmem:[%s1 + $0x5c8] sm:$0xff]
  %v204 = vld [vmem:[%s1 + $0x5d0] sm:$0xff]
  %v205 = vld [vmem:[%s1 + $0x5d8] sm:$0xff]
  %v206 = vld [vmem:[%s1 + $0x5e0] sm:$0xff]
  %v207 = vld [vmem:[%s1 + $0x5e8] sm:$0xff]
  %v208 = vld [vmem:[%s1 + $0x5f0] sm:$0xff]
  %v209 = vld [vmem:[%s1 + $0x5f8] sm:$0xff]
  %v210 = vld [vmem:[%s1 + $0x600] sm:$0xff]
  %v211 = vld [vmem:[%s1 + $0x608] sm:$0xff]
  %v212 = vld [vmem:[%s1 + $0x610] sm:$0xff]
  %v213 = vld [vmem:[%s1 + $0x618] sm:$0xff]
  %v214 = vld [vmem:[%s1 + $0x620] sm:$0xff]
  %v215 = vld [vmem:[%s1 + $0x628] sm:$0xff]
  %v216 = vld [vmem:[%s1 + $0x630] sm:$0xff]
  %v217 = vld [vmem:[%s1 + $0x638] sm:$0xff]
  %v218 = vld [vmem:[%s1 + $0x640] sm:$0xff]
  %v219 = vld [vmem:[%s1 + $0x648] sm:$0xff]
  %v220 = vld [vmem:[%s1 + $0x650] sm:$0xff]
  %v221 = vld [vmem:[%s1 + $0x658] sm:$0xff]
  %v222 = vld [vmem:[%s1 + $0x660] sm:$0xff]
  %v223 = vld [vmem:[%s1 + $0x668] sm:$0xff]
  %v224 = vld [vmem:[%s1 + $0x670] sm:$0xff]
  %v225 = vld [vmem:[%s1 + $0x678] sm:$0xff]
  %v226 = vld [vmem:[%s1 + $0x680] sm:$0xff]
  %v227 = vld [vmem:[%s1 + $0x688] sm:$0xff]
  %v228 = vld [vmem:[%s1 + $0x690] sm:$0xff]
  %v229 = vld [vmem:[%s1 + $0x698] sm:$0xff]
  %v230 = vld [vmem:[%s1 + $0x6a0] sm:$0xff]
  %v231 = vld [vmem:[%s1 + $0x6a8] sm:$0xff]
  %v232 = vld [vmem:[%s1 + $0x6b0] sm:$0xff]
  %v233 = vld [vmem:[%s1 + $0x6b8] sm:$0xff]
  %v234 = vld [vmem:[%s1 + $0x6c0] sm:$0xff]
  %v235 = vld [vmem:[%s1 + $0x6c8] sm:$0xff]
  %v236 = vld [vmem:[%s1 + $0x6d0] sm:$0xff]
  %v237 = vld [vmem:[%s1 + $0x6d8] sm:$0xff]
  %v238 = vld [vmem:[%s1 + $0x6e0] sm:$0xff]
  %v239 = vld [vmem:[%s1 + $0x6e8] sm:$0xff]
  %v240 = vld [vmem:[%s1 + $0x6f0] sm:$0xff]
  %v241 = vld [vmem:[%s1 + $0x6f8] sm:$0xff]
  %v242 = vld [vmem:[%s1 + $0x700] sm:$0xff]
  %v243 = vld [vmem:[%s1 + $0x708] sm:$0xff]
  %v244 = vld [vmem:[%s1 + $0x710] sm:$0xff]
  %v245 = vld [vmem:[%s1 + $0x718] sm:$0xff]
  %v246 = vld [vmem:[%s1 + $0x720] sm:$0xff]
  %v247 = vld [vmem:[%s1 + $0x728] sm:$0xff]
  %v248 = vld [vmem:[%s1 + $0x730] sm:$0xff]
  %v249 = vld [vmem:[%s1 + $0x738] sm:$0xff]
  %v250 = vld [vmem:[%s1 + $0x740] sm:$0xff]
  %v251 = vld [vmem:[%s1 + $0x748] sm:$0xff]
  %v252 = vld [vmem:[%s1 + $0x750] sm:$0xff]
  %v253 = vld [vmem:[%s1 + $0x758] sm:$0xff]
  %v254 = vld [vmem:[%s1 + $0x760] sm:$0xff]
  %v255 = vld [vmem:[%s1 + $0x768] sm:$0xff]
  %v256 = vld [vmem:[%s1 + $0x770] sm:$0xff]
  %v257 = vld [vmem:[%s1 + $0x778] sm:$0xff]
  %v258 = vld [vmem:[%s1 + $0x780] sm:$0xff]
  %v259 = vld [vmem:[%s1 + $0x788] sm:$0xff]
  %v260 = vld [vmem:[%s1 + $0x790] sm:$0xff]
  %v261 = vld [vmem:[%s1 + $0x798] sm:$0xff]
  %v262 = vld [vmem:[%s1 + $0x7a0] sm:$0xff]
  %v263 = vld [vmem:[%s1 + $0x7a8] sm:$0xff]
  %v264 = vld [vmem:[%s1 + $0x7b0] sm:$0xff]
  %v265 = vld [vmem:[%s1 + $0x7b8] sm:$0xff]
  %v266 = vld [vmem:[%s1 + $0x7c0] sm:$0xff]
  %v267 = vld [vmem:[%s1 + $0x7c8] sm:$0xff]
  %v268 = vld [vmem:[%s1 + $0x7d0] sm:$0xff]
  %v269 = vld [vmem:[%s1 + $0x7d8] sm:$0xff]
  %v270 = vld [vmem:[%s1 + $0x7e0] sm:$0xff]
  %v271 = vld [vmem:[%s1 + $0x7e8] sm:$0xff]
  %v272 = vld [vmem:[%s1 + $0x7f0] sm:$0xff]
  %v273 = vld [vmem:[%s1 + $0x7f8] sm:$0xff]
  %v274 = vld [vmem:[%s2] sm:$0xff]
  %v276 = vlaneseq
  %v277 = vshrl.u32 %v276, 7
  %v278 = vsub.s32 0, %v277
  %v279 = vrot.slane %v274, %v278
  %v280 = vlaneseq
  %v281 = vshrl.u32 %v280, 7
  %v282 = vsub.s32 1, %v281
  %v283 = vrot.slane %v274, %v282
  %v284 = vlaneseq
  %v285 = vshrl.u32 %v284, 7
  %v286 = vsub.s32 2, %v285
  %v287 = vrot.slane %v274, %v286
  %v288 = vlaneseq
  %v289 = vshrl.u32 %v288, 7
  %v290 = vsub.s32 3, %v289
  %v291 = vrot.slane %v274, %v290
  %v292 = vlaneseq
  %v293 = vshrl.u32 %v292, 7
  %v294 = vsub.s32 4, %v293
  %v295 = vrot.slane %v274, %v294
  %v296 = vlaneseq
  %v297 = vshrl.u32 %v296, 7
  %v298 = vsub.s32 5, %v297
  %v299 = vrot.slane %v274, %v298
  %v300 = vlaneseq
  %v301 = vshrl.u32 %v300, 7
  %v302 = vsub.s32 6, %v301
  %v303 = vrot.slane %v274, %v302
  %v304 = vlaneseq
  %v305 = vshrl.u32 %v304, 7
  %v306 = vsub.s32 7, %v305
  %v307 = vrot.slane %v274, %v306
  %v320 = vunpack.c.l.b16 %v14
  %v321 = vunpack.c.h.b16 %v14
  %v322 = vunpack.c.l.b16 %v15
  %v323 = vunpack.c.h.b16 %v15
  %v324 = vunpack.c.l.b16 %v16
  %v325 = vunpack.c.h.b16 %v16
  %v326 = vunpack.c.l.b16 %v17
  %v327 = vunpack.c.h.b16 %v17
  %v328 = vpack.c.b16 %v324, %v320
  %v329 = vpack.c.b16 %v325, %v321
  %v330 = vpack.c.b16 %v326, %v322
  %v331 = vpack.c.b16 %v327, %v323
  %v592 = vunpack.c.l.b16 %v18
  %v593 = vunpack.c.h.b16 %v18
  %v594 = vunpack.c.l.b16 %v19
  %v595 = vunpack.c.h.b16 %v19
  %v596 = vunpack.c.l.b16 %v20
  %v597 = vunpack.c.h.b16 %v20
  %v598 = vunpack.c.l.b16 %v21
  %v599 = vunpack.c.h.b16 %v21
  %v600 = vunpack.c.l.b16 %v22
  %v601 = vunpack.c.h.b16 %v22
  %v602 = vunpack.c.l.b16 %v23
  %v603 = vunpack.c.h.b16 %v23
  %v604 = vunpack.c.l.b16 %v24
  %v605 = vunpack.c.h.b16 %v24
  %v606 = vunpack.c.l.b16 %v25
  %v607 = vunpack.c.h.b16 %v25
  %v608 = vunpack.c.l.b16 %v26
  %v609 = vunpack.c.h.b16 %v26
  %v610 = vunpack.c.l.b16 %v27
  %v611 = vunpack.c.h.b16 %v27
  %v612 = vunpack.c.l.b16 %v28
  %v613 = vunpack.c.h.b16 %v28
  %v614 = vunpack.c.l.b16 %v29
  %v615 = vunpack.c.h.b16 %v29
  %v616 = vunpack.c.l.b16 %v30
  %v617 = vunpack.c.h.b16 %v30
  %v618 = vunpack.c.l.b16 %v31
  %v619 = vunpack.c.h.b16 %v31
  %v620 = vunpack.c.l.b16 %v32
  %v621 = vunpack.c.h.b16 %v32
  %v622 = vunpack.c.l.b16 %v33
  %v623 = vunpack.c.h.b16 %v33
  %v624 = vunpack.c.l.b16 %v34
  %v625 = vunpack.c.h.b16 %v34
  %v626 = vunpack.c.l.b16 %v35
  %v627 = vunpack.c.h.b16 %v35
  %v628 = vunpack.c.l.b16 %v36
  %v629 = vunpack.c.h.b16 %v36
  %v630 = vunpack.c.l.b16 %v37
  %v631 = vunpack.c.h.b16 %v37
  %v632 = vunpack.c.l.b16 %v38
  %v633 = vunpack.c.h.b16 %v38
  %v634 = vunpack.c.l.b16 %v39
  %v635 = vunpack.c.h.b16 %v39
  %v636 = vunpack.c.l.b16 %v40
  %v637 = vunpack.c.h.b16 %v40
  %v638 = vunpack.c.l.b16 %v41
  %v639 = vunpack.c.h.b16 %v41
  %v640 = vunpack.c.l.b16 %v42
  %v641 = vunpack.c.h.b16 %v42
  %v642 = vunpack.c.l.b16 %v43
  %v643 = vunpack.c.h.b16 %v43
  %v644 = vunpack.c.l.b16 %v44
  %v645 = vunpack.c.h.b16 %v44
  %v646 = vunpack.c.l.b16 %v45
  %v647 = vunpack.c.h.b16 %v45
  %v648 = vunpack.c.l.b16 %v46
  %v649 = vunpack.c.h.b16 %v46
  %v650 = vunpack.c.l.b16 %v47
  %v651 = vunpack.c.h.b16 %v47
  %v652 = vunpack.c.l.b16 %v48
  %v653 = vunpack.c.h.b16 %v48
  %v654 = vunpack.c.l.b16 %v49
  %v655 = vunpack.c.h.b16 %v49
  %v656 = vunpack.c.l.b16 %v50
  %v657 = vunpack.c.h.b16 %v50
  %v658 = vunpack.c.l.b16 %v51
  %v659 = vunpack.c.h.b16 %v51
  %v660 = vunpack.c.l.b16 %v52
  %v661 = vunpack.c.h.b16 %v52
  %v662 = vunpack.c.l.b16 %v53
  %v663 = vunpack.c.h.b16 %v53
  %v664 = vunpack.c.l.b16 %v54
  %v665 = vunpack.c.h.b16 %v54
  %v666 = vunpack.c.l.b16 %v55
  %v667 = vunpack.c.h.b16 %v55
  %v668 = vunpack.c.l.b16 %v56
  %v669 = vunpack.c.h.b16 %v56
  %v670 = vunpack.c.l.b16 %v57
  %v671 = vunpack.c.h.b16 %v57
  %v672 = vunpack.c.l.b16 %v58
  %v673 = vunpack.c.h.b16 %v58
  %v674 = vunpack.c.l.b16 %v59
  %v675 = vunpack.c.h.b16 %v59
  %v676 = vunpack.c.l.b16 %v60
  %v677 = vunpack.c.h.b16 %v60
  %v678 = vunpack.c.l.b16 %v61
  %v679 = vunpack.c.h.b16 %v61
  %v680 = vunpack.c.l.b16 %v62
  %v681 = vunpack.c.h.b16 %v62
  %v682 = vunpack.c.l.b16 %v63
  %v683 = vunpack.c.h.b16 %v63
  %v684 = vunpack.c.l.b16 %v64
  %v685 = vunpack.c.h.b16 %v64
  %v686 = vunpack.c.l.b16 %v65
  %v687 = vunpack.c.h.b16 %v65
  %v688 = vunpack.c.l.b16 %v66
  %v689 = vunpack.c.h.b16 %v66
  %v690 = vunpack.c.l.b16 %v67
  %v691 = vunpack.c.h.b16 %v67
  %v692 = vunpack.c.l.b16 %v68
  %v693 = vunpack.c.h.b16 %v68
  %v694 = vunpack.c.l.b16 %v69
  %v695 = vunpack.c.h.b16 %v69
  %v696 = vunpack.c.l.b16 %v70
  %v697 = vunpack.c.h.b16 %v70
  %v698 = vunpack.c.l.b16 %v71
  %v699 = vunpack.c.h.b16 %v71
  %v700 = vunpack.c.l.b16 %v72
  %v701 = vunpack.c.h.b16 %v72
  %v702 = vunpack.c.l.b16 %v73
  %v703 = vunpack.c.h.b16 %v73
  %v704 = vunpack.c.l.b16 %v74
  %v705 = vunpack.c.h.b16 %v74
  %v706 = vunpack.c.l.b16 %v75
  %v707 = vunpack.c.h.b16 %v75
  %v708 = vunpack.c.l.b16 %v76
  %v709 = vunpack.c.h.b16 %v76
  %v710 = vunpack.c.l.b16 %v77
  %v711 = vunpack.c.h.b16 %v77
  %v712 = vunpack.c.l.b16 %v78
  %v713 = vunpack.c.h.b16 %v78
  %v714 = vunpack.c.l.b16 %v79
  %v715 = vunpack.c.h.b16 %v79
  %v716 = vunpack.c.l.b16 %v80
  %v717 = vunpack.c.h.b16 %v80
  %v718 = vunpack.c.l.b16 %v81
  %v719 = vunpack.c.h.b16 %v81
  %v720 = vunpack.c.l.b16 %v82
  %v721 = vunpack.c.h.b16 %v82
  %v722 = vunpack.c.l.b16 %v83
  %v723 = vunpack.c.h.b16 %v83
  %v724 = vunpack.c.l.b16 %v84
  %v725 = vunpack.c.h.b16 %v84
  %v726 = vunpack.c.l.b16 %v85
  %v727 = vunpack.c.h.b16 %v85
  %v728 = vunpack.c.l.b16 %v86
  %v729 = vunpack.c.h.b16 %v86
  %v730 = vunpack.c.l.b16 %v87
  %v731 = vunpack.c.h.b16 %v87
  %v732 = vunpack.c.l.b16 %v88
  %v733 = vunpack.c.h.b16 %v88
  %v734 = vunpack.c.l.b16 %v89
  %v735 = vunpack.c.h.b16 %v89
  %v736 = vunpack.c.l.b16 %v90
  %v737 = vunpack.c.h.b16 %v90
  %v738 = vunpack.c.l.b16 %v91
  %v739 = vunpack.c.h.b16 %v91
  %v740 = vunpack.c.l.b16 %v92
  %v741 = vunpack.c.h.b16 %v92
  %v742 = vunpack.c.l.b16 %v93
  %v743 = vunpack.c.h.b16 %v93
  %v744 = vunpack.c.l.b16 %v94
  %v745 = vunpack.c.h.b16 %v94
  %v746 = vunpack.c.l.b16 %v95
  %v747 = vunpack.c.h.b16 %v95
  %v748 = vunpack.c.l.b16 %v96
  %v749 = vunpack.c.h.b16 %v96
  %v750 = vunpack.c.l.b16 %v97
  %v751 = vunpack.c.h.b16 %v97
  %v752 = vunpack.c.l.b16 %v98
  %v753 = vunpack.c.h.b16 %v98
  %v754 = vunpack.c.l.b16 %v99
  %v755 = vunpack.c.h.b16 %v99
  %v756 = vunpack.c.l.b16 %v100
  %v757 = vunpack.c.h.b16 %v100
  %v758 = vunpack.c.l.b16 %v101
  %v759 = vunpack.c.h.b16 %v101
  %v760 = vunpack.c.l.b16 %v102
  %v761 = vunpack.c.h.b16 %v102
  %v762 = vunpack.c.l.b16 %v103
  %v763 = vunpack.c.h.b16 %v103
  %v764 = vunpack.c.l.b16 %v104
  %v765 = vunpack.c.h.b16 %v104
  %v766 = vunpack.c.l.b16 %v105
  %v767 = vunpack.c.h.b16 %v105
  %v768 = vunpack.c.l.b16 %v106
  %v769 = vunpack.c.h.b16 %v106
  %v770 = vunpack.c.l.b16 %v107
  %v771 = vunpack.c.h.b16 %v107
  %v772 = vunpack.c.l.b16 %v108
  %v773 = vunpack.c.h.b16 %v108
  %v774 = vunpack.c.l.b16 %v109
  %v775 = vunpack.c.h.b16 %v109
  %v776 = vunpack.c.l.b16 %v110
  %v777 = vunpack.c.h.b16 %v110
  %v778 = vunpack.c.l.b16 %v111
  %v779 = vunpack.c.h.b16 %v111
  %v780 = vunpack.c.l.b16 %v112
  %v781 = vunpack.c.h.b16 %v112
  %v782 = vunpack.c.l.b16 %v113
  %v783 = vunpack.c.h.b16 %v113
  %v784 = vunpack.c.l.b16 %v114
  %v785 = vunpack.c.h.b16 %v114
  %v786 = vunpack.c.l.b16 %v115
  %v787 = vunpack.c.h.b16 %v115
  %v788 = vunpack.c.l.b16 %v116
  %v789 = vunpack.c.h.b16 %v116
  %v790 = vunpack.c.l.b16 %v117
  %v791 = vunpack.c.h.b16 %v117
  %v792 = vunpack.c.l.b16 %v118
  %v793 = vunpack.c.h.b16 %v118
  %v794 = vunpack.c.l.b16 %v119
  %v795 = vunpack.c.h.b16 %v119
  %v796 = vunpack.c.l.b16 %v120
  %v797 = vunpack.c.h.b16 %v120
  %v798 = vunpack.c.l.b16 %v121
  %v799 = vunpack.c.h.b16 %v121
  %v800 = vunpack.c.l.b16 %v122
  %v801 = vunpack.c.h.b16 %v122
  %v802 = vunpack.c.l.b16 %v123
  %v803 = vunpack.c.h.b16 %v123
  %v804 = vunpack.c.l.b16 %v124
  %v805 = vunpack.c.h.b16 %v124
  %v806 = vunpack.c.l.b16 %v125
  %v807 = vunpack.c.h.b16 %v125
  %v808 = vunpack.c.l.b16 %v126
  %v809 = vunpack.c.h.b16 %v126
  %v810 = vunpack.c.l.b16 %v127
  %v811 = vunpack.c.h.b16 %v127
  %v812 = vunpack.c.l.b16 %v128
  %v813 = vunpack.c.h.b16 %v128
  %v814 = vunpack.c.l.b16 %v129
  %v815 = vunpack.c.h.b16 %v129
  %v816 = vunpack.c.l.b16 %v130
  %v817 = vunpack.c.h.b16 %v130
  %v818 = vunpack.c.l.b16 %v131
  %v819 = vunpack.c.h.b16 %v131
  %v820 = vunpack.c.l.b16 %v132
  %v821 = vunpack.c.h.b16 %v132
  %v822 = vunpack.c.l.b16 %v133
  %v823 = vunpack.c.h.b16 %v133
  %v824 = vunpack.c.l.b16 %v134
  %v825 = vunpack.c.h.b16 %v134
  %v826 = vunpack.c.l.b16 %v135
  %v827 = vunpack.c.h.b16 %v135
  %v828 = vunpack.c.l.b16 %v136
  %v829 = vunpack.c.h.b16 %v136
  %v830 = vunpack.c.l.b16 %v137
  %v831 = vunpack.c.h.b16 %v137
  %v832 = vunpack.c.l.b16 %v138
  %v833 = vunpack.c.h.b16 %v138
  %v834 = vunpack.c.l.b16 %v139
  %v835 = vunpack.c.h.b16 %v139
  %v836 = vunpack.c.l.b16 %v140
  %v837 = vunpack.c.h.b16 %v140
  %v838 = vunpack.c.l.b16 %v141
  %v839 = vunpack.c.h.b16 %v141
  %v840 = vunpack.c.l.b16 %v142
  %v841 = vunpack.c.h.b16 %v142
  %v842 = vunpack.c.l.b16 %v143
  %v843 = vunpack.c.h.b16 %v143
  %v844 = vunpack.c.l.b16 %v144
  %v845 = vunpack.c.h.b16 %v144
  %v846 = vunpack.c.l.b16 %v145
  %v847 = vunpack.c.h.b16 %v145
  %v848 = vunpack.c.l.b16 %v146
  %v849 = vunpack.c.h.b16 %v146
  %v850 = vunpack.c.l.b16 %v147
  %v851 = vunpack.c.h.b16 %v147
  %v852 = vunpack.c.l.b16 %v148
  %v853 = vunpack.c.h.b16 %v148
  %v854 = vunpack.c.l.b16 %v149
  %v855 = vunpack.c.h.b16 %v149
  %v856 = vunpack.c.l.b16 %v150
  %v857 = vunpack.c.h.b16 %v150
  %v858 = vunpack.c.l.b16 %v151
  %v859 = vunpack.c.h.b16 %v151
  %v860 = vunpack.c.l.b16 %v152
  %v861 = vunpack.c.h.b16 %v152
  %v862 = vunpack.c.l.b16 %v153
  %v863 = vunpack.c.h.b16 %v153
  %v864 = vunpack.c.l.b16 %v154
  %v865 = vunpack.c.h.b16 %v154
  %v866 = vunpack.c.l.b16 %v155
  %v867 = vunpack.c.h.b16 %v155
  %v868 = vunpack.c.l.b16 %v156
  %v869 = vunpack.c.h.b16 %v156
  %v870 = vunpack.c.l.b16 %v157
  %v871 = vunpack.c.h.b16 %v157
  %v872 = vunpack.c.l.b16 %v158
  %v873 = vunpack.c.h.b16 %v158
  %v874 = vunpack.c.l.b16 %v159
  %v875 = vunpack.c.h.b16 %v159
  %v876 = vunpack.c.l.b16 %v160
  %v877 = vunpack.c.h.b16 %v160
  %v878 = vunpack.c.l.b16 %v161
  %v879 = vunpack.c.h.b16 %v161
  %v880 = vunpack.c.l.b16 %v162
  %v881 = vunpack.c.h.b16 %v162
  %v882 = vunpack.c.l.b16 %v163
  %v883 = vunpack.c.h.b16 %v163
  %v884 = vunpack.c.l.b16 %v164
  %v885 = vunpack.c.h.b16 %v164
  %v886 = vunpack.c.l.b16 %v165
  %v887 = vunpack.c.h.b16 %v165
  %v888 = vunpack.c.l.b16 %v166
  %v889 = vunpack.c.h.b16 %v166
  %v890 = vunpack.c.l.b16 %v167
  %v891 = vunpack.c.h.b16 %v167
  %v892 = vunpack.c.l.b16 %v168
  %v893 = vunpack.c.h.b16 %v168
  %v894 = vunpack.c.l.b16 %v169
  %v895 = vunpack.c.h.b16 %v169
  %v896 = vunpack.c.l.b16 %v170
  %v897 = vunpack.c.h.b16 %v170
  %v898 = vunpack.c.l.b16 %v171
  %v899 = vunpack.c.h.b16 %v171
  %v900 = vunpack.c.l.b16 %v172
  %v901 = vunpack.c.h.b16 %v172
  %v902 = vunpack.c.l.b16 %v173
  %v903 = vunpack.c.h.b16 %v173
  %v904 = vunpack.c.l.b16 %v174
  %v905 = vunpack.c.h.b16 %v174
  %v906 = vunpack.c.l.b16 %v175
  %v907 = vunpack.c.h.b16 %v175
  %v908 = vunpack.c.l.b16 %v176
  %v909 = vunpack.c.h.b16 %v176
  %v910 = vunpack.c.l.b16 %v177
  %v911 = vunpack.c.h.b16 %v177
  %v912 = vunpack.c.l.b16 %v178
  %v913 = vunpack.c.h.b16 %v178
  %v914 = vunpack.c.l.b16 %v179
  %v915 = vunpack.c.h.b16 %v179
  %v916 = vunpack.c.l.b16 %v180
  %v917 = vunpack.c.h.b16 %v180
  %v918 = vunpack.c.l.b16 %v181
  %v919 = vunpack.c.h.b16 %v181
  %v920 = vunpack.c.l.b16 %v182
  %v921 = vunpack.c.h.b16 %v182
  %v922 = vunpack.c.l.b16 %v183
  %v923 = vunpack.c.h.b16 %v183
  %v924 = vunpack.c.l.b16 %v184
  %v925 = vunpack.c.h.b16 %v184
  %v926 = vunpack.c.l.b16 %v185
  %v927 = vunpack.c.h.b16 %v185
  %v928 = vunpack.c.l.b16 %v186
  %v929 = vunpack.c.h.b16 %v186
  %v930 = vunpack.c.l.b16 %v187
  %v931 = vunpack.c.h.b16 %v187
  %v932 = vunpack.c.l.b16 %v188
  %v933 = vunpack.c.h.b16 %v188
  %v934 = vunpack.c.l.b16 %v189
  %v935 = vunpack.c.h.b16 %v189
  %v936 = vunpack.c.l.b16 %v190
  %v937 = vunpack.c.h.b16 %v190
  %v938 = vunpack.c.l.b16 %v191
  %v939 = vunpack.c.h.b16 %v191
  %v940 = vunpack.c.l.b16 %v192
  %v941 = vunpack.c.h.b16 %v192
  %v942 = vunpack.c.l.b16 %v193
  %v943 = vunpack.c.h.b16 %v193
  %v944 = vunpack.c.l.b16 %v194
  %v945 = vunpack.c.h.b16 %v194
  %v946 = vunpack.c.l.b16 %v195
  %v947 = vunpack.c.h.b16 %v195
  %v948 = vunpack.c.l.b16 %v196
  %v949 = vunpack.c.h.b16 %v196
  %v950 = vunpack.c.l.b16 %v197
  %v951 = vunpack.c.h.b16 %v197
  %v952 = vunpack.c.l.b16 %v198
  %v953 = vunpack.c.h.b16 %v198
  %v954 = vunpack.c.l.b16 %v199
  %v955 = vunpack.c.h.b16 %v199
  %v956 = vunpack.c.l.b16 %v200
  %v957 = vunpack.c.h.b16 %v200
  %v958 = vunpack.c.l.b16 %v201
  %v959 = vunpack.c.h.b16 %v201
  %v960 = vunpack.c.l.b16 %v202
  %v961 = vunpack.c.h.b16 %v202
  %v962 = vunpack.c.l.b16 %v203
  %v963 = vunpack.c.h.b16 %v203
  %v964 = vunpack.c.l.b16 %v204
  %v965 = vunpack.c.h.b16 %v204
  %v966 = vunpack.c.l.b16 %v205
  %v967 = vunpack.c.h.b16 %v205
  %v968 = vunpack.c.l.b16 %v206
  %v969 = vunpack.c.h.b16 %v206
  %v970 = vunpack.c.l.b16 %v207
  %v971 = vunpack.c.h.b16 %v207
  %v972 = vunpack.c.l.b16 %v208
  %v973 = vunpack.c.h.b16 %v208
  %v974 = vunpack.c.l.b16 %v209
  %v975 = vunpack.c.h.b16 %v209
  %v976 = vunpack.c.l.b16 %v210
  %v977 = vunpack.c.h.b16 %v210
  %v978 = vunpack.c.l.b16 %v211
  %v979 = vunpack.c.h.b16 %v211
  %v980 = vunpack.c.l.b16 %v212
  %v981 = vunpack.c.h.b16 %v212
  %v982 = vunpack.c.l.b16 %v213
  %v983 = vunpack.c.h.b16 %v213
  %v984 = vunpack.c.l.b16 %v214
  %v985 = vunpack.c.h.b16 %v214
  %v986 = vunpack.c.l.b16 %v215
  %v987 = vunpack.c.h.b16 %v215
  %v988 = vunpack.c.l.b16 %v216
  %v989 = vunpack.c.h.b16 %v216
  %v990 = vunpack.c.l.b16 %v217
  %v991 = vunpack.c.h.b16 %v217
  %v992 = vunpack.c.l.b16 %v218
  %v993 = vunpack.c.h.b16 %v218
  %v994 = vunpack.c.l.b16 %v219
  %v995 = vunpack.c.h.b16 %v219
  %v996 = vunpack.c.l.b16 %v220
  %v997 = vunpack.c.h.b16 %v220
  %v998 = vunpack.c.l.b16 %v221
  %v999 = vunpack.c.h.b16 %v221
  %v1000 = vunpack.c.l.b16 %v222
  %v1001 = vunpack.c.h.b16 %v222
  %v1002 = vunpack.c.l.b16 %v223
  %v1003 = vunpack.c.h.b16 %v223
  %v1004 = vunpack.c.l.b16 %v224
  %v1005 = vunpack.c.h.b16 %v224
  %v1006 = vunpack.c.l.b16 %v225
  %v1007 = vunpack.c.h.b16 %v225
  %v1008 = vunpack.c.l.b16 %v226
  %v1009 = vunpack.c.h.b16 %v226
  %v1010 = vunpack.c.l.b16 %v227
  %v1011 = vunpack.c.h.b16 %v227
  %v1012 = vunpack.c.l.b16 %v228
  %v1013 = vunpack.c.h.b16 %v228
  %v1014 = vunpack.c.l.b16 %v229
  %v1015 = vunpack.c.h.b16 %v229
  %v1016 = vunpack.c.l.b16 %v230
  %v1017 = vunpack.c.h.b16 %v230
  %v1018 = vunpack.c.l.b16 %v231
  %v1019 = vunpack.c.h.b16 %v231
  %v1020 = vunpack.c.l.b16 %v232
  %v1021 = vunpack.c.h.b16 %v232
  %v1022 = vunpack.c.l.b16 %v233
  %v1023 = vunpack.c.h.b16 %v233
  %v1024 = vunpack.c.l.b16 %v234
  %v1025 = vunpack.c.h.b16 %v234
  %v1026 = vunpack.c.l.b16 %v235
  %v1027 = vunpack.c.h.b16 %v235
  %v1028 = vunpack.c.l.b16 %v236
  %v1029 = vunpack.c.h.b16 %v236
  %v1030 = vunpack.c.l.b16 %v237
  %v1031 = vunpack.c.h.b16 %v237
  %v1032 = vunpack.c.l.b16 %v238
  %v1033 = vunpack.c.h.b16 %v238
  %v1034 = vunpack.c.l.b16 %v239
  %v1035 = vunpack.c.h.b16 %v239
  %v1036 = vunpack.c.l.b16 %v240
  %v1037 = vunpack.c.h.b16 %v240
  %v1038 = vunpack.c.l.b16 %v241
  %v1039 = vunpack.c.h.b16 %v241
  %v1040 = vunpack.c.l.b16 %v242
  %v1041 = vunpack.c.h.b16 %v242
  %v1042 = vunpack.c.l.b16 %v243
  %v1043 = vunpack.c.h.b16 %v243
  %v1044 = vunpack.c.l.b16 %v244
  %v1045 = vunpack.c.h.b16 %v244
  %v1046 = vunpack.c.l.b16 %v245
  %v1047 = vunpack.c.h.b16 %v245
  %v1048 = vunpack.c.l.b16 %v246
  %v1049 = vunpack.c.h.b16 %v246
  %v1050 = vunpack.c.l.b16 %v247
  %v1051 = vunpack.c.h.b16 %v247
  %v1052 = vunpack.c.l.b16 %v248
  %v1053 = vunpack.c.h.b16 %v248
  %v1054 = vunpack.c.l.b16 %v249
  %v1055 = vunpack.c.h.b16 %v249
  %v1056 = vunpack.c.l.b16 %v250
  %v1057 = vunpack.c.h.b16 %v250
  %v1058 = vunpack.c.l.b16 %v251
  %v1059 = vunpack.c.h.b16 %v251
  %v1060 = vunpack.c.l.b16 %v252
  %v1061 = vunpack.c.h.b16 %v252
  %v1062 = vunpack.c.l.b16 %v253
  %v1063 = vunpack.c.h.b16 %v253
  %v1064 = vunpack.c.l.b16 %v254
  %v1065 = vunpack.c.h.b16 %v254
  %v1066 = vunpack.c.l.b16 %v255
  %v1067 = vunpack.c.h.b16 %v255
  %v1068 = vunpack.c.l.b16 %v256
  %v1069 = vunpack.c.h.b16 %v256
  %v1070 = vunpack.c.l.b16 %v257
  %v1071 = vunpack.c.h.b16 %v257
  %v1072 = vunpack.c.l.b16 %v258
  %v1073 = vunpack.c.h.b16 %v258
  %v1074 = vunpack.c.l.b16 %v259
  %v1075 = vunpack.c.h.b16 %v259
  %v1076 = vunpack.c.l.b16 %v260
  %v1077 = vunpack.c.h.b16 %v260
  %v1078 = vunpack.c.l.b16 %v261
  %v1079 = vunpack.c.h.b16 %v261
  %v1080 = vunpack.c.l.b16 %v262
  %v1081 = vunpack.c.h.b16 %v262
  %v1082 = vunpack.c.l.b16 %v263
  %v1083 = vunpack.c.h.b16 %v263
  %v1084 = vunpack.c.l.b16 %v264
  %v1085 = vunpack.c.h.b16 %v264
  %v1086 = vunpack.c.l.b16 %v265
  %v1087 = vunpack.c.h.b16 %v265
  %v1088 = vunpack.c.l.b16 %v266
  %v1089 = vunpack.c.h.b16 %v266
  %v1090 = vunpack.c.l.b16 %v267
  %v1091 = vunpack.c.h.b16 %v267
  %v1092 = vunpack.c.l.b16 %v268
  %v1093 = vunpack.c.h.b16 %v268
  %v1094 = vunpack.c.l.b16 %v269
  %v1095 = vunpack.c.h.b16 %v269
  %v1096 = vunpack.c.l.b16 %v270
  %v1097 = vunpack.c.h.b16 %v270
  %v1098 = vunpack.c.l.b16 %v271
  %v1099 = vunpack.c.h.b16 %v271
  %v1100 = vunpack.c.l.b16 %v272
  %v1101 = vunpack.c.h.b16 %v272
  %v1102 = vunpack.c.l.b16 %v273
  %v1103 = vunpack.c.h.b16 %v273
  %v1104 = vpack.c.b16 %v600, %v592
  %v1105 = vpack.c.b16 %v601, %v593
  %v1106 = vpack.c.b16 %v602, %v594
  %v1107 = vpack.c.b16 %v603, %v595
  %v1108 = vpack.c.b16 %v604, %v596
  %v1109 = vpack.c.b16 %v605, %v597
  %v1110 = vpack.c.b16 %v606, %v598
  %v1111 = vpack.c.b16 %v607, %v599
  %v1112 = vpack.c.b16 %v616, %v608
  %v1113 = vpack.c.b16 %v617, %v609
  %v1114 = vpack.c.b16 %v618, %v610
  %v1115 = vpack.c.b16 %v619, %v611
  %v1116 = vpack.c.b16 %v620, %v612
  %v1117 = vpack.c.b16 %v621, %v613
  %v1118 = vpack.c.b16 %v622, %v614
  %v1119 = vpack.c.b16 %v623, %v615
  %v1120 = vpack.c.b16 %v632, %v624
  %v1121 = vpack.c.b16 %v633, %v625
  %v1122 = vpack.c.b16 %v634, %v626
  %v1123 = vpack.c.b16 %v635, %v627
  %v1124 = vpack.c.b16 %v636, %v628
  %v1125 = vpack.c.b16 %v637, %v629
  %v1126 = vpack.c.b16 %v638, %v630
  %v1127 = vpack.c.b16 %v639, %v631
  %v1128 = vpack.c.b16 %v648, %v640
  %v1129 = vpack.c.b16 %v649, %v641
  %v1130 = vpack.c.b16 %v650, %v642
  %v1131 = vpack.c.b16 %v651, %v643
  %v1132 = vpack.c.b16 %v652, %v644
  %v1133 = vpack.c.b16 %v653, %v645
  %v1134 = vpack.c.b16 %v654, %v646
  %v1135 = vpack.c.b16 %v655, %v647
  %v1136 = vpack.c.b16 %v664, %v656
  %v1137 = vpack.c.b16 %v665, %v657
  %v1138 = vpack.c.b16 %v666, %v658
  %v1139 = vpack.c.b16 %v667, %v659
  %v1140 = vpack.c.b16 %v668, %v660
  %v1141 = vpack.c.b16 %v669, %v661
  %v1142 = vpack.c.b16 %v670, %v662
  %v1143 = vpack.c.b16 %v671, %v663
  %v1144 = vpack.c.b16 %v680, %v672
  %v1145 = vpack.c.b16 %v681, %v673
  %v1146 = vpack.c.b16 %v682, %v674
  %v1147 = vpack.c.b16 %v683, %v675
  %v1148 = vpack.c.b16 %v684, %v676
  %v1149 = vpack.c.b16 %v685, %v677
  %v1150 = vpack.c.b16 %v686, %v678
  %v1151 = vpack.c.b16 %v687, %v679
  %v1152 = vpack.c.b16 %v696, %v688
  %v1153 = vpack.c.b16 %v697, %v689
  %v1154 = vpack.c.b16 %v698, %v690
  %v1155 = vpack.c.b16 %v699, %v691
  %v1156 = vpack.c.b16 %v700, %v692
  %v1157 = vpack.c.b16 %v701, %v693
  %v1158 = vpack.c.b16 %v702, %v694
  %v1159 = vpack.c.b16 %v703, %v695
  %v1160 = vpack.c.b16 %v712, %v704
  %v1161 = vpack.c.b16 %v713, %v705
  %v1162 = vpack.c.b16 %v714, %v706
  %v1163 = vpack.c.b16 %v715, %v707
  %v1164 = vpack.c.b16 %v716, %v708
  %v1165 = vpack.c.b16 %v717, %v709
  %v1166 = vpack.c.b16 %v718, %v710
  %v1167 = vpack.c.b16 %v719, %v711
  %v1168 = vpack.c.b16 %v728, %v720
  %v1169 = vpack.c.b16 %v729, %v721
  %v1170 = vpack.c.b16 %v730, %v722
  %v1171 = vpack.c.b16 %v731, %v723
  %v1172 = vpack.c.b16 %v732, %v724
  %v1173 = vpack.c.b16 %v733, %v725
  %v1174 = vpack.c.b16 %v734, %v726
  %v1175 = vpack.c.b16 %v735, %v727
  %v1176 = vpack.c.b16 %v744, %v736
  %v1177 = vpack.c.b16 %v745, %v737
  %v1178 = vpack.c.b16 %v746, %v738
  %v1179 = vpack.c.b16 %v747, %v739
  %v1180 = vpack.c.b16 %v748, %v740
  %v1181 = vpack.c.b16 %v749, %v741
  %v1182 = vpack.c.b16 %v750, %v742
  %v1183 = vpack.c.b16 %v751, %v743
  %v1184 = vpack.c.b16 %v760, %v752
  %v1185 = vpack.c.b16 %v761, %v753
  %v1186 = vpack.c.b16 %v762, %v754
  %v1187 = vpack.c.b16 %v763, %v755
  %v1188 = vpack.c.b16 %v764, %v756
  %v1189 = vpack.c.b16 %v765, %v757
  %v1190 = vpack.c.b16 %v766, %v758
  %v1191 = vpack.c.b16 %v767, %v759
  %v1192 = vpack.c.b16 %v776, %v768
  %v1193 = vpack.c.b16 %v777, %v769
  %v1194 = vpack.c.b16 %v778, %v770
  %v1195 = vpack.c.b16 %v779, %v771
  %v1196 = vpack.c.b16 %v780, %v772
  %v1197 = vpack.c.b16 %v781, %v773
  %v1198 = vpack.c.b16 %v782, %v774
  %v1199 = vpack.c.b16 %v783, %v775
  %v1200 = vpack.c.b16 %v792, %v784
  %v1201 = vpack.c.b16 %v793, %v785
  %v1202 = vpack.c.b16 %v794, %v786
  %v1203 = vpack.c.b16 %v795, %v787
  %v1204 = vpack.c.b16 %v796, %v788
  %v1205 = vpack.c.b16 %v797, %v789
  %v1206 = vpack.c.b16 %v798, %v790
  %v1207 = vpack.c.b16 %v799, %v791
  %v1208 = vpack.c.b16 %v808, %v800
  %v1209 = vpack.c.b16 %v809, %v801
  %v1210 = vpack.c.b16 %v810, %v802
  %v1211 = vpack.c.b16 %v811, %v803
  %v1212 = vpack.c.b16 %v812, %v804
  %v1213 = vpack.c.b16 %v813, %v805
  %v1214 = vpack.c.b16 %v814, %v806
  %v1215 = vpack.c.b16 %v815, %v807
  %v1216 = vpack.c.b16 %v824, %v816
  %v1217 = vpack.c.b16 %v825, %v817
  %v1218 = vpack.c.b16 %v826, %v818
  %v1219 = vpack.c.b16 %v827, %v819
  %v1220 = vpack.c.b16 %v828, %v820
  %v1221 = vpack.c.b16 %v829, %v821
  %v1222 = vpack.c.b16 %v830, %v822
  %v1223 = vpack.c.b16 %v831, %v823
  %v1224 = vpack.c.b16 %v840, %v832
  %v1225 = vpack.c.b16 %v841, %v833
  %v1226 = vpack.c.b16 %v842, %v834
  %v1227 = vpack.c.b16 %v843, %v835
  %v1228 = vpack.c.b16 %v844, %v836
  %v1229 = vpack.c.b16 %v845, %v837
  %v1230 = vpack.c.b16 %v846, %v838
  %v1231 = vpack.c.b16 %v847, %v839
  %v1232 = vpack.c.b16 %v856, %v848
  %v1233 = vpack.c.b16 %v857, %v849
  %v1234 = vpack.c.b16 %v858, %v850
  %v1235 = vpack.c.b16 %v859, %v851
  %v1236 = vpack.c.b16 %v860, %v852
  %v1237 = vpack.c.b16 %v861, %v853
  %v1238 = vpack.c.b16 %v862, %v854
  %v1239 = vpack.c.b16 %v863, %v855
  %v1240 = vpack.c.b16 %v872, %v864
  %v1241 = vpack.c.b16 %v873, %v865
  %v1242 = vpack.c.b16 %v874, %v866
  %v1243 = vpack.c.b16 %v875, %v867
  %v1244 = vpack.c.b16 %v876, %v868
  %v1245 = vpack.c.b16 %v877, %v869
  %v1246 = vpack.c.b16 %v878, %v870
  %v1247 = vpack.c.b16 %v879, %v871
  %v1248 = vpack.c.b16 %v888, %v880
  %v1249 = vpack.c.b16 %v889, %v881
  %v1250 = vpack.c.b16 %v890, %v882
  %v1251 = vpack.c.b16 %v891, %v883
  %v1252 = vpack.c.b16 %v892, %v884
  %v1253 = vpack.c.b16 %v893, %v885
  %v1254 = vpack.c.b16 %v894, %v886
  %v1255 = vpack.c.b16 %v895, %v887
  %v1256 = vpack.c.b16 %v904, %v896
  %v1257 = vpack.c.b16 %v905, %v897
  %v1258 = vpack.c.b16 %v906, %v898
  %v1259 = vpack.c.b16 %v907, %v899
  %v1260 = vpack.c.b16 %v908, %v900
  %v1261 = vpack.c.b16 %v909, %v901
  %v1262 = vpack.c.b16 %v910, %v902
  %v1263 = vpack.c.b16 %v911, %v903
  %v1264 = vpack.c.b16 %v920, %v912
  %v1265 = vpack.c.b16 %v921, %v913
  %v1266 = vpack.c.b16 %v922, %v914
  %v1267 = vpack.c.b16 %v923, %v915
  %v1268 = vpack.c.b16 %v924, %v916
  %v1269 = vpack.c.b16 %v925, %v917
  %v1270 = vpack.c.b16 %v926, %v918
  %v1271 = vpack.c.b16 %v927, %v919
  %v1272 = vpack.c.b16 %v936, %v928
  %v1273 = vpack.c.b16 %v937, %v929
  %v1274 = vpack.c.b16 %v938, %v930
  %v1275 = vpack.c.b16 %v939, %v931
  %v1276 = vpack.c.b16 %v940, %v932
  %v1277 = vpack.c.b16 %v941, %v933
  %v1278 = vpack.c.b16 %v942, %v934
  %v1279 = vpack.c.b16 %v943, %v935
  %v1280 = vpack.c.b16 %v952, %v944
  %v1281 = vpack.c.b16 %v953, %v945
  %v1282 = vpack.c.b16 %v954, %v946
  %v1283 = vpack.c.b16 %v955, %v947
  %v1284 = vpack.c.b16 %v956, %v948
  %v1285 = vpack.c.b16 %v957, %v949
  %v1286 = vpack.c.b16 %v958, %v950
  %v1287 = vpack.c.b16 %v959, %v951
  %v1288 = vpack.c.b16 %v968, %v960
  %v1289 = vpack.c.b16 %v969, %v961
  %v1290 = vpack.c.b16 %v970, %v962
  %v1291 = vpack.c.b16 %v971, %v963
  %v1292 = vpack.c.b16 %v972, %v964
  %v1293 = vpack.c.b16 %v973, %v965
  %v1294 = vpack.c.b16 %v974, %v966
  %v1295 = vpack.c.b16 %v975, %v967
  %v1296 = vpack.c.b16 %v984, %v976
  %v1297 = vpack.c.b16 %v985, %v977
  %v1298 = vpack.c.b16 %v986, %v978
  %v1299 = vpack.c.b16 %v987, %v979
  %v1300 = vpack.c.b16 %v988, %v980
  %v1301 = vpack.c.b16 %v989, %v981
  %v1302 = vpack.c.b16 %v990, %v982
  %v1303 = vpack.c.b16 %v991, %v983
  %v1304 = vpack.c.b16 %v1000, %v992
  %v1305 = vpack.c.b16 %v1001, %v993
  %v1306 = vpack.c.b16 %v1002, %v994
  %v1307 = vpack.c.b16 %v1003, %v995
  %v1308 = vpack.c.b16 %v1004, %v996
  %v1309 = vpack.c.b16 %v1005, %v997
  %v1310 = vpack.c.b16 %v1006, %v998
  %v1311 = vpack.c.b16 %v1007, %v999
  %v1312 = vpack.c.b16 %v1016, %v1008
  %v1313 = vpack.c.b16 %v1017, %v1009
  %v1314 = vpack.c.b16 %v1018, %v1010
  %v1315 = vpack.c.b16 %v1019, %v1011
  %v1316 = vpack.c.b16 %v1020, %v1012
  %v1317 = vpack.c.b16 %v1021, %v1013
  %v1318 = vpack.c.b16 %v1022, %v1014
  %v1319 = vpack.c.b16 %v1023, %v1015
  %v1320 = vpack.c.b16 %v1032, %v1024
  %v1321 = vpack.c.b16 %v1033, %v1025
  %v1322 = vpack.c.b16 %v1034, %v1026
  %v1323 = vpack.c.b16 %v1035, %v1027
  %v1324 = vpack.c.b16 %v1036, %v1028
  %v1325 = vpack.c.b16 %v1037, %v1029
  %v1326 = vpack.c.b16 %v1038, %v1030
  %v1327 = vpack.c.b16 %v1039, %v1031
  %v1328 = vpack.c.b16 %v1048, %v1040
  %v1329 = vpack.c.b16 %v1049, %v1041
  %v1330 = vpack.c.b16 %v1050, %v1042
  %v1331 = vpack.c.b16 %v1051, %v1043
  %v1332 = vpack.c.b16 %v1052, %v1044
  %v1333 = vpack.c.b16 %v1053, %v1045
  %v1334 = vpack.c.b16 %v1054, %v1046
  %v1335 = vpack.c.b16 %v1055, %v1047
  %v1336 = vpack.c.b16 %v1064, %v1056
  %v1337 = vpack.c.b16 %v1065, %v1057
  %v1338 = vpack.c.b16 %v1066, %v1058
  %v1339 = vpack.c.b16 %v1067, %v1059
  %v1340 = vpack.c.b16 %v1068, %v1060
  %v1341 = vpack.c.b16 %v1069, %v1061
  %v1342 = vpack.c.b16 %v1070, %v1062
  %v1343 = vpack.c.b16 %v1071, %v1063
  %v1344 = vpack.c.b16 %v1080, %v1072
  %v1345 = vpack.c.b16 %v1081, %v1073
  %v1346 = vpack.c.b16 %v1082, %v1074
  %v1347 = vpack.c.b16 %v1083, %v1075
  %v1348 = vpack.c.b16 %v1084, %v1076
  %v1349 = vpack.c.b16 %v1085, %v1077
  %v1350 = vpack.c.b16 %v1086, %v1078
  %v1351 = vpack.c.b16 %v1087, %v1079
  %v1352 = vpack.c.b16 %v1096, %v1088
  %v1353 = vpack.c.b16 %v1097, %v1089
  %v1354 = vpack.c.b16 %v1098, %v1090
  %v1355 = vpack.c.b16 %v1099, %v1091
  %v1356 = vpack.c.b16 %v1100, %v1092
  %v1357 = vpack.c.b16 %v1101, %v1093
  %v1358 = vpack.c.b16 %v1102, %v1094
  %v1359 = vpack.c.b16 %v1103, %v1095
  %1616 = vmatprep.subr.bf16.mxu0 %v1105
  %1617 = vmatpush1.bf16.msra.mxu0 %v1104
  %1618 = vmatprep.subr.bf16.mxu0 %v1113
  %1619 = vmatpush1.bf16.msra.mxu0 %v1112
  %1620 = vmatprep.subr.bf16.mxu0 %v1121
  %1621 = vmatpush1.bf16.msra.mxu0 %v1120
  %1622 = vmatprep.subr.bf16.mxu0 %v1129
  %1623 = vmatpush1.bf16.msra.mxu0 %v1128
  %1624 = vmatprep.subr.bf16.mxu0 %v1137
  %1625 = vmatpush1.bf16.msra.mxu0 %v1136
  %1626 = vmatprep.subr.bf16.mxu0 %v1145
  %1627 = vmatpush1.bf16.msra.mxu0 %v1144
  %1628 = vmatprep.subr.bf16.mxu0 %v1153
  %1629 = vmatpush1.bf16.msra.mxu0 %v1152
  %1630 = vmatprep.subr.bf16.mxu0 %v1161
  %1631 = vmatpush1.bf16.msra.mxu0 %v1160
  %1632 = vmatprep.subr.bf16.mxu0 %v1169
  %1633 = vmatpush1.bf16.msra.mxu0 %v1168
  %1634 = vmatprep.subr.bf16.mxu0 %v1177
  %1635 = vmatpush1.bf16.msra.mxu0 %v1176
  %1636 = vmatprep.subr.bf16.mxu0 %v1185
  %1637 = vmatpush1.bf16.msra.mxu0 %v1184
  %1638 = vmatprep.subr.bf16.mxu0 %v1193
  %1639 = vmatpush1.bf16.msra.mxu0 %v1192
  %1640 = vmatprep.subr.bf16.mxu0 %v1201
  %1641 = vmatpush1.bf16.msra.mxu0 %v1200
  %1642 = vmatprep.subr.bf16.mxu0 %v1209
  %1643 = vmatpush1.bf16.msra.mxu0 %v1208
  %1644 = vmatprep.subr.bf16.mxu0 %v1217
  %1645 = vmatpush1.bf16.msra.mxu0 %v1216
  %1646 = vmatprep.subr.bf16.mxu0 %v1225
  %1647 = vmatpush1.bf16.msra.mxu0 %v1224
  %1648 = vmatprep.mubr.bf16.mxu0 %v329
  %1649 = vmatmul.mubr.bf16.gmra.mrb[0].mxu0 %v328
  %v1650 = vpop.f32.mrb[0].mxu0
  %v1651 = vadd.f32 %v279, %v1650
  %v1652 = vpop.f32.mrb[0].mxu0
  %v1653 = vadd.f32 %v283, %v1652
  %v1654 = vpop.f32.mrb[0].mxu0
  %v1655 = vadd.f32 %v279, %v1654
  %v1656 = vpop.f32.mrb[0].mxu0
  %v1657 = vadd.f32 %v283, %v1656
  %1658 = vdwg.mxu0
  %1659 = vmatprep.subr.bf16.mxu0 %v1233
  %1660 = vmatpush1.bf16.msra.mxu0 %v1232
  %1661 = vmatprep.subr.bf16.mxu0 %v1241
  %1662 = vmatpush1.bf16.msra.mxu0 %v1240
  %1663 = vmatprep.subr.bf16.mxu0 %v1249
  %1664 = vmatpush1.bf16.msra.mxu0 %v1248
  %1665 = vmatprep.subr.bf16.mxu0 %v1257
  %1666 = vmatpush1.bf16.msra.mxu0 %v1256
  %1667 = vmatprep.subr.bf16.mxu0 %v1265
  %1668 = vmatpush1.bf16.msra.mxu0 %v1264
  %1669 = vmatprep.subr.bf16.mxu0 %v1273
  %1670 = vmatpush1.bf16.msra.mxu0 %v1272
  %1671 = vmatprep.subr.bf16.mxu0 %v1281
  %1672 = vmatpush1.bf16.msra.mxu0 %v1280
  %1673 = vmatprep.subr.bf16.mxu0 %v1289
  %1674 = vmatpush1.bf16.msra.mxu0 %v1288
  %1675 = vmatprep.subr.bf16.mxu0 %v1297
  %1676 = vmatpush1.bf16.msra.mxu0 %v1296
  %1677 = vmatprep.subr.bf16.mxu0 %v1305
  %1678 = vmatpush1.bf16.msra.mxu0 %v1304
  %1679 = vmatprep.subr.bf16.mxu0 %v1313
  %1680 = vmatpush1.bf16.msra.mxu0 %v1312
  %1681 = vmatprep.subr.bf16.mxu0 %v1321
  %1682 = vmatpush1.bf16.msra.mxu0 %v1320
  %1683 = vmatprep.subr.bf16.mxu0 %v1329
  %1684 = vmatpush1.bf16.msra.mxu0 %v1328
  %1685 = vmatprep.subr.bf16.mxu0 %v1337
  %1686 = vmatpush1.bf16.msra.mxu0 %v1336
  %1687 = vmatprep.subr.bf16.mxu0 %v1345
  %1688 = vmatpush1.bf16.msra.mxu0 %v1344
  %1689 = vmatprep.subr.bf16.mxu0 %v1353
  %1690 = vmatpush1.bf16.msra.mxu0 %v1352
  %1691 = vmatprep.mubr.bf16.mxu0 %v331
  %1692 = vmatmul.mubr.bf16.gmra.mrb[0].mxu0 %v330
  %v1693 = vpop.f32.mrb[0].mxu0
  %v1694 = vadd.f32 %v1651, %v1693
  %v1695 = vpop.f32.mrb[0].mxu0
  %v1696 = vadd.f32 %v1653, %v1695
  %v1697 = vpop.f32.mrb[0].mxu0
  %v1698 = vadd.f32 %v1655, %v1697
  %v1699 = vpop.f32.mrb[0].mxu0
  %v1700 = vadd.f32 %v1657, %v1699
  %1701 = vdwg.mxu0
  %1702 = vmatprep.subr.bf16.mxu0 %v1107
  %1703 = vmatpush1.bf16.msra.mxu0 %v1106
  %1704 = vmatprep.subr.bf16.mxu0 %v1115
  %1705 = vmatpush1.bf16.msra.mxu0 %v1114
  %1706 = vmatprep.subr.bf16.mxu0 %v1123
  %1707 = vmatpush1.bf16.msra.mxu0 %v1122
  %1708 = vmatprep.subr.bf16.mxu0 %v1131
  %1709 = vmatpush1.bf16.msra.mxu0 %v1130
  %1710 = vmatprep.subr.bf16.mxu0 %v1139
  %1711 = vmatpush1.bf16.msra.mxu0 %v1138
  %1712 = vmatprep.subr.bf16.mxu0 %v1147
  %1713 = vmatpush1.bf16.msra.mxu0 %v1146
  %1714 = vmatprep.subr.bf16.mxu0 %v1155
  %1715 = vmatpush1.bf16.msra.mxu0 %v1154
  %1716 = vmatprep.subr.bf16.mxu0 %v1163
  %1717 = vmatpush1.bf16.msra.mxu0 %v1162
  %1718 = vmatprep.subr.bf16.mxu0 %v1171
  %1719 = vmatpush1.bf16.msra.mxu0 %v1170
  %1720 = vmatprep.subr.bf16.mxu0 %v1179
  %1721 = vmatpush1.bf16.msra.mxu0 %v1178
  %1722 = vmatprep.subr.bf16.mxu0 %v1187
  %1723 = vmatpush1.bf16.msra.mxu0 %v1186
  %1724 = vmatprep.subr.bf16.mxu0 %v1195
  %1725 = vmatpush1.bf16.msra.mxu0 %v1194
  %1726 = vmatprep.subr.bf16.mxu0 %v1203
  %1727 = vmatpush1.bf16.msra.mxu0 %v1202
  %1728 = vmatprep.subr.bf16.mxu0 %v1211
  %1729 = vmatpush1.bf16.msra.mxu0 %v1210
  %1730 = vmatprep.subr.bf16.mxu0 %v1219
  %1731 = vmatpush1.bf16.msra.mxu0 %v1218
  %1732 = vmatprep.subr.bf16.mxu0 %v1227
  %1733 = vmatpush1.bf16.msra.mxu0 %v1226
  %1734 = vmatprep.mubr.bf16.mxu0 %v329
  %1735 = vmatmul.mubr.bf16.gmra.mrb[0].mxu0 %v328
  %v1736 = vpop.f32.mrb[0].mxu0
  %v1737 = vadd.f32 %v287, %v1736
  %v1738 = vpop.f32.mrb[0].mxu0
  %v1739 = vadd.f32 %v291, %v1738
  %v1740 = vpop.f32.mrb[0].mxu0
  %v1741 = vadd.f32 %v287, %v1740
  %v1742 = vpop.f32.mrb[0].mxu0
  %v1743 = vadd.f32 %v291, %v1742
  %1744 = vdwg.mxu0
  %1745 = vmatprep.subr.bf16.mxu0 %v1235
  %1746 = vmatpush1.bf16.msra.mxu0 %v1234
  %1747 = vmatprep.subr.bf16.mxu0 %v1243
  %1748 = vmatpush1.bf16.msra.mxu0 %v1242
  %1749 = vmatprep.subr.bf16.mxu0 %v1251
  %1750 = vmatpush1.bf16.msra.mxu0 %v1250
  %1751 = vmatprep.subr.bf16.mxu0 %v1259
  %1752 = vmatpush1.bf16.msra.mxu0 %v1258
  %1753 = vmatprep.subr.bf16.mxu0 %v1267
  %1754 = vmatpush1.bf16.msra.mxu0 %v1266
  %1755 = vmatprep.subr.bf16.mxu0 %v1275
  %1756 = vmatpush1.bf16.msra.mxu0 %v1274
  %1757 = vmatprep.subr.bf16.mxu0 %v1283
  %1758 = vmatpush1.bf16.msra.mxu0 %v1282
  %1759 = vmatprep.subr.bf16.mxu0 %v1291
  %1760 = vmatpush1.bf16.msra.mxu0 %v1290
  %1761 = vmatprep.subr.bf16.mxu0 %v1299
  %1762 = vmatpush1.bf16.msra.mxu0 %v1298
  %1763 = vmatprep.subr.bf16.mxu0 %v1307
  %1764 = vmatpush1.bf16.msra.mxu0 %v1306
  %1765 = vmatprep.subr.bf16.mxu0 %v1315
  %1766 = vmatpush1.bf16.msra.mxu0 %v1314
  %1767 = vmatprep.subr.bf16.mxu0 %v1323
  %1768 = vmatpush1.bf16.msra.mxu0 %v1322
  %1769 = vmatprep.subr.bf16.mxu0 %v1331
  %1770 = vmatpush1.bf16.msra.mxu0 %v1330
  %1771 = vmatprep.subr.bf16.mxu0 %v1339
  %1772 = vmatpush1.bf16.msra.mxu0 %v1338
  %1773 = vmatprep.subr.bf16.mxu0 %v1347
  %1774 = vmatpush1.bf16.msra.mxu0 %v1346
  %1775 = vmatprep.subr.bf16.mxu0 %v1355
  %1776 = vmatpush1.bf16.msra.mxu0 %v1354
  %1777 = vmatprep.mubr.bf16.mxu0 %v331
  %1778 = vmatmul.mubr.bf16.gmra.mrb[0].mxu0 %v330
  %v1779 = vpop.f32.mrb[0].mxu0
  %v1780 = vadd.f32 %v1737, %v1779
  %v1781 = vpop.f32.mrb[0].mxu0
  %v1782 = vadd.f32 %v1739, %v1781
  %v1783 = vpop.f32.mrb[0].mxu0
  %v1784 = vadd.f32 %v1741, %v1783
  %v1785 = vpop.f32.mrb[0].mxu0
  %v1786 = vadd.f32 %v1743, %v1785
  %1787 = vdwg.mxu0
  %1788 = vmatprep.subr.bf16.mxu0 %v1109
  %1789 = vmatpush1.bf16.msra.mxu0 %v1108
  %1790 = vmatprep.subr.bf16.mxu0 %v1117
  %1791 = vmatpush1.bf16.msra.mxu0 %v1116
  %1792 = vmatprep.subr.bf16.mxu0 %v1125
  %1793 = vmatpush1.bf16.msra.mxu0 %v1124
  %1794 = vmatprep.subr.bf16.mxu0 %v1133
  %1795 = vmatpush1.bf16.msra.mxu0 %v1132
  %1796 = vmatprep.subr.bf16.mxu0 %v1141
  %1797 = vmatpush1.bf16.msra.mxu0 %v1140
  %1798 = vmatprep.subr.bf16.mxu0 %v1149
  %1799 = vmatpush1.bf16.msra.mxu0 %v1148
  %1800 = vmatprep.subr.bf16.mxu0 %v1157
  %1801 = vmatpush1.bf16.msra.mxu0 %v1156
  %1802 = vmatprep.subr.bf16.mxu0 %v1165
  %1803 = vmatpush1.bf16.msra.mxu0 %v1164
  %1804 = vmatprep.subr.bf16.mxu0 %v1173
  %1805 = vmatpush1.bf16.msra.mxu0 %v1172
  %1806 = vmatprep.subr.bf16.mxu0 %v1181
  %1807 = vmatpush1.bf16.msra.mxu0 %v1180
  %1808 = vmatprep.subr.bf16.mxu0 %v1189
  %1809 = vmatpush1.bf16.msra.mxu0 %v1188
  %1810 = vmatprep.subr.bf16.mxu0 %v1197
  %1811 = vmatpush1.bf16.msra.mxu0 %v1196
  %1812 = vmatprep.subr.bf16.mxu0 %v1205
  %1813 = vmatpush1.bf16.msra.mxu0 %v1204
  %1814 = vmatprep.subr.bf16.mxu0 %v1213
  %1815 = vmatpush1.bf16.msra.mxu0 %v1212
  %1816 = vmatprep.subr.bf16.mxu0 %v1221
  %1817 = vmatpush1.bf16.msra.mxu0 %v1220
  %1818 = vmatprep.subr.bf16.mxu0 %v1229
  %1819 = vmatpush1.bf16.msra.mxu0 %v1228
  %1820 = vmatprep.mubr.bf16.mxu0 %v329
  %1821 = vmatmul.mubr.bf16.gmra.mrb[0].mxu0 %v328
  %v1822 = vpop.f32.mrb[0].mxu0
  %v1823 = vadd.f32 %v295, %v1822
  %v1824 = vpop.f32.mrb[0].mxu0
  %v1825 = vadd.f32 %v299, %v1824
  %v1826 = vpop.f32.mrb[0].mxu0
  %v1827 = vadd.f32 %v295, %v1826
  %v1828 = vpop.f32.mrb[0].mxu0
  %v1829 = vadd.f32 %v299, %v1828
  %1830 = vdwg.mxu0
  %1831 = vmatprep.subr.bf16.mxu0 %v1237
  %1832 = vmatpush1.bf16.msra.mxu0 %v1236
  %1833 = vmatprep.subr.bf16.mxu0 %v1245
  %1834 = vmatpush1.bf16.msra.mxu0 %v1244
  %1835 = vmatprep.subr.bf16.mxu0 %v1253
  %1836 = vmatpush1.bf16.msra.mxu0 %v1252
  %1837 = vmatprep.subr.bf16.mxu0 %v1261
  %1838 = vmatpush1.bf16.msra.mxu0 %v1260
  %1839 = vmatprep.subr.bf16.mxu0 %v1269
  %1840 = vmatpush1.bf16.msra.mxu0 %v1268
  %1841 = vmatprep.subr.bf16.mxu0 %v1277
  %1842 = vmatpush1.bf16.msra.mxu0 %v1276
  %1843 = vmatprep.subr.bf16.mxu0 %v1285
  %1844 = vmatpush1.bf16.msra.mxu0 %v1284
  %1845 = vmatprep.subr.bf16.mxu0 %v1293
  %1846 = vmatpush1.bf16.msra.mxu0 %v1292
  %1847 = vmatprep.subr.bf16.mxu0 %v1301
  %1848 = vmatpush1.bf16.msra.mxu0 %v1300
  %1849 = vmatprep.subr.bf16.mxu0 %v1309
  %1850 = vmatpush1.bf16.msra.mxu0 %v1308
  %1851 = vmatprep.subr.bf16.mxu0 %v1317
  %1852 = vmatpush1.bf16.msra.mxu0 %v1316
  %1853 = vmatprep.subr.bf16.mxu0 %v1325
  %1854 = vmatpush1.bf16.msra.mxu0 %v1324
  %1855 = vmatprep.subr.bf16.mxu0 %v1333
  %1856 = vmatpush1.bf16.msra.mxu0 %v1332
  %1857 = vmatprep.subr.bf16.mxu0 %v1341
  %1858 = vmatpush1.bf16.msra.mxu0 %v1340
  %1859 = vmatprep.subr.bf16.mxu0 %v1349
  %1860 = vmatpush1.bf16.msra.mxu0 %v1348
  %1861 = vmatprep.subr.bf16.mxu0 %v1357
  %1862 = vmatpush1.bf16.msra.mxu0 %v1356
  %1863 = vmatprep.mubr.bf16.mxu0 %v331
  %1864 = vmatmul.mubr.bf16.gmra.mrb[0].mxu0 %v330
  %v1865 = vpop.f32.mrb[0].mxu0
  %v1866 = vadd.f32 %v1823, %v1865
  %v1867 = vpop.f32.mrb[0].mxu0
  %v1868 = vadd.f32 %v1825, %v1867
  %v1869 = vpop.f32.mrb[0].mxu0
  %v1870 = vadd.f32 %v1827, %v1869
  %v1871 = vpop.f32.mrb[0].mxu0
  %v1872 = vadd.f32 %v1829, %v1871
  %1873 = vdwg.mxu0
  %1874 = vmatprep.subr.bf16.mxu0 %v1111
  %1875 = vmatpush1.bf16.msra.mxu0 %v1110
  %1876 = vmatprep.subr.bf16.mxu0 %v1119
  %1877 = vmatpush1.bf16.msra.mxu0 %v1118
  %1878 = vmatprep.subr.bf16.mxu0 %v1127
  %1879 = vmatpush1.bf16.msra.mxu0 %v1126
  %1880 = vmatprep.subr.bf16.mxu0 %v1135
  %1881 = vmatpush1.bf16.msra.mxu0 %v1134
  %1882 = vmatprep.subr.bf16.mxu0 %v1143
  %1883 = vmatpush1.bf16.msra.mxu0 %v1142
  %1884 = vmatprep.subr.bf16.mxu0 %v1151
  %1885 = vmatpush1.bf16.msra.mxu0 %v1150
  %1886 = vmatprep.subr.bf16.mxu0 %v1159
  %1887 = vmatpush1.bf16.msra.mxu0 %v1158
  %1888 = vmatprep.subr.bf16.mxu0 %v1167
  %1889 = vmatpush1.bf16.msra.mxu0 %v1166
  %1890 = vmatprep.subr.bf16.mxu0 %v1175
  %1891 = vmatpush1.bf16.msra.mxu0 %v1174
  %1892 = vmatprep.subr.bf16.mxu0 %v1183
  %1893 = vmatpush1.bf16.msra.mxu0 %v1182
  %1894 = vmatprep.subr.bf16.mxu0 %v1191
  %1895 = vmatpush1.bf16.msra.mxu0 %v1190
  %1896 = vmatprep.subr.bf16.mxu0 %v1199
  %1897 = vmatpush1.bf16.msra.mxu0 %v1198
  %1898 = vmatprep.subr.bf16.mxu0 %v1207
  %1899 = vmatpush1.bf16.msra.mxu0 %v1206
  %1900 = vmatprep.subr.bf16.mxu0 %v1215
  %1901 = vmatpush1.bf16.msra.mxu0 %v1214
  %1902 = vmatprep.subr.bf16.mxu0 %v1223
  %1903 = vmatpush1.bf16.msra.mxu0 %v1222
  %1904 = vmatprep.subr.bf16.mxu0 %v1231
  %1905 = vmatpush1.bf16.msra.mxu0 %v1230
  %1906 = vmatprep.mubr.bf16.mxu0 %v329
  %1907 = vmatmul.mubr.bf16.gmra.mrb[0].mxu0 %v328
  %v1908 = vpop.f32.mrb[0].mxu0
  %v1909 = vadd.f32 %v303, %v1908
  %v1910 = vpop.f32.mrb[0].mxu0
  %v1911 = vadd.f32 %v307, %v1910
  %v1912 = vpop.f32.mrb[0].mxu0
  %v1913 = vadd.f32 %v303, %v1912
  %v1914 = vpop.f32.mrb[0].mxu0
  %v1915 = vadd.f32 %v307, %v1914
  %1916 = vdwg.mxu0
  %1917 = vmatprep.subr.bf16.mxu0 %v1239
  %1918 = vmatpush1.bf16.msra.mxu0 %v1238
  %1919 = vmatprep.subr.bf16.mxu0 %v1247
  %1920 = vmatpush1.bf16.msra.mxu0 %v1246
  %1921 = vmatprep.subr.bf16.mxu0 %v1255
  %1922 = vmatpush1.bf16.msra.mxu0 %v1254
  %1923 = vmatprep.subr.bf16.mxu0 %v1263
  %1924 = vmatpush1.bf16.msra.mxu0 %v1262
  %1925 = vmatprep.subr.bf16.mxu0 %v1271
  %1926 = vmatpush1.bf16.msra.mxu0 %v1270
  %1927 = vmatprep.subr.bf16.mxu0 %v1279
  %1928 = vmatpush1.bf16.msra.mxu0 %v1278
  %1929 = vmatprep.subr.bf16.mxu0 %v1287
  %1930 = vmatpush1.bf16.msra.mxu0 %v1286
  %1931 = vmatprep.subr.bf16.mxu0 %v1295
  %1932 = vmatpush1.bf16.msra.mxu0 %v1294
  %1933 = vmatprep.subr.bf16.mxu0 %v1303
  %1934 = vmatpush1.bf16.msra.mxu0 %v1302
  %1935 = vmatprep.subr.bf16.mxu0 %v1311
  %1936 = vmatpush1.bf16.msra.mxu0 %v1310
  %1937 = vmatprep.subr.bf16.mxu0 %v1319
  %1938 = vmatpush1.bf16.msra.mxu0 %v1318
  %1939 = vmatprep.subr.bf16.mxu0 %v1327
  %1940 = vmatpush1.bf16.msra.mxu0 %v1326
  %1941 = vmatprep.subr.bf16.mxu0 %v1335
  %1942 = vmatpush1.bf16.msra.mxu0 %v1334
  %1943 = vmatprep.subr.bf16.mxu0 %v1343
  %1944 = vmatpush1.bf16.msra.mxu0 %v1342
  %1945 = vmatprep.subr.bf16.mxu0 %v1351
  %1946 = vmatpush1.bf16.msra.mxu0 %v1350
  %1947 = vmatprep.subr.bf16.mxu0 %v1359
  %1948 = vmatpush1.bf16.msra.mxu0 %v1358
  %1949 = vmatprep.mubr.bf16.mxu0 %v331
  %1950 = vmatmul.mubr.bf16.gmra.mrb[0].mxu0 %v330
  %v1951 = vpop.f32.mrb[0].mxu0
  %v1952 = vadd.f32 %v1909, %v1951
  %v1953 = vpop.f32.mrb[0].mxu0
  %v1954 = vadd.f32 %v1911, %v1953
  %v1955 = vpop.f32.mrb[0].mxu0
  %v1956 = vadd.f32 %v1913, %v1955
  %v1957 = vpop.f32.mrb[0].mxu0
  %v1958 = vadd.f32 %v1915, %v1957
  %1959 = vdwg.mxu0
  %v1960 = vpack.c.bf16 %v1698, %v1694
  %v1961 = vpack.c.bf16 %v1700, %v1696
  %v1962 = vpack.c.bf16 %v1784, %v1780
  %v1963 = vpack.c.bf16 %v1786, %v1782
  %v1964 = vpack.c.bf16 %v1870, %v1866
  %v1965 = vpack.c.bf16 %v1872, %v1868
  %v1966 = vpack.c.bf16 %v1956, %v1952
  %v1967 = vpack.c.bf16 %v1958, %v1954
  %v1976 = vunpack.c.l.b16 %v1960
  %v1977 = vunpack.c.l.b16 %v1961
  %v1978 = vunpack.c.l.b16 %v1962
  %v1979 = vunpack.c.l.b16 %v1963
  %v1980 = vunpack.c.l.b16 %v1964
  %v1981 = vunpack.c.l.b16 %v1965
  %v1982 = vunpack.c.l.b16 %v1966
  %v1983 = vunpack.c.l.b16 %v1967
  %v1984 = vunpack.c.h.b16 %v1960
  %v1985 = vunpack.c.h.b16 %v1961
  %v1986 = vunpack.c.h.b16 %v1962
  %v1987 = vunpack.c.h.b16 %v1963
  %v1988 = vunpack.c.h.b16 %v1964
  %v1989 = vunpack.c.h.b16 %v1965
  %v1990 = vunpack.c.h.b16 %v1966
  %v1991 = vunpack.c.h.b16 %v1967
  %v1992 = vpack.c.b16 %v1977, %v1976
  %v1993 = vpack.c.b16 %v1979, %v1978
  %v1994 = vpack.c.b16 %v1981, %v1980
  %v1995 = vpack.c.b16 %v1983, %v1982
  %v1996 = vpack.c.b16 %v1985, %v1984
  %v1997 = vpack.c.b16 %v1987, %v1986
  %v1998 = vpack.c.b16 %v1989, %v1988
  %v1999 = vpack.c.b16 %v1991, %v1990
  %2008 = vst [vmem:[%s3] sm:$0xff] %v1992
  %2009 = vst [vmem:[%s3 + $0x8] sm:$0xff] %v1993
  %2010 = vst [vmem:[%s3 + $0x10] sm:$0xff] %v1994
  %2011 = vst [vmem:[%s3 + $0x18] sm:$0xff] %v1995
  %2012 = vst [vmem:[%s3 + $0x20] sm:$0xff] %v1996
  %2013 = vst [vmem:[%s3 + $0x28] sm:$0xff] %v1997
  %2014 = vst [vmem:[%s3 + $0x30] sm:$0xff] %v1998
  %2015 = vst [vmem:[%s3 + $0x38] sm:$0xff] %v1999
  // Predicated region
  $region14: #{_lambda_.50} parent=0 // pred_check
    _
  $region15: #{_lambda_.50} parent=0 // pred_check_branch
    %2017 = sbr.rel (0) target = $region17
  $region16: #{_lambda_.50} parent=0 // pred_region
    _
  $region17: #{_lambda_.50} parent=0 // pred_fallthru
    _
  // Predicated region
  $region18: #{_lambda_.50} parent=0 // pred_check
    _
  $region19: #{_lambda_.50} parent=0 // pred_check_branch
    %2019 = sbr.rel (0) target = $region21
  $region20: #{_lambda_.50} parent=0 // pred_region
    _
  $region21: #{_lambda_.50} parent=0 // pred_fallthru
    _

// kernel: _lambda_.51
$region0: #{_lambda_.51}
  #allocation0 [shape = 'u32[]', space=smem, size = 0x4, offset = 0x4, fixed_abs, tag = 'smem constant byte address 0x4 - core index']
  #allocation1 [shape = 'u32[144,128]{1,0:T(1,128)}', space=vmem, size = 0x12000, scoped, tag = 'internal scratch']
  %s0 = inlined_call_operand.vmem [shape: bf16[64,512], index: 0, kind: input, shape index: {}]
  %s1 = inlined_call_operand.vmem [shape: bf16[512,256], index: 1, kind: input, shape index: {}]
  %s2 = inlined_call_operand.vmem [shape: f32[1,256], index: 2, kind: input, shape index: {}]
  %s3 = inlined_call_operand.vmem [shape: bf16[64,256], index: 3, kind: output, shape index: {}]
  %s4 = sld [smem:[#allocation0]]
  $region22: #{_lambda_.51} parent=0
    _
  %s6 = ssub.s32 1, %s4
  %s7 = scalar_select 0, %s6, %s4
  // Predicated region
  $region2: #{_lambda_.51} parent=0 // pred_check
    _
  $region3: #{_lambda_.51} parent=0 // pred_check_branch
    %9 = sbr.rel (0) target = $region5
  $region4: #{_lambda_.51} parent=0 // pred_region
    _
  $region5: #{_lambda_.51} parent=0 // pred_fallthru
    _
  // Predicated region
  $region6: #{_lambda_.51} parent=0 // pred_check
    _
  $region7: #{_lambda_.51} parent=0 // pred_check_branch
    %11 = sbr.rel (0) target = $region9
  $region8: #{_lambda_.51} parent=0 // pred_region
    _
  $region9: #{_lambda_.51} parent=0 // pred_fallthru
    _
  // Predicated region
  $region10: #{_lambda_.51} parent=0 // pred_check
    _
  $region11: #{_lambda_.51} parent=0 // pred_check_branch
    %13 = sbr.rel (0) target = $region13
  $region12: #{_lambda_.51} parent=0 // pred_region
    _
  $region13: #{_lambda_.51} parent=0 // pred_fallthru
    _
  %v14 = vld [vmem:[%s0] sm:$0xff]
  %v15 = vld [vmem:[%s0 + $0x8] sm:$0xff]
  %v16 = vld [vmem:[%s0 + $0x10] sm:$0xff]
  %v17 = vld [vmem:[%s0 + $0x18] sm:$0xff]
  %v18 = vld [vmem:[%s0 + $0x20] sm:$0xff]
  %v19 = vld [vmem:[%s0 + $0x28] sm:$0xff]
  %v20 = vld [vmem:[%s0 + $0x30] sm:$0xff]
  %v21 = vld [vmem:[%s0 + $0x38] sm:$0xff]
  %v22 = vld [vmem:[%s0 + $0x40] sm:$0xff]
  %v23 = vld [vmem:[%s0 + $0x48] sm:$0xff]
  %v24 = vld [vmem:[%s0 + $0x50] sm:$0xff]
  %v25 = vld [vmem:[%s0 + $0x58] sm:$0xff]
  %v26 = vld [vmem:[%s0 + $0x60] sm:$0xff]
  %v27 = vld [vmem:[%s0 + $0x68] sm:$0xff]
  %v28 = vld [vmem:[%s0 + $0x70] sm:$0xff]
  %v29 = vld [vmem:[%s0 + $0x78] sm:$0xff]
  %v30 = vld [vmem:[%s1] sm:$0xff]
  %v31 = vld [vmem:[%s1 + $0x8] sm:$0xff]
  %v32 = vld [vmem:[%s1 + $0x10] sm:$0xff]
  %v33 = vld [vmem:[%s1 + $0x18] sm:$0xff]
  %v34 = vld [vmem:[%s1 + $0x20] sm:$0xff]
  %v35 = vld [vmem:[%s1 + $0x28] sm:$0xff]
  %v36 = vld [vmem:[%s1 + $0x30] sm:$0xff]
  %v37 = vld [vmem:[%s1 + $0x38] sm:$0xff]
  %v38 = vld [vmem:[%s1 + $0x40] sm:$0xff]
  %v39 = vld [vmem:[%s1 + $0x48] sm:$0xff]
  %v40 = vld [vmem:[%s1 + $0x50] sm:$0xff]
  %v41 = vld [vmem:[%s1 + $0x58] sm:$0xff]
  %v42 = vld [vmem:[%s1 + $0x60] sm:$0xff]
  %v43 = vld [vmem:[%s1 + $0x68] sm:$0xff]
  %v44 = vld [vmem:[%s1 + $0x70] sm:$0xff]
  %v45 = vld [vmem:[%s1 + $0x78] sm:$0xff]
  %v46 = vld [vmem:[%s1 + $0x80] sm:$0xff]
  %v47 = vld [vmem:[%s1 + $0x88] sm:$0xff]
  %v48 = vld [vmem:[%s1 + $0x90] sm:$0xff]
  %v49 = vld [vmem:[%s1 + $0x98] sm:$0xff]
  %v50 = vld [vmem:[%s1 + $0xa0] sm:$0xff]
  %v51 = vld [vmem:[%s1 + $0xa8] sm:$0xff]
  %v52 = vld [vmem:[%s1 + $0xb0] sm:$0xff]
  %v53 = vld [vmem:[%s1 + $0xb8] sm:$0xff]
  %v54 = vld [vmem:[%s1 + $0xc0] sm:$0xff]
  %v55 = vld [vmem:[%s1 + $0xc8] sm:$0xff]
  %v56 = vld [vmem:[%s1 + $0xd0] sm:$0xff]
  %v57 = vld [vmem:[%s1 + $0xd8] sm:$0xff]
  %v58 = vld [vmem:[%s1 + $0xe0] sm:$0xff]
  %v59 = vld [vmem:[%s1 + $0xe8] sm:$0xff]
  %v60 = vld [vmem:[%s1 + $0xf0] sm:$0xff]
  %v61 = vld [vmem:[%s1 + $0xf8] sm:$0xff]
  %v62 = vld [vmem:[%s1 + $0x100] sm:$0xff]
  %v63 = vld [vmem:[%s1 + $0x108] sm:$0xff]
  %v64 = vld [vmem:[%s1 + $0x110] sm:$0xff]
  %v65 = vld [vmem:[%s1 + $0x118] sm:$0xff]
  %v66 = vld [vmem:[%s1 + $0x120] sm:$0xff]
  %v67 = vld [vmem:[%s1 + $0x128] sm:$0xff]
  %v68 = vld [vmem:[%s1 + $0x130] sm:$0xff]
  %v69 = vld [vmem:[%s1 + $0x138] sm:$0xff]
  %v70 = vld [vmem:[%s1 + $0x140] sm:$0xff]
  %v71 = vld [vmem:[%s1 + $0x148] sm:$0xff]
  %v72 = vld [vmem:[%s1 + $0x150] sm:$0xff]
  %v73 = vld [vmem:[%s1 + $0x158] sm:$0xff]
  %v74 = vld [vmem:[%s1 + $0x160] sm:$0xff]
  %v75 = vld [vmem:[%s1 + $0x168] sm:$0xff]
  %v76 = vld [vmem:[%s1 + $0x170] sm:$0xff]
  %v77 = vld [vmem:[%s1 + $0x178] sm:$0xff]
  %v78 = vld [vmem:[%s1 + $0x180] sm:$0xff]
  %v79 = vld [vmem:[%s1 + $0x188] sm:$0xff]
  %v80 = vld [vmem:[%s1 + $0x190] sm:$0xff]
  %v81 = vld [vmem:[%s1 + $0x198] sm:$0xff]
  %v82 = vld [vmem:[%s1 + $0x1a0] sm:$0xff]
  %v83 = vld [vmem:[%s1 + $0x1a8] sm:$0xff]
  %v84 = vld [vmem:[%s1 + $0x1b0] sm:$0xff]
  %v85 = vld [vmem:[%s1 + $0x1b8] sm:$0xff]
  %v86 = vld [vmem:[%s1 + $0x1c0] sm:$0xff]
  %v87 = vld [vmem:[%s1 + $0x1c8] sm:$0xff]
  %v88 = vld [vmem:[%s1 + $0x1d0] sm:$0xff]
  %v89 = vld [vmem:[%s1 + $0x1d8] sm:$0xff]
  %v90 = vld [vmem:[%s1 + $0x1e0] sm:$0xff]
  %v91 = vld [vmem:[%s1 + $0x1e8] sm:$0xff]
  %v92 = vld [vmem:[%s1 + $0x1f0] sm:$0xff]
  %v93 = vld [vmem:[%s1 + $0x1f8] sm:$0xff]
  %v94 = vld [vmem:[%s2] sm:$0x3]
  %v96 = vlaneseq
  %v97 = vshrl.u32 %v96, 7
  %v98 = vsub.s32 0, %v97
  %v99 = vrot.slane %v94, %v98
  %v100 = vlaneseq
  %v101 = vshrl.u32 %v100, 7
  %v102 = vsub.s32 1, %v101
  %v103 = vrot.slane %v94, %v102
  %v122 = vunpack.c.l.b16 %v14
  %v123 = vunpack.c.h.b16 %v14
  %v124 = vunpack.c.l.b16 %v15
  %v125 = vunpack.c.h.b16 %v15
  %v126 = vunpack.c.l.b16 %v16
  %v127 = vunpack.c.h.b16 %v16
  %v128 = vunpack.c.l.b16 %v17
  %v129 = vunpack.c.h.b16 %v17
  %v130 = vunpack.c.l.b16 %v18
  %v131 = vunpack.c.h.b16 %v18
  %v132 = vunpack.c.l.b16 %v19
  %v133 = vunpack.c.h.b16 %v19
  %v134 = vunpack.c.l.b16 %v20
  %v135 = vunpack.c.h.b16 %v20
  %v136 = vunpack.c.l.b16 %v21
  %v137 = vunpack.c.h.b16 %v21
  %v138 = vunpack.c.l.b16 %v22
  %v139 = vunpack.c.h.b16 %v22
  %v140 = vunpack.c.l.b16 %v23
  %v141 = vunpack.c.h.b16 %v23
  %v142 = vunpack.c.l.b16 %v24
  %v143 = vunpack.c.h.b16 %v24
  %v144 = vunpack.c.l.b16 %v25
  %v145 = vunpack.c.h.b16 %v25
  %v146 = vunpack.c.l.b16 %v26
  %v147 = vunpack.c.h.b16 %v26
  %v148 = vunpack.c.l.b16 %v27
  %v149 = vunpack.c.h.b16 %v27
  %v150 = vunpack.c.l.b16 %v28
  %v151 = vunpack.c.h.b16 %v28
  %v152 = vunpack.c.l.b16 %v29
  %v153 = vunpack.c.h.b16 %v29
  %v154 = vpack.c.b16 %v126, %v122
  %v155 = vpack.c.b16 %v127, %v123
  %v156 = vpack.c.b16 %v128, %v124
  %v157 = vpack.c.b16 %v129, %v125
  %v158 = vpack.c.b16 %v134, %v130
  %v159 = vpack.c.b16 %v135, %v131
  %v160 = vpack.c.b16 %v136, %v132
  %v161 = vpack.c.b16 %v137, %v133
  %v162 = vpack.c.b16 %v142, %v138
  %v163 = vpack.c.b16 %v143, %v139
  %v164 = vpack.c.b16 %v144, %v140
  %v165 = vpack.c.b16 %v145, %v141
  %v166 = vpack.c.b16 %v150, %v146
  %v167 = vpack.c.b16 %v151, %v147
  %v168 = vpack.c.b16 %v152, %v148
  %v169 = vpack.c.b16 %v153, %v149
  %v250 = vunpack.c.l.b16 %v30
  %v251 = vunpack.c.h.b16 %v30
  %v252 = vunpack.c.l.b16 %v31
  %v253 = vunpack.c.h.b16 %v31
  %v254 = vunpack.c.l.b16 %v32
  %v255 = vunpack.c.h.b16 %v32
  %v256 = vunpack.c.l.b16 %v33
  %v257 = vunpack.c.h.b16 %v33
  %v258 = vunpack.c.l.b16 %v34
  %v259 = vunpack.c.h.b16 %v34
  %v260 = vunpack.c.l.b16 %v35
  %v261 = vunpack.c.h.b16 %v35
  %v262 = vunpack.c.l.b16 %v36
  %v263 = vunpack.c.h.b16 %v36
  %v264 = vunpack.c.l.b16 %v37
  %v265 = vunpack.c.h.b16 %v37
  %v266 = vunpack.c.l.b16 %v38
  %v267 = vunpack.c.h.b16 %v38
  %v268 = vunpack.c.l.b16 %v39
  %v269 = vunpack.c.h.b16 %v39
  %v270 = vunpack.c.l.b16 %v40
  %v271 = vunpack.c.h.b16 %v40
  %v272 = vunpack.c.l.b16 %v41
  %v273 = vunpack.c.h.b16 %v41
  %v274 = vunpack.c.l.b16 %v42
  %v275 = vunpack.c.h.b16 %v42
  %v276 = vunpack.c.l.b16 %v43
  %v277 = vunpack.c.h.b16 %v43
  %v278 = vunpack.c.l.b16 %v44
  %v279 = vunpack.c.h.b16 %v44
  %v280 = vunpack.c.l.b16 %v45
  %v281 = vunpack.c.h.b16 %v45
  %v282 = vunpack.c.l.b16 %v46
  %v283 = vunpack.c.h.b16 %v46
  %v284 = vunpack.c.l.b16 %v47
  %v285 = vunpack.c.h.b16 %v47
  %v286 = vunpack.c.l.b16 %v48
  %v287 = vunpack.c.h.b16 %v48
  %v288 = vunpack.c.l.b16 %v49
  %v289 = vunpack.c.h.b16 %v49
  %v290 = vunpack.c.l.b16 %v50
  %v291 = vunpack.c.h.b16 %v50
  %v292 = vunpack.c.l.b16 %v51
  %v293 = vunpack.c.h.b16 %v51
  %v294 = vunpack.c.l.b16 %v52
  %v295 = vunpack.c.h.b16 %v52
  %v296 = vunpack.c.l.b16 %v53
  %v297 = vunpack.c.h.b16 %v53
  %v298 = vunpack.c.l.b16 %v54
  %v299 = vunpack.c.h.b16 %v54
  %v300 = vunpack.c.l.b16 %v55
  %v301 = vunpack.c.h.b16 %v55
  %v302 = vunpack.c.l.b16 %v56
  %v303 = vunpack.c.h.b16 %v56
  %v304 = vunpack.c.l.b16 %v57
  %v305 = vunpack.c.h.b16 %v57
  %v306 = vunpack.c.l.b16 %v58
  %v307 = vunpack.c.h.b16 %v58
  %v308 = vunpack.c.l.b16 %v59
  %v309 = vunpack.c.h.b16 %v59
  %v310 = vunpack.c.l.b16 %v60
  %v311 = vunpack.c.h.b16 %v60
  %v312 = vunpack.c.l.b16 %v61
  %v313 = vunpack.c.h.b16 %v61
  %v314 = vunpack.c.l.b16 %v62
  %v315 = vunpack.c.h.b16 %v62
  %v316 = vunpack.c.l.b16 %v63
  %v317 = vunpack.c.h.b16 %v63
  %v318 = vunpack.c.l.b16 %v64
  %v319 = vunpack.c.h.b16 %v64
  %v320 = vunpack.c.l.b16 %v65
  %v321 = vunpack.c.h.b16 %v65
  %v322 = vunpack.c.l.b16 %v66
  %v323 = vunpack.c.h.b16 %v66
  %v324 = vunpack.c.l.b16 %v67
  %v325 = vunpack.c.h.b16 %v67
  %v326 = vunpack.c.l.b16 %v68
  %v327 = vunpack.c.h.b16 %v68
  %v328 = vunpack.c.l.b16 %v69
  %v329 = vunpack.c.h.b16 %v69
  %v330 = vunpack.c.l.b16 %v70
  %v331 = vunpack.c.h.b16 %v70
  %v332 = vunpack.c.l.b16 %v71
  %v333 = vunpack.c.h.b16 %v71
  %v334 = vunpack.c.l.b16 %v72
  %v335 = vunpack.c.h.b16 %v72
  %v336 = vunpack.c.l.b16 %v73
  %v337 = vunpack.c.h.b16 %v73
  %v338 = vunpack.c.l.b16 %v74
  %v339 = vunpack.c.h.b16 %v74
  %v340 = vunpack.c.l.b16 %v75
  %v341 = vunpack.c.h.b16 %v75
  %v342 = vunpack.c.l.b16 %v76
  %v343 = vunpack.c.h.b16 %v76
  %v344 = vunpack.c.l.b16 %v77
  %v345 = vunpack.c.h.b16 %v77
  %v346 = vunpack.c.l.b16 %v78
  %v347 = vunpack.c.h.b16 %v78
  %v348 = vunpack.c.l.b16 %v79
  %v349 = vunpack.c.h.b16 %v79
  %v350 = vunpack.c.l.b16 %v80
  %v351 = vunpack.c.h.b16 %v80
  %v352 = vunpack.c.l.b16 %v81
  %v353 = vunpack.c.h.b16 %v81
  %v354 = vunpack.c.l.b16 %v82
  %v355 = vunpack.c.h.b16 %v82
  %v356 = vunpack.c.l.b16 %v83
  %v357 = vunpack.c.h.b16 %v83
  %v358 = vunpack.c.l.b16 %v84
  %v359 = vunpack.c.h.b16 %v84
  %v360 = vunpack.c.l.b16 %v85
  %v361 = vunpack.c.h.b16 %v85
  %v362 = vunpack.c.l.b16 %v86
  %v363 = vunpack.c.h.b16 %v86
  %v364 = vunpack.c.l.b16 %v87
  %v365 = vunpack.c.h.b16 %v87
  %v366 = vunpack.c.l.b16 %v88
  %v367 = vunpack.c.h.b16 %v88
  %v368 = vunpack.c.l.b16 %v89
  %v369 = vunpack.c.h.b16 %v89
  %v370 = vunpack.c.l.b16 %v90
  %v371 = vunpack.c.h.b16 %v90
  %v372 = vunpack.c.l.b16 %v91
  %v373 = vunpack.c.h.b16 %v91
  %v374 = vunpack.c.l.b16 %v92
  %v375 = vunpack.c.h.b16 %v92
  %v376 = vunpack.c.l.b16 %v93
  %v377 = vunpack.c.h.b16 %v93
  %v378 = vpack.c.b16 %v252, %v250
  %v379 = vpack.c.b16 %v253, %v251
  %v380 = vpack.c.b16 %v256, %v254
  %v381 = vpack.c.b16 %v257, %v255
  %v382 = vpack.c.b16 %v260, %v258
  %v383 = vpack.c.b16 %v261, %v259
  %v384 = vpack.c.b16 %v264, %v262
  %v385 = vpack.c.b16 %v265, %v263
  %v386 = vpack.c.b16 %v268, %v266
  %v387 = vpack.c.b16 %v269, %v267
  %v388 = vpack.c.b16 %v272, %v270
  %v389 = vpack.c.b16 %v273, %v271
  %v390 = vpack.c.b16 %v276, %v274
  %v391 = vpack.c.b16 %v277, %v275
  %v392 = vpack.c.b16 %v280, %v278
  %v393 = vpack.c.b16 %v281, %v279
  %v394 = vpack.c.b16 %v284, %v282
  %v395 = vpack.c.b16 %v285, %v283
  %v396 = vpack.c.b16 %v288, %v286
  %v397 = vpack.c.b16 %v289, %v287
  %v398 = vpack.c.b16 %v292, %v290
  %v399 = vpack.c.b16 %v293, %v291
  %v400 = vpack.c.b16 %v296, %v294
  %v401 = vpack.c.b16 %v297, %v295
  %v402 = vpack.c.b16 %v300, %v298
  %v403 = vpack.c.b16 %v301, %v299
  %v404 = vpack.c.b16 %v304, %v302
  %v405 = vpack.c.b16 %v305, %v303
  %v406 = vpack.c.b16 %v308, %v306
  %v407 = vpack.c.b16 %v309, %v307
  %v408 = vpack.c.b16 %v312, %v310
  %v409 = vpack.c.b16 %v313, %v311
  %v410 = vpack.c.b16 %v316, %v314
  %v411 = vpack.c.b16 %v317, %v315
  %v412 = vpack.c.b16 %v320, %v318
  %v413 = vpack.c.b16 %v321, %v319
  %v414 = vpack.c.b16 %v324, %v322
  %v415 = vpack.c.b16 %v325, %v323
  %v416 = vpack.c.b16 %v328, %v326
  %v417 = vpack.c.b16 %v329, %v327
  %v418 = vpack.c.b16 %v332, %v330
  %v419 = vpack.c.b16 %v333, %v331
  %v420 = vpack.c.b16 %v336, %v334
  %v421 = vpack.c.b16 %v337, %v335
  %v422 = vpack.c.b16 %v340, %v338
  %v423 = vpack.c.b16 %v341, %v339
  %v424 = vpack.c.b16 %v344, %v342
  %v425 = vpack.c.b16 %v345, %v343
  %v426 = vpack.c.b16 %v348, %v346
  %v427 = vpack.c.b16 %v349, %v347
  %v428 = vpack.c.b16 %v352, %v350
  %v429 = vpack.c.b16 %v353, %v351
  %v430 = vpack.c.b16 %v356, %v354
  %v431 = vpack.c.b16 %v357, %v355
  %v432 = vpack.c.b16 %v360, %v358
  %v433 = vpack.c.b16 %v361, %v359
  %v434 = vpack.c.b16 %v364, %v362
  %v435 = vpack.c.b16 %v365, %v363
  %v436 = vpack.c.b16 %v368, %v366
  %v437 = vpack.c.b16 %v369, %v367
  %v438 = vpack.c.b16 %v372, %v370
  %v439 = vpack.c.b16 %v373, %v371
  %v440 = vpack.c.b16 %v376, %v374
  %v441 = vpack.c.b16 %v377, %v375
  %506 = vmatprep.subr.bf16.mxu0 %v379
  %507 = vmatpush1.bf16.msra.mxu0 %v378
  %508 = vmatprep.subr.bf16.mxu0 %v381
  %509 = vmatpush1.bf16.msra.mxu0 %v380
  %510 = vmatprep.subr.bf16.mxu0 %v383
  %511 = vmatpush1.bf16.msra.mxu0 %v382
  %512 = vmatprep.subr.bf16.mxu0 %v385
  %513 = vmatpush1.bf16.msra.mxu0 %v384
  %514 = vmatprep.subr.bf16.mxu0 %v387
  %515 = vmatpush1.bf16.msra.mxu0 %v386
  %516 = vmatprep.subr.bf16.mxu0 %v389
  %517 = vmatpush1.bf16.msra.mxu0 %v388
  %518 = vmatprep.subr.bf16.mxu0 %v391
  %519 = vmatpush1.bf16.msra.mxu0 %v390
  %520 = vmatprep.subr.bf16.mxu0 %v393
  %521 = vmatpush1.bf16.msra.mxu0 %v392
  %522 = vmatprep.subr.bf16.mxu0 %v395
  %523 = vmatpush1.bf16.msra.mxu0 %v394
  %524 = vmatprep.subr.bf16.mxu0 %v397
  %525 = vmatpush1.bf16.msra.mxu0 %v396
  %526 = vmatprep.subr.bf16.mxu0 %v399
  %527 = vmatpush1.bf16.msra.mxu0 %v398
  %528 = vmatprep.subr.bf16.mxu0 %v401
  %529 = vmatpush1.bf16.msra.mxu0 %v400
  %530 = vmatprep.subr.bf16.mxu0 %v403
  %531 = vmatpush1.bf16.msra.mxu0 %v402
  %532 = vmatprep.subr.bf16.mxu0 %v405
  %533 = vmatpush1.bf16.msra.mxu0 %v404
  %534 = vmatprep.subr.bf16.mxu0 %v407
  %535 = vmatpush1.bf16.msra.mxu0 %v406
  %536 = vmatprep.subr.bf16.mxu0 %v409
  %537 = vmatpush1.bf16.msra.mxu0 %v408
  %538 = vmatprep.mubr.bf16.mxu0 %v155
  %539 = vmatmul.mubr.bf16.gmra.mrb[0].mxu0 %v154
  %v540 = vpop.f32.mrb[0].mxu0
  %v541 = vadd.f32 %v99, %v540
  %v542 = vpop.f32.mrb[0].mxu0
  %v543 = vadd.f32 %v103, %v542
  %v544 = vpop.f32.mrb[0].mxu0
  %v545 = vadd.f32 %v99, %v544
  %v546 = vpop.f32.mrb[0].mxu0
  %v547 = vadd.f32 %v103, %v546
  %548 = vmatprep.mubr.bf16.mxu0 %v159
  %549 = vmatmul.mubr.bf16.gmra.mrb[0].mxu0 %v158
  %v550 = vpop.f32.mrb[0].mxu0
  %v551 = vadd.f32 %v99, %v550
  %v552 = vpop.f32.mrb[0].mxu0
  %v553 = vadd.f32 %v103, %v552
  %v554 = vpop.f32.mrb[0].mxu0
  %v555 = vadd.f32 %v99, %v554
  %v556 = vpop.f32.mrb[0].mxu0
  %v557 = vadd.f32 %v103, %v556
  %558 = vmatprep.mubr.bf16.mxu0 %v163
  %559 = vmatmul.mubr.bf16.gmra.mrb[0].mxu0 %v162
  %v560 = vpop.f32.mrb[0].mxu0
  %v561 = vadd.f32 %v99, %v560
  %v562 = vpop.f32.mrb[0].mxu0
  %v563 = vadd.f32 %v103, %v562
  %v564 = vpop.f32.mrb[0].mxu0
  %v565 = vadd.f32 %v99, %v564
  %v566 = vpop.f32.mrb[0].mxu0
  %v567 = vadd.f32 %v103, %v566
  %568 = vmatprep.mubr.bf16.mxu0 %v167
  %569 = vmatmul.mubr.bf16.gmra.mrb[0].mxu0 %v166
  %v570 = vpop.f32.mrb[0].mxu0
  %v571 = vadd.f32 %v99, %v570
  %v572 = vpop.f32.mrb[0].mxu0
  %v573 = vadd.f32 %v103, %v572
  %v574 = vpop.f32.mrb[0].mxu0
  %v575 = vadd.f32 %v99, %v574
  %v576 = vpop.f32.mrb[0].mxu0
  %v577 = vadd.f32 %v103, %v576
  %578 = vdwg.mxu0
  %579 = vmatprep.subr.bf16.mxu0 %v411
  %580 = vmatpush1.bf16.msra.mxu0 %v410
  %581 = vmatprep.subr.bf16.mxu0 %v413
  %582 = vmatpush1.bf16.msra.mxu0 %v412
  %583 = vmatprep.subr.bf16.mxu0 %v415
  %584 = vmatpush1.bf16.msra.mxu0 %v414
  %585 = vmatprep.subr.bf16.mxu0 %v417
  %586 = vmatpush1.bf16.msra.mxu0 %v416
  %587 = vmatprep.subr.bf16.mxu0 %v419
  %588 = vmatpush1.bf16.msra.mxu0 %v418
  %589 = vmatprep.subr.bf16.mxu0 %v421
  %590 = vmatpush1.bf16.msra.mxu0 %v420
  %591 = vmatprep.subr.bf16.mxu0 %v423
  %592 = vmatpush1.bf16.msra.mxu0 %v422
  %593 = vmatprep.subr.bf16.mxu0 %v425
  %594 = vmatpush1.bf16.msra.mxu0 %v424
  %595 = vmatprep.subr.bf16.mxu0 %v427
  %596 = vmatpush1.bf16.msra.mxu0 %v426
  %597 = vmatprep.subr.bf16.mxu0 %v429
  %598 = vmatpush1.bf16.msra.mxu0 %v428
  %599 = vmatprep.subr.bf16.mxu0 %v431
  %600 = vmatpush1.bf16.msra.mxu0 %v430
  %601 = vmatprep.subr.bf16.mxu0 %v433
  %602 = vmatpush1.bf16.msra.mxu0 %v432
  %603 = vmatprep.subr.bf16.mxu0 %v435
  %604 = vmatpush1.bf16.msra.mxu0 %v434
  %605 = vmatprep.subr.bf16.mxu0 %v437
  %606 = vmatpush1.bf16.msra.mxu0 %v436
  %607 = vmatprep.subr.bf16.mxu0 %v439
  %608 = vmatpush1.bf16.msra.mxu0 %v438
  %609 = vmatprep.subr.bf16.mxu0 %v441
  %610 = vmatpush1.bf16.msra.mxu0 %v440
  %611 = vmatprep.mubr.bf16.mxu0 %v157
  %612 = vmatmul.mubr.bf16.gmra.mrb[0].mxu0 %v156
  %v613 = vpop.f32.mrb[0].mxu0
  %v614 = vadd.f32 %v541, %v613
  %v615 = vpop.f32.mrb[0].mxu0
  %v616 = vadd.f32 %v543, %v615
  %v617 = vpop.f32.mrb[0].mxu0
  %v618 = vadd.f32 %v545, %v617
  %v619 = vpop.f32.mrb[0].mxu0
  %v620 = vadd.f32 %v547, %v619
  %621 = vmatprep.mubr.bf16.mxu0 %v161
  %622 = vmatmul.mubr.bf16.gmra.mrb[0].mxu0 %v160
  %v623 = vpop.f32.mrb[0].mxu0
  %v624 = vadd.f32 %v551, %v623
  %v625 = vpop.f32.mrb[0].mxu0
  %v626 = vadd.f32 %v553, %v625
  %v627 = vpop.f32.mrb[0].mxu0
  %v628 = vadd.f32 %v555, %v627
  %v629 = vpop.f32.mrb[0].mxu0
  %v630 = vadd.f32 %v557, %v629
  %631 = vmatprep.mubr.bf16.mxu0 %v165
  %632 = vmatmul.mubr.bf16.gmra.mrb[0].mxu0 %v164
  %v633 = vpop.f32.mrb[0].mxu0
  %v634 = vadd.f32 %v561, %v633
  %v635 = vpop.f32.mrb[0].mxu0
  %v636 = vadd.f32 %v563, %v635
  %v637 = vpop.f32.mrb[0].mxu0
  %v638 = vadd.f32 %v565, %v637
  %v639 = vpop.f32.mrb[0].mxu0
  %v640 = vadd.f32 %v567, %v639
  %641 = vmatprep.mubr.bf16.mxu0 %v169
  %642 = vmatmul.mubr.bf16.gmra.mrb[0].mxu0 %v168
  %v643 = vpop.f32.mrb[0].mxu0
  %v644 = vadd.f32 %v571, %v643
  %v645 = vpop.f32.mrb[0].mxu0
  %v646 = vadd.f32 %v573, %v645
  %v647 = vpop.f32.mrb[0].mxu0
  %v648 = vadd.f32 %v575, %v647
  %v649 = vpop.f32.mrb[0].mxu0
  %v650 = vadd.f32 %v577, %v649
  %651 = vdwg.mxu0
  %v652 = vmax.f32 %v614, 0.0
  %v653 = vmax.f32 %v616, 0.0
  %v654 = vmax.f32 %v618, 0.0
  %v655 = vmax.f32 %v620, 0.0
  %v656 = vmax.f32 %v624, 0.0
  %v657 = vmax.f32 %v626, 0.0
  %v658 = vmax.f32 %v628, 0.0
  %v659 = vmax.f32 %v630, 0.0
  %v660 = vmax.f32 %v634, 0.0
  %v661 = vmax.f32 %v636, 0.0
  %v662 = vmax.f32 %v638, 0.0
  %v663 = vmax.f32 %v640, 0.0
  %v664 = vmax.f32 %v644, 0.0
  %v665 = vmax.f32 %v646, 0.0
  %v666 = vmax.f32 %v648, 0.0
  %v667 = vmax.f32 %v650, 0.0
  %v668 = vpack.c.bf16 %v654, %v652
  %v669 = vpack.c.bf16 %v655, %v653
  %v670 = vpack.c.bf16 %v658, %v656
  %v671 = vpack.c.bf16 %v659, %v657
  %v672 = vpack.c.bf16 %v662, %v660
  %v673 = vpack.c.bf16 %v663, %v661
  %v674 = vpack.c.bf16 %v666, %v664
  %v675 = vpack.c.bf16 %v667, %v665
  %v684 = vunpack.c.l.b16 %v668
  %v685 = vunpack.c.l.b16 %v669
  %v686 = vunpack.c.h.b16 %v668
  %v687 = vunpack.c.h.b16 %v669
  %v688 = vunpack.c.l.b16 %v670
  %v689 = vunpack.c.l.b16 %v671
  %v690 = vunpack.c.h.b16 %v670
  %v691 = vunpack.c.h.b16 %v671
  %v692 = vunpack.c.l.b16 %v672
  %v693 = vunpack.c.l.b16 %v673
  %v694 = vunpack.c.h.b16 %v672
  %v695 = vunpack.c.h.b16 %v673
  %v696 = vunpack.c.l.b16 %v674
  %v697 = vunpack.c.l.b16 %v675
  %v698 = vunpack.c.h.b16 %v674
  %v699 = vunpack.c.h.b16 %v675
  %v700 = vpack.c.b16 %v685, %v684
  %v701 = vpack.c.b16 %v687, %v686
  %v702 = vpack.c.b16 %v689, %v688
  %v703 = vpack.c.b16 %v691, %v690
  %v704 = vpack.c.b16 %v693, %v692
  %v705 = vpack.c.b16 %v695, %v694
  %v706 = vpack.c.b16 %v697, %v696
  %v707 = vpack.c.b16 %v699, %v698
  %716 = vst [vmem:[%s3] sm:$0xff] %v700
  %717 = vst [vmem:[%s3 + $0x8] sm:$0xff] %v701
  %718 = vst [vmem:[%s3 + $0x10] sm:$0xff] %v702
  %719 = vst [vmem:[%s3 + $0x18] sm:$0xff] %v703
  %720 = vst [vmem:[%s3 + $0x20] sm:$0xff] %v704
  %721 = vst [vmem:[%s3 + $0x28] sm:$0xff] %v705
  %722 = vst [vmem:[%s3 + $0x30] sm:$0xff] %v706
  %723 = vst [vmem:[%s3 + $0x38] sm:$0xff] %v707
  // Predicated region
  $region14: #{_lambda_.51} parent=0 // pred_check
    _
  $region15: #{_lambda_.51} parent=0 // pred_check_branch
    %725 = sbr.rel (0) target = $region17
  $region16: #{_lambda_.51} parent=0 // pred_region
    _
  $region17: #{_lambda_.51} parent=0 // pred_fallthru
    _
  // Predicated region
  $region18: #{_lambda_.51} parent=0 // pred_check
    _
  $region19: #{_lambda_.51} parent=0 // pred_check_branch
    %727 = sbr.rel (0) target = $region21
  $region20: #{_lambda_.51} parent=0 // pred_region
    _
  $region21: #{_lambda_.51} parent=0 // pred_fallthru
    _

// kernel: _lambda_.52
$region0: #{_lambda_.52}
  #allocation0 [shape = 'u32[]', space=smem, size = 0x4, offset = 0x4, fixed_abs, tag = 'smem constant byte address 0x4 - core index']
  #allocation1 [shape = 'u32[144,128]{1,0:T(1,128)}', space=vmem, size = 0x12000, scoped, tag = 'internal scratch']
  %s0 = inlined_call_operand.vmem [shape: bf16[16,256], index: 0, kind: input, shape index: {}]
  %s1 = inlined_call_operand.vmem [shape: bf16[256,1024], index: 1, kind: input, shape index: {}]
  %s2 = inlined_call_operand.vmem [shape: f32[1,1024], index: 2, kind: input, shape index: {}]
  %s3 = inlined_call_operand.vmem [shape: f32[1,256], index: 3, kind: input, shape index: {}]
  %s4 = inlined_call_operand.vmem [shape: bf16[16,1024], index: 4, kind: input, shape index: {}]
  %s5 = inlined_call_operand.vmem [shape: bf16[16,1024], index: 5, kind: output, shape index: {}]
  %s6 = sld [smem:[#allocation0]]
  $region30: #{_lambda_.52} parent=0
    _
  %s8 = ssub.s32 1, %s6
  %s9 = scalar_select 0, %s8, %s6
  // Predicated region
  $region2: #{_lambda_.52} parent=0 // pred_check
    _
  $region3: #{_lambda_.52} parent=0 // pred_check_branch
    %11 = sbr.rel (0) target = $region5
  $region4: #{_lambda_.52} parent=0 // pred_region
    _
  $region5: #{_lambda_.52} parent=0 // pred_fallthru
    _
  // Predicated region
  $region6: #{_lambda_.52} parent=0 // pred_check
    _
  $region7: #{_lambda_.52} parent=0 // pred_check_branch
    %13 = sbr.rel (0) target = $region9
  $region8: #{_lambda_.52} parent=0 // pred_region
    _
  $region9: #{_lambda_.52} parent=0 // pred_fallthru
    _
  // Predicated region
  $region10: #{_lambda_.52} parent=0 // pred_check
    _
  $region11: #{_lambda_.52} parent=0 // pred_check_branch
    %15 = sbr.rel (0) target = $region13
  $region12: #{_lambda_.52} parent=0 // pred_region
    _
  $region13: #{_lambda_.52} parent=0 // pred_fallthru
    _
  // Predicated region
  $region14: #{_lambda_.52} parent=0 // pred_check
    _
  $region15: #{_lambda_.52} parent=0 // pred_check_branch
    %17 = sbr.rel (0) target = $region17
  $region16: #{_lambda_.52} parent=0 // pred_region
    _
  $region17: #{_lambda_.52} parent=0 // pred_fallthru
    _
  // Predicated region
  $region18: #{_lambda_.52} parent=0 // pred_check
    _
  $region19: #{_lambda_.52} parent=0 // pred_check_branch
    %19 = sbr.rel (0) target = $region21
  $region20: #{_lambda_.52} parent=0 // pred_region
    _
  $region21: #{_lambda_.52} parent=0 // pred_fallthru
    _
  %v20 = vld [vmem:[%s0] sm:$0xff]
  %v21 = vld [vmem:[%s0 + $0x8] sm:$0xff]
  %v22 = vunpack.c.l.bf16 %v20
  %v23 = vunpack.c.h.bf16 %v20
  %v24 = vunpack.c.l.bf16 %v21
  %v25 = vunpack.c.h.bf16 %v21
  %v26 = vld [vmem:[%s3] sm:$0x3]
  %v28 = vlaneseq
  %v29 = vshrl.u32 %v28, 7
  %v30 = vsub.s32 0, %v29
  %v31 = vrot.slane %v26, %v30
  %v32 = vlaneseq
  %v33 = vshrl.u32 %v32, 7
  %v34 = vsub.s32 1, %v33
  %v35 = vrot.slane %v26, %v34
  %v38 = vadd.f32 %v22, %v31
  %v39 = vadd.f32 %v23, %v35
  %v40 = vadd.f32 %v24, %v31
  %v41 = vadd.f32 %v25, %v35
  %v42 = vmax.f32 %v38, 0.0
  %v43 = vmax.f32 %v39, 0.0
  %v44 = vmax.f32 %v40, 0.0
  %v45 = vmax.f32 %v41, 0.0
  %v46 = vpack.c.bf16 %v44, %v42
  %v47 = vpack.c.bf16 %v45, %v43
  %v48 = vld [vmem:[%s1] sm:$0xff]
  %v49 = vld [vmem:[%s1 + $0x8] sm:$0xff]
  %v50 = vld [vmem:[%s1 + $0x10] sm:$0xff]
  %v51 = vld [vmem:[%s1 + $0x18] sm:$0xff]
  %v52 = vld [vmem:[%s1 + $0x20] sm:$0xff]
  %v53 = vld [vmem:[%s1 + $0x28] sm:$0xff]
  %v54 = vld [vmem:[%s1 + $0x30] sm:$0xff]
  %v55 = vld [vmem:[%s1 + $0x38] sm:$0xff]
  %v56 = vld [vmem:[%s1 + $0x40] sm:$0xff]
  %v57 = vld [vmem:[%s1 + $0x48] sm:$0xff]
  %v58 = vld [vmem:[%s1 + $0x50] sm:$0xff]
  %v59 = vld [vmem:[%s1 + $0x58] sm:$0xff]
  %v60 = vld [vmem:[%s1 + $0x60] sm:$0xff]
  %v61 = vld [vmem:[%s1 + $0x68] sm:$0xff]
  %v62 = vld [vmem:[%s1 + $0x70] sm:$0xff]
  %v63 = vld [vmem:[%s1 + $0x78] sm:$0xff]
  %v64 = vld [vmem:[%s1 + $0x80] sm:$0xff]
  %v65 = vld [vmem:[%s1 + $0x88] sm:$0xff]
  %v66 = vld [vmem:[%s1 + $0x90] sm:$0xff]
  %v67 = vld [vmem:[%s1 + $0x98] sm:$0xff]
  %v68 = vld [vmem:[%s1 + $0xa0] sm:$0xff]
  %v69 = vld [vmem:[%s1 + $0xa8] sm:$0xff]
  %v70 = vld [vmem:[%s1 + $0xb0] sm:$0xff]
  %v71 = vld [vmem:[%s1 + $0xb8] sm:$0xff]
  %v72 = vld [vmem:[%s1 + $0xc0] sm:$0xff]
  %v73 = vld [vmem:[%s1 + $0xc8] sm:$0xff]
  %v74 = vld [vmem:[%s1 + $0xd0] sm:$0xff]
  %v75 = vld [vmem:[%s1 + $0xd8] sm:$0xff]
  %v76 = vld [vmem:[%s1 + $0xe0] sm:$0xff]
  %v77 = vld [vmem:[%s1 + $0xe8] sm:$0xff]
  %v78 = vld [vmem:[%s1 + $0xf0] sm:$0xff]
  %v79 = vld [vmem:[%s1 + $0xf8] sm:$0xff]
  %v80 = vld [vmem:[%s1 + $0x100] sm:$0xff]
  %v81 = vld [vmem:[%s1 + $0x108] sm:$0xff]
  %v82 = vld [vmem:[%s1 + $0x110] sm:$0xff]
  %v83 = vld [vmem:[%s1 + $0x118] sm:$0xff]
  %v84 = vld [vmem:[%s1 + $0x120] sm:$0xff]
  %v85 = vld [vmem:[%s1 + $0x128] sm:$0xff]
  %v86 = vld [vmem:[%s1 + $0x130] sm:$0xff]
  %v87 = vld [vmem:[%s1 + $0x138] sm:$0xff]
  %v88 = vld [vmem:[%s1 + $0x140] sm:$0xff]
  %v89 = vld [vmem:[%s1 + $0x148] sm:$0xff]
  %v90 = vld [vmem:[%s1 + $0x150] sm:$0xff]
  %v91 = vld [vmem:[%s1 + $0x158] sm:$0xff]
  %v92 = vld [vmem:[%s1 + $0x160] sm:$0xff]
  %v93 = vld [vmem:[%s1 + $0x168] sm:$0xff]
  %v94 = vld [vmem:[%s1 + $0x170] sm:$0xff]
  %v95 = vld [vmem:[%s1 + $0x178] sm:$0xff]
  %v96 = vld [vmem:[%s1 + $0x180] sm:$0xff]
  %v97 = vld [vmem:[%s1 + $0x188] sm:$0xff]
  %v98 = vld [vmem:[%s1 + $0x190] sm:$0xff]
  %v99 = vld [vmem:[%s1 + $0x198] sm:$0xff]
  %v100 = vld [vmem:[%s1 + $0x1a0] sm:$0xff]
  %v101 = vld [vmem:[%s1 + $0x1a8] sm:$0xff]
  %v102 = vld [vmem:[%s1 + $0x1b0] sm:$0xff]
  %v103 = vld [vmem:[%s1 + $0x1b8] sm:$0xff]
  %v104 = vld [vmem:[%s1 + $0x1c0] sm:$0xff]
  %v105 = vld [vmem:[%s1 + $0x1c8] sm:$0xff]
  %v106 = vld [vmem:[%s1 + $0x1d0] sm:$0xff]
  %v107 = vld [vmem:[%s1 + $0x1d8] sm:$0xff]
  %v108 = vld [vmem:[%s1 + $0x1e0] sm:$0xff]
  %v109 = vld [vmem:[%s1 + $0x1e8] sm:$0xff]
  %v110 = vld [vmem:[%s1 + $0x1f0] sm:$0xff]
  %v111 = vld [vmem:[%s1 + $0x1f8] sm:$0xff]
  %v112 = vld [vmem:[%s1 + $0x200] sm:$0xff]
  %v113 = vld [vmem:[%s1 + $0x208] sm:$0xff]
  %v114 = vld [vmem:[%s1 + $0x210] sm:$0xff]
  %v115 = vld [vmem:[%s1 + $0x218] sm:$0xff]
  %v116 = vld [vmem:[%s1 + $0x220] sm:$0xff]
  %v117 = vld [vmem:[%s1 + $0x228] sm:$0xff]
  %v118 = vld [vmem:[%s1 + $0x230] sm:$0xff]
  %v119 = vld [vmem:[%s1 + $0x238] sm:$0xff]
  %v120 = vld [vmem:[%s1 + $0x240] sm:$0xff]
  %v121 = vld [vmem:[%s1 + $0x248] sm:$0xff]
  %v122 = vld [vmem:[%s1 + $0x250] sm:$0xff]
  %v123 = vld [vmem:[%s1 + $0x258] sm:$0xff]
  %v124 = vld [vmem:[%s1 + $0x260] sm:$0xff]
  %v125 = vld [vmem:[%s1 + $0x268] sm:$0xff]
  %v126 = vld [vmem:[%s1 + $0x270] sm:$0xff]
  %v127 = vld [vmem:[%s1 + $0x278] sm:$0xff]
  %v128 = vld [vmem:[%s1 + $0x280] sm:$0xff]
  %v129 = vld [vmem:[%s1 + $0x288] sm:$0xff]
  %v130 = vld [vmem:[%s1 + $0x290] sm:$0xff]
  %v131 = vld [vmem:[%s1 + $0x298] sm:$0xff]
  %v132 = vld [vmem:[%s1 + $0x2a0] sm:$0xff]
  %v133 = vld [vmem:[%s1 + $0x2a8] sm:$0xff]
  %v134 = vld [vmem:[%s1 + $0x2b0] sm:$0xff]
  %v135 = vld [vmem:[%s1 + $0x2b8] sm:$0xff]
  %v136 = vld [vmem:[%s1 + $0x2c0] sm:$0xff]
  %v137 = vld [vmem:[%s1 + $0x2c8] sm:$0xff]
  %v138 = vld [vmem:[%s1 + $0x2d0] sm:$0xff]
  %v139 = vld [vmem:[%s1 + $0x2d8] sm:$0xff]
  %v140 = vld [vmem:[%s1 + $0x2e0] sm:$0xff]
  %v141 = vld [vmem:[%s1 + $0x2e8] sm:$0xff]
  %v142 = vld [vmem:[%s1 + $0x2f0] sm:$0xff]
  %v143 = vld [vmem:[%s1 + $0x2f8] sm:$0xff]
  %v144 = vld [vmem:[%s1 + $0x300] sm:$0xff]
  %v145 = vld [vmem:[%s1 + $0x308] sm:$0xff]
  %v146 = vld [vmem:[%s1 + $0x310] sm:$0xff]
  %v147 = vld [vmem:[%s1 + $0x318] sm:$0xff]
  %v148 = vld [vmem:[%s1 + $0x320] sm:$0xff]
  %v149 = vld [vmem:[%s1 + $0x328] sm:$0xff]
  %v150 = vld [vmem:[%s1 + $0x330] sm:$0xff]
  %v151 = vld [vmem:[%s1 + $0x338] sm:$0xff]
  %v152 = vld [vmem:[%s1 + $0x340] sm:$0xff]
  %v153 = vld [vmem:[%s1 + $0x348] sm:$0xff]
  %v154 = vld [vmem:[%s1 + $0x350] sm:$0xff]
  %v155 = vld [vmem:[%s1 + $0x358] sm:$0xff]
  %v156 = vld [vmem:[%s1 + $0x360] sm:$0xff]
  %v157 = vld [vmem:[%s1 + $0x368] sm:$0xff]
  %v158 = vld [vmem:[%s1 + $0x370] sm:$0xff]
  %v159 = vld [vmem:[%s1 + $0x378] sm:$0xff]
  %v160 = vld [vmem:[%s1 + $0x380] sm:$0xff]
  %v161 = vld [vmem:[%s1 + $0x388] sm:$0xff]
  %v162 = vld [vmem:[%s1 + $0x390] sm:$0xff]
  %v163 = vld [vmem:[%s1 + $0x398] sm:$0xff]
  %v164 = vld [vmem:[%s1 + $0x3a0] sm:$0xff]
  %v165 = vld [vmem:[%s1 + $0x3a8] sm:$0xff]
  %v166 = vld [vmem:[%s1 + $0x3b0] sm:$0xff]
  %v167 = vld [vmem:[%s1 + $0x3b8] sm:$0xff]
  %v168 = vld [vmem:[%s1 + $0x3c0] sm:$0xff]
  %v169 = vld [vmem:[%s1 + $0x3c8] sm:$0xff]
  %v170 = vld [vmem:[%s1 + $0x3d0] sm:$0xff]
  %v171 = vld [vmem:[%s1 + $0x3d8] sm:$0xff]
  %v172 = vld [vmem:[%s1 + $0x3e0] sm:$0xff]
  %v173 = vld [vmem:[%s1 + $0x3e8] sm:$0xff]
  %v174 = vld [vmem:[%s1 + $0x3f0] sm:$0xff]
  %v175 = vld [vmem:[%s1 + $0x3f8] sm:$0xff]
  %v176 = vld [vmem:[%s2] sm:$0xff]
  %v178 = vlaneseq
  %v179 = vshrl.u32 %v178, 7
  %v180 = vsub.s32 0, %v179
  %v181 = vrot.slane %v176, %v180
  %v182 = vlaneseq
  %v183 = vshrl.u32 %v182, 7
  %v184 = vsub.s32 1, %v183
  %v185 = vrot.slane %v176, %v184
  %v186 = vlaneseq
  %v187 = vshrl.u32 %v186, 7
  %v188 = vsub.s32 2, %v187
  %v189 = vrot.slane %v176, %v188
  %v190 = vlaneseq
  %v191 = vshrl.u32 %v190, 7
  %v192 = vsub.s32 3, %v191
  %v193 = vrot.slane %v176, %v192
  %v194 = vlaneseq
  %v195 = vshrl.u32 %v194, 7
  %v196 = vsub.s32 4, %v195
  %v197 = vrot.slane %v176, %v196
  %v198 = vlaneseq
  %v199 = vshrl.u32 %v198, 7
  %v200 = vsub.s32 5, %v199
  %v201 = vrot.slane %v176, %v200
  %v202 = vlaneseq
  %v203 = vshrl.u32 %v202, 7
  %v204 = vsub.s32 6, %v203
  %v205 = vrot.slane %v176, %v204
  %v206 = vlaneseq
  %v207 = vshrl.u32 %v206, 7
  %v208 = vsub.s32 7, %v207
  %v209 = vrot.slane %v176, %v208
  %v346 = vunpack.c.l.b16 %v48
  %v347 = vunpack.c.h.b16 %v48
  %v348 = vunpack.c.l.b16 %v49
  %v349 = vunpack.c.h.b16 %v49
  %v350 = vunpack.c.l.b16 %v50
  %v351 = vunpack.c.h.b16 %v50
  %v352 = vunpack.c.l.b16 %v51
  %v353 = vunpack.c.h.b16 %v51
  %v354 = vunpack.c.l.b16 %v52
  %v355 = vunpack.c.h.b16 %v52
  %v356 = vunpack.c.l.b16 %v53
  %v357 = vunpack.c.h.b16 %v53
  %v358 = vunpack.c.l.b16 %v54
  %v359 = vunpack.c.h.b16 %v54
  %v360 = vunpack.c.l.b16 %v55
  %v361 = vunpack.c.h.b16 %v55
  %v362 = vunpack.c.l.b16 %v56
  %v363 = vunpack.c.h.b16 %v56
  %v364 = vunpack.c.l.b16 %v57
  %v365 = vunpack.c.h.b16 %v57
  %v366 = vunpack.c.l.b16 %v58
  %v367 = vunpack.c.h.b16 %v58
  %v368 = vunpack.c.l.b16 %v59
  %v369 = vunpack.c.h.b16 %v59
  %v370 = vunpack.c.l.b16 %v60
  %v371 = vunpack.c.h.b16 %v60
  %v372 = vunpack.c.l.b16 %v61
  %v373 = vunpack.c.h.b16 %v61
  %v374 = vunpack.c.l.b16 %v62
  %v375 = vunpack.c.h.b16 %v62
  %v376 = vunpack.c.l.b16 %v63
  %v377 = vunpack.c.h.b16 %v63
  %v378 = vunpack.c.l.b16 %v64
  %v379 = vunpack.c.h.b16 %v64
  %v380 = vunpack.c.l.b16 %v65
  %v381 = vunpack.c.h.b16 %v65
  %v382 = vunpack.c.l.b16 %v66
  %v383 = vunpack.c.h.b16 %v66
  %v384 = vunpack.c.l.b16 %v67
  %v385 = vunpack.c.h.b16 %v67
  %v386 = vunpack.c.l.b16 %v68
  %v387 = vunpack.c.h.b16 %v68
  %v388 = vunpack.c.l.b16 %v69
  %v389 = vunpack.c.h.b16 %v69
  %v390 = vunpack.c.l.b16 %v70
  %v391 = vunpack.c.h.b16 %v70
  %v392 = vunpack.c.l.b16 %v71
  %v393 = vunpack.c.h.b16 %v71
  %v394 = vunpack.c.l.b16 %v72
  %v395 = vunpack.c.h.b16 %v72
  %v396 = vunpack.c.l.b16 %v73
  %v397 = vunpack.c.h.b16 %v73
  %v398 = vunpack.c.l.b16 %v74
  %v399 = vunpack.c.h.b16 %v74
  %v400 = vunpack.c.l.b16 %v75
  %v401 = vunpack.c.h.b16 %v75
  %v402 = vunpack.c.l.b16 %v76
  %v403 = vunpack.c.h.b16 %v76
  %v404 = vunpack.c.l.b16 %v77
  %v405 = vunpack.c.h.b16 %v77
  %v406 = vunpack.c.l.b16 %v78
  %v407 = vunpack.c.h.b16 %v78
  %v408 = vunpack.c.l.b16 %v79
  %v409 = vunpack.c.h.b16 %v79
  %v410 = vunpack.c.l.b16 %v80
  %v411 = vunpack.c.h.b16 %v80
  %v412 = vunpack.c.l.b16 %v81
  %v413 = vunpack.c.h.b16 %v81
  %v414 = vunpack.c.l.b16 %v82
  %v415 = vunpack.c.h.b16 %v82
  %v416 = vunpack.c.l.b16 %v83
  %v417 = vunpack.c.h.b16 %v83
  %v418 = vunpack.c.l.b16 %v84
  %v419 = vunpack.c.h.b16 %v84
  %v420 = vunpack.c.l.b16 %v85
  %v421 = vunpack.c.h.b16 %v85
  %v422 = vunpack.c.l.b16 %v86
  %v423 = vunpack.c.h.b16 %v86
  %v424 = vunpack.c.l.b16 %v87
  %v425 = vunpack.c.h.b16 %v87
  %v426 = vunpack.c.l.b16 %v88
  %v427 = vunpack.c.h.b16 %v88
  %v428 = vunpack.c.l.b16 %v89
  %v429 = vunpack.c.h.b16 %v89
  %v430 = vunpack.c.l.b16 %v90
  %v431 = vunpack.c.h.b16 %v90
  %v432 = vunpack.c.l.b16 %v91
  %v433 = vunpack.c.h.b16 %v91
  %v434 = vunpack.c.l.b16 %v92
  %v435 = vunpack.c.h.b16 %v92
  %v436 = vunpack.c.l.b16 %v93
  %v437 = vunpack.c.h.b16 %v93
  %v438 = vunpack.c.l.b16 %v94
  %v439 = vunpack.c.h.b16 %v94
  %v440 = vunpack.c.l.b16 %v95
  %v441 = vunpack.c.h.b16 %v95
  %v442 = vunpack.c.l.b16 %v96
  %v443 = vunpack.c.h.b16 %v96
  %v444 = vunpack.c.l.b16 %v97
  %v445 = vunpack.c.h.b16 %v97
  %v446 = vunpack.c.l.b16 %v98
  %v447 = vunpack.c.h.b16 %v98
  %v448 = vunpack.c.l.b16 %v99
  %v449 = vunpack.c.h.b16 %v99
  %v450 = vunpack.c.l.b16 %v100
  %v451 = vunpack.c.h.b16 %v100
  %v452 = vunpack.c.l.b16 %v101
  %v453 = vunpack.c.h.b16 %v101
  %v454 = vunpack.c.l.b16 %v102
  %v455 = vunpack.c.h.b16 %v102
  %v456 = vunpack.c.l.b16 %v103
  %v457 = vunpack.c.h.b16 %v103
  %v458 = vunpack.c.l.b16 %v104
  %v459 = vunpack.c.h.b16 %v104
  %v460 = vunpack.c.l.b16 %v105
  %v461 = vunpack.c.h.b16 %v105
  %v462 = vunpack.c.l.b16 %v106
  %v463 = vunpack.c.h.b16 %v106
  %v464 = vunpack.c.l.b16 %v107
  %v465 = vunpack.c.h.b16 %v107
  %v466 = vunpack.c.l.b16 %v108
  %v467 = vunpack.c.h.b16 %v108
  %v468 = vunpack.c.l.b16 %v109
  %v469 = vunpack.c.h.b16 %v109
  %v470 = vunpack.c.l.b16 %v110
  %v471 = vunpack.c.h.b16 %v110
  %v472 = vunpack.c.l.b16 %v111
  %v473 = vunpack.c.h.b16 %v111
  %v474 = vunpack.c.l.b16 %v112
  %v475 = vunpack.c.h.b16 %v112
  %v476 = vunpack.c.l.b16 %v113
  %v477 = vunpack.c.h.b16 %v113
  %v478 = vunpack.c.l.b16 %v114
  %v479 = vunpack.c.h.b16 %v114
  %v480 = vunpack.c.l.b16 %v115
  %v481 = vunpack.c.h.b16 %v115
  %v482 = vunpack.c.l.b16 %v116
  %v483 = vunpack.c.h.b16 %v116
  %v484 = vunpack.c.l.b16 %v117
  %v485 = vunpack.c.h.b16 %v117
  %v486 = vunpack.c.l.b16 %v118
  %v487 = vunpack.c.h.b16 %v118
  %v488 = vunpack.c.l.b16 %v119
  %v489 = vunpack.c.h.b16 %v119
  %v490 = vunpack.c.l.b16 %v120
  %v491 = vunpack.c.h.b16 %v120
  %v492 = vunpack.c.l.b16 %v121
  %v493 = vunpack.c.h.b16 %v121
  %v494 = vunpack.c.l.b16 %v122
  %v495 = vunpack.c.h.b16 %v122
  %v496 = vunpack.c.l.b16 %v123
  %v497 = vunpack.c.h.b16 %v123
  %v498 = vunpack.c.l.b16 %v124
  %v499 = vunpack.c.h.b16 %v124
  %v500 = vunpack.c.l.b16 %v125
  %v501 = vunpack.c.h.b16 %v125
  %v502 = vunpack.c.l.b16 %v126
  %v503 = vunpack.c.h.b16 %v126
  %v504 = vunpack.c.l.b16 %v127
  %v505 = vunpack.c.h.b16 %v127
  %v506 = vunpack.c.l.b16 %v128
  %v507 = vunpack.c.h.b16 %v128
  %v508 = vunpack.c.l.b16 %v129
  %v509 = vunpack.c.h.b16 %v129
  %v510 = vunpack.c.l.b16 %v130
  %v511 = vunpack.c.h.b16 %v130
  %v512 = vunpack.c.l.b16 %v131
  %v513 = vunpack.c.h.b16 %v131
  %v514 = vunpack.c.l.b16 %v132
  %v515 = vunpack.c.h.b16 %v132
  %v516 = vunpack.c.l.b16 %v133
  %v517 = vunpack.c.h.b16 %v133
  %v518 = vunpack.c.l.b16 %v134
  %v519 = vunpack.c.h.b16 %v134
  %v520 = vunpack.c.l.b16 %v135
  %v521 = vunpack.c.h.b16 %v135
  %v522 = vunpack.c.l.b16 %v136
  %v523 = vunpack.c.h.b16 %v136
  %v524 = vunpack.c.l.b16 %v137
  %v525 = vunpack.c.h.b16 %v137
  %v526 = vunpack.c.l.b16 %v138
  %v527 = vunpack.c.h.b16 %v138
  %v528 = vunpack.c.l.b16 %v139
  %v529 = vunpack.c.h.b16 %v139
  %v530 = vunpack.c.l.b16 %v140
  %v531 = vunpack.c.h.b16 %v140
  %v532 = vunpack.c.l.b16 %v141
  %v533 = vunpack.c.h.b16 %v141
  %v534 = vunpack.c.l.b16 %v142
  %v535 = vunpack.c.h.b16 %v142
  %v536 = vunpack.c.l.b16 %v143
  %v537 = vunpack.c.h.b16 %v143
  %v538 = vunpack.c.l.b16 %v144
  %v539 = vunpack.c.h.b16 %v144
  %v540 = vunpack.c.l.b16 %v145
  %v541 = vunpack.c.h.b16 %v145
  %v542 = vunpack.c.l.b16 %v146
  %v543 = vunpack.c.h.b16 %v146
  %v544 = vunpack.c.l.b16 %v147
  %v545 = vunpack.c.h.b16 %v147
  %v546 = vunpack.c.l.b16 %v148
  %v547 = vunpack.c.h.b16 %v148
  %v548 = vunpack.c.l.b16 %v149
  %v549 = vunpack.c.h.b16 %v149
  %v550 = vunpack.c.l.b16 %v150
  %v551 = vunpack.c.h.b16 %v150
  %v552 = vunpack.c.l.b16 %v151
  %v553 = vunpack.c.h.b16 %v151
  %v554 = vunpack.c.l.b16 %v152
  %v555 = vunpack.c.h.b16 %v152
  %v556 = vunpack.c.l.b16 %v153
  %v557 = vunpack.c.h.b16 %v153
  %v558 = vunpack.c.l.b16 %v154
  %v559 = vunpack.c.h.b16 %v154
  %v560 = vunpack.c.l.b16 %v155
  %v561 = vunpack.c.h.b16 %v155
  %v562 = vunpack.c.l.b16 %v156
  %v563 = vunpack.c.h.b16 %v156
  %v564 = vunpack.c.l.b16 %v157
  %v565 = vunpack.c.h.b16 %v157
  %v566 = vunpack.c.l.b16 %v158
  %v567 = vunpack.c.h.b16 %v158
  %v568 = vunpack.c.l.b16 %v159
  %v569 = vunpack.c.h.b16 %v159
  %v570 = vunpack.c.l.b16 %v160
  %v571 = vunpack.c.h.b16 %v160
  %v572 = vunpack.c.l.b16 %v161
  %v573 = vunpack.c.h.b16 %v161
  %v574 = vunpack.c.l.b16 %v162
  %v575 = vunpack.c.h.b16 %v162
  %v576 = vunpack.c.l.b16 %v163
  %v577 = vunpack.c.h.b16 %v163
  %v578 = vunpack.c.l.b16 %v164
  %v579 = vunpack.c.h.b16 %v164
  %v580 = vunpack.c.l.b16 %v165
  %v581 = vunpack.c.h.b16 %v165
  %v582 = vunpack.c.l.b16 %v166
  %v583 = vunpack.c.h.b16 %v166
  %v584 = vunpack.c.l.b16 %v167
  %v585 = vunpack.c.h.b16 %v167
  %v586 = vunpack.c.l.b16 %v168
  %v587 = vunpack.c.h.b16 %v168
  %v588 = vunpack.c.l.b16 %v169
  %v589 = vunpack.c.h.b16 %v169
  %v590 = vunpack.c.l.b16 %v170
  %v591 = vunpack.c.h.b16 %v170
  %v592 = vunpack.c.l.b16 %v171
  %v593 = vunpack.c.h.b16 %v171
  %v594 = vunpack.c.l.b16 %v172
  %v595 = vunpack.c.h.b16 %v172
  %v596 = vunpack.c.l.b16 %v173
  %v597 = vunpack.c.h.b16 %v173
  %v598 = vunpack.c.l.b16 %v174
  %v599 = vunpack.c.h.b16 %v174
  %v600 = vunpack.c.l.b16 %v175
  %v601 = vunpack.c.h.b16 %v175
  %v602 = vpack.c.b16 %v354, %v346
  %v603 = vpack.c.b16 %v355, %v347
  %v604 = vpack.c.b16 %v356, %v348
  %v605 = vpack.c.b16 %v357, %v349
  %v606 = vpack.c.b16 %v358, %v350
  %v607 = vpack.c.b16 %v359, %v351
  %v608 = vpack.c.b16 %v360, %v352
  %v609 = vpack.c.b16 %v361, %v353
  %v610 = vpack.c.b16 %v370, %v362
  %v611 = vpack.c.b16 %v371, %v363
  %v612 = vpack.c.b16 %v372, %v364
  %v613 = vpack.c.b16 %v373, %v365
  %v614 = vpack.c.b16 %v374, %v366
  %v615 = vpack.c.b16 %v375, %v367
  %v616 = vpack.c.b16 %v376, %v368
  %v617 = vpack.c.b16 %v377, %v369
  %v618 = vpack.c.b16 %v386, %v378
  %v619 = vpack.c.b16 %v387, %v379
  %v620 = vpack.c.b16 %v388, %v380
  %v621 = vpack.c.b16 %v389, %v381
  %v622 = vpack.c.b16 %v390, %v382
  %v623 = vpack.c.b16 %v391, %v383
  %v624 = vpack.c.b16 %v392, %v384
  %v625 = vpack.c.b16 %v393, %v385
  %v626 = vpack.c.b16 %v402, %v394
  %v627 = vpack.c.b16 %v403, %v395
  %v628 = vpack.c.b16 %v404, %v396
  %v629 = vpack.c.b16 %v405, %v397
  %v630 = vpack.c.b16 %v406, %v398
  %v631 = vpack.c.b16 %v407, %v399
  %v632 = vpack.c.b16 %v408, %v400
  %v633 = vpack.c.b16 %v409, %v401
  %v634 = vpack.c.b16 %v418, %v410
  %v635 = vpack.c.b16 %v419, %v411
  %v636 = vpack.c.b16 %v420, %v412
  %v637 = vpack.c.b16 %v421, %v413
  %v638 = vpack.c.b16 %v422, %v414
  %v639 = vpack.c.b16 %v423, %v415
  %v640 = vpack.c.b16 %v424, %v416
  %v641 = vpack.c.b16 %v425, %v417
  %v642 = vpack.c.b16 %v434, %v426
  %v643 = vpack.c.b16 %v435, %v427
  %v644 = vpack.c.b16 %v436, %v428
  %v645 = vpack.c.b16 %v437, %v429
  %v646 = vpack.c.b16 %v438, %v430
  %v647 = vpack.c.b16 %v439, %v431
  %v648 = vpack.c.b16 %v440, %v432
  %v649 = vpack.c.b16 %v441, %v433
  %v650 = vpack.c.b16 %v450, %v442
  %v651 = vpack.c.b16 %v451, %v443
  %v652 = vpack.c.b16 %v452, %v444
  %v653 = vpack.c.b16 %v453, %v445
  %v654 = vpack.c.b16 %v454, %v446
  %v655 = vpack.c.b16 %v455, %v447
  %v656 = vpack.c.b16 %v456, %v448
  %v657 = vpack.c.b16 %v457, %v449
  %v658 = vpack.c.b16 %v466, %v458
  %v659 = vpack.c.b16 %v467, %v459
  %v660 = vpack.c.b16 %v468, %v460
  %v661 = vpack.c.b16 %v469, %v461
  %v662 = vpack.c.b16 %v470, %v462
  %v663 = vpack.c.b16 %v471, %v463
  %v664 = vpack.c.b16 %v472, %v464
  %v665 = vpack.c.b16 %v473, %v465
  %v666 = vpack.c.b16 %v482, %v474
  %v667 = vpack.c.b16 %v483, %v475
  %v668 = vpack.c.b16 %v484, %v476
  %v669 = vpack.c.b16 %v485, %v477
  %v670 = vpack.c.b16 %v486, %v478
  %v671 = vpack.c.b16 %v487, %v479
  %v672 = vpack.c.b16 %v488, %v480
  %v673 = vpack.c.b16 %v489, %v481
  %v674 = vpack.c.b16 %v498, %v490
  %v675 = vpack.c.b16 %v499, %v491
  %v676 = vpack.c.b16 %v500, %v492
  %v677 = vpack.c.b16 %v501, %v493
  %v678 = vpack.c.b16 %v502, %v494
  %v679 = vpack.c.b16 %v503, %v495
  %v680 = vpack.c.b16 %v504, %v496
  %v681 = vpack.c.b16 %v505, %v497
  %v682 = vpack.c.b16 %v514, %v506
  %v683 = vpack.c.b16 %v515, %v507
  %v684 = vpack.c.b16 %v516, %v508
  %v685 = vpack.c.b16 %v517, %v509
  %v686 = vpack.c.b16 %v518, %v510
  %v687 = vpack.c.b16 %v519, %v511
  %v688 = vpack.c.b16 %v520, %v512
  %v689 = vpack.c.b16 %v521, %v513
  %v690 = vpack.c.b16 %v530, %v522
  %v691 = vpack.c.b16 %v531, %v523
  %v692 = vpack.c.b16 %v532, %v524
  %v693 = vpack.c.b16 %v533, %v525
  %v694 = vpack.c.b16 %v534, %v526
  %v695 = vpack.c.b16 %v535, %v527
  %v696 = vpack.c.b16 %v536, %v528
  %v697 = vpack.c.b16 %v537, %v529
  %v698 = vpack.c.b16 %v546, %v538
  %v699 = vpack.c.b16 %v547, %v539
  %v700 = vpack.c.b16 %v548, %v540
  %v701 = vpack.c.b16 %v549, %v541
  %v702 = vpack.c.b16 %v550, %v542
  %v703 = vpack.c.b16 %v551, %v543
  %v704 = vpack.c.b16 %v552, %v544
  %v705 = vpack.c.b16 %v553, %v545
  %v706 = vpack.c.b16 %v562, %v554
  %v707 = vpack.c.b16 %v563, %v555
  %v708 = vpack.c.b16 %v564, %v556
  %v709 = vpack.c.b16 %v565, %v557
  %v710 = vpack.c.b16 %v566, %v558
  %v711 = vpack.c.b16 %v567, %v559
  %v712 = vpack.c.b16 %v568, %v560
  %v713 = vpack.c.b16 %v569, %v561
  %v714 = vpack.c.b16 %v578, %v570
  %v715 = vpack.c.b16 %v579, %v571
  %v716 = vpack.c.b16 %v580, %v572
  %v717 = vpack.c.b16 %v581, %v573
  %v718 = vpack.c.b16 %v582, %v574
  %v719 = vpack.c.b16 %v583, %v575
  %v720 = vpack.c.b16 %v584, %v576
  %v721 = vpack.c.b16 %v585, %v577
  %v722 = vpack.c.b16 %v594, %v586
  %v723 = vpack.c.b16 %v595, %v587
  %v724 = vpack.c.b16 %v596, %v588
  %v725 = vpack.c.b16 %v597, %v589
  %v726 = vpack.c.b16 %v598, %v590
  %v727 = vpack.c.b16 %v599, %v591
  %v728 = vpack.c.b16 %v600, %v592
  %v729 = vpack.c.b16 %v601, %v593
  %858 = vmatprep.subr.bf16.mxu0 %v603
  %859 = vmatpush1.bf16.msra.mxu0 %v602
  %860 = vmatprep.subr.bf16.mxu0 %v611
  %861 = vmatpush1.bf16.msra.mxu0 %v610
  %862 = vmatprep.subr.bf16.mxu0 %v619
  %863 = vmatpush1.bf16.msra.mxu0 %v618
  %864 = vmatprep.subr.bf16.mxu0 %v627
  %865 = vmatpush1.bf16.msra.mxu0 %v626
  %866 = vmatprep.subr.bf16.mxu0 %v635
  %867 = vmatpush1.bf16.msra.mxu0 %v634
  %868 = vmatprep.subr.bf16.mxu0 %v643
  %869 = vmatpush1.bf16.msra.mxu0 %v642
  %870 = vmatprep.subr.bf16.mxu0 %v651
  %871 = vmatpush1.bf16.msra.mxu0 %v650
  %872 = vmatprep.subr.bf16.mxu0 %v659
  %873 = vmatpush1.bf16.msra.mxu0 %v658
  %874 = vmatprep.subr.bf16.mxu0 %v667
  %875 = vmatpush1.bf16.msra.mxu0 %v666
  %876 = vmatprep.subr.bf16.mxu0 %v675
  %877 = vmatpush1.bf16.msra.mxu0 %v674
  %878 = vmatprep.subr.bf16.mxu0 %v683
  %879 = vmatpush1.bf16.msra.mxu0 %v682
  %880 = vmatprep.subr.bf16.mxu0 %v691
  %881 = vmatpush1.bf16.msra.mxu0 %v690
  %882 = vmatprep.subr.bf16.mxu0 %v699
  %883 = vmatpush1.bf16.msra.mxu0 %v698
  %884 = vmatprep.subr.bf16.mxu0 %v707
  %885 = vmatpush1.bf16.msra.mxu0 %v706
  %886 = vmatprep.subr.bf16.mxu0 %v715
  %887 = vmatpush1.bf16.msra.mxu0 %v714
  %888 = vmatprep.subr.bf16.mxu0 %v723
  %889 = vmatpush1.bf16.msra.mxu0 %v722
  %890 = vmatprep.mubr.bf16.mxu0 %v47
  %891 = vmatmul.mubr.bf16.gmra.mrb[0].mxu0 %v46
  %v892 = vpop.f32.mrb[0].mxu0
  %v893 = vadd.f32 %v181, %v892
  %v894 = vpop.f32.mrb[0].mxu0
  %v895 = vadd.f32 %v185, %v894
  %v896 = vpop.f32.mrb[0].mxu0
  %v897 = vadd.f32 %v181, %v896
  %v898 = vpop.f32.mrb[0].mxu0
  %v899 = vadd.f32 %v185, %v898
  %900 = vdwg.mxu0
  %901 = vmatprep.subr.bf16.mxu0 %v605
  %902 = vmatpush1.bf16.msra.mxu0 %v604
  %903 = vmatprep.subr.bf16.mxu0 %v613
  %904 = vmatpush1.bf16.msra.mxu0 %v612
  %905 = vmatprep.subr.bf16.mxu0 %v621
  %906 = vmatpush1.bf16.msra.mxu0 %v620
  %907 = vmatprep.subr.bf16.mxu0 %v629
  %908 = vmatpush1.bf16.msra.mxu0 %v628
  %909 = vmatprep.subr.bf16.mxu0 %v637
  %910 = vmatpush1.bf16.msra.mxu0 %v636
  %911 = vmatprep.subr.bf16.mxu0 %v645
  %912 = vmatpush1.bf16.msra.mxu0 %v644
  %913 = vmatprep.subr.bf16.mxu0 %v653
  %914 = vmatpush1.bf16.msra.mxu0 %v652
  %915 = vmatprep.subr.bf16.mxu0 %v661
  %916 = vmatpush1.bf16.msra.mxu0 %v660
  %917 = vmatprep.subr.bf16.mxu0 %v669
  %918 = vmatpush1.bf16.msra.mxu0 %v668
  %919 = vmatprep.subr.bf16.mxu0 %v677
  %920 = vmatpush1.bf16.msra.mxu0 %v676
  %921 = vmatprep.subr.bf16.mxu0 %v685
  %922 = vmatpush1.bf16.msra.mxu0 %v684
  %923 = vmatprep.subr.bf16.mxu0 %v693
  %924 = vmatpush1.bf16.msra.mxu0 %v692
  %925 = vmatprep.subr.bf16.mxu0 %v701
  %926 = vmatpush1.bf16.msra.mxu0 %v700
  %927 = vmatprep.subr.bf16.mxu0 %v709
  %928 = vmatpush1.bf16.msra.mxu0 %v708
  %929 = vmatprep.subr.bf16.mxu0 %v717
  %930 = vmatpush1.bf16.msra.mxu0 %v716
  %931 = vmatprep.subr.bf16.mxu0 %v725
  %932 = vmatpush1.bf16.msra.mxu0 %v724
  %933 = vmatprep.mubr.bf16.mxu0 %v47
  %934 = vmatmul.mubr.bf16.gmra.mrb[0].mxu0 %v46
  %v935 = vpop.f32.mrb[0].mxu0
  %v936 = vadd.f32 %v189, %v935
  %v937 = vpop.f32.mrb[0].mxu0
  %v938 = vadd.f32 %v193, %v937
  %v939 = vpop.f32.mrb[0].mxu0
  %v940 = vadd.f32 %v189, %v939
  %v941 = vpop.f32.mrb[0].mxu0
  %v942 = vadd.f32 %v193, %v941
  %943 = vdwg.mxu0
  %944 = vmatprep.subr.bf16.mxu0 %v607
  %945 = vmatpush1.bf16.msra.mxu0 %v606
  %946 = vmatprep.subr.bf16.mxu0 %v615
  %947 = vmatpush1.bf16.msra.mxu0 %v614
  %948 = vmatprep.subr.bf16.mxu0 %v623
  %949 = vmatpush1.bf16.msra.mxu0 %v622
  %950 = vmatprep.subr.bf16.mxu0 %v631
  %951 = vmatpush1.bf16.msra.mxu0 %v630
  %952 = vmatprep.subr.bf16.mxu0 %v639
  %953 = vmatpush1.bf16.msra.mxu0 %v638
  %954 = vmatprep.subr.bf16.mxu0 %v647
  %955 = vmatpush1.bf16.msra.mxu0 %v646
  %956 = vmatprep.subr.bf16.mxu0 %v655
  %957 = vmatpush1.bf16.msra.mxu0 %v654
  %958 = vmatprep.subr.bf16.mxu0 %v663
  %959 = vmatpush1.bf16.msra.mxu0 %v662
  %960 = vmatprep.subr.bf16.mxu0 %v671
  %961 = vmatpush1.bf16.msra.mxu0 %v670
  %962 = vmatprep.subr.bf16.mxu0 %v679
  %963 = vmatpush1.bf16.msra.mxu0 %v678
  %964 = vmatprep.subr.bf16.mxu0 %v687
  %965 = vmatpush1.bf16.msra.mxu0 %v686
  %966 = vmatprep.subr.bf16.mxu0 %v695
  %967 = vmatpush1.bf16.msra.mxu0 %v694
  %968 = vmatprep.subr.bf16.mxu0 %v703
  %969 = vmatpush1.bf16.msra.mxu0 %v702
  %970 = vmatprep.subr.bf16.mxu0 %v711
  %971 = vmatpush1.bf16.msra.mxu0 %v710
  %972 = vmatprep.subr.bf16.mxu0 %v719
  %973 = vmatpush1.bf16.msra.mxu0 %v718
  %974 = vmatprep.subr.bf16.mxu0 %v727
  %975 = vmatpush1.bf16.msra.mxu0 %v726
  %976 = vmatprep.mubr.bf16.mxu0 %v47
  %977 = vmatmul.mubr.bf16.gmra.mrb[0].mxu0 %v46
  %v978 = vpop.f32.mrb[0].mxu0
  %v979 = vadd.f32 %v197, %v978
  %v980 = vpop.f32.mrb[0].mxu0
  %v981 = vadd.f32 %v201, %v980
  %v982 = vpop.f32.mrb[0].mxu0
  %v983 = vadd.f32 %v197, %v982
  %v984 = vpop.f32.mrb[0].mxu0
  %v985 = vadd.f32 %v201, %v984
  %986 = vdwg.mxu0
  %987 = vmatprep.subr.bf16.mxu0 %v609
  %988 = vmatpush1.bf16.msra.mxu0 %v608
  %989 = vmatprep.subr.bf16.mxu0 %v617
  %990 = vmatpush1.bf16.msra.mxu0 %v616
  %991 = vmatprep.subr.bf16.mxu0 %v625
  %992 = vmatpush1.bf16.msra.mxu0 %v624
  %993 = vmatprep.subr.bf16.mxu0 %v633
  %994 = vmatpush1.bf16.msra.mxu0 %v632
  %995 = vmatprep.subr.bf16.mxu0 %v641
  %996 = vmatpush1.bf16.msra.mxu0 %v640
  %997 = vmatprep.subr.bf16.mxu0 %v649
  %998 = vmatpush1.bf16.msra.mxu0 %v648
  %999 = vmatprep.subr.bf16.mxu0 %v657
  %1000 = vmatpush1.bf16.msra.mxu0 %v656
  %1001 = vmatprep.subr.bf16.mxu0 %v665
  %1002 = vmatpush1.bf16.msra.mxu0 %v664
  %1003 = vmatprep.subr.bf16.mxu0 %v673
  %1004 = vmatpush1.bf16.msra.mxu0 %v672
  %1005 = vmatprep.subr.bf16.mxu0 %v681
  %1006 = vmatpush1.bf16.msra.mxu0 %v680
  %1007 = vmatprep.subr.bf16.mxu0 %v689
  %1008 = vmatpush1.bf16.msra.mxu0 %v688
  %1009 = vmatprep.subr.bf16.mxu0 %v697
  %1010 = vmatpush1.bf16.msra.mxu0 %v696
  %1011 = vmatprep.subr.bf16.mxu0 %v705
  %1012 = vmatpush1.bf16.msra.mxu0 %v704
  %1013 = vmatprep.subr.bf16.mxu0 %v713
  %1014 = vmatpush1.bf16.msra.mxu0 %v712
  %1015 = vmatprep.subr.bf16.mxu0 %v721
  %1016 = vmatpush1.bf16.msra.mxu0 %v720
  %1017 = vmatprep.subr.bf16.mxu0 %v729
  %1018 = vmatpush1.bf16.msra.mxu0 %v728
  %1019 = vmatprep.mubr.bf16.mxu0 %v47
  %1020 = vmatmul.mubr.bf16.gmra.mrb[0].mxu0 %v46
  %v1021 = vpop.f32.mrb[0].mxu0
  %v1022 = vadd.f32 %v205, %v1021
  %v1023 = vpop.f32.mrb[0].mxu0
  %v1024 = vadd.f32 %v209, %v1023
  %v1025 = vpop.f32.mrb[0].mxu0
  %v1026 = vadd.f32 %v205, %v1025
  %v1027 = vpop.f32.mrb[0].mxu0
  %v1028 = vadd.f32 %v209, %v1027
  %1029 = vdwg.mxu0
  %v1030 = vld [vmem:[%s4] sm:$0xff]
  %v1031 = vld [vmem:[%s4 + $0x8] sm:$0xff]
  %v1032 = vld [vmem:[%s4 + $0x10] sm:$0xff]
  %v1033 = vld [vmem:[%s4 + $0x18] sm:$0xff]
  %v1034 = vld [vmem:[%s4 + $0x20] sm:$0xff]
  %v1035 = vld [vmem:[%s4 + $0x28] sm:$0xff]
  %v1036 = vld [vmem:[%s4 + $0x30] sm:$0xff]
  %v1037 = vld [vmem:[%s4 + $0x38] sm:$0xff]
  %v1038 = vunpack.c.l.bf16 %v1030
  %v1039 = vunpack.c.h.bf16 %v1030
  %v1040 = vunpack.c.l.bf16 %v1031
  %v1041 = vunpack.c.h.bf16 %v1031
  %v1042 = vunpack.c.l.bf16 %v1032
  %v1043 = vunpack.c.h.bf16 %v1032
  %v1044 = vunpack.c.l.bf16 %v1033
  %v1045 = vunpack.c.h.bf16 %v1033
  %v1046 = vunpack.c.l.bf16 %v1034
  %v1047 = vunpack.c.h.bf16 %v1034
  %v1048 = vunpack.c.l.bf16 %v1035
  %v1049 = vunpack.c.h.bf16 %v1035
  %v1050 = vunpack.c.l.bf16 %v1036
  %v1051 = vunpack.c.h.bf16 %v1036
  %v1052 = vunpack.c.l.bf16 %v1037
  %v1053 = vunpack.c.h.bf16 %v1037
  %v1054 = vadd.f32 %v893, %v1038
  %v1055 = vadd.f32 %v895, %v1039
  %v1056 = vadd.f32 %v936, %v1040
  %v1057 = vadd.f32 %v938, %v1041
  %v1058 = vadd.f32 %v979, %v1042
  %v1059 = vadd.f32 %v981, %v1043
  %v1060 = vadd.f32 %v1022, %v1044
  %v1061 = vadd.f32 %v1024, %v1045
  %v1062 = vadd.f32 %v897, %v1046
  %v1063 = vadd.f32 %v899, %v1047
  %v1064 = vadd.f32 %v940, %v1048
  %v1065 = vadd.f32 %v942, %v1049
  %v1066 = vadd.f32 %v983, %v1050
  %v1067 = vadd.f32 %v985, %v1051
  %v1068 = vadd.f32 %v1026, %v1052
  %v1069 = vadd.f32 %v1028, %v1053
  %v1070 = vmax.f32 %v1054, 0.0
  %v1071 = vmax.f32 %v1055, 0.0
  %v1072 = vmax.f32 %v1056, 0.0
  %v1073 = vmax.f32 %v1057, 0.0
  %v1074 = vmax.f32 %v1058, 0.0
  %v1075 = vmax.f32 %v1059, 0.0
  %v1076 = vmax.f32 %v1060, 0.0
  %v1077 = vmax.f32 %v1061, 0.0
  %v1078 = vmax.f32 %v1062, 0.0
  %v1079 = vmax.f32 %v1063, 0.0
  %v1080 = vmax.f32 %v1064, 0.0
  %v1081 = vmax.f32 %v1065, 0.0
  %v1082 = vmax.f32 %v1066, 0.0
  %v1083 = vmax.f32 %v1067, 0.0
  %v1084 = vmax.f32 %v1068, 0.0
  %v1085 = vmax.f32 %v1069, 0.0
  %v1086 = vpack.c.bf16 %v1078, %v1070
  %v1087 = vpack.c.bf16 %v1079, %v1071
  %v1088 = vpack.c.bf16 %v1080, %v1072
  %v1089 = vpack.c.bf16 %v1081, %v1073
  %v1090 = vpack.c.bf16 %v1082, %v1074
  %v1091 = vpack.c.bf16 %v1083, %v1075
  %v1092 = vpack.c.bf16 %v1084, %v1076
  %v1093 = vpack.c.bf16 %v1085, %v1077
  %v1102 = vunpack.c.l.b16 %v1086
  %v1103 = vunpack.c.l.b16 %v1087
  %v1104 = vunpack.c.l.b16 %v1088
  %v1105 = vunpack.c.l.b16 %v1089
  %v1106 = vunpack.c.l.b16 %v1090
  %v1107 = vunpack.c.l.b16 %v1091
  %v1108 = vunpack.c.l.b16 %v1092
  %v1109 = vunpack.c.l.b16 %v1093
  %v1110 = vunpack.c.h.b16 %v1086
  %v1111 = vunpack.c.h.b16 %v1087
  %v1112 = vunpack.c.h.b16 %v1088
  %v1113 = vunpack.c.h.b16 %v1089
  %v1114 = vunpack.c.h.b16 %v1090
  %v1115 = vunpack.c.h.b16 %v1091
  %v1116 = vunpack.c.h.b16 %v1092
  %v1117 = vunpack.c.h.b16 %v1093
  %v1118 = vpack.c.b16 %v1103, %v1102
  %v1119 = vpack.c.b16 %v1105, %v1104
  %v1120 = vpack.c.b16 %v1107, %v1106
  %v1121 = vpack.c.b16 %v1109, %v1108
  %v1122 = vpack.c.b16 %v1111, %v1110
  %v1123 = vpack.c.b16 %v1113, %v1112
  %v1124 = vpack.c.b16 %v1115, %v1114
  %v1125 = vpack.c.b16 %v1117, %v1116
  %1134 = vst [vmem:[%s5] sm:$0xff] %v1118
  %1135 = vst [vmem:[%s5 + $0x8] sm:$0xff] %v1119
  %1136 = vst [vmem:[%s5 + $0x10] sm:$0xff] %v1120
  %1137 = vst [vmem:[%s5 + $0x18] sm:$0xff] %v1121
  %1138 = vst [vmem:[%s5 + $0x20] sm:$0xff] %v1122
  %1139 = vst [vmem:[%s5 + $0x28] sm:$0xff] %v1123
  %1140 = vst [vmem:[%s5 + $0x30] sm:$0xff] %v1124
  %1141 = vst [vmem:[%s5 + $0x38] sm:$0xff] %v1125
  // Predicated region
  $region22: #{_lambda_.52} parent=0 // pred_check
    _
  $region23: #{_lambda_.52} parent=0 // pred_check_branch
    %1143 = sbr.rel (0) target = $region25
  $region24: #{_lambda_.52} parent=0 // pred_region
    _
  $region25: #{_lambda_.52} parent=0 // pred_fallthru
    _
  // Predicated region
  $region26: #{_lambda_.52} parent=0 // pred_check
    _
  $region27: #{_lambda_.52} parent=0 // pred_check_branch
    %1145 = sbr.rel (0) target = $region29
  $region28: #{_lambda_.52} parent=0 // pred_region
    _
  $region29: #{_lambda_.52} parent=0 // pred_fallthru
    _

// kernel: _lambda_.53
$region0: #{_lambda_.53}
  #allocation0 [shape = 'u32[]', space=smem, size = 0x4, offset = 0x4, fixed_abs, tag = 'smem constant byte address 0x4 - core index']
  #allocation1 [shape = 'u32[144,128]{1,0:T(1,128)}', space=vmem, size = 0x12000, scoped, tag = 'internal scratch']
  %s0 = inlined_call_operand.vmem [shape: bf16[16,1024], index: 0, kind: input, shape index: {}]
  %s1 = inlined_call_operand.vmem [shape: bf16[1024,256], index: 1, kind: input, shape index: {}]
  %s2 = inlined_call_operand.vmem [shape: f32[1,256], index: 2, kind: input, shape index: {}]
  %s3 = inlined_call_operand.vmem [shape: bf16[16,256], index: 3, kind: output, shape index: {}]
  %s4 = sld [smem:[#allocation0]]
  $region22: #{_lambda_.53} parent=0
    _
  %s6 = ssub.s32 1, %s4
  %s7 = scalar_select 0, %s6, %s4
  // Predicated region
  $region2: #{_lambda_.53} parent=0 // pred_check
    _
  $region3: #{_lambda_.53} parent=0 // pred_check_branch
    %9 = sbr.rel (0) target = $region5
  $region4: #{_lambda_.53} parent=0 // pred_region
    _
  $region5: #{_lambda_.53} parent=0 // pred_fallthru
    _
  // Predicated region
  $region6: #{_lambda_.53} parent=0 // pred_check
    _
  $region7: #{_lambda_.53} parent=0 // pred_check_branch
    %11 = sbr.rel (0) target = $region9
  $region8: #{_lambda_.53} parent=0 // pred_region
    _
  $region9: #{_lambda_.53} parent=0 // pred_fallthru
    _
  // Predicated region
  $region10: #{_lambda_.53} parent=0 // pred_check
    _
  $region11: #{_lambda_.53} parent=0 // pred_check_branch
    %13 = sbr.rel (0) target = $region13
  $region12: #{_lambda_.53} parent=0 // pred_region
    _
  $region13: #{_lambda_.53} parent=0 // pred_fallthru
    _
  %v14 = vld [vmem:[%s0] sm:$0xff]
  %v15 = vld [vmem:[%s0 + $0x8] sm:$0xff]
  %v16 = vld [vmem:[%s0 + $0x10] sm:$0xff]
  %v17 = vld [vmem:[%s0 + $0x18] sm:$0xff]
  %v18 = vld [vmem:[%s0 + $0x20] sm:$0xff]
  %v19 = vld [vmem:[%s0 + $0x28] sm:$0xff]
  %v20 = vld [vmem:[%s0 + $0x30] sm:$0xff]
  %v21 = vld [vmem:[%s0 + $0x38] sm:$0xff]
  %v22 = vld [vmem:[%s1] sm:$0xff]
  %v23 = vld [vmem:[%s1 + $0x8] sm:$0xff]
  %v24 = vld [vmem:[%s1 + $0x10] sm:$0xff]
  %v25 = vld [vmem:[%s1 + $0x18] sm:$0xff]
  %v26 = vld [vmem:[%s1 + $0x20] sm:$0xff]
  %v27 = vld [vmem:[%s1 + $0x28] sm:$0xff]
  %v28 = vld [vmem:[%s1 + $0x30] sm:$0xff]
  %v29 = vld [vmem:[%s1 + $0x38] sm:$0xff]
  %v30 = vld [vmem:[%s1 + $0x40] sm:$0xff]
  %v31 = vld [vmem:[%s1 + $0x48] sm:$0xff]
  %v32 = vld [vmem:[%s1 + $0x50] sm:$0xff]
  %v33 = vld [vmem:[%s1 + $0x58] sm:$0xff]
  %v34 = vld [vmem:[%s1 + $0x60] sm:$0xff]
  %v35 = vld [vmem:[%s1 + $0x68] sm:$0xff]
  %v36 = vld [vmem:[%s1 + $0x70] sm:$0xff]
  %v37 = vld [vmem:[%s1 + $0x78] sm:$0xff]
  %v38 = vld [vmem:[%s1 + $0x80] sm:$0xff]
  %v39 = vld [vmem:[%s1 + $0x88] sm:$0xff]
  %v40 = vld [vmem:[%s1 + $0x90] sm:$0xff]
  %v41 = vld [vmem:[%s1 + $0x98] sm:$0xff]
  %v42 = vld [vmem:[%s1 + $0xa0] sm:$0xff]
  %v43 = vld [vmem:[%s1 + $0xa8] sm:$0xff]
  %v44 = vld [vmem:[%s1 + $0xb0] sm:$0xff]
  %v45 = vld [vmem:[%s1 + $0xb8] sm:$0xff]
  %v46 = vld [vmem:[%s1 + $0xc0] sm:$0xff]
  %v47 = vld [vmem:[%s1 + $0xc8] sm:$0xff]
  %v48 = vld [vmem:[%s1 + $0xd0] sm:$0xff]
  %v49 = vld [vmem:[%s1 + $0xd8] sm:$0xff]
  %v50 = vld [vmem:[%s1 + $0xe0] sm:$0xff]
  %v51 = vld [vmem:[%s1 + $0xe8] sm:$0xff]
  %v52 = vld [vmem:[%s1 + $0xf0] sm:$0xff]
  %v53 = vld [vmem:[%s1 + $0xf8] sm:$0xff]
  %v54 = vld [vmem:[%s1 + $0x100] sm:$0xff]
  %v55 = vld [vmem:[%s1 + $0x108] sm:$0xff]
  %v56 = vld [vmem:[%s1 + $0x110] sm:$0xff]
  %v57 = vld [vmem:[%s1 + $0x118] sm:$0xff]
  %v58 = vld [vmem:[%s1 + $0x120] sm:$0xff]
  %v59 = vld [vmem:[%s1 + $0x128] sm:$0xff]
  %v60 = vld [vmem:[%s1 + $0x130] sm:$0xff]
  %v61 = vld [vmem:[%s1 + $0x138] sm:$0xff]
  %v62 = vld [vmem:[%s1 + $0x140] sm:$0xff]
  %v63 = vld [vmem:[%s1 + $0x148] sm:$0xff]
  %v64 = vld [vmem:[%s1 + $0x150] sm:$0xff]
  %v65 = vld [vmem:[%s1 + $0x158] sm:$0xff]
  %v66 = vld [vmem:[%s1 + $0x160] sm:$0xff]
  %v67 = vld [vmem:[%s1 + $0x168] sm:$0xff]
  %v68 = vld [vmem:[%s1 + $0x170] sm:$0xff]
  %v69 = vld [vmem:[%s1 + $0x178] sm:$0xff]
  %v70 = vld [vmem:[%s1 + $0x180] sm:$0xff]
  %v71 = vld [vmem:[%s1 + $0x188] sm:$0xff]
  %v72 = vld [vmem:[%s1 + $0x190] sm:$0xff]
  %v73 = vld [vmem:[%s1 + $0x198] sm:$0xff]
  %v74 = vld [vmem:[%s1 + $0x1a0] sm:$0xff]
  %v75 = vld [vmem:[%s1 + $0x1a8] sm:$0xff]
  %v76 = vld [vmem:[%s1 + $0x1b0] sm:$0xff]
  %v77 = vld [vmem:[%s1 + $0x1b8] sm:$0xff]
  %v78 = vld [vmem:[%s1 + $0x1c0] sm:$0xff]
  %v79 = vld [vmem:[%s1 + $0x1c8] sm:$0xff]
  %v80 = vld [vmem:[%s1 + $0x1d0] sm:$0xff]
  %v81 = vld [vmem:[%s1 + $0x1d8] sm:$0xff]
  %v82 = vld [vmem:[%s1 + $0x1e0] sm:$0xff]
  %v83 = vld [vmem:[%s1 + $0x1e8] sm:$0xff]
  %v84 = vld [vmem:[%s1 + $0x1f0] sm:$0xff]
  %v85 = vld [vmem:[%s1 + $0x1f8] sm:$0xff]
  %v86 = vld [vmem:[%s1 + $0x200] sm:$0xff]
  %v87 = vld [vmem:[%s1 + $0x208] sm:$0xff]
  %v88 = vld [vmem:[%s1 + $0x210] sm:$0xff]
  %v89 = vld [vmem:[%s1 + $0x218] sm:$0xff]
  %v90 = vld [vmem:[%s1 + $0x220] sm:$0xff]
  %v91 = vld [vmem:[%s1 + $0x228] sm:$0xff]
  %v92 = vld [vmem:[%s1 + $0x230] sm:$0xff]
  %v93 = vld [vmem:[%s1 + $0x238] sm:$0xff]
  %v94 = vld [vmem:[%s1 + $0x240] sm:$0xff]
  %v95 = vld [vmem:[%s1 + $0x248] sm:$0xff]
  %v96 = vld [vmem:[%s1 + $0x250] sm:$0xff]
  %v97 = vld [vmem:[%s1 + $0x258] sm:$0xff]
  %v98 = vld [vmem:[%s1 + $0x260] sm:$0xff]
  %v99 = vld [vmem:[%s1 + $0x268] sm:$0xff]
  %v100 = vld [vmem:[%s1 + $0x270] sm:$0xff]
  %v101 = vld [vmem:[%s1 + $0x278] sm:$0xff]
  %v102 = vld [vmem:[%s1 + $0x280] sm:$0xff]
  %v103 = vld [vmem:[%s1 + $0x288] sm:$0xff]
  %v104 = vld [vmem:[%s1 + $0x290] sm:$0xff]
  %v105 = vld [vmem:[%s1 + $0x298] sm:$0xff]
  %v106 = vld [vmem:[%s1 + $0x2a0] sm:$0xff]
  %v107 = vld [vmem:[%s1 + $0x2a8] sm:$0xff]
  %v108 = vld [vmem:[%s1 + $0x2b0] sm:$0xff]
  %v109 = vld [vmem:[%s1 + $0x2b8] sm:$0xff]
  %v110 = vld [vmem:[%s1 + $0x2c0] sm:$0xff]
  %v111 = vld [vmem:[%s1 + $0x2c8] sm:$0xff]
  %v112 = vld [vmem:[%s1 + $0x2d0] sm:$0xff]
  %v113 = vld [vmem:[%s1 + $0x2d8] sm:$0xff]
  %v114 = vld [vmem:[%s1 + $0x2e0] sm:$0xff]
  %v115 = vld [vmem:[%s1 + $0x2e8] sm:$0xff]
  %v116 = vld [vmem:[%s1 + $0x2f0] sm:$0xff]
  %v117 = vld [vmem:[%s1 + $0x2f8] sm:$0xff]
  %v118 = vld [vmem:[%s1 + $0x300] sm:$0xff]
  %v119 = vld [vmem:[%s1 + $0x308] sm:$0xff]
  %v120 = vld [vmem:[%s1 + $0x310] sm:$0xff]
  %v121 = vld [vmem:[%s1 + $0x318] sm:$0xff]
  %v122 = vld [vmem:[%s1 + $0x320] sm:$0xff]
  %v123 = vld [vmem:[%s1 + $0x328] sm:$0xff]
  %v124 = vld [vmem:[%s1 + $0x330] sm:$0xff]
  %v125 = vld [vmem:[%s1 + $0x338] sm:$0xff]
  %v126 = vld [vmem:[%s1 + $0x340] sm:$0xff]
  %v127 = vld [vmem:[%s1 + $0x348] sm:$0xff]
  %v128 = vld [vmem:[%s1 + $0x350] sm:$0xff]
  %v129 = vld [vmem:[%s1 + $0x358] sm:$0xff]
  %v130 = vld [vmem:[%s1 + $0x360] sm:$0xff]
  %v131 = vld [vmem:[%s1 + $0x368] sm:$0xff]
  %v132 = vld [vmem:[%s1 + $0x370] sm:$0xff]
  %v133 = vld [vmem:[%s1 + $0x378] sm:$0xff]
  %v134 = vld [vmem:[%s1 + $0x380] sm:$0xff]
  %v135 = vld [vmem:[%s1 + $0x388] sm:$0xff]
  %v136 = vld [vmem:[%s1 + $0x390] sm:$0xff]
  %v137 = vld [vmem:[%s1 + $0x398] sm:$0xff]
  %v138 = vld [vmem:[%s1 + $0x3a0] sm:$0xff]
  %v139 = vld [vmem:[%s1 + $0x3a8] sm:$0xff]
  %v140 = vld [vmem:[%s1 + $0x3b0] sm:$0xff]
  %v141 = vld [vmem:[%s1 + $0x3b8] sm:$0xff]
  %v142 = vld [vmem:[%s1 + $0x3c0] sm:$0xff]
  %v143 = vld [vmem:[%s1 + $0x3c8] sm:$0xff]
  %v144 = vld [vmem:[%s1 + $0x3d0] sm:$0xff]
  %v145 = vld [vmem:[%s1 + $0x3d8] sm:$0xff]
  %v146 = vld [vmem:[%s1 + $0x3e0] sm:$0xff]
  %v147 = vld [vmem:[%s1 + $0x3e8] sm:$0xff]
  %v148 = vld [vmem:[%s1 + $0x3f0] sm:$0xff]
  %v149 = vld [vmem:[%s1 + $0x3f8] sm:$0xff]
  %v150 = vld [vmem:[%s2] sm:$0x3]
  %v152 = vlaneseq
  %v153 = vshrl.u32 %v152, 7
  %v154 = vsub.s32 0, %v153
  %v155 = vrot.slane %v150, %v154
  %v156 = vlaneseq
  %v157 = vshrl.u32 %v156, 7
  %v158 = vsub.s32 1, %v157
  %v159 = vrot.slane %v150, %v158
  %v170 = vunpack.c.l.b16 %v14
  %v171 = vunpack.c.h.b16 %v14
  %v172 = vunpack.c.l.b16 %v15
  %v173 = vunpack.c.h.b16 %v15
  %v174 = vunpack.c.l.b16 %v16
  %v175 = vunpack.c.h.b16 %v16
  %v176 = vunpack.c.l.b16 %v17
  %v177 = vunpack.c.h.b16 %v17
  %v178 = vunpack.c.l.b16 %v18
  %v179 = vunpack.c.h.b16 %v18
  %v180 = vunpack.c.l.b16 %v19
  %v181 = vunpack.c.h.b16 %v19
  %v182 = vunpack.c.l.b16 %v20
  %v183 = vunpack.c.h.b16 %v20
  %v184 = vunpack.c.l.b16 %v21
  %v185 = vunpack.c.h.b16 %v21
  %v186 = vpack.c.b16 %v178, %v170
  %v187 = vpack.c.b16 %v179, %v171
  %v188 = vpack.c.b16 %v180, %v172
  %v189 = vpack.c.b16 %v181, %v173
  %v190 = vpack.c.b16 %v182, %v174
  %v191 = vpack.c.b16 %v183, %v175
  %v192 = vpack.c.b16 %v184, %v176
  %v193 = vpack.c.b16 %v185, %v177
  %v330 = vunpack.c.l.b16 %v22
  %v331 = vunpack.c.h.b16 %v22
  %v332 = vunpack.c.l.b16 %v23
  %v333 = vunpack.c.h.b16 %v23
  %v334 = vunpack.c.l.b16 %v24
  %v335 = vunpack.c.h.b16 %v24
  %v336 = vunpack.c.l.b16 %v25
  %v337 = vunpack.c.h.b16 %v25
  %v338 = vunpack.c.l.b16 %v26
  %v339 = vunpack.c.h.b16 %v26
  %v340 = vunpack.c.l.b16 %v27
  %v341 = vunpack.c.h.b16 %v27
  %v342 = vunpack.c.l.b16 %v28
  %v343 = vunpack.c.h.b16 %v28
  %v344 = vunpack.c.l.b16 %v29
  %v345 = vunpack.c.h.b16 %v29
  %v346 = vunpack.c.l.b16 %v30
  %v347 = vunpack.c.h.b16 %v30
  %v348 = vunpack.c.l.b16 %v31
  %v349 = vunpack.c.h.b16 %v31
  %v350 = vunpack.c.l.b16 %v32
  %v351 = vunpack.c.h.b16 %v32
  %v352 = vunpack.c.l.b16 %v33
  %v353 = vunpack.c.h.b16 %v33
  %v354 = vunpack.c.l.b16 %v34
  %v355 = vunpack.c.h.b16 %v34
  %v356 = vunpack.c.l.b16 %v35
  %v357 = vunpack.c.h.b16 %v35
  %v358 = vunpack.c.l.b16 %v36
  %v359 = vunpack.c.h.b16 %v36
  %v360 = vunpack.c.l.b16 %v37
  %v361 = vunpack.c.h.b16 %v37
  %v362 = vunpack.c.l.b16 %v38
  %v363 = vunpack.c.h.b16 %v38
  %v364 = vunpack.c.l.b16 %v39
  %v365 = vunpack.c.h.b16 %v39
  %v366 = vunpack.c.l.b16 %v40
  %v367 = vunpack.c.h.b16 %v40
  %v368 = vunpack.c.l.b16 %v41
  %v369 = vunpack.c.h.b16 %v41
  %v370 = vunpack.c.l.b16 %v42
  %v371 = vunpack.c.h.b16 %v42
  %v372 = vunpack.c.l.b16 %v43
  %v373 = vunpack.c.h.b16 %v43
  %v374 = vunpack.c.l.b16 %v44
  %v375 = vunpack.c.h.b16 %v44
  %v376 = vunpack.c.l.b16 %v45
  %v377 = vunpack.c.h.b16 %v45
  %v378 = vunpack.c.l.b16 %v46
  %v379 = vunpack.c.h.b16 %v46
  %v380 = vunpack.c.l.b16 %v47
  %v381 = vunpack.c.h.b16 %v47
  %v382 = vunpack.c.l.b16 %v48
  %v383 = vunpack.c.h.b16 %v48
  %v384 = vunpack.c.l.b16 %v49
  %v385 = vunpack.c.h.b16 %v49
  %v386 = vunpack.c.l.b16 %v50
  %v387 = vunpack.c.h.b16 %v50
  %v388 = vunpack.c.l.b16 %v51
  %v389 = vunpack.c.h.b16 %v51
  %v390 = vunpack.c.l.b16 %v52
  %v391 = vunpack.c.h.b16 %v52
  %v392 = vunpack.c.l.b16 %v53
  %v393 = vunpack.c.h.b16 %v53
  %v394 = vunpack.c.l.b16 %v54
  %v395 = vunpack.c.h.b16 %v54
  %v396 = vunpack.c.l.b16 %v55
  %v397 = vunpack.c.h.b16 %v55
  %v398 = vunpack.c.l.b16 %v56
  %v399 = vunpack.c.h.b16 %v56
  %v400 = vunpack.c.l.b16 %v57
  %v401 = vunpack.c.h.b16 %v57
  %v402 = vunpack.c.l.b16 %v58
  %v403 = vunpack.c.h.b16 %v58
  %v404 = vunpack.c.l.b16 %v59
  %v405 = vunpack.c.h.b16 %v59
  %v406 = vunpack.c.l.b16 %v60
  %v407 = vunpack.c.h.b16 %v60
  %v408 = vunpack.c.l.b16 %v61
  %v409 = vunpack.c.h.b16 %v61
  %v410 = vunpack.c.l.b16 %v62
  %v411 = vunpack.c.h.b16 %v62
  %v412 = vunpack.c.l.b16 %v63
  %v413 = vunpack.c.h.b16 %v63
  %v414 = vunpack.c.l.b16 %v64
  %v415 = vunpack.c.h.b16 %v64
  %v416 = vunpack.c.l.b16 %v65
  %v417 = vunpack.c.h.b16 %v65
  %v418 = vunpack.c.l.b16 %v66
  %v419 = vunpack.c.h.b16 %v66
  %v420 = vunpack.c.l.b16 %v67
  %v421 = vunpack.c.h.b16 %v67
  %v422 = vunpack.c.l.b16 %v68
  %v423 = vunpack.c.h.b16 %v68
  %v424 = vunpack.c.l.b16 %v69
  %v425 = vunpack.c.h.b16 %v69
  %v426 = vunpack.c.l.b16 %v70
  %v427 = vunpack.c.h.b16 %v70
  %v428 = vunpack.c.l.b16 %v71
  %v429 = vunpack.c.h.b16 %v71
  %v430 = vunpack.c.l.b16 %v72
  %v431 = vunpack.c.h.b16 %v72
  %v432 = vunpack.c.l.b16 %v73
  %v433 = vunpack.c.h.b16 %v73
  %v434 = vunpack.c.l.b16 %v74
  %v435 = vunpack.c.h.b16 %v74
  %v436 = vunpack.c.l.b16 %v75
  %v437 = vunpack.c.h.b16 %v75
  %v438 = vunpack.c.l.b16 %v76
  %v439 = vunpack.c.h.b16 %v76
  %v440 = vunpack.c.l.b16 %v77
  %v441 = vunpack.c.h.b16 %v77
  %v442 = vunpack.c.l.b16 %v78
  %v443 = vunpack.c.h.b16 %v78
  %v444 = vunpack.c.l.b16 %v79
  %v445 = vunpack.c.h.b16 %v79
  %v446 = vunpack.c.l.b16 %v80
  %v447 = vunpack.c.h.b16 %v80
  %v448 = vunpack.c.l.b16 %v81
  %v449 = vunpack.c.h.b16 %v81
  %v450 = vunpack.c.l.b16 %v82
  %v451 = vunpack.c.h.b16 %v82
  %v452 = vunpack.c.l.b16 %v83
  %v453 = vunpack.c.h.b16 %v83
  %v454 = vunpack.c.l.b16 %v84
  %v455 = vunpack.c.h.b16 %v84
  %v456 = vunpack.c.l.b16 %v85
  %v457 = vunpack.c.h.b16 %v85
  %v458 = vunpack.c.l.b16 %v86
  %v459 = vunpack.c.h.b16 %v86
  %v460 = vunpack.c.l.b16 %v87
  %v461 = vunpack.c.h.b16 %v87
  %v462 = vunpack.c.l.b16 %v88
  %v463 = vunpack.c.h.b16 %v88
  %v464 = vunpack.c.l.b16 %v89
  %v465 = vunpack.c.h.b16 %v89
  %v466 = vunpack.c.l.b16 %v90
  %v467 = vunpack.c.h.b16 %v90
  %v468 = vunpack.c.l.b16 %v91
  %v469 = vunpack.c.h.b16 %v91
  %v470 = vunpack.c.l.b16 %v92
  %v471 = vunpack.c.h.b16 %v92
  %v472 = vunpack.c.l.b16 %v93
  %v473 = vunpack.c.h.b16 %v93
  %v474 = vunpack.c.l.b16 %v94
  %v475 = vunpack.c.h.b16 %v94
  %v476 = vunpack.c.l.b16 %v95
  %v477 = vunpack.c.h.b16 %v95
  %v478 = vunpack.c.l.b16 %v96
  %v479 = vunpack.c.h.b16 %v96
  %v480 = vunpack.c.l.b16 %v97
  %v481 = vunpack.c.h.b16 %v97
  %v482 = vunpack.c.l.b16 %v98
  %v483 = vunpack.c.h.b16 %v98
  %v484 = vunpack.c.l.b16 %v99
  %v485 = vunpack.c.h.b16 %v99
  %v486 = vunpack.c.l.b16 %v100
  %v487 = vunpack.c.h.b16 %v100
  %v488 = vunpack.c.l.b16 %v101
  %v489 = vunpack.c.h.b16 %v101
  %v490 = vunpack.c.l.b16 %v102
  %v491 = vunpack.c.h.b16 %v102
  %v492 = vunpack.c.l.b16 %v103
  %v493 = vunpack.c.h.b16 %v103
  %v494 = vunpack.c.l.b16 %v104
  %v495 = vunpack.c.h.b16 %v104
  %v496 = vunpack.c.l.b16 %v105
  %v497 = vunpack.c.h.b16 %v105
  %v498 = vunpack.c.l.b16 %v106
  %v499 = vunpack.c.h.b16 %v106
  %v500 = vunpack.c.l.b16 %v107
  %v501 = vunpack.c.h.b16 %v107
  %v502 = vunpack.c.l.b16 %v108
  %v503 = vunpack.c.h.b16 %v108
  %v504 = vunpack.c.l.b16 %v109
  %v505 = vunpack.c.h.b16 %v109
  %v506 = vunpack.c.l.b16 %v110
  %v507 = vunpack.c.h.b16 %v110
  %v508 = vunpack.c.l.b16 %v111
  %v509 = vunpack.c.h.b16 %v111
  %v510 = vunpack.c.l.b16 %v112
  %v511 = vunpack.c.h.b16 %v112
  %v512 = vunpack.c.l.b16 %v113
  %v513 = vunpack.c.h.b16 %v113
  %v514 = vunpack.c.l.b16 %v114
  %v515 = vunpack.c.h.b16 %v114
  %v516 = vunpack.c.l.b16 %v115
  %v517 = vunpack.c.h.b16 %v115
  %v518 = vunpack.c.l.b16 %v116
  %v519 = vunpack.c.h.b16 %v116
  %v520 = vunpack.c.l.b16 %v117
  %v521 = vunpack.c.h.b16 %v117
  %v522 = vunpack.c.l.b16 %v118
  %v523 = vunpack.c.h.b16 %v118
  %v524 = vunpack.c.l.b16 %v119
  %v525 = vunpack.c.h.b16 %v119
  %v526 = vunpack.c.l.b16 %v120
  %v527 = vunpack.c.h.b16 %v120
  %v528 = vunpack.c.l.b16 %v121
  %v529 = vunpack.c.h.b16 %v121
  %v530 = vunpack.c.l.b16 %v122
  %v531 = vunpack.c.h.b16 %v122
  %v532 = vunpack.c.l.b16 %v123
  %v533 = vunpack.c.h.b16 %v123
  %v534 = vunpack.c.l.b16 %v124
  %v535 = vunpack.c.h.b16 %v124
  %v536 = vunpack.c.l.b16 %v125
  %v537 = vunpack.c.h.b16 %v125
  %v538 = vunpack.c.l.b16 %v126
  %v539 = vunpack.c.h.b16 %v126
  %v540 = vunpack.c.l.b16 %v127
  %v541 = vunpack.c.h.b16 %v127
  %v542 = vunpack.c.l.b16 %v128
  %v543 = vunpack.c.h.b16 %v128
  %v544 = vunpack.c.l.b16 %v129
  %v545 = vunpack.c.h.b16 %v129
  %v546 = vunpack.c.l.b16 %v130
  %v547 = vunpack.c.h.b16 %v130
  %v548 = vunpack.c.l.b16 %v131
  %v549 = vunpack.c.h.b16 %v131
  %v550 = vunpack.c.l.b16 %v132
  %v551 = vunpack.c.h.b16 %v132
  %v552 = vunpack.c.l.b16 %v133
  %v553 = vunpack.c.h.b16 %v133
  %v554 = vunpack.c.l.b16 %v134
  %v555 = vunpack.c.h.b16 %v134
  %v556 = vunpack.c.l.b16 %v135
  %v557 = vunpack.c.h.b16 %v135
  %v558 = vunpack.c.l.b16 %v136
  %v559 = vunpack.c.h.b16 %v136
  %v560 = vunpack.c.l.b16 %v137
  %v561 = vunpack.c.h.b16 %v137
  %v562 = vunpack.c.l.b16 %v138
  %v563 = vunpack.c.h.b16 %v138
  %v564 = vunpack.c.l.b16 %v139
  %v565 = vunpack.c.h.b16 %v139
  %v566 = vunpack.c.l.b16 %v140
  %v567 = vunpack.c.h.b16 %v140
  %v568 = vunpack.c.l.b16 %v141
  %v569 = vunpack.c.h.b16 %v141
  %v570 = vunpack.c.l.b16 %v142
  %v571 = vunpack.c.h.b16 %v142
  %v572 = vunpack.c.l.b16 %v143
  %v573 = vunpack.c.h.b16 %v143
  %v574 = vunpack.c.l.b16 %v144
  %v575 = vunpack.c.h.b16 %v144
  %v576 = vunpack.c.l.b16 %v145
  %v577 = vunpack.c.h.b16 %v145
  %v578 = vunpack.c.l.b16 %v146
  %v579 = vunpack.c.h.b16 %v146
  %v580 = vunpack.c.l.b16 %v147
  %v581 = vunpack.c.h.b16 %v147
  %v582 = vunpack.c.l.b16 %v148
  %v583 = vunpack.c.h.b16 %v148
  %v584 = vunpack.c.l.b16 %v149
  %v585 = vunpack.c.h.b16 %v149
  %v586 = vpack.c.b16 %v332, %v330
  %v587 = vpack.c.b16 %v333, %v331
  %v588 = vpack.c.b16 %v336, %v334
  %v589 = vpack.c.b16 %v337, %v335
  %v590 = vpack.c.b16 %v340, %v338
  %v591 = vpack.c.b16 %v341, %v339
  %v592 = vpack.c.b16 %v344, %v342
  %v593 = vpack.c.b16 %v345, %v343
  %v594 = vpack.c.b16 %v348, %v346
  %v595 = vpack.c.b16 %v349, %v347
  %v596 = vpack.c.b16 %v352, %v350
  %v597 = vpack.c.b16 %v353, %v351
  %v598 = vpack.c.b16 %v356, %v354
  %v599 = vpack.c.b16 %v357, %v355
  %v600 = vpack.c.b16 %v360, %v358
  %v601 = vpack.c.b16 %v361, %v359
  %v602 = vpack.c.b16 %v364, %v362
  %v603 = vpack.c.b16 %v365, %v363
  %v604 = vpack.c.b16 %v368, %v366
  %v605 = vpack.c.b16 %v369, %v367
  %v606 = vpack.c.b16 %v372, %v370
  %v607 = vpack.c.b16 %v373, %v371
  %v608 = vpack.c.b16 %v376, %v374
  %v609 = vpack.c.b16 %v377, %v375
  %v610 = vpack.c.b16 %v380, %v378
  %v611 = vpack.c.b16 %v381, %v379
  %v612 = vpack.c.b16 %v384, %v382
  %v613 = vpack.c.b16 %v385, %v383
  %v614 = vpack.c.b16 %v388, %v386
  %v615 = vpack.c.b16 %v389, %v387
  %v616 = vpack.c.b16 %v392, %v390
  %v617 = vpack.c.b16 %v393, %v391
  %v618 = vpack.c.b16 %v396, %v394
  %v619 = vpack.c.b16 %v397, %v395
  %v620 = vpack.c.b16 %v400, %v398
  %v621 = vpack.c.b16 %v401, %v399
  %v622 = vpack.c.b16 %v404, %v402
  %v623 = vpack.c.b16 %v405, %v403
  %v624 = vpack.c.b16 %v408, %v406
  %v625 = vpack.c.b16 %v409, %v407
  %v626 = vpack.c.b16 %v412, %v410
  %v627 = vpack.c.b16 %v413, %v411
  %v628 = vpack.c.b16 %v416, %v414
  %v629 = vpack.c.b16 %v417, %v415
  %v630 = vpack.c.b16 %v420, %v418
  %v631 = vpack.c.b16 %v421, %v419
  %v632 = vpack.c.b16 %v424, %v422
  %v633 = vpack.c.b16 %v425, %v423
  %v634 = vpack.c.b16 %v428, %v426
  %v635 = vpack.c.b16 %v429, %v427
  %v636 = vpack.c.b16 %v432, %v430
  %v637 = vpack.c.b16 %v433, %v431
  %v638 = vpack.c.b16 %v436, %v434
  %v639 = vpack.c.b16 %v437, %v435
  %v640 = vpack.c.b16 %v440, %v438
  %v641 = vpack.c.b16 %v441, %v439
  %v642 = vpack.c.b16 %v444, %v442
  %v643 = vpack.c.b16 %v445, %v443
  %v644 = vpack.c.b16 %v448, %v446
  %v645 = vpack.c.b16 %v449, %v447
  %v646 = vpack.c.b16 %v452, %v450
  %v647 = vpack.c.b16 %v453, %v451
  %v648 = vpack.c.b16 %v456, %v454
  %v649 = vpack.c.b16 %v457, %v455
  %v650 = vpack.c.b16 %v460, %v458
  %v651 = vpack.c.b16 %v461, %v459
  %v652 = vpack.c.b16 %v464, %v462
  %v653 = vpack.c.b16 %v465, %v463
  %v654 = vpack.c.b16 %v468, %v466
  %v655 = vpack.c.b16 %v469, %v467
  %v656 = vpack.c.b16 %v472, %v470
  %v657 = vpack.c.b16 %v473, %v471
  %v658 = vpack.c.b16 %v476, %v474
  %v659 = vpack.c.b16 %v477, %v475
  %v660 = vpack.c.b16 %v480, %v478
  %v661 = vpack.c.b16 %v481, %v479
  %v662 = vpack.c.b16 %v484, %v482
  %v663 = vpack.c.b16 %v485, %v483
  %v664 = vpack.c.b16 %v488, %v486
  %v665 = vpack.c.b16 %v489, %v487
  %v666 = vpack.c.b16 %v492, %v490
  %v667 = vpack.c.b16 %v493, %v491
  %v668 = vpack.c.b16 %v496, %v494
  %v669 = vpack.c.b16 %v497, %v495
  %v670 = vpack.c.b16 %v500, %v498
  %v671 = vpack.c.b16 %v501, %v499
  %v672 = vpack.c.b16 %v504, %v502
  %v673 = vpack.c.b16 %v505, %v503
  %v674 = vpack.c.b16 %v508, %v506
  %v675 = vpack.c.b16 %v509, %v507
  %v676 = vpack.c.b16 %v512, %v510
  %v677 = vpack.c.b16 %v513, %v511
  %v678 = vpack.c.b16 %v516, %v514
  %v679 = vpack.c.b16 %v517, %v515
  %v680 = vpack.c.b16 %v520, %v518
  %v681 = vpack.c.b16 %v521, %v519
  %v682 = vpack.c.b16 %v524, %v522
  %v683 = vpack.c.b16 %v525, %v523
  %v684 = vpack.c.b16 %v528, %v526
  %v685 = vpack.c.b16 %v529, %v527
  %v686 = vpack.c.b16 %v532, %v530
  %v687 = vpack.c.b16 %v533, %v531
  %v688 = vpack.c.b16 %v536, %v534
  %v689 = vpack.c.b16 %v537, %v535
  %v690 = vpack.c.b16 %v540, %v538
  %v691 = vpack.c.b16 %v541, %v539
  %v692 = vpack.c.b16 %v544, %v542
  %v693 = vpack.c.b16 %v545, %v543
  %v694 = vpack.c.b16 %v548, %v546
  %v695 = vpack.c.b16 %v549, %v547
  %v696 = vpack.c.b16 %v552, %v550
  %v697 = vpack.c.b16 %v553, %v551
  %v698 = vpack.c.b16 %v556, %v554
  %v699 = vpack.c.b16 %v557, %v555
  %v700 = vpack.c.b16 %v560, %v558
  %v701 = vpack.c.b16 %v561, %v559
  %v702 = vpack.c.b16 %v564, %v562
  %v703 = vpack.c.b16 %v565, %v563
  %v704 = vpack.c.b16 %v568, %v566
  %v705 = vpack.c.b16 %v569, %v567
  %v706 = vpack.c.b16 %v572, %v570
  %v707 = vpack.c.b16 %v573, %v571
  %v708 = vpack.c.b16 %v576, %v574
  %v709 = vpack.c.b16 %v577, %v575
  %v710 = vpack.c.b16 %v580, %v578
  %v711 = vpack.c.b16 %v581, %v579
  %v712 = vpack.c.b16 %v584, %v582
  %v713 = vpack.c.b16 %v585, %v583
  %842 = vmatprep.subr.bf16.mxu0 %v587
  %843 = vmatpush1.bf16.msra.mxu0 %v586
  %844 = vmatprep.subr.bf16.mxu0 %v589
  %845 = vmatpush1.bf16.msra.mxu0 %v588
  %846 = vmatprep.subr.bf16.mxu0 %v591
  %847 = vmatpush1.bf16.msra.mxu0 %v590
  %848 = vmatprep.subr.bf16.mxu0 %v593
  %849 = vmatpush1.bf16.msra.mxu0 %v592
  %850 = vmatprep.subr.bf16.mxu0 %v595
  %851 = vmatpush1.bf16.msra.mxu0 %v594
  %852 = vmatprep.subr.bf16.mxu0 %v597
  %853 = vmatpush1.bf16.msra.mxu0 %v596
  %854 = vmatprep.subr.bf16.mxu0 %v599
  %855 = vmatpush1.bf16.msra.mxu0 %v598
  %856 = vmatprep.subr.bf16.mxu0 %v601
  %857 = vmatpush1.bf16.msra.mxu0 %v600
  %858 = vmatprep.subr.bf16.mxu0 %v603
  %859 = vmatpush1.bf16.msra.mxu0 %v602
  %860 = vmatprep.subr.bf16.mxu0 %v605
  %861 = vmatpush1.bf16.msra.mxu0 %v604
  %862 = vmatprep.subr.bf16.mxu0 %v607
  %863 = vmatpush1.bf16.msra.mxu0 %v606
  %864 = vmatprep.subr.bf16.mxu0 %v609
  %865 = vmatpush1.bf16.msra.mxu0 %v608
  %866 = vmatprep.subr.bf16.mxu0 %v611
  %867 = vmatpush1.bf16.msra.mxu0 %v610
  %868 = vmatprep.subr.bf16.mxu0 %v613
  %869 = vmatpush1.bf16.msra.mxu0 %v612
  %870 = vmatprep.subr.bf16.mxu0 %v615
  %871 = vmatpush1.bf16.msra.mxu0 %v614
  %872 = vmatprep.subr.bf16.mxu0 %v617
  %873 = vmatpush1.bf16.msra.mxu0 %v616
  %874 = vmatprep.mubr.bf16.mxu0 %v187
  %875 = vmatmul.mubr.bf16.gmra.mrb[0].mxu0 %v186
  %v876 = vpop.f32.mrb[0].mxu0
  %v877 = vadd.f32 %v155, %v876
  %v878 = vpop.f32.mrb[0].mxu0
  %v879 = vadd.f32 %v159, %v878
  %v880 = vpop.f32.mrb[0].mxu0
  %v881 = vadd.f32 %v155, %v880
  %v882 = vpop.f32.mrb[0].mxu0
  %v883 = vadd.f32 %v159, %v882
  %884 = vdwg.mxu0
  %885 = vmatprep.subr.bf16.mxu0 %v619
  %886 = vmatpush1.bf16.msra.mxu0 %v618
  %887 = vmatprep.subr.bf16.mxu0 %v621
  %888 = vmatpush1.bf16.msra.mxu0 %v620
  %889 = vmatprep.subr.bf16.mxu0 %v623
  %890 = vmatpush1.bf16.msra.mxu0 %v622
  %891 = vmatprep.subr.bf16.mxu0 %v625
  %892 = vmatpush1.bf16.msra.mxu0 %v624
  %893 = vmatprep.subr.bf16.mxu0 %v627
  %894 = vmatpush1.bf16.msra.mxu0 %v626
  %895 = vmatprep.subr.bf16.mxu0 %v629
  %896 = vmatpush1.bf16.msra.mxu0 %v628
  %897 = vmatprep.subr.bf16.mxu0 %v631
  %898 = vmatpush1.bf16.msra.mxu0 %v630
  %899 = vmatprep.subr.bf16.mxu0 %v633
  %900 = vmatpush1.bf16.msra.mxu0 %v632
  %901 = vmatprep.subr.bf16.mxu0 %v635
  %902 = vmatpush1.bf16.msra.mxu0 %v634
  %903 = vmatprep.subr.bf16.mxu0 %v637
  %904 = vmatpush1.bf16.msra.mxu0 %v636
  %905 = vmatprep.subr.bf16.mxu0 %v639
  %906 = vmatpush1.bf16.msra.mxu0 %v638
  %907 = vmatprep.subr.bf16.mxu0 %v641
  %908 = vmatpush1.bf16.msra.mxu0 %v640
  %909 = vmatprep.subr.bf16.mxu0 %v643
  %910 = vmatpush1.bf16.msra.mxu0 %v642
  %911 = vmatprep.subr.bf16.mxu0 %v645
  %912 = vmatpush1.bf16.msra.mxu0 %v644
  %913 = vmatprep.subr.bf16.mxu0 %v647
  %914 = vmatpush1.bf16.msra.mxu0 %v646
  %915 = vmatprep.subr.bf16.mxu0 %v649
  %916 = vmatpush1.bf16.msra.mxu0 %v648
  %917 = vmatprep.mubr.bf16.mxu0 %v189
  %918 = vmatmul.mubr.bf16.gmra.mrb[0].mxu0 %v188
  %v919 = vpop.f32.mrb[0].mxu0
  %v920 = vadd.f32 %v877, %v919
  %v921 = vpop.f32.mrb[0].mxu0
  %v922 = vadd.f32 %v879, %v921
  %v923 = vpop.f32.mrb[0].mxu0
  %v924 = vadd.f32 %v881, %v923
  %v925 = vpop.f32.mrb[0].mxu0
  %v926 = vadd.f32 %v883, %v925
  %927 = vdwg.mxu0
  %928 = vmatprep.subr.bf16.mxu0 %v651
  %929 = vmatpush1.bf16.msra.mxu0 %v650
  %930 = vmatprep.subr.bf16.mxu0 %v653
  %931 = vmatpush1.bf16.msra.mxu0 %v652
  %932 = vmatprep.subr.bf16.mxu0 %v655
  %933 = vmatpush1.bf16.msra.mxu0 %v654
  %934 = vmatprep.subr.bf16.mxu0 %v657
  %935 = vmatpush1.bf16.msra.mxu0 %v656
  %936 = vmatprep.subr.bf16.mxu0 %v659
  %937 = vmatpush1.bf16.msra.mxu0 %v658
  %938 = vmatprep.subr.bf16.mxu0 %v661
  %939 = vmatpush1.bf16.msra.mxu0 %v660
  %940 = vmatprep.subr.bf16.mxu0 %v663
  %941 = vmatpush1.bf16.msra.mxu0 %v662
  %942 = vmatprep.subr.bf16.mxu0 %v665
  %943 = vmatpush1.bf16.msra.mxu0 %v664
  %944 = vmatprep.subr.bf16.mxu0 %v667
  %945 = vmatpush1.bf16.msra.mxu0 %v666
  %946 = vmatprep.subr.bf16.mxu0 %v669
  %947 = vmatpush1.bf16.msra.mxu0 %v668
  %948 = vmatprep.subr.bf16.mxu0 %v671
  %949 = vmatpush1.bf16.msra.mxu0 %v670
  %950 = vmatprep.subr.bf16.mxu0 %v673
  %951 = vmatpush1.bf16.msra.mxu0 %v672
  %952 = vmatprep.subr.bf16.mxu0 %v675
  %953 = vmatpush1.bf16.msra.mxu0 %v674
  %954 = vmatprep.subr.bf16.mxu0 %v677
  %955 = vmatpush1.bf16.msra.mxu0 %v676
  %956 = vmatprep.subr.bf16.mxu0 %v679
  %957 = vmatpush1.bf16.msra.mxu0 %v678
  %958 = vmatprep.subr.bf16.mxu0 %v681
  %959 = vmatpush1.bf16.msra.mxu0 %v680
  %960 = vmatprep.mubr.bf16.mxu0 %v191
  %961 = vmatmul.mubr.bf16.gmra.mrb[0].mxu0 %v190
  %v962 = vpop.f32.mrb[0].mxu0
  %v963 = vadd.f32 %v920, %v962
  %v964 = vpop.f32.mrb[0].mxu0
  %v965 = vadd.f32 %v922, %v964
  %v966 = vpop.f32.mrb[0].mxu0
  %v967 = vadd.f32 %v924, %v966
  %v968 = vpop.f32.mrb[0].mxu0
  %v969 = vadd.f32 %v926, %v968
  %970 = vdwg.mxu0
  %971 = vmatprep.subr.bf16.mxu0 %v683
  %972 = vmatpush1.bf16.msra.mxu0 %v682
  %973 = vmatprep.subr.bf16.mxu0 %v685
  %974 = vmatpush1.bf16.msra.mxu0 %v684
  %975 = vmatprep.subr.bf16.mxu0 %v687
  %976 = vmatpush1.bf16.msra.mxu0 %v686
  %977 = vmatprep.subr.bf16.mxu0 %v689
  %978 = vmatpush1.bf16.msra.mxu0 %v688
  %979 = vmatprep.subr.bf16.mxu0 %v691
  %980 = vmatpush1.bf16.msra.mxu0 %v690
  %981 = vmatprep.subr.bf16.mxu0 %v693
  %982 = vmatpush1.bf16.msra.mxu0 %v692
  %983 = vmatprep.subr.bf16.mxu0 %v695
  %984 = vmatpush1.bf16.msra.mxu0 %v694
  %985 = vmatprep.subr.bf16.mxu0 %v697
  %986 = vmatpush1.bf16.msra.mxu0 %v696
  %987 = vmatprep.subr.bf16.mxu0 %v699
  %988 = vmatpush1.bf16.msra.mxu0 %v698
  %989 = vmatprep.subr.bf16.mxu0 %v701
  %990 = vmatpush1.bf16.msra.mxu0 %v700
  %991 = vmatprep.subr.bf16.mxu0 %v703
  %992 = vmatpush1.bf16.msra.mxu0 %v702
  %993 = vmatprep.subr.bf16.mxu0 %v705
  %994 = vmatpush1.bf16.msra.mxu0 %v704
  %995 = vmatprep.subr.bf16.mxu0 %v707
  %996 = vmatpush1.bf16.msra.mxu0 %v706
  %997 = vmatprep.subr.bf16.mxu0 %v709
  %998 = vmatpush1.bf16.msra.mxu0 %v708
  %999 = vmatprep.subr.bf16.mxu0 %v711
  %1000 = vmatpush1.bf16.msra.mxu0 %v710
  %1001 = vmatprep.subr.bf16.mxu0 %v713
  %1002 = vmatpush1.bf16.msra.mxu0 %v712
  %1003 = vmatprep.mubr.bf16.mxu0 %v193
  %1004 = vmatmul.mubr.bf16.gmra.mrb[0].mxu0 %v192
  %v1005 = vpop.f32.mrb[0].mxu0
  %v1006 = vadd.f32 %v963, %v1005
  %v1007 = vpop.f32.mrb[0].mxu0
  %v1008 = vadd.f32 %v965, %v1007
  %v1009 = vpop.f32.mrb[0].mxu0
  %v1010 = vadd.f32 %v967, %v1009
  %v1011 = vpop.f32.mrb[0].mxu0
  %v1012 = vadd.f32 %v969, %v1011
  %1013 = vdwg.mxu0
  %v1014 = vmax.f32 %v1006, 0.0
  %v1015 = vmax.f32 %v1008, 0.0
  %v1016 = vmax.f32 %v1010, 0.0
  %v1017 = vmax.f32 %v1012, 0.0
  %v1018 = vpack.c.bf16 %v1016, %v1014
  %v1019 = vpack.c.bf16 %v1017, %v1015
  %v1022 = vunpack.c.l.b16 %v1018
  %v1023 = vunpack.c.l.b16 %v1019
  %v1024 = vunpack.c.h.b16 %v1018
  %v1025 = vunpack.c.h.b16 %v1019
  %v1026 = vpack.c.b16 %v1023, %v1022
  %v1027 = vpack.c.b16 %v1025, %v1024
  %1030 = vst [vmem:[%s3] sm:$0xff] %v1026
  %1031 = vst [vmem:[%s3 + $0x8] sm:$0xff] %v1027
  // Predicated region
  $region14: #{_lambda_.53} parent=0 // pred_check
    _
  $region15: #{_lambda_.53} parent=0 // pred_check_branch
    %1033 = sbr.rel (0) target = $region17
  $region16: #{_lambda_.53} parent=0 // pred_region
    _
  $region17: #{_lambda_.53} parent=0 // pred_fallthru
    _
  // Predicated region
  $region18: #{_lambda_.53} parent=0 // pred_check
    _
  $region19: #{_lambda_.53} parent=0 // pred_check_branch
    %1035 = sbr.rel (0) target = $region21
  $region20: #{_lambda_.53} parent=0 // pred_region
    _
  $region21: #{_lambda_.53} parent=0 // pred_fallthru
    _

// kernel: _lambda_.63
$region0: #{_lambda_.63}
  #allocation0 [shape = 'u32[]', space=smem, size = 0x4, offset = 0x4, fixed_abs, tag = 'smem constant byte address 0x4 - core index']
  #allocation1 [shape = 'u32[144,128]{1,0:T(1,128)}', space=vmem, size = 0x12000, scoped, tag = 'internal scratch']
  #allocation2 [shape = 'f32[2,1]{1,0:T(2,128)}', space=vmem, size = 0x400, scoped, tag = 'scratch operand']
  %s0 = inlined_call_operand.vmem [shape: bf16[2,4096], index: 0, kind: input, shape index: {}]
  %s1 = inlined_call_operand.vmem [shape: bf16[2,4096], index: 1, kind: input, shape index: {}]
  %s2 = inlined_call_operand.vmem [shape: f32[2,1], index: 2, kind: output, shape index: {}]
  %s3 = sld [smem:[#allocation0]]
  $region26: #{_lambda_.63} parent=0
    _
  %s5 = ssub.s32 1, %s3
  %s6 = scalar_select 0, %s5, %s3
  // Predicated region
  $region2: #{_lambda_.63} parent=0 // pred_check
    _
  $region3: #{_lambda_.63} parent=0 // pred_check_branch
    %8 = sbr.rel (0) target = $region5
  $region4: #{_lambda_.63} parent=0 // pred_region
    _
  $region5: #{_lambda_.63} parent=0 // pred_fallthru
    _
  // Predicated region
  $region6: #{_lambda_.63} parent=0 // pred_check
    _
  $region7: #{_lambda_.63} parent=0 // pred_check_branch
    %10 = sbr.rel (0) target = $region9
  $region8: #{_lambda_.63} parent=0 // pred_region
    _
  $region9: #{_lambda_.63} parent=0 // pred_fallthru
    _
  %p11 = scmp.eq.s32.totalorder 0, 0
  // Predicated region
  $region10: #{_lambda_.63} parent=0 // pred_check
    %p12 = pneg %p11
  $region11: #{_lambda_.63} parent=0 // pred_check_branch
    %14 = sbr.rel (%p12) target = $region13
  $region12: #{_lambda_.63} parent=0 // pred_region
    %vm15 = vcmask 1024
    %16 = vst.msk [vmem:[#allocation2] sm:$0x3] %vm15, 0.0
  $region13: #{_lambda_.63} parent=0 // pred_fallthru
    _
  %v17 = vld [vmem:[%s0] sm:$0xff]
  %v18 = vld [vmem:[%s0 + $0x8] sm:$0xff]
  %v19 = vld [vmem:[%s0 + $0x10] sm:$0xff]
  %v20 = vld [vmem:[%s0 + $0x18] sm:$0xff]
  %v21 = vunpack.c.l.bf16 %v17
  %v22 = vunpack.c.h.bf16 %v17
  %v23 = vunpack.c.l.bf16 %v18
  %v24 = vunpack.c.h.bf16 %v18
  %v25 = vunpack.c.l.bf16 %v19
  %v26 = vunpack.c.h.bf16 %v19
  %v27 = vunpack.c.l.bf16 %v20
  %v28 = vunpack.c.h.bf16 %v20
  %v29 = vld [vmem:[%s1] sm:$0xff]
  %v30 = vld [vmem:[%s1 + $0x8] sm:$0xff]
  %v31 = vld [vmem:[%s1 + $0x10] sm:$0xff]
  %v32 = vld [vmem:[%s1 + $0x18] sm:$0xff]
  %v33 = vunpack.c.l.bf16 %v29
  %v34 = vunpack.c.h.bf16 %v29
  %v35 = vunpack.c.l.bf16 %v30
  %v36 = vunpack.c.h.bf16 %v30
  %v37 = vunpack.c.l.bf16 %v31
  %v38 = vunpack.c.h.bf16 %v31
  %v39 = vunpack.c.l.bf16 %v32
  %v40 = vunpack.c.h.bf16 %v32
  %v41 = vsub.f32 %v21, %v33
  %v42 = vsub.f32 %v22, %v34
  %v43 = vsub.f32 %v23, %v35
  %v44 = vsub.f32 %v24, %v36
  %v45 = vsub.f32 %v25, %v37
  %v46 = vsub.f32 %v26, %v38
  %v47 = vsub.f32 %v27, %v39
  %v48 = vsub.f32 %v28, %v40
  %v49 = vld [vmem:[#allocation2] sm:$0x3]
  %v50 = vmul.f32 %v41, %v41
  %v51 = vmul.f32 %v42, %v42
  %v52 = vmul.f32 %v43, %v43
  %v53 = vmul.f32 %v44, %v44
  %v54 = vmul.f32 %v45, %v45
  %v55 = vmul.f32 %v46, %v46
  %v56 = vmul.f32 %v47, %v47
  %v57 = vmul.f32 %v48, %v48
  %v66 = vcombine.high %v50, %v50
  %v68 = vunpack.c.l.s4 1983009808
  %v69 = vunpack.c.0.s8 %v68
  %v70 = vlaneseq
  %v71 = vshrl.u32 %v70, 7
  %v72 = vsub.s32 %v69, %v71
  %v73 = vrot.slane %v50, %v72
  %v75 = vunpack.c.l.s4 1983009808
  %v76 = vunpack.c.0.s8 %v75
  %v77 = vlaneseq
  %v78 = vshrl.u32 %v77, 7
  %v79 = vsub.s32 %v76, %v78
  %v80 = vrot.slane %v66, %v79
  %v81 = vcombine.high %v73, %v73
  %v82 = vcombine.high %v80, %v80
  %v83 = vcombine.high %v51, %v51
  %v85 = vunpack.c.l.s4 1983009808
  %v86 = vunpack.c.0.s8 %v85
  %v87 = vlaneseq
  %v88 = vshrl.u32 %v87, 7
  %v89 = vsub.s32 %v86, %v88
  %v90 = vrot.slane %v51, %v89
  %v92 = vunpack.c.l.s4 1983009808
  %v93 = vunpack.c.0.s8 %v92
  %v94 = vlaneseq
  %v95 = vshrl.u32 %v94, 7
  %v96 = vsub.s32 %v93, %v95
  %v97 = vrot.slane %v83, %v96
  %v98 = vcombine.high %v90, %v90
  %v99 = vcombine.high %v97, %v97
  %v100 = vcombine.high %v52, %v52
  %v102 = vunpack.c.l.s4 1983009808
  %v103 = vunpack.c.0.s8 %v102
  %v104 = vlaneseq
  %v105 = vshrl.u32 %v104, 7
  %v106 = vsub.s32 %v103, %v105
  %v107 = vrot.slane %v52, %v106
  %v109 = vunpack.c.l.s4 1983009808
  %v110 = vunpack.c.0.s8 %v109
  %v111 = vlaneseq
  %v112 = vshrl.u32 %v111, 7
  %v113 = vsub.s32 %v110, %v112
  %v114 = vrot.slane %v100, %v113
  %v115 = vcombine.high %v107, %v107
  %v116 = vcombine.high %v114, %v114
  %v117 = vcombine.high %v53, %v53
  %v119 = vunpack.c.l.s4 1983009808
  %v120 = vunpack.c.0.s8 %v119
  %v121 = vlaneseq
  %v122 = vshrl.u32 %v121, 7
  %v123 = vsub.s32 %v120, %v122
  %v124 = vrot.slane %v53, %v123
  %v126 = vunpack.c.l.s4 1983009808
  %v127 = vunpack.c.0.s8 %v126
  %v128 = vlaneseq
  %v129 = vshrl.u32 %v128, 7
  %v130 = vsub.s32 %v127, %v129
  %v131 = vrot.slane %v117, %v130
  %v132 = vcombine.high %v124, %v124
  %v133 = vcombine.high %v131, %v131
  %v134 = vcombine.high %v54, %v54
  %v136 = vunpack.c.l.s4 1983009808
  %v137 = vunpack.c.0.s8 %v136
  %v138 = vlaneseq
  %v139 = vshrl.u32 %v138, 7
  %v140 = vsub.s32 %v137, %v139
  %v141 = vrot.slane %v54, %v140
  %v143 = vunpack.c.l.s4 1983009808
  %v144 = vunpack.c.0.s8 %v143
  %v145 = vlaneseq
  %v146 = vshrl.u32 %v145, 7
  %v147 = vsub.s32 %v144, %v146
  %v148 = vrot.slane %v134, %v147
  %v149 = vcombine.high %v141, %v141
  %v150 = vcombine.high %v148, %v148
  %v151 = vcombine.high %v55, %v55
  %v153 = vunpack.c.l.s4 1983009808
  %v154 = vunpack.c.0.s8 %v153
  %v155 = vlaneseq
  %v156 = vshrl.u32 %v155, 7
  %v157 = vsub.s32 %v154, %v156
  %v158 = vrot.slane %v55, %v157
  %v160 = vunpack.c.l.s4 1983009808
  %v161 = vunpack.c.0.s8 %v160
  %v162 = vlaneseq
  %v163 = vshrl.u32 %v162, 7
  %v164 = vsub.s32 %v161, %v163
  %v165 = vrot.slane %v151, %v164
  %v166 = vcombine.high %v158, %v158
  %v167 = vcombine.high %v165, %v165
  %v168 = vcombine.high %v56, %v56
  %v170 = vunpack.c.l.s4 1983009808
  %v171 = vunpack.c.0.s8 %v170
  %v172 = vlaneseq
  %v173 = vshrl.u32 %v172, 7
  %v174 = vsub.s32 %v171, %v173
  %v175 = vrot.slane %v56, %v174
  %v177 = vunpack.c.l.s4 1983009808
  %v178 = vunpack.c.0.s8 %v177
  %v179 = vlaneseq
  %v180 = vshrl.u32 %v179, 7
  %v181 = vsub.s32 %v178, %v180
  %v182 = vrot.slane %v168, %v181
  %v183 = vcombine.high %v175, %v175
  %v184 = vcombine.high %v182, %v182
  %v185 = vcombine.high %v57, %v57
  %v187 = vunpack.c.l.s4 1983009808
  %v188 = vunpack.c.0.s8 %v187
  %v189 = vlaneseq
  %v190 = vshrl.u32 %v189, 7
  %v191 = vsub.s32 %v188, %v190
  %v192 = vrot.slane %v57, %v191
  %v194 = vunpack.c.l.s4 1983009808
  %v195 = vunpack.c.0.s8 %v194
  %v196 = vlaneseq
  %v197 = vshrl.u32 %v196, 7
  %v198 = vsub.s32 %v195, %v197
  %v199 = vrot.slane %v185, %v198
  %v200 = vcombine.high %v192, %v192
  %v201 = vcombine.high %v199, %v199
  %vm234 = vcmask 1041408
  %v235 = vsel %vm234, %v73, 0.0
  %v236 = vsel %vm234, %v81, 0.0
  %v237 = vadd.f32 %v235, %v236
  %v238 = vsel %vm234, %v80, 0.0
  %v239 = vadd.f32 %v237, %v238
  %v240 = vsel %vm234, %v82, 0.0
  %v241 = vadd.f32 %v239, %v240
  %v242 = vsel %vm234, %v90, 0.0
  %v243 = vadd.f32 %v241, %v242
  %v244 = vsel %vm234, %v98, 0.0
  %v245 = vadd.f32 %v243, %v244
  %v246 = vsel %vm234, %v97, 0.0
  %v247 = vadd.f32 %v245, %v246
  %v248 = vsel %vm234, %v99, 0.0
  %v249 = vadd.f32 %v247, %v248
  %v250 = vsel %vm234, %v107, 0.0
  %v251 = vadd.f32 %v249, %v250
  %v252 = vsel %vm234, %v115, 0.0
  %v253 = vadd.f32 %v251, %v252
  %v254 = vsel %vm234, %v114, 0.0
  %v255 = vadd.f32 %v253, %v254
  %v256 = vsel %vm234, %v116, 0.0
  %v257 = vadd.f32 %v255, %v256
  %v258 = vsel %vm234, %v124, 0.0
  %v259 = vadd.f32 %v257, %v258
  %v260 = vsel %vm234, %v132, 0.0
  %v261 = vadd.f32 %v259, %v260
  %v262 = vsel %vm234, %v131, 0.0
  %v263 = vadd.f32 %v261, %v262
  %v264 = vsel %vm234, %v133, 0.0
  %v265 = vadd.f32 %v263, %v264
  %v266 = vsel %vm234, %v141, 0.0
  %v267 = vadd.f32 %v265, %v266
  %v268 = vsel %vm234, %v149, 0.0
  %v269 = vadd.f32 %v267, %v268
  %v270 = vsel %vm234, %v148, 0.0
  %v271 = vadd.f32 %v269, %v270
  %v272 = vsel %vm234, %v150, 0.0
  %v273 = vadd.f32 %v271, %v272
  %v274 = vsel %vm234, %v158, 0.0
  %v275 = vadd.f32 %v273, %v274
  %v276 = vsel %vm234, %v166, 0.0
  %v277 = vadd.f32 %v275, %v276
  %v278 = vsel %vm234, %v165, 0.0
  %v279 = vadd.f32 %v277, %v278
  %v280 = vsel %vm234, %v167, 0.0
  %v281 = vadd.f32 %v279, %v280
  %v282 = vsel %vm234, %v175, 0.0
  %v283 = vadd.f32 %v281, %v282
  %v284 = vsel %vm234, %v183, 0.0
  %v285 = vadd.f32 %v283, %v284
  %v286 = vsel %vm234, %v182, 0.0
  %v287 = vadd.f32 %v285, %v286
  %v288 = vsel %vm234, %v184, 0.0
  %v289 = vadd.f32 %v287, %v288
  %v290 = vsel %vm234, %v192, 0.0
  %v291 = vadd.f32 %v289, %v290
  %v292 = vsel %vm234, %v200, 0.0
  %v293 = vadd.f32 %v291, %v292
  %v294 = vsel %vm234, %v199, 0.0
  %v295 = vadd.f32 %v293, %v294
  %v296 = vsel %vm234, %v201, 0.0
  %v297 = vadd.f32 %v295, %v296
  %298 = vadd.xlane.f32.xlu0 %v297
  %v299 = vpop.xlane.xlu0 %298
  %v300 = vadd.f32 %v49, %v299
  %vm301 = vcmask 1024
  %302 = vst.msk [vmem:[#allocation2] sm:$0x3] %vm301, %v300
  // Predicated region
  $region14: #{_lambda_.63} parent=0 // pred_check
    %p303 = pneg %p11
  $region15: #{_lambda_.63} parent=0 // pred_check_branch
    %305 = sbr.rel (%p303) target = $region17
  $region16: #{_lambda_.63} parent=0 // pred_region
    %v306 = vld [vmem:[#allocation2] sm:$0x3]
    %v307 = vmul.f32 %v306, 0.00024414063
    %308 = vst.msk [vmem:[%s2] sm:$0x3] %vm301, %v307
  $region17: #{_lambda_.63} parent=0 // pred_fallthru
    _
  // Predicated region
  $region18: #{_lambda_.63} parent=0 // pred_check
    _
  $region19: #{_lambda_.63} parent=0 // pred_check_branch
    %310 = sbr.rel (0) target = $region21
  $region20: #{_lambda_.63} parent=0 // pred_region
    _
  $region21: #{_lambda_.63} parent=0 // pred_fallthru
    _
  // Predicated region
  $region22: #{_lambda_.63} parent=0 // pred_check
    _
  $region23: #{_lambda_.63} parent=0 // pred_check_branch
    %312 = sbr.rel (0) target = $region25
  $region24: #{_lambda_.63} parent=0 // pred_region
    _
  $region25: #{_lambda_.63} parent=0 // pred_fallthru
    _

// kernel: _lambda_.49
$region0: #{_lambda_.49}
  #allocation0 [shape = 'u32[]', space=smem, size = 0x4, offset = 0x4, fixed_abs, tag = 'smem constant byte address 0x4 - core index']
  #allocation1 [shape = 'u32[144,128]{1,0:T(1,128)}', space=vmem, size = 0x12000, scoped, tag = 'internal scratch']
  #allocation2 [shape = 'f32[2,1]{1,0:T(2,128)}', space=vmem, size = 0x400, scoped, tag = 'scratch operand']
  %s0 = inlined_call_operand.vmem [shape: bf16[2,8192], index: 0, kind: input, shape index: {}]
  %s1 = inlined_call_operand.vmem [shape: bf16[2,8192], index: 1, kind: input, shape index: {}]
  %s2 = inlined_call_operand.vmem [shape: f32[2,1], index: 2, kind: output, shape index: {}]
  %s3 = sld [smem:[#allocation0]]
  $region26: #{_lambda_.49} parent=0
    _
  %s5 = ssub.s32 1, %s3
  %s6 = scalar_select 0, %s5, %s3
  // Predicated region
  $region2: #{_lambda_.49} parent=0 // pred_check
    _
  $region3: #{_lambda_.49} parent=0 // pred_check_branch
    %8 = sbr.rel (0) target = $region5
  $region4: #{_lambda_.49} parent=0 // pred_region
    _
  $region5: #{_lambda_.49} parent=0 // pred_fallthru
    _
  // Predicated region
  $region6: #{_lambda_.49} parent=0 // pred_check
    _
  $region7: #{_lambda_.49} parent=0 // pred_check_branch
    %10 = sbr.rel (0) target = $region9
  $region8: #{_lambda_.49} parent=0 // pred_region
    _
  $region9: #{_lambda_.49} parent=0 // pred_fallthru
    _
  %p11 = scmp.eq.s32.totalorder 0, 0
  // Predicated region
  $region10: #{_lambda_.49} parent=0 // pred_check
    %p12 = pneg %p11
  $region11: #{_lambda_.49} parent=0 // pred_check_branch
    %14 = sbr.rel (%p12) target = $region13
  $region12: #{_lambda_.49} parent=0 // pred_region
    %vm15 = vcmask 1024
    %16 = vst.msk [vmem:[#allocation2] sm:$0x3] %vm15, 0.0
  $region13: #{_lambda_.49} parent=0 // pred_fallthru
    _
  %v17 = vld [vmem:[%s0] sm:$0xff]
  %v18 = vld [vmem:[%s0 + $0x8] sm:$0xff]
  %v19 = vld [vmem:[%s0 + $0x10] sm:$0xff]
  %v20 = vld [vmem:[%s0 + $0x18] sm:$0xff]
  %v21 = vld [vmem:[%s0 + $0x20] sm:$0xff]
  %v22 = vld [vmem:[%s0 + $0x28] sm:$0xff]
  %v23 = vld [vmem:[%s0 + $0x30] sm:$0xff]
  %v24 = vld [vmem:[%s0 + $0x38] sm:$0xff]
  %v25 = vunpack.c.l.bf16 %v17
  %v26 = vunpack.c.h.bf16 %v17
  %v27 = vunpack.c.l.bf16 %v18
  %v28 = vunpack.c.h.bf16 %v18
  %v29 = vunpack.c.l.bf16 %v19
  %v30 = vunpack.c.h.bf16 %v19
  %v31 = vunpack.c.l.bf16 %v20
  %v32 = vunpack.c.h.bf16 %v20
  %v33 = vunpack.c.l.bf16 %v21
  %v34 = vunpack.c.h.bf16 %v21
  %v35 = vunpack.c.l.bf16 %v22
  %v36 = vunpack.c.h.bf16 %v22
  %v37 = vunpack.c.l.bf16 %v23
  %v38 = vunpack.c.h.bf16 %v23
  %v39 = vunpack.c.l.bf16 %v24
  %v40 = vunpack.c.h.bf16 %v24
  %v41 = vld [vmem:[%s1] sm:$0xff]
  %v42 = vld [vmem:[%s1 + $0x8] sm:$0xff]
  %v43 = vld [vmem:[%s1 + $0x10] sm:$0xff]
  %v44 = vld [vmem:[%s1 + $0x18] sm:$0xff]
  %v45 = vld [vmem:[%s1 + $0x20] sm:$0xff]
  %v46 = vld [vmem:[%s1 + $0x28] sm:$0xff]
  %v47 = vld [vmem:[%s1 + $0x30] sm:$0xff]
  %v48 = vld [vmem:[%s1 + $0x38] sm:$0xff]
  %v49 = vunpack.c.l.bf16 %v41
  %v50 = vunpack.c.h.bf16 %v41
  %v51 = vunpack.c.l.bf16 %v42
  %v52 = vunpack.c.h.bf16 %v42
  %v53 = vunpack.c.l.bf16 %v43
  %v54 = vunpack.c.h.bf16 %v43
  %v55 = vunpack.c.l.bf16 %v44
  %v56 = vunpack.c.h.bf16 %v44
  %v57 = vunpack.c.l.bf16 %v45
  %v58 = vunpack.c.h.bf16 %v45
  %v59 = vunpack.c.l.bf16 %v46
  %v60 = vunpack.c.h.bf16 %v46
  %v61 = vunpack.c.l.bf16 %v47
  %v62 = vunpack.c.h.bf16 %v47
  %v63 = vunpack.c.l.bf16 %v48
  %v64 = vunpack.c.h.bf16 %v48
  %v65 = vsub.f32 %v25, %v49
  %v66 = vsub.f32 %v26, %v50
  %v67 = vsub.f32 %v27, %v51
  %v68 = vsub.f32 %v28, %v52
  %v69 = vsub.f32 %v29, %v53
  %v70 = vsub.f32 %v30, %v54
  %v71 = vsub.f32 %v31, %v55
  %v72 = vsub.f32 %v32, %v56
  %v73 = vsub.f32 %v33, %v57
  %v74 = vsub.f32 %v34, %v58
  %v75 = vsub.f32 %v35, %v59
  %v76 = vsub.f32 %v36, %v60
  %v77 = vsub.f32 %v37, %v61
  %v78 = vsub.f32 %v38, %v62
  %v79 = vsub.f32 %v39, %v63
  %v80 = vsub.f32 %v40, %v64
  %v81 = vld [vmem:[#allocation2] sm:$0x3]
  %v82 = vmul.f32 %v65, %v65
  %v83 = vmul.f32 %v66, %v66
  %v84 = vmul.f32 %v67, %v67
  %v85 = vmul.f32 %v68, %v68
  %v86 = vmul.f32 %v69, %v69
  %v87 = vmul.f32 %v70, %v70
  %v88 = vmul.f32 %v71, %v71
  %v89 = vmul.f32 %v72, %v72
  %v90 = vmul.f32 %v73, %v73
  %v91 = vmul.f32 %v74, %v74
  %v92 = vmul.f32 %v75, %v75
  %v93 = vmul.f32 %v76, %v76
  %v94 = vmul.f32 %v77, %v77
  %v95 = vmul.f32 %v78, %v78
  %v96 = vmul.f32 %v79, %v79
  %v97 = vmul.f32 %v80, %v80
  %v114 = vcombine.high %v82, %v82
  %v116 = vunpack.c.l.s4 1983009808
  %v117 = vunpack.c.0.s8 %v116
  %v118 = vlaneseq
  %v119 = vshrl.u32 %v118, 7
  %v120 = vsub.s32 %v117, %v119
  %v121 = vrot.slane %v82, %v120
  %v123 = vunpack.c.l.s4 1983009808
  %v124 = vunpack.c.0.s8 %v123
  %v125 = vlaneseq
  %v126 = vshrl.u32 %v125, 7
  %v127 = vsub.s32 %v124, %v126
  %v128 = vrot.slane %v114, %v127
  %v129 = vcombine.high %v121, %v121
  %v130 = vcombine.high %v128, %v128
  %v131 = vcombine.high %v83, %v83
  %v133 = vunpack.c.l.s4 1983009808
  %v134 = vunpack.c.0.s8 %v133
  %v135 = vlaneseq
  %v136 = vshrl.u32 %v135, 7
  %v137 = vsub.s32 %v134, %v136
  %v138 = vrot.slane %v83, %v137
  %v140 = vunpack.c.l.s4 1983009808
  %v141 = vunpack.c.0.s8 %v140
  %v142 = vlaneseq
  %v143 = vshrl.u32 %v142, 7
  %v144 = vsub.s32 %v141, %v143
  %v145 = vrot.slane %v131, %v144
  %v146 = vcombine.high %v138, %v138
  %v147 = vcombine.high %v145, %v145
  %v148 = vcombine.high %v84, %v84
  %v150 = vunpack.c.l.s4 1983009808
  %v151 = vunpack.c.0.s8 %v150
  %v152 = vlaneseq
  %v153 = vshrl.u32 %v152, 7
  %v154 = vsub.s32 %v151, %v153
  %v155 = vrot.slane %v84, %v154
  %v157 = vunpack.c.l.s4 1983009808
  %v158 = vunpack.c.0.s8 %v157
  %v159 = vlaneseq
  %v160 = vshrl.u32 %v159, 7
  %v161 = vsub.s32 %v158, %v160
  %v162 = vrot.slane %v148, %v161
  %v163 = vcombine.high %v155, %v155
  %v164 = vcombine.high %v162, %v162
  %v165 = vcombine.high %v85, %v85
  %v167 = vunpack.c.l.s4 1983009808
  %v168 = vunpack.c.0.s8 %v167
  %v169 = vlaneseq
  %v170 = vshrl.u32 %v169, 7
  %v171 = vsub.s32 %v168, %v170
  %v172 = vrot.slane %v85, %v171
  %v174 = vunpack.c.l.s4 1983009808
  %v175 = vunpack.c.0.s8 %v174
  %v176 = vlaneseq
  %v177 = vshrl.u32 %v176, 7
  %v178 = vsub.s32 %v175, %v177
  %v179 = vrot.slane %v165, %v178
  %v180 = vcombine.high %v172, %v172
  %v181 = vcombine.high %v179, %v179
  %v182 = vcombine.high %v86, %v86
  %v184 = vunpack.c.l.s4 1983009808
  %v185 = vunpack.c.0.s8 %v184
  %v186 = vlaneseq
  %v187 = vshrl.u32 %v186, 7
  %v188 = vsub.s32 %v185, %v187
  %v189 = vrot.slane %v86, %v188
  %v191 = vunpack.c.l.s4 1983009808
  %v192 = vunpack.c.0.s8 %v191
  %v193 = vlaneseq
  %v194 = vshrl.u32 %v193, 7
  %v195 = vsub.s32 %v192, %v194
  %v196 = vrot.slane %v182, %v195
  %v197 = vcombine.high %v189, %v189
  %v198 = vcombine.high %v196, %v196
  %v199 = vcombine.high %v87, %v87
  %v201 = vunpack.c.l.s4 1983009808
  %v202 = vunpack.c.0.s8 %v201
  %v203 = vlaneseq
  %v204 = vshrl.u32 %v203, 7
  %v205 = vsub.s32 %v202, %v204
  %v206 = vrot.slane %v87, %v205
  %v208 = vunpack.c.l.s4 1983009808
  %v209 = vunpack.c.0.s8 %v208
  %v210 = vlaneseq
  %v211 = vshrl.u32 %v210, 7
  %v212 = vsub.s32 %v209, %v211
  %v213 = vrot.slane %v199, %v212
  %v214 = vcombine.high %v206, %v206
  %v215 = vcombine.high %v213, %v213
  %v216 = vcombine.high %v88, %v88
  %v218 = vunpack.c.l.s4 1983009808
  %v219 = vunpack.c.0.s8 %v218
  %v220 = vlaneseq
  %v221 = vshrl.u32 %v220, 7
  %v222 = vsub.s32 %v219, %v221
  %v223 = vrot.slane %v88, %v222
  %v225 = vunpack.c.l.s4 1983009808
  %v226 = vunpack.c.0.s8 %v225
  %v227 = vlaneseq
  %v228 = vshrl.u32 %v227, 7
  %v229 = vsub.s32 %v226, %v228
  %v230 = vrot.slane %v216, %v229
  %v231 = vcombine.high %v223, %v223
  %v232 = vcombine.high %v230, %v230
  %v233 = vcombine.high %v89, %v89
  %v235 = vunpack.c.l.s4 1983009808
  %v236 = vunpack.c.0.s8 %v235
  %v237 = vlaneseq
  %v238 = vshrl.u32 %v237, 7
  %v239 = vsub.s32 %v236, %v238
  %v240 = vrot.slane %v89, %v239
  %v242 = vunpack.c.l.s4 1983009808
  %v243 = vunpack.c.0.s8 %v242
  %v244 = vlaneseq
  %v245 = vshrl.u32 %v244, 7
  %v246 = vsub.s32 %v243, %v245
  %v247 = vrot.slane %v233, %v246
  %v248 = vcombine.high %v240, %v240
  %v249 = vcombine.high %v247, %v247
  %v250 = vcombine.high %v90, %v90
  %v252 = vunpack.c.l.s4 1983009808
  %v253 = vunpack.c.0.s8 %v252
  %v254 = vlaneseq
  %v255 = vshrl.u32 %v254, 7
  %v256 = vsub.s32 %v253, %v255
  %v257 = vrot.slane %v90, %v256
  %v259 = vunpack.c.l.s4 1983009808
  %v260 = vunpack.c.0.s8 %v259
  %v261 = vlaneseq
  %v262 = vshrl.u32 %v261, 7
  %v263 = vsub.s32 %v260, %v262
  %v264 = vrot.slane %v250, %v263
  %v265 = vcombine.high %v257, %v257
  %v266 = vcombine.high %v264, %v264
  %v267 = vcombine.high %v91, %v91
  %v269 = vunpack.c.l.s4 1983009808
  %v270 = vunpack.c.0.s8 %v269
  %v271 = vlaneseq
  %v272 = vshrl.u32 %v271, 7
  %v273 = vsub.s32 %v270, %v272
  %v274 = vrot.slane %v91, %v273
  %v276 = vunpack.c.l.s4 1983009808
  %v277 = vunpack.c.0.s8 %v276
  %v278 = vlaneseq
  %v279 = vshrl.u32 %v278, 7
  %v280 = vsub.s32 %v277, %v279
  %v281 = vrot.slane %v267, %v280
  %v282 = vcombine.high %v274, %v274
  %v283 = vcombine.high %v281, %v281
  %v284 = vcombine.high %v92, %v92
  %v286 = vunpack.c.l.s4 1983009808
  %v287 = vunpack.c.0.s8 %v286
  %v288 = vlaneseq
  %v289 = vshrl.u32 %v288, 7
  %v290 = vsub.s32 %v287, %v289
  %v291 = vrot.slane %v92, %v290
  %v293 = vunpack.c.l.s4 1983009808
  %v294 = vunpack.c.0.s8 %v293
  %v295 = vlaneseq
  %v296 = vshrl.u32 %v295, 7
  %v297 = vsub.s32 %v294, %v296
  %v298 = vrot.slane %v284, %v297
  %v299 = vcombine.high %v291, %v291
  %v300 = vcombine.high %v298, %v298
  %v301 = vcombine.high %v93, %v93
  %v303 = vunpack.c.l.s4 1983009808
  %v304 = vunpack.c.0.s8 %v303
  %v305 = vlaneseq
  %v306 = vshrl.u32 %v305, 7
  %v307 = vsub.s32 %v304, %v306
  %v308 = vrot.slane %v93, %v307
  %v310 = vunpack.c.l.s4 1983009808
  %v311 = vunpack.c.0.s8 %v310
  %v312 = vlaneseq
  %v313 = vshrl.u32 %v312, 7
  %v314 = vsub.s32 %v311, %v313
  %v315 = vrot.slane %v301, %v314
  %v316 = vcombine.high %v308, %v308
  %v317 = vcombine.high %v315, %v315
  %v318 = vcombine.high %v94, %v94
  %v320 = vunpack.c.l.s4 1983009808
  %v321 = vunpack.c.0.s8 %v320
  %v322 = vlaneseq
  %v323 = vshrl.u32 %v322, 7
  %v324 = vsub.s32 %v321, %v323
  %v325 = vrot.slane %v94, %v324
  %v327 = vunpack.c.l.s4 1983009808
  %v328 = vunpack.c.0.s8 %v327
  %v329 = vlaneseq
  %v330 = vshrl.u32 %v329, 7
  %v331 = vsub.s32 %v328, %v330
  %v332 = vrot.slane %v318, %v331
  %v333 = vcombine.high %v325, %v325
  %v334 = vcombine.high %v332, %v332
  %v335 = vcombine.high %v95, %v95
  %v337 = vunpack.c.l.s4 1983009808
  %v338 = vunpack.c.0.s8 %v337
  %v339 = vlaneseq
  %v340 = vshrl.u32 %v339, 7
  %v341 = vsub.s32 %v338, %v340
  %v342 = vrot.slane %v95, %v341
  %v344 = vunpack.c.l.s4 1983009808
  %v345 = vunpack.c.0.s8 %v344
  %v346 = vlaneseq
  %v347 = vshrl.u32 %v346, 7
  %v348 = vsub.s32 %v345, %v347
  %v349 = vrot.slane %v335, %v348
  %v350 = vcombine.high %v342, %v342
  %v351 = vcombine.high %v349, %v349
  %v352 = vcombine.high %v96, %v96
  %v354 = vunpack.c.l.s4 1983009808
  %v355 = vunpack.c.0.s8 %v354
  %v356 = vlaneseq
  %v357 = vshrl.u32 %v356, 7
  %v358 = vsub.s32 %v355, %v357
  %v359 = vrot.slane %v96, %v358
  %v361 = vunpack.c.l.s4 1983009808
  %v362 = vunpack.c.0.s8 %v361
  %v363 = vlaneseq
  %v364 = vshrl.u32 %v363, 7
  %v365 = vsub.s32 %v362, %v364
  %v366 = vrot.slane %v352, %v365
  %v367 = vcombine.high %v359, %v359
  %v368 = vcombine.high %v366, %v366
  %v369 = vcombine.high %v97, %v97
  %v371 = vunpack.c.l.s4 1983009808
  %v372 = vunpack.c.0.s8 %v371
  %v373 = vlaneseq
  %v374 = vshrl.u32 %v373, 7
  %v375 = vsub.s32 %v372, %v374
  %v376 = vrot.slane %v97, %v375
  %v378 = vunpack.c.l.s4 1983009808
  %v379 = vunpack.c.0.s8 %v378
  %v380 = vlaneseq
  %v381 = vshrl.u32 %v380, 7
  %v382 = vsub.s32 %v379, %v381
  %v383 = vrot.slane %v369, %v382
  %v384 = vcombine.high %v376, %v376
  %v385 = vcombine.high %v383, %v383
  %vm450 = vcmask 1041408
  %v451 = vsel %vm450, %v121, 0.0
  %v452 = vsel %vm450, %v129, 0.0
  %v453 = vadd.f32 %v451, %v452
  %v454 = vsel %vm450, %v128, 0.0
  %v455 = vadd.f32 %v453, %v454
  %v456 = vsel %vm450, %v130, 0.0
  %v457 = vadd.f32 %v455, %v456
  %v458 = vsel %vm450, %v138, 0.0
  %v459 = vadd.f32 %v457, %v458
  %v460 = vsel %vm450, %v146, 0.0
  %v461 = vadd.f32 %v459, %v460
  %v462 = vsel %vm450, %v145, 0.0
  %v463 = vadd.f32 %v461, %v462
  %v464 = vsel %vm450, %v147, 0.0
  %v465 = vadd.f32 %v463, %v464
  %v466 = vsel %vm450, %v155, 0.0
  %v467 = vadd.f32 %v465, %v466
  %v468 = vsel %vm450, %v163, 0.0
  %v469 = vadd.f32 %v467, %v468
  %v470 = vsel %vm450, %v162, 0.0
  %v471 = vadd.f32 %v469, %v470
  %v472 = vsel %vm450, %v164, 0.0
  %v473 = vadd.f32 %v471, %v472
  %v474 = vsel %vm450, %v172, 0.0
  %v475 = vadd.f32 %v473, %v474
  %v476 = vsel %vm450, %v180, 0.0
  %v477 = vadd.f32 %v475, %v476
  %v478 = vsel %vm450, %v179, 0.0
  %v479 = vadd.f32 %v477, %v478
  %v480 = vsel %vm450, %v181, 0.0
  %v481 = vadd.f32 %v479, %v480
  %v482 = vsel %vm450, %v189, 0.0
  %v483 = vadd.f32 %v481, %v482
  %v484 = vsel %vm450, %v197, 0.0
  %v485 = vadd.f32 %v483, %v484
  %v486 = vsel %vm450, %v196, 0.0
  %v487 = vadd.f32 %v485, %v486
  %v488 = vsel %vm450, %v198, 0.0
  %v489 = vadd.f32 %v487, %v488
  %v490 = vsel %vm450, %v206, 0.0
  %v491 = vadd.f32 %v489, %v490
  %v492 = vsel %vm450, %v214, 0.0
  %v493 = vadd.f32 %v491, %v492
  %v494 = vsel %vm450, %v213, 0.0
  %v495 = vadd.f32 %v493, %v494
  %v496 = vsel %vm450, %v215, 0.0
  %v497 = vadd.f32 %v495, %v496
  %v498 = vsel %vm450, %v223, 0.0
  %v499 = vadd.f32 %v497, %v498
  %v500 = vsel %vm450, %v231, 0.0
  %v501 = vadd.f32 %v499, %v500
  %v502 = vsel %vm450, %v230, 0.0
  %v503 = vadd.f32 %v501, %v502
  %v504 = vsel %vm450, %v232, 0.0
  %v505 = vadd.f32 %v503, %v504
  %v506 = vsel %vm450, %v240, 0.0
  %v507 = vadd.f32 %v505, %v506
  %v508 = vsel %vm450, %v248, 0.0
  %v509 = vadd.f32 %v507, %v508
  %v510 = vsel %vm450, %v247, 0.0
  %v511 = vadd.f32 %v509, %v510
  %v512 = vsel %vm450, %v249, 0.0
  %v513 = vadd.f32 %v511, %v512
  %v514 = vsel %vm450, %v257, 0.0
  %v515 = vadd.f32 %v513, %v514
  %v516 = vsel %vm450, %v265, 0.0
  %v517 = vadd.f32 %v515, %v516
  %v518 = vsel %vm450, %v264, 0.0
  %v519 = vadd.f32 %v517, %v518
  %v520 = vsel %vm450, %v266, 0.0
  %v521 = vadd.f32 %v519, %v520
  %v522 = vsel %vm450, %v274, 0.0
  %v523 = vadd.f32 %v521, %v522
  %v524 = vsel %vm450, %v282, 0.0
  %v525 = vadd.f32 %v523, %v524
  %v526 = vsel %vm450, %v281, 0.0
  %v527 = vadd.f32 %v525, %v526
  %v528 = vsel %vm450, %v283, 0.0
  %v529 = vadd.f32 %v527, %v528
  %v530 = vsel %vm450, %v291, 0.0
  %v531 = vadd.f32 %v529, %v530
  %v532 = vsel %vm450, %v299, 0.0
  %v533 = vadd.f32 %v531, %v532
  %v534 = vsel %vm450, %v298, 0.0
  %v535 = vadd.f32 %v533, %v534
  %v536 = vsel %vm450, %v300, 0.0
  %v537 = vadd.f32 %v535, %v536
  %v538 = vsel %vm450, %v308, 0.0
  %v539 = vadd.f32 %v537, %v538
  %v540 = vsel %vm450, %v316, 0.0
  %v541 = vadd.f32 %v539, %v540
  %v542 = vsel %vm450, %v315, 0.0
  %v543 = vadd.f32 %v541, %v542
  %v544 = vsel %vm450, %v317, 0.0
  %v545 = vadd.f32 %v543, %v544
  %v546 = vsel %vm450, %v325, 0.0
  %v547 = vadd.f32 %v545, %v546
  %v548 = vsel %vm450, %v333, 0.0
  %v549 = vadd.f32 %v547, %v548
  %v550 = vsel %vm450, %v332, 0.0
  %v551 = vadd.f32 %v549, %v550
  %v552 = vsel %vm450, %v334, 0.0
  %v553 = vadd.f32 %v551, %v552
  %v554 = vsel %vm450, %v342, 0.0
  %v555 = vadd.f32 %v553, %v554
  %v556 = vsel %vm450, %v350, 0.0
  %v557 = vadd.f32 %v555, %v556
  %v558 = vsel %vm450, %v349, 0.0
  %v559 = vadd.f32 %v557, %v558
  %v560 = vsel %vm450, %v351, 0.0
  %v561 = vadd.f32 %v559, %v560
  %v562 = vsel %vm450, %v359, 0.0
  %v563 = vadd.f32 %v561, %v562
  %v564 = vsel %vm450, %v367, 0.0
  %v565 = vadd.f32 %v563, %v564
  %v566 = vsel %vm450, %v366, 0.0
  %v567 = vadd.f32 %v565, %v566
  %v568 = vsel %vm450, %v368, 0.0
  %v569 = vadd.f32 %v567, %v568
  %v570 = vsel %vm450, %v376, 0.0
  %v571 = vadd.f32 %v569, %v570
  %v572 = vsel %vm450, %v384, 0.0
  %v573 = vadd.f32 %v571, %v572
  %v574 = vsel %vm450, %v383, 0.0
  %v575 = vadd.f32 %v573, %v574
  %v576 = vsel %vm450, %v385, 0.0
  %v577 = vadd.f32 %v575, %v576
  %578 = vadd.xlane.f32.xlu0 %v577
  %v579 = vpop.xlane.xlu0 %578
  %v580 = vadd.f32 %v81, %v579
  %vm581 = vcmask 1024
  %582 = vst.msk [vmem:[#allocation2] sm:$0x3] %vm581, %v580
  // Predicated region
  $region14: #{_lambda_.49} parent=0 // pred_check
    %p583 = pneg %p11
  $region15: #{_lambda_.49} parent=0 // pred_check_branch
    %585 = sbr.rel (%p583) target = $region17
  $region16: #{_lambda_.49} parent=0 // pred_region
    %v586 = vld [vmem:[#allocation2] sm:$0x3]
    %v587 = vmul.f32 %v586, 0.00012207031
    %588 = vst.msk [vmem:[%s2] sm:$0x3] %vm581, %v587
  $region17: #{_lambda_.49} parent=0 // pred_fallthru
    _
  // Predicated region
  $region18: #{_lambda_.49} parent=0 // pred_check
    _
  $region19: #{_lambda_.49} parent=0 // pred_check_branch
    %590 = sbr.rel (0) target = $region21
  $region20: #{_lambda_.49} parent=0 // pred_region
    _
  $region21: #{_lambda_.49} parent=0 // pred_fallthru
    _
  // Predicated region
  $region22: #{_lambda_.49} parent=0 // pred_check
    _
  $region23: #{_lambda_.49} parent=0 // pred_check_branch
    %592 = sbr.rel (0) target = $region25
  $region24: #{_lambda_.49} parent=0 // pred_region
    _
  $region25: #{_lambda_.49} parent=0 // pred_fallthru
    _

// kernel: _lambda_.39
$region0: #{_lambda_.39}
  #allocation0 [shape = 'u32[]', space=smem, size = 0x4, offset = 0x4, fixed_abs, tag = 'smem constant byte address 0x4 - core index']
  #allocation1 [shape = 'u32[144,128]{1,0:T(1,128)}', space=vmem, size = 0x12000, scoped, tag = 'internal scratch']
  #allocation2 [shape = 'f32[2,1]{1,0:T(2,128)}', space=vmem, size = 0x400, scoped, tag = 'scratch operand']
  %s0 = inlined_call_operand.vmem [shape: bf16[2,16384], index: 0, kind: input, shape index: {}]
  %s1 = inlined_call_operand.vmem [shape: bf16[2,16384], index: 1, kind: input, shape index: {}]
  %s2 = inlined_call_operand.vmem [shape: f32[2,1], index: 2, kind: output, shape index: {}]
  %s3 = sld [smem:[#allocation0]]
  $region26: #{_lambda_.39} parent=0
    _
  %s5 = ssub.s32 1, %s3
  %s6 = scalar_select 0, %s5, %s3
  // Predicated region
  $region2: #{_lambda_.39} parent=0 // pred_check
    _
  $region3: #{_lambda_.39} parent=0 // pred_check_branch
    %8 = sbr.rel (0) target = $region5
  $region4: #{_lambda_.39} parent=0 // pred_region
    _
  $region5: #{_lambda_.39} parent=0 // pred_fallthru
    _
  // Predicated region
  $region6: #{_lambda_.39} parent=0 // pred_check
    _
  $region7: #{_lambda_.39} parent=0 // pred_check_branch
    %10 = sbr.rel (0) target = $region9
  $region8: #{_lambda_.39} parent=0 // pred_region
    _
  $region9: #{_lambda_.39} parent=0 // pred_fallthru
    _
  %p11 = scmp.eq.s32.totalorder 0, 0
  // Predicated region
  $region10: #{_lambda_.39} parent=0 // pred_check
    %p12 = pneg %p11
  $region11: #{_lambda_.39} parent=0 // pred_check_branch
    %14 = sbr.rel (%p12) target = $region13
  $region12: #{_lambda_.39} parent=0 // pred_region
    %vm15 = vcmask 1024
    %16 = vst.msk [vmem:[#allocation2] sm:$0x3] %vm15, 0.0
  $region13: #{_lambda_.39} parent=0 // pred_fallthru
    _
  %v17 = vld [vmem:[%s0] sm:$0xff]
  %v18 = vld [vmem:[%s0 + $0x8] sm:$0xff]
  %v19 = vld [vmem:[%s0 + $0x10] sm:$0xff]
  %v20 = vld [vmem:[%s0 + $0x18] sm:$0xff]
  %v21 = vld [vmem:[%s0 + $0x20] sm:$0xff]
  %v22 = vld [vmem:[%s0 + $0x28] sm:$0xff]
  %v23 = vld [vmem:[%s0 + $0x30] sm:$0xff]
  %v24 = vld [vmem:[%s0 + $0x38] sm:$0xff]
  %v25 = vld [vmem:[%s0 + $0x40] sm:$0xff]
  %v26 = vld [vmem:[%s0 + $0x48] sm:$0xff]
  %v27 = vld [vmem:[%s0 + $0x50] sm:$0xff]
  %v28 = vld [vmem:[%s0 + $0x58] sm:$0xff]
  %v29 = vld [vmem:[%s0 + $0x60] sm:$0xff]
  %v30 = vld [vmem:[%s0 + $0x68] sm:$0xff]
  %v31 = vld [vmem:[%s0 + $0x70] sm:$0xff]
  %v32 = vld [vmem:[%s0 + $0x78] sm:$0xff]
  %v33 = vunpack.c.l.bf16 %v17
  %v34 = vunpack.c.h.bf16 %v17
  %v35 = vunpack.c.l.bf16 %v18
  %v36 = vunpack.c.h.bf16 %v18
  %v37 = vunpack.c.l.bf16 %v19
  %v38 = vunpack.c.h.bf16 %v19
  %v39 = vunpack.c.l.bf16 %v20
  %v40 = vunpack.c.h.bf16 %v20
  %v41 = vunpack.c.l.bf16 %v21
  %v42 = vunpack.c.h.bf16 %v21
  %v43 = vunpack.c.l.bf16 %v22
  %v44 = vunpack.c.h.bf16 %v22
  %v45 = vunpack.c.l.bf16 %v23
  %v46 = vunpack.c.h.bf16 %v23
  %v47 = vunpack.c.l.bf16 %v24
  %v48 = vunpack.c.h.bf16 %v24
  %v49 = vunpack.c.l.bf16 %v25
  %v50 = vunpack.c.h.bf16 %v25
  %v51 = vunpack.c.l.bf16 %v26
  %v52 = vunpack.c.h.bf16 %v26
  %v53 = vunpack.c.l.bf16 %v27
  %v54 = vunpack.c.h.bf16 %v27
  %v55 = vunpack.c.l.bf16 %v28
  %v56 = vunpack.c.h.bf16 %v28
  %v57 = vunpack.c.l.bf16 %v29
  %v58 = vunpack.c.h.bf16 %v29
  %v59 = vunpack.c.l.bf16 %v30
  %v60 = vunpack.c.h.bf16 %v30
  %v61 = vunpack.c.l.bf16 %v31
  %v62 = vunpack.c.h.bf16 %v31
  %v63 = vunpack.c.l.bf16 %v32
  %v64 = vunpack.c.h.bf16 %v32
  %v65 = vld [vmem:[%s1] sm:$0xff]
  %v66 = vld [vmem:[%s1 + $0x8] sm:$0xff]
  %v67 = vld [vmem:[%s1 + $0x10] sm:$0xff]
  %v68 = vld [vmem:[%s1 + $0x18] sm:$0xff]
  %v69 = vld [vmem:[%s1 + $0x20] sm:$0xff]
  %v70 = vld [vmem:[%s1 + $0x28] sm:$0xff]
  %v71 = vld [vmem:[%s1 + $0x30] sm:$0xff]
  %v72 = vld [vmem:[%s1 + $0x38] sm:$0xff]
  %v73 = vld [vmem:[%s1 + $0x40] sm:$0xff]
  %v74 = vld [vmem:[%s1 + $0x48] sm:$0xff]
  %v75 = vld [vmem:[%s1 + $0x50] sm:$0xff]
  %v76 = vld [vmem:[%s1 + $0x58] sm:$0xff]
  %v77 = vld [vmem:[%s1 + $0x60] sm:$0xff]
  %v78 = vld [vmem:[%s1 + $0x68] sm:$0xff]
  %v79 = vld [vmem:[%s1 + $0x70] sm:$0xff]
  %v80 = vld [vmem:[%s1 + $0x78] sm:$0xff]
  %v81 = vunpack.c.l.bf16 %v65
  %v82 = vunpack.c.h.bf16 %v65
  %v83 = vunpack.c.l.bf16 %v66
  %v84 = vunpack.c.h.bf16 %v66
  %v85 = vunpack.c.l.bf16 %v67
  %v86 = vunpack.c.h.bf16 %v67
  %v87 = vunpack.c.l.bf16 %v68
  %v88 = vunpack.c.h.bf16 %v68
  %v89 = vunpack.c.l.bf16 %v69
  %v90 = vunpack.c.h.bf16 %v69
  %v91 = vunpack.c.l.bf16 %v70
  %v92 = vunpack.c.h.bf16 %v70
  %v93 = vunpack.c.l.bf16 %v71
  %v94 = vunpack.c.h.bf16 %v71
  %v95 = vunpack.c.l.bf16 %v72
  %v96 = vunpack.c.h.bf16 %v72
  %v97 = vunpack.c.l.bf16 %v73
  %v98 = vunpack.c.h.bf16 %v73
  %v99 = vunpack.c.l.bf16 %v74
  %v100 = vunpack.c.h.bf16 %v74
  %v101 = vunpack.c.l.bf16 %v75
  %v102 = vunpack.c.h.bf16 %v75
  %v103 = vunpack.c.l.bf16 %v76
  %v104 = vunpack.c.h.bf16 %v76
  %v105 = vunpack.c.l.bf16 %v77
  %v106 = vunpack.c.h.bf16 %v77
  %v107 = vunpack.c.l.bf16 %v78
  %v108 = vunpack.c.h.bf16 %v78
  %v109 = vunpack.c.l.bf16 %v79
  %v110 = vunpack.c.h.bf16 %v79
  %v111 = vunpack.c.l.bf16 %v80
  %v112 = vunpack.c.h.bf16 %v80
  %v113 = vsub.f32 %v33, %v81
  %v114 = vsub.f32 %v34, %v82
  %v115 = vsub.f32 %v35, %v83
  %v116 = vsub.f32 %v36, %v84
  %v117 = vsub.f32 %v37, %v85
  %v118 = vsub.f32 %v38, %v86
  %v119 = vsub.f32 %v39, %v87
  %v120 = vsub.f32 %v40, %v88
  %v121 = vsub.f32 %v41, %v89
  %v122 = vsub.f32 %v42, %v90
  %v123 = vsub.f32 %v43, %v91
  %v124 = vsub.f32 %v44, %v92
  %v125 = vsub.f32 %v45, %v93
  %v126 = vsub.f32 %v46, %v94
  %v127 = vsub.f32 %v47, %v95
  %v128 = vsub.f32 %v48, %v96
  %v129 = vsub.f32 %v49, %v97
  %v130 = vsub.f32 %v50, %v98
  %v131 = vsub.f32 %v51, %v99
  %v132 = vsub.f32 %v52, %v100
  %v133 = vsub.f32 %v53, %v101
  %v134 = vsub.f32 %v54, %v102
  %v135 = vsub.f32 %v55, %v103
  %v136 = vsub.f32 %v56, %v104
  %v137 = vsub.f32 %v57, %v105
  %v138 = vsub.f32 %v58, %v106
  %v139 = vsub.f32 %v59, %v107
  %v140 = vsub.f32 %v60, %v108
  %v141 = vsub.f32 %v61, %v109
  %v142 = vsub.f32 %v62, %v110
  %v143 = vsub.f32 %v63, %v111
  %v144 = vsub.f32 %v64, %v112
  %v145 = vld [vmem:[#allocation2] sm:$0x3]
  %v146 = vmul.f32 %v113, %v113
  %v147 = vmul.f32 %v114, %v114
  %v148 = vmul.f32 %v115, %v115
  %v149 = vmul.f32 %v116, %v116
  %v150 = vmul.f32 %v117, %v117
  %v151 = vmul.f32 %v118, %v118
  %v152 = vmul.f32 %v119, %v119
  %v153 = vmul.f32 %v120, %v120
  %v154 = vmul.f32 %v121, %v121
  %v155 = vmul.f32 %v122, %v122
  %v156 = vmul.f32 %v123, %v123
  %v157 = vmul.f32 %v124, %v124
  %v158 = vmul.f32 %v125, %v125
  %v159 = vmul.f32 %v126, %v126
  %v160 = vmul.f32 %v127, %v127
  %v161 = vmul.f32 %v128, %v128
  %v162 = vmul.f32 %v129, %v129
  %v163 = vmul.f32 %v130, %v130
  %v164 = vmul.f32 %v131, %v131
  %v165 = vmul.f32 %v132, %v132
  %v166 = vmul.f32 %v133, %v133
  %v167 = vmul.f32 %v134, %v134
  %v168 = vmul.f32 %v135, %v135
  %v169 = vmul.f32 %v136, %v136
  %v170 = vmul.f32 %v137, %v137
  %v171 = vmul.f32 %v138, %v138
  %v172 = vmul.f32 %v139, %v139
  %v173 = vmul.f32 %v140, %v140
  %v174 = vmul.f32 %v141, %v141
  %v175 = vmul.f32 %v142, %v142
  %v176 = vmul.f32 %v143, %v143
  %v177 = vmul.f32 %v144, %v144
  %v210 = vcombine.high %v146, %v146
  %v212 = vunpack.c.l.s4 1983009808
  %v213 = vunpack.c.0.s8 %v212
  %v214 = vlaneseq
  %v215 = vshrl.u32 %v214, 7
  %v216 = vsub.s32 %v213, %v215
  %v217 = vrot.slane %v146, %v216
  %v219 = vunpack.c.l.s4 1983009808
  %v220 = vunpack.c.0.s8 %v219
  %v221 = vlaneseq
  %v222 = vshrl.u32 %v221, 7
  %v223 = vsub.s32 %v220, %v222
  %v224 = vrot.slane %v210, %v223
  %v225 = vcombine.high %v217, %v217
  %v226 = vcombine.high %v224, %v224
  %v227 = vcombine.high %v147, %v147
  %v229 = vunpack.c.l.s4 1983009808
  %v230 = vunpack.c.0.s8 %v229
  %v231 = vlaneseq
  %v232 = vshrl.u32 %v231, 7
  %v233 = vsub.s32 %v230, %v232
  %v234 = vrot.slane %v147, %v233
  %v236 = vunpack.c.l.s4 1983009808
  %v237 = vunpack.c.0.s8 %v236
  %v238 = vlaneseq
  %v239 = vshrl.u32 %v238, 7
  %v240 = vsub.s32 %v237, %v239
  %v241 = vrot.slane %v227, %v240
  %v242 = vcombine.high %v234, %v234
  %v243 = vcombine.high %v241, %v241
  %v244 = vcombine.high %v148, %v148
  %v246 = vunpack.c.l.s4 1983009808
  %v247 = vunpack.c.0.s8 %v246
  %v248 = vlaneseq
  %v249 = vshrl.u32 %v248, 7
  %v250 = vsub.s32 %v247, %v249
  %v251 = vrot.slane %v148, %v250
  %v253 = vunpack.c.l.s4 1983009808
  %v254 = vunpack.c.0.s8 %v253
  %v255 = vlaneseq
  %v256 = vshrl.u32 %v255, 7
  %v257 = vsub.s32 %v254, %v256
  %v258 = vrot.slane %v244, %v257
  %v259 = vcombine.high %v251, %v251
  %v260 = vcombine.high %v258, %v258
  %v261 = vcombine.high %v149, %v149
  %v263 = vunpack.c.l.s4 1983009808
  %v264 = vunpack.c.0.s8 %v263
  %v265 = vlaneseq
  %v266 = vshrl.u32 %v265, 7
  %v267 = vsub.s32 %v264, %v266
  %v268 = vrot.slane %v149, %v267
  %v270 = vunpack.c.l.s4 1983009808
  %v271 = vunpack.c.0.s8 %v270
  %v272 = vlaneseq
  %v273 = vshrl.u32 %v272, 7
  %v274 = vsub.s32 %v271, %v273
  %v275 = vrot.slane %v261, %v274
  %v276 = vcombine.high %v268, %v268
  %v277 = vcombine.high %v275, %v275
  %v278 = vcombine.high %v150, %v150
  %v280 = vunpack.c.l.s4 1983009808
  %v281 = vunpack.c.0.s8 %v280
  %v282 = vlaneseq
  %v283 = vshrl.u32 %v282, 7
  %v284 = vsub.s32 %v281, %v283
  %v285 = vrot.slane %v150, %v284
  %v287 = vunpack.c.l.s4 1983009808
  %v288 = vunpack.c.0.s8 %v287
  %v289 = vlaneseq
  %v290 = vshrl.u32 %v289, 7
  %v291 = vsub.s32 %v288, %v290
  %v292 = vrot.slane %v278, %v291
  %v293 = vcombine.high %v285, %v285
  %v294 = vcombine.high %v292, %v292
  %v295 = vcombine.high %v151, %v151
  %v297 = vunpack.c.l.s4 1983009808
  %v298 = vunpack.c.0.s8 %v297
  %v299 = vlaneseq
  %v300 = vshrl.u32 %v299, 7
  %v301 = vsub.s32 %v298, %v300
  %v302 = vrot.slane %v151, %v301
  %v304 = vunpack.c.l.s4 1983009808
  %v305 = vunpack.c.0.s8 %v304
  %v306 = vlaneseq
  %v307 = vshrl.u32 %v306, 7
  %v308 = vsub.s32 %v305, %v307
  %v309 = vrot.slane %v295, %v308
  %v310 = vcombine.high %v302, %v302
  %v311 = vcombine.high %v309, %v309
  %v312 = vcombine.high %v152, %v152
  %v314 = vunpack.c.l.s4 1983009808
  %v315 = vunpack.c.0.s8 %v314
  %v316 = vlaneseq
  %v317 = vshrl.u32 %v316, 7
  %v318 = vsub.s32 %v315, %v317
  %v319 = vrot.slane %v152, %v318
  %v321 = vunpack.c.l.s4 1983009808
  %v322 = vunpack.c.0.s8 %v321
  %v323 = vlaneseq
  %v324 = vshrl.u32 %v323, 7
  %v325 = vsub.s32 %v322, %v324
  %v326 = vrot.slane %v312, %v325
  %v327 = vcombine.high %v319, %v319
  %v328 = vcombine.high %v326, %v326
  %v329 = vcombine.high %v153, %v153
  %v331 = vunpack.c.l.s4 1983009808
  %v332 = vunpack.c.0.s8 %v331
  %v333 = vlaneseq
  %v334 = vshrl.u32 %v333, 7
  %v335 = vsub.s32 %v332, %v334
  %v336 = vrot.slane %v153, %v335
  %v338 = vunpack.c.l.s4 1983009808
  %v339 = vunpack.c.0.s8 %v338
  %v340 = vlaneseq
  %v341 = vshrl.u32 %v340, 7
  %v342 = vsub.s32 %v339, %v341
  %v343 = vrot.slane %v329, %v342
  %v344 = vcombine.high %v336, %v336
  %v345 = vcombine.high %v343, %v343
  %v346 = vcombine.high %v154, %v154
  %v348 = vunpack.c.l.s4 1983009808
  %v349 = vunpack.c.0.s8 %v348
  %v350 = vlaneseq
  %v351 = vshrl.u32 %v350, 7
  %v352 = vsub.s32 %v349, %v351
  %v353 = vrot.slane %v154, %v352
  %v355 = vunpack.c.l.s4 1983009808
  %v356 = vunpack.c.0.s8 %v355
  %v357 = vlaneseq
  %v358 = vshrl.u32 %v357, 7
  %v359 = vsub.s32 %v356, %v358
  %v360 = vrot.slane %v346, %v359
  %v361 = vcombine.high %v353, %v353
  %v362 = vcombine.high %v360, %v360
  %v363 = vcombine.high %v155, %v155
  %v365 = vunpack.c.l.s4 1983009808
  %v366 = vunpack.c.0.s8 %v365
  %v367 = vlaneseq
  %v368 = vshrl.u32 %v367, 7
  %v369 = vsub.s32 %v366, %v368
  %v370 = vrot.slane %v155, %v369
  %v372 = vunpack.c.l.s4 1983009808
  %v373 = vunpack.c.0.s8 %v372
  %v374 = vlaneseq
  %v375 = vshrl.u32 %v374, 7
  %v376 = vsub.s32 %v373, %v375
  %v377 = vrot.slane %v363, %v376
  %v378 = vcombine.high %v370, %v370
  %v379 = vcombine.high %v377, %v377
  %v380 = vcombine.high %v156, %v156
  %v382 = vunpack.c.l.s4 1983009808
  %v383 = vunpack.c.0.s8 %v382
  %v384 = vlaneseq
  %v385 = vshrl.u32 %v384, 7
  %v386 = vsub.s32 %v383, %v385
  %v387 = vrot.slane %v156, %v386
  %v389 = vunpack.c.l.s4 1983009808
  %v390 = vunpack.c.0.s8 %v389
  %v391 = vlaneseq
  %v392 = vshrl.u32 %v391, 7
  %v393 = vsub.s32 %v390, %v392
  %v394 = vrot.slane %v380, %v393
  %v395 = vcombine.high %v387, %v387
  %v396 = vcombine.high %v394, %v394
  %v397 = vcombine.high %v157, %v157
  %v399 = vunpack.c.l.s4 1983009808
  %v400 = vunpack.c.0.s8 %v399
  %v401 = vlaneseq
  %v402 = vshrl.u32 %v401, 7
  %v403 = vsub.s32 %v400, %v402
  %v404 = vrot.slane %v157, %v403
  %v406 = vunpack.c.l.s4 1983009808
  %v407 = vunpack.c.0.s8 %v406
  %v408 = vlaneseq
  %v409 = vshrl.u32 %v408, 7
  %v410 = vsub.s32 %v407, %v409
  %v411 = vrot.slane %v397, %v410
  %v412 = vcombine.high %v404, %v404
  %v413 = vcombine.high %v411, %v411
  %v414 = vcombine.high %v158, %v158
  %v416 = vunpack.c.l.s4 1983009808
  %v417 = vunpack.c.0.s8 %v416
  %v418 = vlaneseq
  %v419 = vshrl.u32 %v418, 7
  %v420 = vsub.s32 %v417, %v419
  %v421 = vrot.slane %v158, %v420
  %v423 = vunpack.c.l.s4 1983009808
  %v424 = vunpack.c.0.s8 %v423
  %v425 = vlaneseq
  %v426 = vshrl.u32 %v425, 7
  %v427 = vsub.s32 %v424, %v426
  %v428 = vrot.slane %v414, %v427
  %v429 = vcombine.high %v421, %v421
  %v430 = vcombine.high %v428, %v428
  %v431 = vcombine.high %v159, %v159
  %v433 = vunpack.c.l.s4 1983009808
  %v434 = vunpack.c.0.s8 %v433
  %v435 = vlaneseq
  %v436 = vshrl.u32 %v435, 7
  %v437 = vsub.s32 %v434, %v436
  %v438 = vrot.slane %v159, %v437
  %v440 = vunpack.c.l.s4 1983009808
  %v441 = vunpack.c.0.s8 %v440
  %v442 = vlaneseq
  %v443 = vshrl.u32 %v442, 7
  %v444 = vsub.s32 %v441, %v443
  %v445 = vrot.slane %v431, %v444
  %v446 = vcombine.high %v438, %v438
  %v447 = vcombine.high %v445, %v445
  %v448 = vcombine.high %v160, %v160
  %v450 = vunpack.c.l.s4 1983009808
  %v451 = vunpack.c.0.s8 %v450
  %v452 = vlaneseq
  %v453 = vshrl.u32 %v452, 7
  %v454 = vsub.s32 %v451, %v453
  %v455 = vrot.slane %v160, %v454
  %v457 = vunpack.c.l.s4 1983009808
  %v458 = vunpack.c.0.s8 %v457
  %v459 = vlaneseq
  %v460 = vshrl.u32 %v459, 7
  %v461 = vsub.s32 %v458, %v460
  %v462 = vrot.slane %v448, %v461
  %v463 = vcombine.high %v455, %v455
  %v464 = vcombine.high %v462, %v462
  %v465 = vcombine.high %v161, %v161
  %v467 = vunpack.c.l.s4 1983009808
  %v468 = vunpack.c.0.s8 %v467
  %v469 = vlaneseq
  %v470 = vshrl.u32 %v469, 7
  %v471 = vsub.s32 %v468, %v470
  %v472 = vrot.slane %v161, %v471
  %v474 = vunpack.c.l.s4 1983009808
  %v475 = vunpack.c.0.s8 %v474
  %v476 = vlaneseq
  %v477 = vshrl.u32 %v476, 7
  %v478 = vsub.s32 %v475, %v477
  %v479 = vrot.slane %v465, %v478
  %v480 = vcombine.high %v472, %v472
  %v481 = vcombine.high %v479, %v479
  %v482 = vcombine.high %v162, %v162
  %v484 = vunpack.c.l.s4 1983009808
  %v485 = vunpack.c.0.s8 %v484
  %v486 = vlaneseq
  %v487 = vshrl.u32 %v486, 7
  %v488 = vsub.s32 %v485, %v487
  %v489 = vrot.slane %v162, %v488
  %v491 = vunpack.c.l.s4 1983009808
  %v492 = vunpack.c.0.s8 %v491
  %v493 = vlaneseq
  %v494 = vshrl.u32 %v493, 7
  %v495 = vsub.s32 %v492, %v494
  %v496 = vrot.slane %v482, %v495
  %v497 = vcombine.high %v489, %v489
  %v498 = vcombine.high %v496, %v496
  %v499 = vcombine.high %v163, %v163
  %v501 = vunpack.c.l.s4 1983009808
  %v502 = vunpack.c.0.s8 %v501
  %v503 = vlaneseq
  %v504 = vshrl.u32 %v503, 7
  %v505 = vsub.s32 %v502, %v504
  %v506 = vrot.slane %v163, %v505
  %v508 = vunpack.c.l.s4 1983009808
  %v509 = vunpack.c.0.s8 %v508
  %v510 = vlaneseq
  %v511 = vshrl.u32 %v510, 7
  %v512 = vsub.s32 %v509, %v511
  %v513 = vrot.slane %v499, %v512
  %v514 = vcombine.high %v506, %v506
  %v515 = vcombine.high %v513, %v513
  %v516 = vcombine.high %v164, %v164
  %v518 = vunpack.c.l.s4 1983009808
  %v519 = vunpack.c.0.s8 %v518
  %v520 = vlaneseq
  %v521 = vshrl.u32 %v520, 7
  %v522 = vsub.s32 %v519, %v521
  %v523 = vrot.slane %v164, %v522
  %v525 = vunpack.c.l.s4 1983009808
  %v526 = vunpack.c.0.s8 %v525
  %v527 = vlaneseq
  %v528 = vshrl.u32 %v527, 7
  %v529 = vsub.s32 %v526, %v528
  %v530 = vrot.slane %v516, %v529
  %v531 = vcombine.high %v523, %v523
  %v532 = vcombine.high %v530, %v530
  %v533 = vcombine.high %v165, %v165
  %v535 = vunpack.c.l.s4 1983009808
  %v536 = vunpack.c.0.s8 %v535
  %v537 = vlaneseq
  %v538 = vshrl.u32 %v537, 7
  %v539 = vsub.s32 %v536, %v538
  %v540 = vrot.slane %v165, %v539
  %v542 = vunpack.c.l.s4 1983009808
  %v543 = vunpack.c.0.s8 %v542
  %v544 = vlaneseq
  %v545 = vshrl.u32 %v544, 7
  %v546 = vsub.s32 %v543, %v545
  %v547 = vrot.slane %v533, %v546
  %v548 = vcombine.high %v540, %v540
  %v549 = vcombine.high %v547, %v547
  %v550 = vcombine.high %v166, %v166
  %v552 = vunpack.c.l.s4 1983009808
  %v553 = vunpack.c.0.s8 %v552
  %v554 = vlaneseq
  %v555 = vshrl.u32 %v554, 7
  %v556 = vsub.s32 %v553, %v555
  %v557 = vrot.slane %v166, %v556
  %v559 = vunpack.c.l.s4 1983009808
  %v560 = vunpack.c.0.s8 %v559
  %v561 = vlaneseq
  %v562 = vshrl.u32 %v561, 7
  %v563 = vsub.s32 %v560, %v562
  %v564 = vrot.slane %v550, %v563
  %v565 = vcombine.high %v557, %v557
  %v566 = vcombine.high %v564, %v564
  %v567 = vcombine.high %v167, %v167
  %v569 = vunpack.c.l.s4 1983009808
  %v570 = vunpack.c.0.s8 %v569
  %v571 = vlaneseq
  %v572 = vshrl.u32 %v571, 7
  %v573 = vsub.s32 %v570, %v572
  %v574 = vrot.slane %v167, %v573
  %v576 = vunpack.c.l.s4 1983009808
  %v577 = vunpack.c.0.s8 %v576
  %v578 = vlaneseq
  %v579 = vshrl.u32 %v578, 7
  %v580 = vsub.s32 %v577, %v579
  %v581 = vrot.slane %v567, %v580
  %v582 = vcombine.high %v574, %v574
  %v583 = vcombine.high %v581, %v581
  %v584 = vcombine.high %v168, %v168
  %v586 = vunpack.c.l.s4 1983009808
  %v587 = vunpack.c.0.s8 %v586
  %v588 = vlaneseq
  %v589 = vshrl.u32 %v588, 7
  %v590 = vsub.s32 %v587, %v589
  %v591 = vrot.slane %v168, %v590
  %v593 = vunpack.c.l.s4 1983009808
  %v594 = vunpack.c.0.s8 %v593
  %v595 = vlaneseq
  %v596 = vshrl.u32 %v595, 7
  %v597 = vsub.s32 %v594, %v596
  %v598 = vrot.slane %v584, %v597
  %v599 = vcombine.high %v591, %v591
  %v600 = vcombine.high %v598, %v598
  %v601 = vcombine.high %v169, %v169
  %v603 = vunpack.c.l.s4 1983009808
  %v604 = vunpack.c.0.s8 %v603
  %v605 = vlaneseq
  %v606 = vshrl.u32 %v605, 7
  %v607 = vsub.s32 %v604, %v606
  %v608 = vrot.slane %v169, %v607
  %v610 = vunpack.c.l.s4 1983009808
  %v611 = vunpack.c.0.s8 %v610
  %v612 = vlaneseq
  %v613 = vshrl.u32 %v612, 7
  %v614 = vsub.s32 %v611, %v613
  %v615 = vrot.slane %v601, %v614
  %v616 = vcombine.high %v608, %v608
  %v617 = vcombine.high %v615, %v615
  %v618 = vcombine.high %v170, %v170
  %v620 = vunpack.c.l.s4 1983009808
  %v621 = vunpack.c.0.s8 %v620
  %v622 = vlaneseq
  %v623 = vshrl.u32 %v622, 7
  %v624 = vsub.s32 %v621, %v623
  %v625 = vrot.slane %v170, %v624
  %v627 = vunpack.c.l.s4 1983009808
  %v628 = vunpack.c.0.s8 %v627
  %v629 = vlaneseq
  %v630 = vshrl.u32 %v629, 7
  %v631 = vsub.s32 %v628, %v630
  %v632 = vrot.slane %v618, %v631
  %v633 = vcombine.high %v625, %v625
  %v634 = vcombine.high %v632, %v632
  %v635 = vcombine.high %v171, %v171
  %v637 = vunpack.c.l.s4 1983009808
  %v638 = vunpack.c.0.s8 %v637
  %v639 = vlaneseq
  %v640 = vshrl.u32 %v639, 7
  %v641 = vsub.s32 %v638, %v640
  %v642 = vrot.slane %v171, %v641
  %v644 = vunpack.c.l.s4 1983009808
  %v645 = vunpack.c.0.s8 %v644
  %v646 = vlaneseq
  %v647 = vshrl.u32 %v646, 7
  %v648 = vsub.s32 %v645, %v647
  %v649 = vrot.slane %v635, %v648
  %v650 = vcombine.high %v642, %v642
  %v651 = vcombine.high %v649, %v649
  %v652 = vcombine.high %v172, %v172
  %v654 = vunpack.c.l.s4 1983009808
  %v655 = vunpack.c.0.s8 %v654
  %v656 = vlaneseq
  %v657 = vshrl.u32 %v656, 7
  %v658 = vsub.s32 %v655, %v657
  %v659 = vrot.slane %v172, %v658
  %v661 = vunpack.c.l.s4 1983009808
  %v662 = vunpack.c.0.s8 %v661
  %v663 = vlaneseq
  %v664 = vshrl.u32 %v663, 7
  %v665 = vsub.s32 %v662, %v664
  %v666 = vrot.slane %v652, %v665
  %v667 = vcombine.high %v659, %v659
  %v668 = vcombine.high %v666, %v666
  %v669 = vcombine.high %v173, %v173
  %v671 = vunpack.c.l.s4 1983009808
  %v672 = vunpack.c.0.s8 %v671
  %v673 = vlaneseq
  %v674 = vshrl.u32 %v673, 7
  %v675 = vsub.s32 %v672, %v674
  %v676 = vrot.slane %v173, %v675
  %v678 = vunpack.c.l.s4 1983009808
  %v679 = vunpack.c.0.s8 %v678
  %v680 = vlaneseq
  %v681 = vshrl.u32 %v680, 7
  %v682 = vsub.s32 %v679, %v681
  %v683 = vrot.slane %v669, %v682
  %v684 = vcombine.high %v676, %v676
  %v685 = vcombine.high %v683, %v683
  %v686 = vcombine.high %v174, %v174
  %v688 = vunpack.c.l.s4 1983009808
  %v689 = vunpack.c.0.s8 %v688
  %v690 = vlaneseq
  %v691 = vshrl.u32 %v690, 7
  %v692 = vsub.s32 %v689, %v691
  %v693 = vrot.slane %v174, %v692
  %v695 = vunpack.c.l.s4 1983009808
  %v696 = vunpack.c.0.s8 %v695
  %v697 = vlaneseq
  %v698 = vshrl.u32 %v697, 7
  %v699 = vsub.s32 %v696, %v698
  %v700 = vrot.slane %v686, %v699
  %v701 = vcombine.high %v693, %v693
  %v702 = vcombine.high %v700, %v700
  %v703 = vcombine.high %v175, %v175
  %v705 = vunpack.c.l.s4 1983009808
  %v706 = vunpack.c.0.s8 %v705
  %v707 = vlaneseq
  %v708 = vshrl.u32 %v707, 7
  %v709 = vsub.s32 %v706, %v708
  %v710 = vrot.slane %v175, %v709
  %v712 = vunpack.c.l.s4 1983009808
  %v713 = vunpack.c.0.s8 %v712
  %v714 = vlaneseq
  %v715 = vshrl.u32 %v714, 7
  %v716 = vsub.s32 %v713, %v715
  %v717 = vrot.slane %v703, %v716
  %v718 = vcombine.high %v710, %v710
  %v719 = vcombine.high %v717, %v717
  %v720 = vcombine.high %v176, %v176
  %v722 = vunpack.c.l.s4 1983009808
  %v723 = vunpack.c.0.s8 %v722
  %v724 = vlaneseq
  %v725 = vshrl.u32 %v724, 7
  %v726 = vsub.s32 %v723, %v725
  %v727 = vrot.slane %v176, %v726
  %v729 = vunpack.c.l.s4 1983009808
  %v730 = vunpack.c.0.s8 %v729
  %v731 = vlaneseq
  %v732 = vshrl.u32 %v731, 7
  %v733 = vsub.s32 %v730, %v732
  %v734 = vrot.slane %v720, %v733
  %v735 = vcombine.high %v727, %v727
  %v736 = vcombine.high %v734, %v734
  %v737 = vcombine.high %v177, %v177
  %v739 = vunpack.c.l.s4 1983009808
  %v740 = vunpack.c.0.s8 %v739
  %v741 = vlaneseq
  %v742 = vshrl.u32 %v741, 7
  %v743 = vsub.s32 %v740, %v742
  %v744 = vrot.slane %v177, %v743
  %v746 = vunpack.c.l.s4 1983009808
  %v747 = vunpack.c.0.s8 %v746
  %v748 = vlaneseq
  %v749 = vshrl.u32 %v748, 7
  %v750 = vsub.s32 %v747, %v749
  %v751 = vrot.slane %v737, %v750
  %v752 = vcombine.high %v744, %v744
  %v753 = vcombine.high %v751, %v751
  %vm882 = vcmask 1041408
  %v883 = vsel %vm882, %v217, 0.0
  %v884 = vsel %vm882, %v225, 0.0
  %v885 = vadd.f32 %v883, %v884
  %v886 = vsel %vm882, %v224, 0.0
  %v887 = vadd.f32 %v885, %v886
  %v888 = vsel %vm882, %v226, 0.0
  %v889 = vadd.f32 %v887, %v888
  %v890 = vsel %vm882, %v234, 0.0
  %v891 = vadd.f32 %v889, %v890
  %v892 = vsel %vm882, %v242, 0.0
  %v893 = vadd.f32 %v891, %v892
  %v894 = vsel %vm882, %v241, 0.0
  %v895 = vadd.f32 %v893, %v894
  %v896 = vsel %vm882, %v243, 0.0
  %v897 = vadd.f32 %v895, %v896
  %v898 = vsel %vm882, %v251, 0.0
  %v899 = vadd.f32 %v897, %v898
  %v900 = vsel %vm882, %v259, 0.0
  %v901 = vadd.f32 %v899, %v900
  %v902 = vsel %vm882, %v258, 0.0
  %v903 = vadd.f32 %v901, %v902
  %v904 = vsel %vm882, %v260, 0.0
  %v905 = vadd.f32 %v903, %v904
  %v906 = vsel %vm882, %v268, 0.0
  %v907 = vadd.f32 %v905, %v906
  %v908 = vsel %vm882, %v276, 0.0
  %v909 = vadd.f32 %v907, %v908
  %v910 = vsel %vm882, %v275, 0.0
  %v911 = vadd.f32 %v909, %v910
  %v912 = vsel %vm882, %v277, 0.0
  %v913 = vadd.f32 %v911, %v912
  %v914 = vsel %vm882, %v285, 0.0
  %v915 = vadd.f32 %v913, %v914
  %v916 = vsel %vm882, %v293, 0.0
  %v917 = vadd.f32 %v915, %v916
  %v918 = vsel %vm882, %v292, 0.0
  %v919 = vadd.f32 %v917, %v918
  %v920 = vsel %vm882, %v294, 0.0
  %v921 = vadd.f32 %v919, %v920
  %v922 = vsel %vm882, %v302, 0.0
  %v923 = vadd.f32 %v921, %v922
  %v924 = vsel %vm882, %v310, 0.0
  %v925 = vadd.f32 %v923, %v924
  %v926 = vsel %vm882, %v309, 0.0
  %v927 = vadd.f32 %v925, %v926
  %v928 = vsel %vm882, %v311, 0.0
  %v929 = vadd.f32 %v927, %v928
  %v930 = vsel %vm882, %v319, 0.0
  %v931 = vadd.f32 %v929, %v930
  %v932 = vsel %vm882, %v327, 0.0
  %v933 = vadd.f32 %v931, %v932
  %v934 = vsel %vm882, %v326, 0.0
  %v935 = vadd.f32 %v933, %v934
  %v936 = vsel %vm882, %v328, 0.0
  %v937 = vadd.f32 %v935, %v936
  %v938 = vsel %vm882, %v336, 0.0
  %v939 = vadd.f32 %v937, %v938
  %v940 = vsel %vm882, %v344, 0.0
  %v941 = vadd.f32 %v939, %v940
  %v942 = vsel %vm882, %v343, 0.0
  %v943 = vadd.f32 %v941, %v942
  %v944 = vsel %vm882, %v345, 0.0
  %v945 = vadd.f32 %v943, %v944
  %v946 = vsel %vm882, %v353, 0.0
  %v947 = vadd.f32 %v945, %v946
  %v948 = vsel %vm882, %v361, 0.0
  %v949 = vadd.f32 %v947, %v948
  %v950 = vsel %vm882, %v360, 0.0
  %v951 = vadd.f32 %v949, %v950
  %v952 = vsel %vm882, %v362, 0.0
  %v953 = vadd.f32 %v951, %v952
  %v954 = vsel %vm882, %v370, 0.0
  %v955 = vadd.f32 %v953, %v954
  %v956 = vsel %vm882, %v378, 0.0
  %v957 = vadd.f32 %v955, %v956
  %v958 = vsel %vm882, %v377, 0.0
  %v959 = vadd.f32 %v957, %v958
  %v960 = vsel %vm882, %v379, 0.0
  %v961 = vadd.f32 %v959, %v960
  %v962 = vsel %vm882, %v387, 0.0
  %v963 = vadd.f32 %v961, %v962
  %v964 = vsel %vm882, %v395, 0.0
  %v965 = vadd.f32 %v963, %v964
  %v966 = vsel %vm882, %v394, 0.0
  %v967 = vadd.f32 %v965, %v966
  %v968 = vsel %vm882, %v396, 0.0
  %v969 = vadd.f32 %v967, %v968
  %v970 = vsel %vm882, %v404, 0.0
  %v971 = vadd.f32 %v969, %v970
  %v972 = vsel %vm882, %v412, 0.0
  %v973 = vadd.f32 %v971, %v972
  %v974 = vsel %vm882, %v411, 0.0
  %v975 = vadd.f32 %v973, %v974
  %v976 = vsel %vm882, %v413, 0.0
  %v977 = vadd.f32 %v975, %v976
  %v978 = vsel %vm882, %v421, 0.0
  %v979 = vadd.f32 %v977, %v978
  %v980 = vsel %vm882, %v429, 0.0
  %v981 = vadd.f32 %v979, %v980
  %v982 = vsel %vm882, %v428, 0.0
  %v983 = vadd.f32 %v981, %v982
  %v984 = vsel %vm882, %v430, 0.0
  %v985 = vadd.f32 %v983, %v984
  %v986 = vsel %vm882, %v438, 0.0
  %v987 = vadd.f32 %v985, %v986
  %v988 = vsel %vm882, %v446, 0.0
  %v989 = vadd.f32 %v987, %v988
  %v990 = vsel %vm882, %v445, 0.0
  %v991 = vadd.f32 %v989, %v990
  %v992 = vsel %vm882, %v447, 0.0
  %v993 = vadd.f32 %v991, %v992
  %v994 = vsel %vm882, %v455, 0.0
  %v995 = vadd.f32 %v993, %v994
  %v996 = vsel %vm882, %v463, 0.0
  %v997 = vadd.f32 %v995, %v996
  %v998 = vsel %vm882, %v462, 0.0
  %v999 = vadd.f32 %v997, %v998
  %v1000 = vsel %vm882, %v464, 0.0
  %v1001 = vadd.f32 %v999, %v1000
  %v1002 = vsel %vm882, %v472, 0.0
  %v1003 = vadd.f32 %v1001, %v1002
  %v1004 = vsel %vm882, %v480, 0.0
  %v1005 = vadd.f32 %v1003, %v1004
  %v1006 = vsel %vm882, %v479, 0.0
  %v1007 = vadd.f32 %v1005, %v1006
  %v1008 = vsel %vm882, %v481, 0.0
  %v1009 = vadd.f32 %v1007, %v1008
  %v1010 = vsel %vm882, %v489, 0.0
  %v1011 = vadd.f32 %v1009, %v1010
  %v1012 = vsel %vm882, %v497, 0.0
  %v1013 = vadd.f32 %v1011, %v1012
  %v1014 = vsel %vm882, %v496, 0.0
  %v1015 = vadd.f32 %v1013, %v1014
  %v1016 = vsel %vm882, %v498, 0.0
  %v1017 = vadd.f32 %v1015, %v1016
  %v1018 = vsel %vm882, %v506, 0.0
  %v1019 = vadd.f32 %v1017, %v1018
  %v1020 = vsel %vm882, %v514, 0.0
  %v1021 = vadd.f32 %v1019, %v1020
  %v1022 = vsel %vm882, %v513, 0.0
  %v1023 = vadd.f32 %v1021, %v1022
  %v1024 = vsel %vm882, %v515, 0.0
  %v1025 = vadd.f32 %v1023, %v1024
  %v1026 = vsel %vm882, %v523, 0.0
  %v1027 = vadd.f32 %v1025, %v1026
  %v1028 = vsel %vm882, %v531, 0.0
  %v1029 = vadd.f32 %v1027, %v1028
  %v1030 = vsel %vm882, %v530, 0.0
  %v1031 = vadd.f32 %v1029, %v1030
  %v1032 = vsel %vm882, %v532, 0.0
  %v1033 = vadd.f32 %v1031, %v1032
  %v1034 = vsel %vm882, %v540, 0.0
  %v1035 = vadd.f32 %v1033, %v1034
  %v1036 = vsel %vm882, %v548, 0.0
  %v1037 = vadd.f32 %v1035, %v1036
  %v1038 = vsel %vm882, %v547, 0.0
  %v1039 = vadd.f32 %v1037, %v1038
  %v1040 = vsel %vm882, %v549, 0.0
  %v1041 = vadd.f32 %v1039, %v1040
  %v1042 = vsel %vm882, %v557, 0.0
  %v1043 = vadd.f32 %v1041, %v1042
  %v1044 = vsel %vm882, %v565, 0.0
  %v1045 = vadd.f32 %v1043, %v1044
  %v1046 = vsel %vm882, %v564, 0.0
  %v1047 = vadd.f32 %v1045, %v1046
  %v1048 = vsel %vm882, %v566, 0.0
  %v1049 = vadd.f32 %v1047, %v1048
  %v1050 = vsel %vm882, %v574, 0.0
  %v1051 = vadd.f32 %v1049, %v1050
  %v1052 = vsel %vm882, %v582, 0.0
  %v1053 = vadd.f32 %v1051, %v1052
  %v1054 = vsel %vm882, %v581, 0.0
  %v1055 = vadd.f32 %v1053, %v1054
  %v1056 = vsel %vm882, %v583, 0.0
  %v1057 = vadd.f32 %v1055, %v1056
  %v1058 = vsel %vm882, %v591, 0.0
  %v1059 = vadd.f32 %v1057, %v1058
  %v1060 = vsel %vm882, %v599, 0.0
  %v1061 = vadd.f32 %v1059, %v1060
  %v1062 = vsel %vm882, %v598, 0.0
  %v1063 = vadd.f32 %v1061, %v1062
  %v1064 = vsel %vm882, %v600, 0.0
  %v1065 = vadd.f32 %v1063, %v1064
  %v1066 = vsel %vm882, %v608, 0.0
  %v1067 = vadd.f32 %v1065, %v1066
  %v1068 = vsel %vm882, %v616, 0.0
  %v1069 = vadd.f32 %v1067, %v1068
  %v1070 = vsel %vm882, %v615, 0.0
  %v1071 = vadd.f32 %v1069, %v1070
  %v1072 = vsel %vm882, %v617, 0.0
  %v1073 = vadd.f32 %v1071, %v1072
  %v1074 = vsel %vm882, %v625, 0.0
  %v1075 = vadd.f32 %v1073, %v1074
  %v1076 = vsel %vm882, %v633, 0.0
  %v1077 = vadd.f32 %v1075, %v1076
  %v1078 = vsel %vm882, %v632, 0.0
  %v1079 = vadd.f32 %v1077, %v1078
  %v1080 = vsel %vm882, %v634, 0.0
  %v1081 = vadd.f32 %v1079, %v1080
  %v1082 = vsel %vm882, %v642, 0.0
  %v1083 = vadd.f32 %v1081, %v1082
  %v1084 = vsel %vm882, %v650, 0.0
  %v1085 = vadd.f32 %v1083, %v1084
  %v1086 = vsel %vm882, %v649, 0.0
  %v1087 = vadd.f32 %v1085, %v1086
  %v1088 = vsel %vm882, %v651, 0.0
  %v1089 = vadd.f32 %v1087, %v1088
  %v1090 = vsel %vm882, %v659, 0.0
  %v1091 = vadd.f32 %v1089, %v1090
  %v1092 = vsel %vm882, %v667, 0.0
  %v1093 = vadd.f32 %v1091, %v1092
  %v1094 = vsel %vm882, %v666, 0.0
  %v1095 = vadd.f32 %v1093, %v1094
  %v1096 = vsel %vm882, %v668, 0.0
  %v1097 = vadd.f32 %v1095, %v1096
  %v1098 = vsel %vm882, %v676, 0.0
  %v1099 = vadd.f32 %v1097, %v1098
  %v1100 = vsel %vm882, %v684, 0.0
  %v1101 = vadd.f32 %v1099, %v1100
  %v1102 = vsel %vm882, %v683, 0.0
  %v1103 = vadd.f32 %v1101, %v1102
  %v1104 = vsel %vm882, %v685, 0.0
  %v1105 = vadd.f32 %v1103, %v1104
  %v1106 = vsel %vm882, %v693, 0.0
  %v1107 = vadd.f32 %v1105, %v1106
  %v1108 = vsel %vm882, %v701, 0.0
  %v1109 = vadd.f32 %v1107, %v1108
  %v1110 = vsel %vm882, %v700, 0.0
  %v1111 = vadd.f32 %v1109, %v1110
  %v1112 = vsel %vm882, %v702, 0.0
  %v1113 = vadd.f32 %v1111, %v1112
  %v1114 = vsel %vm882, %v710, 0.0
  %v1115 = vadd.f32 %v1113, %v1114
  %v1116 = vsel %vm882, %v718, 0.0
  %v1117 = vadd.f32 %v1115, %v1116
  %v1118 = vsel %vm882, %v717, 0.0
  %v1119 = vadd.f32 %v1117, %v1118
  %v1120 = vsel %vm882, %v719, 0.0
  %v1121 = vadd.f32 %v1119, %v1120
  %v1122 = vsel %vm882, %v727, 0.0
  %v1123 = vadd.f32 %v1121, %v1122
  %v1124 = vsel %vm882, %v735, 0.0
  %v1125 = vadd.f32 %v1123, %v1124
  %v1126 = vsel %vm882, %v734, 0.0
  %v1127 = vadd.f32 %v1125, %v1126
  %v1128 = vsel %vm882, %v736, 0.0
  %v1129 = vadd.f32 %v1127, %v1128
  %v1130 = vsel %vm882, %v744, 0.0
  %v1131 = vadd.f32 %v1129, %v1130
  %v1132 = vsel %vm882, %v752, 0.0
  %v1133 = vadd.f32 %v1131, %v1132
  %v1134 = vsel %vm882, %v751, 0.0
  %v1135 = vadd.f32 %v1133, %v1134
  %v1136 = vsel %vm882, %v753, 0.0
  %v1137 = vadd.f32 %v1135, %v1136
  %1138 = vadd.xlane.f32.xlu0 %v1137
  %v1139 = vpop.xlane.xlu0 %1138
  %v1140 = vadd.f32 %v145, %v1139
  %vm1141 = vcmask 1024
  %1142 = vst.msk [vmem:[#allocation2] sm:$0x3] %vm1141, %v1140
  // Predicated region
  $region14: #{_lambda_.39} parent=0 // pred_check
    %p1143 = pneg %p11
  $region15: #{_lambda_.39} parent=0 // pred_check_branch
    %1145 = sbr.rel (%p1143) target = $region17
  $region16: #{_lambda_.39} parent=0 // pred_region
    %v1146 = vld [vmem:[#allocation2] sm:$0x3]
    %v1147 = vmul.f32 %v1146, 6.1035156e-05
    %1148 = vst.msk [vmem:[%s2] sm:$0x3] %vm1141, %v1147
  $region17: #{_lambda_.39} parent=0 // pred_fallthru
    _
  // Predicated region
  $region18: #{_lambda_.39} parent=0 // pred_check
    _
  $region19: #{_lambda_.39} parent=0 // pred_check_branch
    %1150 = sbr.rel (0) target = $region21
  $region20: #{_lambda_.39} parent=0 // pred_region
    _
  $region21: #{_lambda_.39} parent=0 // pred_fallthru
    _
  // Predicated region
  $region22: #{_lambda_.39} parent=0 // pred_check
    _
  $region23: #{_lambda_.39} parent=0 // pred_check_branch
    %1152 = sbr.rel (0) target = $region25
  $region24: #{_lambda_.39} parent=0 // pred_region
    _
  $region25: #{_lambda_.39} parent=0 // pred_fallthru
    _

</llo_original>
